<compile_context>
chip_gen: v7x
topology: tpu7x:2x2x1
jax: 0.10.0
libtpu: 0.0.40
codegen_flags: <defaults>
</compile_context>

<pallas_src>
import functools

import jax
import jax.numpy as jnp
from jax.experimental import pallas as pl
from jax.experimental.pallas import tpu as pltpu

BN_EPS = 1e-5
EMB = 1024                      # PointNet embedding dim
ROW_TILE = 512                  # row-tile target (multiple of 8)
OUT_LANES = 8                   # lane width of the head's logit slab (col 0 is real)
VMEM_LIMIT = 40 * 1024 * 1024   # explicit scoped-VMEM limit (< v7x 64 MiB physical)


def _pick_tile(n, target=ROW_TILE):
    """Largest tile <= target that divides n (multiple of 8 when possible)."""
    # TODO(synk): pad awkward point counts up to a multiple of the tile (and mask
    # the pad rows out of BN sums / pooling) instead of falling back to tile=n.
    target = max(8, (target // 8) * 8)
    if n <= target:
        return n
    for t in range(target, 7, -8):
        if n % t == 0:
            return t
    return n


# ----------------------------------------------------------------------------
# Pallas kernels
# ----------------------------------------------------------------------------
def _feat_layer_kernel(x_ref, psc_ref, psh_ref, w_ref, *out_refs,
                       apply_prev, emit_y, emit_minmax):
    """Fused: prev-layer BN(scale/shift)+ReLU -> matmul -> packed BN/pool stats.

    Stats layout (1, 8, Cout): sublane 0 = sum, 1 = sum of squares,
    2 = per-channel max, 3 = per-channel min (rows 4..7 are don't-care).
    """
    if apply_prev:
        x = x_ref[...].astype(jnp.float32)
        x = jnp.maximum(x * psc_ref[...] + psh_ref[...], 0.0).astype(jnp.bfloat16)
    else:
        x = x_ref[...]
    # Conv bias omitted: it is exactly absorbed by the following BatchNorm.
    y = jnp.dot(x, w_ref[...], preferred_element_type=jnp.float32)

    if emit_y:
        y_ref = out_refs[0]
        y_ref[...] = y.astype(y_ref.dtype)

    stats_ref = out_refs[-1]
    s1 = jnp.sum(y, axis=0, keepdims=True)          # [1, Cout]
    s2 = jnp.sum(y * y, axis=0, keepdims=True)      # [1, Cout]
    if emit_minmax:
        r2 = jnp.max(y, axis=0, keepdims=True)
        r3 = jnp.min(y, axis=0, keepdims=True)
    else:
        r2, r3 = s1, s2
    rid = jax.lax.broadcasted_iota(jnp.int32, stats_ref.shape[1:], 0)
    packed = jnp.where(rid == 0, s1,
                       jnp.where(rid == 1, s2,
                                 jnp.where(rid == 2, r2, r3)))
    stats_ref[...] = packed[None]


def _head_kernel(y_ref, sc_ref, sh_ref, ph_ref,
                 w1_ref, w2_ref, b2_ref, w3_ref, b3_ref,
                 w4_ref, b4_ref, w5_ref, b5_ref, o_ref):
    """Whole mask head fused per row tile; weights stay resident in VMEM."""
    # Template features: last feature layer's BN + ReLU applied on the fly.
    t = jnp.maximum(y_ref[...].astype(jnp.float32) * sc_ref[...] + sh_ref[...], 0.0)
    # Head layer 1 (split concat): template-side matmul + pooled-side broadcast add.
    h = jnp.dot(t.astype(jnp.bfloat16), w1_ref[...], preferred_element_type=jnp.float32)
    h = jnp.maximum(h + ph_ref[0], 0.0)
    h = jnp.maximum(
        jnp.dot(h.astype(jnp.bfloat16), w2_ref[...],
                preferred_element_type=jnp.float32) + b2_ref[...], 0.0)
    h = jnp.maximum(
        jnp.dot(h.astype(jnp.bfloat16), w3_ref[...],
                preferred_element_type=jnp.float32) + b3_ref[...], 0.0)
    h = jnp.maximum(
        jnp.dot(h.astype(jnp.bfloat16), w4_ref[...],
                preferred_element_type=jnp.float32) + b4_ref[...], 0.0)
    # Final 128->1 layer as 128->128 (zero-padded columns) on the MXU, then only
    # the first OUT_LANES columns are sigmoid'ed and stored (column 0 is real).
    logits = jnp.dot(h.astype(jnp.bfloat16), w5_ref[...],
                     preferred_element_type=jnp.float32) + b5_ref[...]
    lg = logits[:, :OUT_LANES]
    o_ref[...] = pl.reciprocal(1.0 + jnp.exp(-lg), approx=True)


# ----------------------------------------------------------------------------
# pallas_call wrappers
# ----------------------------------------------------------------------------
def _feat_layer(x, psc, psh, w, tile, *, apply_prev, emit_y, emit_minmax):
    R, cin = x.shape
    cout = w.shape[1]
    nt = R // tile
    kern = functools.partial(_feat_layer_kernel, apply_prev=apply_prev,
                             emit_y=emit_y, emit_minmax=emit_minmax)

    stats_shape = jax.ShapeDtypeStruct((nt, 8, cout), jnp.float32)
    stats_spec = pl.BlockSpec((1, 8, cout), lambda i: (i, 0, 0))
    if emit_y:
        out_shape = (jax.ShapeDtypeStruct((R, cout), jnp.bfloat16), stats_shape)
        out_specs = (pl.BlockSpec((tile, cout), lambda i: (i, 0)), stats_spec)
    else:
        out_shape = stats_shape
        out_specs = stats_spec

    res = pl.pallas_call(
        kern,
        out_shape=out_shape,
        grid=(nt,),
        in_specs=[
            pl.BlockSpec((tile, cin), lambda i: (i, 0)),
            pl.BlockSpec((1, cin), lambda i: (0, 0)),
            pl.BlockSpec((1, cin), lambda i: (0, 0)),
            pl.BlockSpec((cin, cout), lambda i: (0, 0)),
        ],
        out_specs=out_specs,
        compiler_params=pltpu.CompilerParams(
            dimension_semantics=("parallel",),
            vmem_limit_bytes=VMEM_LIMIT),
    )(x, psc, psh, w)

    if emit_y:
        return res            # (y, stats)
    return None, res


def _bn_fold(stats, rows, gamma, beta):
    """Per-channel batch stats -> folded (scale, shift). Tiny, runs in JAX."""
    s1t = jnp.sum(stats[:, 0, :], axis=0)            # [C] total sum
    s2t = jnp.sum(stats[:, 1, :], axis=0)            # [C] total sum of squares
    mean = s1t / rows
    var = jnp.maximum(s2t / rows - mean * mean, 0.0)
    inv = jax.lax.rsqrt(var + BN_EPS)
    scale = gamma.reshape(-1) * inv
    shift = beta.reshape(-1) - mean * scale
    return (scale.reshape(1, -1).astype(jnp.float32),
            shift.reshape(1, -1).astype(jnp.float32))


def mask_head(y_t, sc, sh, pooled_head, head_params, B, Nt):
    """Fused head MLP.  Returns [B*Nt, OUT_LANES] slab; column 0 is the mask."""
    (w1t, _w1b, _b1), (w2, b2), (w3, b3), (w4, b4), (w5, b5) = head_params
    R, C = y_t.shape
    tile = _pick_tile(Nt)
    tpb = Nt // tile

    def _rep(shape):
        return pl.BlockSpec(shape, lambda b, j: (0,) * len(shape))

    return pl.pallas_call(
        _head_kernel,
        out_shape=jax.ShapeDtypeStruct((R, OUT_LANES), jnp.float32),
        grid=(B, tpb),
        in_specs=[
            pl.BlockSpec((tile, C), lambda b, j: (b * tpb + j, 0)),
            _rep((1, C)), _rep((1, C)),
            pl.BlockSpec((1, 1, 1024), lambda b, j: (b, 0, 0)),
            _rep(w1t.shape),
            _rep(w2.shape), _rep(b2.shape),
            _rep(w3.shape), _rep(b3.shape),
            _rep(w4.shape), _rep(b4.shape),
            _rep(w5.shape), _rep(b5.shape),
        ],
        out_specs=pl.BlockSpec((tile, OUT_LANES), lambda b, j: (b * tpb + j, 0)),
        compiler_params=pltpu.CompilerParams(
            dimension_semantics=("parallel", "parallel"),
            vmem_limit_bytes=VMEM_LIMIT),
    )(y_t, sc, sh, pooled_head, w1t, w2, b2, w3, b3, w4, b4, w5, b5)


# ----------------------------------------------------------------------------
# Parameter construction (deterministic, synthetic)
# ----------------------------------------------------------------------------
def make_params(key):
    # PointNet(use_bn=True): 3 -> 64 -> 64 -> 64 -> 128 -> EMB, each + BN + ReLU.
    # The 64-wide layers are zero-padded to 128 output channels (padded gamma=0,
    # beta=0 so padded activations are exactly 0 -> numerically a no-op).
    feat_real = [3, 64, 64, 64, 128, EMB]
    # h3 head: (EMB + EMB) -> 1024 -> 512 -> 256 -> 128 -> 1, ReLU / Sigmoid.
    head_dims = [2 * EMB, 1024, 512, 256, 128, 1]
    n_feat, n_head = len(feat_real) - 1, len(head_dims) - 1
    keys = jax.random.split(key, n_feat + n_head)

    def _pad(c, m):
        return -(-c // m) * m

    feat_params = []
    for i in range(n_feat):
        cin, cout = feat_real[i], feat_real[i + 1]
        cin_p = 8 if i == 0 else _pad(cin, 128)          # coords padded 3 -> 8
        cout_p = _pad(cout, 128)
        w = jax.random.normal(keys[i], (cin, cout), jnp.float32) / jnp.sqrt(cin)
        wp = jnp.zeros((cin_p, cout_p), jnp.float32).at[:cin, :cout].set(w)
        gamma = jnp.zeros((1, cout_p), jnp.float32).at[:, :cout].set(1.0)
        beta = jnp.zeros((1, cout_p), jnp.float32)
        # Conv bias intentionally omitted (absorbed exactly by BatchNorm).
        feat_params.append((wp.astype(jnp.bfloat16), gamma, beta))

    head_params = []
    for i in range(n_head):
        cin, cout = head_dims[i], head_dims[i + 1]
        w = jax.random.normal(keys[n_feat + i], (cin, cout), jnp.float32) / jnp.sqrt(cin)
        b = jnp.zeros((1, cout), jnp.float32)
        if i == 0:
            # cat([template_feat, pooled_source], channel): rows 0:EMB -> template,
            # rows EMB:2*EMB -> pooled source (bias added on the pooled side).
            head_params.append((w[:EMB].astype(jnp.bfloat16),
                                w[EMB:].astype(jnp.bfloat16), b))
        elif i == n_head - 1:
            wp = jnp.zeros((cin, 128), jnp.float32).at[:, :cout].set(w)
            bp = jnp.zeros((1, 128), jnp.float32).at[:, :cout].set(b)
            head_params.append((wp.astype(jnp.bfloat16), bp))
        else:
            head_params.append((w.astype(jnp.bfloat16), b))
    return feat_params, head_params


# ----------------------------------------------------------------------------
# Model forward
# ----------------------------------------------------------------------------
def pointnet_features(points, feat_params, *, want_pool=False):
    """points: [B, N, 3].

    want_pool=False (template path): returns (pre-BN last-layer features
      [B*N, EMB] bf16, folded last-layer BN scale/shift [1, EMB], None).
    want_pool=True (source path): the max-pool over points of ReLU(BN(y)) is
      fused into the last feature layer (per-tile max/min side stats); the
      last-layer activations are never written to HBM.  Returns
      (None, scale, shift, pooled [B, EMB]).
    """
    B, N, _ = points.shape
    R = B * N
    tile = _pick_tile(N)            # tile | N  ->  tiles never cross batches
    tpb = N // tile

    x = points.reshape(R, 3).astype(jnp.float32)
    x = jnp.pad(x, ((0, 0), (0, 5))).astype(jnp.bfloat16)   # Cin 3 -> 8
    scale = jnp.ones((1, 8), jnp.float32)                   # dummies for layer 0
    shift = jnp.zeros((1, 8), jnp.float32)

    n_layers = len(feat_params)
    for li, (w, gamma, beta) in enumerate(feat_params):
        last = li == n_layers - 1
        fuse_pool = last and want_pool
        y, stats = _feat_layer(x, scale, shift, w, tile,
                               apply_prev=(li > 0),
                               emit_y=not fuse_pool,
                               emit_minmax=fuse_pool)
        scale, shift = _bn_fold(stats, R, gamma, beta)       # batch stats, all rows
        if fuse_pool:
            C = w.shape[1]
            st = stats.reshape(B, tpb, 8, C)
            mx_b = jnp.max(st[:, :, 2, :], axis=1)           # [B, C] per-batch max(y)
            mn_b = jnp.min(st[:, :, 3, :], axis=1)           # [B, C] per-batch min(y)
            # max over points of relu(scale*y + shift), sign-aware in scale.
            pooled = jnp.maximum(
                jnp.maximum(scale * mx_b, scale * mn_b) + shift, 0.0)
            return None, scale, shift, pooled
        x = y
    return x, scale, shift, None


def masknet_forward(template, source, feat_params, head_params):
    """Equivalent of MaskNet.forward (is_training=True -> topk branch)."""
    B, Nt, _ = template.shape
    Ns = source.shape[1]

    # Shared PointNet; BN batch stats computed per call (source / template separately).
    _, _, _, pooled = pointnet_features(source, feat_params, want_pool=True)    # [B, EMB]
    y_t, sc_t, sh_t, _ = pointnet_features(template, feat_params, want_pool=False)

    # Pooled-source side of head layer 1 (only B rows -> plain JAX matmul).
    w1t, w1b, b1 = head_params[0]
    ph = jnp.dot(pooled.astype(jnp.bfloat16), w1b,
                 preferred_element_type=jnp.float32) + b1                        # [B, 1024]
    ph = ph.reshape(B, 1, 1024)

    # Fused mask head over template rows; slice the single real logit column.
    slab = mask_head(y_t, sc_t, sh_t, ph, head_params, B, Nt)                    # [B*Nt, 8]
    mask = slab[:, 0].reshape(B, Nt)

    # MaskNet.forward: is_training=True -> topk(mask, k=source.shape[1], sorted=False)
    # (sorted=False leaves ordering unspecified in torch; we return descending order)
    _, mask_idx = jax.lax.top_k(mask, Ns)                                        # [B, Ns]
    new_template = jnp.take_along_axis(template, mask_idx[:, :, None], axis=1)
    return new_template, mask


# ----------------------------------------------------------------------------
if __name__ == "__main__":
    key = jax.random.PRNGKey(0)
    k_par, k_t, k_s = jax.random.split(key, 3)

    B, N = 2, 16  # small shapes: batch=2, 16 points per cloud, 3-D coordinates
    template = jax.random.normal(k_t, (B, N, 3), jnp.float32)
    source = jax.random.normal(k_s, (B, N, 3), jnp.float32)

    feat_params, head_params = make_params(k_par)

    fwd = jax.jit(masknet_forward)
    new_template, mask = fwd(template, source, feat_params, head_params)
    jax.block_until_ready((new_template, mask))

    assert new_template.shape == (B, N, 3)
    assert mask.shape == (B, N)
    assert bool(jnp.all(jnp.isfinite(mask)))
    print("KERNEL_OK")
</pallas_src>

<mosaic_0001>
module attributes {stable_mosaic.version = 11 : i64} {
  func.func @_feat_layer_kernel(%arg0: i32, %arg1: memref<16x128xbf16, #tpu.memory_space<vmem>>, %arg2: memref<1x128xf32, #tpu.memory_space<vmem>>, %arg3: memref<1x128xf32, #tpu.memory_space<vmem>>, %arg4: memref<128x1024xbf16, #tpu.memory_space<vmem>>, %arg5: memref<1x8x1024xf32, #tpu.memory_space<vmem>>) attributes {dimension_semantics = [#tpu.dimension_semantics<parallel>], iteration_bounds = array<i64: 2>, scalar_prefetch = 0 : i64, scratch_operands = 0 : i64, tpu.core_type = #tpu.core_type<tc>, window_params = [{transform_indices = @transform_0, window_bounds = array<i64: 16, 128>}, {pipeline_mode = #tpu.pipeline_mode<synchronous>, transform_indices = @transform_1, window_bounds = array<i64: 1, 128>}, {pipeline_mode = #tpu.pipeline_mode<synchronous>, transform_indices = @transform_2, window_bounds = array<i64: 1, 128>}, {pipeline_mode = #tpu.pipeline_mode<synchronous>, transform_indices = @transform_3, window_bounds = array<i64: 128, 1024>}, {transform_indices = @transform_4, window_bounds = array<i64: 1, 8, 1024>}]} {
    %c0 = arith.constant 0 : index
    %c0_0 = arith.constant 0 : index
    %0 = vector.load %arg1[%c0, %c0_0] : memref<16x128xbf16, #tpu.memory_space<vmem>>, vector<16x128xbf16>
    %1 = arith.extf %0 : vector<16x128xbf16> to vector<16x128xf32>
    %c0_1 = arith.constant 0 : index
    %c0_2 = arith.constant 0 : index
    %2 = vector.load %arg2[%c0_1, %c0_2] : memref<1x128xf32, #tpu.memory_space<vmem>>, vector<1x128xf32>
    %3 = vector.broadcast %2 : vector<1x128xf32> to vector<16x128xf32>
    %4 = arith.mulf %1, %3 : vector<16x128xf32>
    %c0_3 = arith.constant 0 : index
    %c0_4 = arith.constant 0 : index
    %5 = vector.load %arg3[%c0_3, %c0_4] : memref<1x128xf32, #tpu.memory_space<vmem>>, vector<1x128xf32>
    %6 = vector.broadcast %5 : vector<1x128xf32> to vector<16x128xf32>
    %7 = arith.addf %4, %6 : vector<16x128xf32>
    %cst = arith.constant 0.000000e+00 : f32
    %8 = vector.broadcast %cst : f32 to vector<16x128xf32>
    %9 = arith.maximumf %7, %8 : vector<16x128xf32>
    %10 = arith.truncf %9 : vector<16x128xf32> to vector<16x128xbf16>
    %c0_5 = arith.constant 0 : index
    %c0_6 = arith.constant 0 : index
    %11 = vector.load %arg4[%c0_5, %c0_6] : memref<128x1024xbf16, #tpu.memory_space<vmem>>, vector<128x1024xbf16>
    %cst_7 = arith.constant dense<0.000000e+00> : vector<16x1024xf32>
    %12 = tpu.matmul %10, %11, %cst_7 {dimension_numbers = #tpu.dot_dimension_numbers<[1], [0], [0], [1], [0, 0, 1, 1], [], []>} : vector<16x128xbf16>, vector<128x1024xbf16>, vector<16x1024xf32> -> vector<16x1024xf32>
    %cst_8 = arith.constant dense<0.000000e+00> : vector<1024xf32>
    %13 = vector.multi_reduction <add>, %12, %cst_8 [0] : vector<16x1024xf32> to vector<1024xf32>
    %14 = vector.shape_cast %13 : vector<1024xf32> to vector<1x1024xf32>
    %15 = arith.mulf %12, %12 : vector<16x1024xf32>
    %cst_9 = arith.constant dense<0.000000e+00> : vector<1024xf32>
    %16 = vector.multi_reduction <add>, %15, %cst_9 [0] : vector<16x1024xf32> to vector<1024xf32>
    %17 = vector.shape_cast %16 : vector<1024xf32> to vector<1x1024xf32>
    %cst_10 = arith.constant dense<0xFF800000> : vector<1024xf32>
    %18 = vector.multi_reduction <maximumf>, %12, %cst_10 [0] : vector<16x1024xf32> to vector<1024xf32>
    %19 = vector.shape_cast %18 : vector<1024xf32> to vector<1x1024xf32>
    %cst_11 = arith.constant dense<0x7F800000> : vector<1024xf32>
    %20 = vector.multi_reduction <minimumf>, %12, %cst_11 [0] : vector<16x1024xf32> to vector<1024xf32>
    %21 = vector.shape_cast %20 : vector<1024xf32> to vector<1x1024xf32>
    %22 = tpu.iota {dimensions = array<i32: 0>} : vector<8x1024xi32>
    %c0_i32 = arith.constant 0 : i32
    %23 = vector.broadcast %c0_i32 : i32 to vector<8x1024xi32>
    %24 = arith.cmpi eq, %22, %23 : vector<8x1024xi32>
    %c1_i32 = arith.constant 1 : i32
    %25 = vector.broadcast %c1_i32 : i32 to vector<8x1024xi32>
    %26 = arith.cmpi eq, %22, %25 : vector<8x1024xi32>
    %c2_i32 = arith.constant 2 : i32
    %27 = vector.broadcast %c2_i32 : i32 to vector<8x1024xi32>
    %28 = arith.cmpi eq, %22, %27 : vector<8x1024xi32>
    %29 = vector.shape_cast %19 : vector<1x1024xf32> to vector<1x1024xf32>
    %30 = vector.broadcast %29 : vector<1x1024xf32> to vector<8x1024xf32>
    %31 = vector.shape_cast %21 : vector<1x1024xf32> to vector<1x1024xf32>
    %32 = vector.broadcast %31 : vector<1x1024xf32> to vector<8x1024xf32>
    %33 = arith.select %28, %30, %32 : vector<8x1024xi1>, vector<8x1024xf32>
    %34 = vector.shape_cast %17 : vector<1x1024xf32> to vector<1x1024xf32>
    %35 = vector.broadcast %34 : vector<1x1024xf32> to vector<8x1024xf32>
    %36 = arith.select %26, %35, %33 : vector<8x1024xi1>, vector<8x1024xf32>
    %37 = vector.shape_cast %14 : vector<1x1024xf32> to vector<1x1024xf32>
    %38 = vector.broadcast %37 : vector<1x1024xf32> to vector<8x1024xf32>
    %39 = arith.select %24, %38, %36 : vector<8x1024xi1>, vector<8x1024xf32>
    %40 = vector.shape_cast %39 : vector<8x1024xf32> to vector<1x8x1024xf32>
    %c0_12 = arith.constant 0 : index
    %c0_13 = arith.constant 0 : index
    %c0_14 = arith.constant 0 : index
    %41 = vector.load %arg5[%c0_12, %c0_13, %c0_14] : memref<1x8x1024xf32, #tpu.memory_space<vmem>>, vector<1x8x1024xf32>
    tpu.vector_store %arg5[%c0_12, %c0_13, %c0_14], %40 {strides = array<i32>} : memref<1x8x1024xf32, #tpu.memory_space<vmem>>, vector<1x8x1024xf32>,
    return
  }
  func.func @transform_0(%arg0: i32) -> (i32, i32) {
    %c0_i32 = arith.constant 0 : i32
    %c0_i32_0 = arith.constant 0 : i32
    return %arg0, %c0_i32 : i32, i32
  }
  func.func @transform_1(%arg0: i32) -> (i32, i32) {
    %c0_i32 = arith.constant 0 : i32
    %c0_i32_0 = arith.constant 0 : i32
    %c0_i32_1 = arith.constant 0 : i32
    return %c0_i32, %c0_i32_0 : i32, i32
  }
  func.func @transform_2(%arg0: i32) -> (i32, i32) {
    %c0_i32 = arith.constant 0 : i32
    %c0_i32_0 = arith.constant 0 : i32
    %c0_i32_1 = arith.constant 0 : i32
    return %c0_i32, %c0_i32_0 : i32, i32
  }
  func.func @transform_3(%arg0: i32) -> (i32, i32) {
    %c0_i32 = arith.constant 0 : i32
    %c0_i32_0 = arith.constant 0 : i32
    %c0_i32_1 = arith.constant 0 : i32
    return %c0_i32, %c0_i32_0 : i32, i32
  }
  func.func @transform_4(%arg0: i32) -> (i32, i32, i32) {
    %c0_i32 = arith.constant 0 : i32
    %c0_i32_0 = arith.constant 0 : i32
    %c0_i32_1 = arith.constant 0 : i32
    return %arg0, %c0_i32, %c0_i32_0 : i32, i32, i32
  }
}

module attributes {stable_mosaic.version = 11 : i64} {
  func.func @_feat_layer_kernel(%arg0: i32, %arg1: memref<16x8xbf16, #tpu.memory_space<vmem>>, %arg2: memref<1x8xf32, #tpu.memory_space<vmem>>, %arg3: memref<1x8xf32, #tpu.memory_space<vmem>>, %arg4: memref<8x128xbf16, #tpu.memory_space<vmem>>, %arg5: memref<16x128xbf16, #tpu.memory_space<vmem>>, %arg6: memref<1x8x128xf32, #tpu.memory_space<vmem>>) attributes {dimension_semantics = [#tpu.dimension_semantics<parallel>], iteration_bounds = array<i64: 2>, scalar_prefetch = 0 : i64, scratch_operands = 0 : i64, tpu.core_type = #tpu.core_type<tc>, window_params = [{transform_indices = @transform_0, window_bounds = array<i64: 16, 8>}, {pipeline_mode = #tpu.pipeline_mode<synchronous>, transform_indices = @transform_1, window_bounds = array<i64: 1, 8>}, {pipeline_mode = #tpu.pipeline_mode<synchronous>, transform_indices = @transform_2, window_bounds = array<i64: 1, 8>}, {pipeline_mode = #tpu.pipeline_mode<synchronous>, transform_indices = @transform_3, window_bounds = array<i64: 8, 128>}, {transform_indices = @transform_4, window_bounds = array<i64: 16, 128>}, {transform_indices = @transform_5, window_bounds = array<i64: 1, 8, 128>}]} {
    %c0 = arith.constant 0 : index
    %c0_0 = arith.constant 0 : index
    %0 = vector.load %arg1[%c0, %c0_0] : memref<16x8xbf16, #tpu.memory_space<vmem>>, vector<16x8xbf16>
    %c0_1 = arith.constant 0 : index
    %c0_2 = arith.constant 0 : index
    %1 = vector.load %arg4[%c0_1, %c0_2] : memref<8x128xbf16, #tpu.memory_space<vmem>>, vector<8x128xbf16>
    %cst = arith.constant dense<0.000000e+00> : vector<16x128xf32>
    %2 = tpu.matmul %0, %1, %cst {dimension_numbers = #tpu.dot_dimension_numbers<[1], [0], [0], [1], [0, 0, 1, 1], [], []>} : vector<16x8xbf16>, vector<8x128xbf16>, vector<16x128xf32> -> vector<16x128xf32>
    %3 = arith.truncf %2 : vector<16x128xf32> to vector<16x128xbf16>
    %c0_3 = arith.constant 0 : index
    %c0_4 = arith.constant 0 : index
    %4 = vector.load %arg5[%c0_3, %c0_4] : memref<16x128xbf16, #tpu.memory_space<vmem>>, vector<16x128xbf16>
    tpu.vector_store %arg5[%c0_3, %c0_4], %3 {strides = array<i32>} : memref<16x128xbf16, #tpu.memory_space<vmem>>, vector<16x128xbf16>,
    %cst_5 = arith.constant dense<0.000000e+00> : vector<128xf32>
    %5 = vector.multi_reduction <add>, %2, %cst_5 [0] : vector<16x128xf32> to vector<128xf32>
    %6 = vector.shape_cast %5 : vector<128xf32> to vector<1x128xf32>
    %7 = arith.mulf %2, %2 : vector<16x128xf32>
    %cst_6 = arith.constant dense<0.000000e+00> : vector<128xf32>
    %8 = vector.multi_reduction <add>, %7, %cst_6 [0] : vector<16x128xf32> to vector<128xf32>
    %9 = vector.shape_cast %8 : vector<128xf32> to vector<1x128xf32>
    %10 = tpu.iota {dimensions = array<i32: 0>} : vector<8x128xi32>
    %c0_i32 = arith.constant 0 : i32
    %11 = vector.broadcast %c0_i32 : i32 to vector<8x128xi32>
    %12 = arith.cmpi eq, %10, %11 : vector<8x128xi32>
    %c1_i32 = arith.constant 1 : i32
    %13 = vector.broadcast %c1_i32 : i32 to vector<8x128xi32>
    %14 = arith.cmpi eq, %10, %13 : vector<8x128xi32>
    %c2_i32 = arith.constant 2 : i32
    %15 = vector.broadcast %c2_i32 : i32 to vector<8x128xi32>
    %16 = arith.cmpi eq, %10, %15 : vector<8x128xi32>
    %17 = vector.shape_cast %6 : vector<1x128xf32> to vector<1x128xf32>
    %18 = vector.broadcast %17 : vector<1x128xf32> to vector<8x128xf32>
    %19 = vector.shape_cast %9 : vector<1x128xf32> to vector<1x128xf32>
    %20 = vector.broadcast %19 : vector<1x128xf32> to vector<8x128xf32>
    %21 = arith.select %16, %18, %20 : vector<8x128xi1>, vector<8x128xf32>
    %22 = vector.shape_cast %9 : vector<1x128xf32> to vector<1x128xf32>
    %23 = vector.broadcast %22 : vector<1x128xf32> to vector<8x128xf32>
    %24 = arith.select %14, %23, %21 : vector<8x128xi1>, vector<8x128xf32>
    %25 = vector.shape_cast %6 : vector<1x128xf32> to vector<1x128xf32>
    %26 = vector.broadcast %25 : vector<1x128xf32> to vector<8x128xf32>
    %27 = arith.select %12, %26, %24 : vector<8x128xi1>, vector<8x128xf32>
    %28 = vector.shape_cast %27 : vector<8x128xf32> to vector<1x8x128xf32>
    %c0_7 = arith.constant 0 : index
    %c0_8 = arith.constant 0 : index
    %c0_9 = arith.constant 0 : index
    %29 = vector.load %arg6[%c0_7, %c0_8, %c0_9] : memref<1x8x128xf32, #tpu.memory_space<vmem>>, vector<1x8x128xf32>
    tpu.vector_store %arg6[%c0_7, %c0_8, %c0_9], %28 {strides = array<i32>} : memref<1x8x128xf32, #tpu.memory_space<vmem>>, vector<1x8x128xf32>,
    return
  }
  func.func @transform_0(%arg0: i32) -> (i32, i32) {
    %c0_i32 = arith.constant 0 : i32
    %c0_i32_0 = arith.constant 0 : i32
    return %arg0, %c0_i32 : i32, i32
  }
  func.func @transform_1(%arg0: i32) -> (i32, i32) {
    %c0_i32 = arith.constant 0 : i32
    %c0_i32_0 = arith.constant 0 : i32
    %c0_i32_1 = arith.constant 0 : i32
    return %c0_i32, %c0_i32_0 : i32, i32
  }
  func.func @transform_2(%arg0: i32) -> (i32, i32) {
    %c0_i32 = arith.constant 0 : i32
    %c0_i32_0 = arith.constant 0 : i32
    %c0_i32_1 = arith.constant 0 : i32
    return %c0_i32, %c0_i32_0 : i32, i32
  }
  func.func @transform_3(%arg0: i32) -> (i32, i32) {
    %c0_i32 = arith.constant 0 : i32
    %c0_i32_0 = arith.constant 0 : i32
    %c0_i32_1 = arith.constant 0 : i32
    return %c0_i32, %c0_i32_0 : i32, i32
  }
  func.func @transform_4(%arg0: i32) -> (i32, i32) {
    %c0_i32 = arith.constant 0 : i32
    %c0_i32_0 = arith.constant 0 : i32
    return %arg0, %c0_i32 : i32, i32
  }
  func.func @transform_5(%arg0: i32) -> (i32, i32, i32) {
    %c0_i32 = arith.constant 0 : i32
    %c0_i32_0 = arith.constant 0 : i32
    %c0_i32_1 = arith.constant 0 : i32
    return %arg0, %c0_i32, %c0_i32_0 : i32, i32, i32
  }
}

module attributes {stable_mosaic.version = 11 : i64} {
  func.func @_feat_layer_kernel(%arg0: i32, %arg1: memref<16x128xbf16, #tpu.memory_space<vmem>>, %arg2: memref<1x128xf32, #tpu.memory_space<vmem>>, %arg3: memref<1x128xf32, #tpu.memory_space<vmem>>, %arg4: memref<128x128xbf16, #tpu.memory_space<vmem>>, %arg5: memref<16x128xbf16, #tpu.memory_space<vmem>>, %arg6: memref<1x8x128xf32, #tpu.memory_space<vmem>>) attributes {dimension_semantics = [#tpu.dimension_semantics<parallel>], iteration_bounds = array<i64: 2>, scalar_prefetch = 0 : i64, scratch_operands = 0 : i64, tpu.core_type = #tpu.core_type<tc>, window_params = [{transform_indices = @transform_0, window_bounds = array<i64: 16, 128>}, {pipeline_mode = #tpu.pipeline_mode<synchronous>, transform_indices = @transform_1, window_bounds = array<i64: 1, 128>}, {pipeline_mode = #tpu.pipeline_mode<synchronous>, transform_indices = @transform_2, window_bounds = array<i64: 1, 128>}, {pipeline_mode = #tpu.pipeline_mode<synchronous>, transform_indices = @transform_3, window_bounds = array<i64: 128, 128>}, {transform_indices = @transform_4, window_bounds = array<i64: 16, 128>}, {transform_indices = @transform_5, window_bounds = array<i64: 1, 8, 128>}]} {
    %c0 = arith.constant 0 : index
    %c0_0 = arith.constant 0 : index
    %0 = vector.load %arg1[%c0, %c0_0] : memref<16x128xbf16, #tpu.memory_space<vmem>>, vector<16x128xbf16>
    %1 = arith.extf %0 : vector<16x128xbf16> to vector<16x128xf32>
    %c0_1 = arith.constant 0 : index
    %c0_2 = arith.constant 0 : index
    %2 = vector.load %arg2[%c0_1, %c0_2] : memref<1x128xf32, #tpu.memory_space<vmem>>, vector<1x128xf32>
    %3 = vector.broadcast %2 : vector<1x128xf32> to vector<16x128xf32>
    %4 = arith.mulf %1, %3 : vector<16x128xf32>
    %c0_3 = arith.constant 0 : index
    %c0_4 = arith.constant 0 : index
    %5 = vector.load %arg3[%c0_3, %c0_4] : memref<1x128xf32, #tpu.memory_space<vmem>>, vector<1x128xf32>
    %6 = vector.broadcast %5 : vector<1x128xf32> to vector<16x128xf32>
    %7 = arith.addf %4, %6 : vector<16x128xf32>
    %cst = arith.constant 0.000000e+00 : f32
    %8 = vector.broadcast %cst : f32 to vector<16x128xf32>
    %9 = arith.maximumf %7, %8 : vector<16x128xf32>
    %10 = arith.truncf %9 : vector<16x128xf32> to vector<16x128xbf16>
    %c0_5 = arith.constant 0 : index
    %c0_6 = arith.constant 0 : index
    %11 = vector.load %arg4[%c0_5, %c0_6] : memref<128x128xbf16, #tpu.memory_space<vmem>>, vector<128x128xbf16>
    %cst_7 = arith.constant dense<0.000000e+00> : vector<16x128xf32>
    %12 = tpu.matmul %10, %11, %cst_7 {dimension_numbers = #tpu.dot_dimension_numbers<[1], [0], [0], [1], [0, 0, 1, 1], [], []>} : vector<16x128xbf16>, vector<128x128xbf16>, vector<16x128xf32> -> vector<16x128xf32>
    %13 = arith.truncf %12 : vector<16x128xf32> to vector<16x128xbf16>
    %c0_8 = arith.constant 0 : index
    %c0_9 = arith.constant 0 : index
    %14 = vector.load %arg5[%c0_8, %c0_9] : memref<16x128xbf16, #tpu.memory_space<vmem>>, vector<16x128xbf16>
    tpu.vector_store %arg5[%c0_8, %c0_9], %13 {strides = array<i32>} : memref<16x128xbf16, #tpu.memory_space<vmem>>, vector<16x128xbf16>,
    %cst_10 = arith.constant dense<0.000000e+00> : vector<128xf32>
    %15 = vector.multi_reduction <add>, %12, %cst_10 [0] : vector<16x128xf32> to vector<128xf32>
    %16 = vector.shape_cast %15 : vector<128xf32> to vector<1x128xf32>
    %17 = arith.mulf %12, %12 : vector<16x128xf32>
    %cst_11 = arith.constant dense<0.000000e+00> : vector<128xf32>
    %18 = vector.multi_reduction <add>, %17, %cst_11 [0] : vector<16x128xf32> to vector<128xf32>
    %19 = vector.shape_cast %18 : vector<128xf32> to vector<1x128xf32>
    %20 = tpu.iota {dimensions = array<i32: 0>} : vector<8x128xi32>
    %c0_i32 = arith.constant 0 : i32
    %21 = vector.broadcast %c0_i32 : i32 to vector<8x128xi32>
    %22 = arith.cmpi eq, %20, %21 : vector<8x128xi32>
    %c1_i32 = arith.constant 1 : i32
    %23 = vector.broadcast %c1_i32 : i32 to vector<8x128xi32>
    %24 = arith.cmpi eq, %20, %23 : vector<8x128xi32>
    %c2_i32 = arith.constant 2 : i32
    %25 = vector.broadcast %c2_i32 : i32 to vector<8x128xi32>
    %26 = arith.cmpi eq, %20, %25 : vector<8x128xi32>
    %27 = vector.shape_cast %16 : vector<1x128xf32> to vector<1x128xf32>
    %28 = vector.broadcast %27 : vector<1x128xf32> to vector<8x128xf32>
    %29 = vector.shape_cast %19 : vector<1x128xf32> to vector<1x128xf32>
    %30 = vector.broadcast %29 : vector<1x128xf32> to vector<8x128xf32>
    %31 = arith.select %26, %28, %30 : vector<8x128xi1>, vector<8x128xf32>
    %32 = vector.shape_cast %19 : vector<1x128xf32> to vector<1x128xf32>
    %33 = vector.broadcast %32 : vector<1x128xf32> to vector<8x128xf32>
    %34 = arith.select %24, %33, %31 : vector<8x128xi1>, vector<8x128xf32>
    %35 = vector.shape_cast %16 : vector<1x128xf32> to vector<1x128xf32>
    %36 = vector.broadcast %35 : vector<1x128xf32> to vector<8x128xf32>
    %37 = arith.select %22, %36, %34 : vector<8x128xi1>, vector<8x128xf32>
    %38 = vector.shape_cast %37 : vector<8x128xf32> to vector<1x8x128xf32>
    %c0_12 = arith.constant 0 : index
    %c0_13 = arith.constant 0 : index
    %c0_14 = arith.constant 0 : index
    %39 = vector.load %arg6[%c0_12, %c0_13, %c0_14] : memref<1x8x128xf32, #tpu.memory_space<vmem>>, vector<1x8x128xf32>
    tpu.vector_store %arg6[%c0_12, %c0_13, %c0_14], %38 {strides = array<i32>} : memref<1x8x128xf32, #tpu.memory_space<vmem>>, vector<1x8x128xf32>,
    return
  }
  func.func @transform_0(%arg0: i32) -> (i32, i32) {
    %c0_i32 = arith.constant 0 : i32
    %c0_i32_0 = arith.constant 0 : i32
    return %arg0, %c0_i32 : i32, i32
  }
  func.func @transform_1(%arg0: i32) -> (i32, i32) {
    %c0_i32 = arith.constant 0 : i32
    %c0_i32_0 = arith.constant 0 : i32
    %c0_i32_1 = arith.constant 0 : i32
    return %c0_i32, %c0_i32_0 : i32, i32
  }
  func.func @transform_2(%arg0: i32) -> (i32, i32) {
    %c0_i32 = arith.constant 0 : i32
    %c0_i32_0 = arith.constant 0 : i32
    %c0_i32_1 = arith.constant 0 : i32
    return %c0_i32, %c0_i32_0 : i32, i32
  }
  func.func @transform_3(%arg0: i32) -> (i32, i32) {
    %c0_i32 = arith.constant 0 : i32
    %c0_i32_0 = arith.constant 0 : i32
    %c0_i32_1 = arith.constant 0 : i32
    return %c0_i32, %c0_i32_0 : i32, i32
  }
  func.func @transform_4(%arg0: i32) -> (i32, i32) {
    %c0_i32 = arith.constant 0 : i32
    %c0_i32_0 = arith.constant 0 : i32
    return %arg0, %c0_i32 : i32, i32
  }
  func.func @transform_5(%arg0: i32) -> (i32, i32, i32) {
    %c0_i32 = arith.constant 0 : i32
    %c0_i32_0 = arith.constant 0 : i32
    %c0_i32_1 = arith.constant 0 : i32
    return %arg0, %c0_i32, %c0_i32_0 : i32, i32, i32
  }
}

module attributes {stable_mosaic.version = 11 : i64} {
  func.func @_feat_layer_kernel(%arg0: i32, %arg1: memref<16x128xbf16, #tpu.memory_space<vmem>>, %arg2: memref<1x128xf32, #tpu.memory_space<vmem>>, %arg3: memref<1x128xf32, #tpu.memory_space<vmem>>, %arg4: memref<128x1024xbf16, #tpu.memory_space<vmem>>, %arg5: memref<16x1024xbf16, #tpu.memory_space<vmem>>, %arg6: memref<1x8x1024xf32, #tpu.memory_space<vmem>>) attributes {dimension_semantics = [#tpu.dimension_semantics<parallel>], iteration_bounds = array<i64: 2>, scalar_prefetch = 0 : i64, scratch_operands = 0 : i64, tpu.core_type = #tpu.core_type<tc>, window_params = [{transform_indices = @transform_0, window_bounds = array<i64: 16, 128>}, {pipeline_mode = #tpu.pipeline_mode<synchronous>, transform_indices = @transform_1, window_bounds = array<i64: 1, 128>}, {pipeline_mode = #tpu.pipeline_mode<synchronous>, transform_indices = @transform_2, window_bounds = array<i64: 1, 128>}, {pipeline_mode = #tpu.pipeline_mode<synchronous>, transform_indices = @transform_3, window_bounds = array<i64: 128, 1024>}, {transform_indices = @transform_4, window_bounds = array<i64: 16, 1024>}, {transform_indices = @transform_5, window_bounds = array<i64: 1, 8, 1024>}]} {
    %c0 = arith.constant 0 : index
    %c0_0 = arith.constant 0 : index
    %0 = vector.load %arg1[%c0, %c0_0] : memref<16x128xbf16, #tpu.memory_space<vmem>>, vector<16x128xbf16>
    %1 = arith.extf %0 : vector<16x128xbf16> to vector<16x128xf32>
    %c0_1 = arith.constant 0 : index
    %c0_2 = arith.constant 0 : index
    %2 = vector.load %arg2[%c0_1, %c0_2] : memref<1x128xf32, #tpu.memory_space<vmem>>, vector<1x128xf32>
    %3 = vector.broadcast %2 : vector<1x128xf32> to vector<16x128xf32>
    %4 = arith.mulf %1, %3 : vector<16x128xf32>
    %c0_3 = arith.constant 0 : index
    %c0_4 = arith.constant 0 : index
    %5 = vector.load %arg3[%c0_3, %c0_4] : memref<1x128xf32, #tpu.memory_space<vmem>>, vector<1x128xf32>
    %6 = vector.broadcast %5 : vector<1x128xf32> to vector<16x128xf32>
    %7 = arith.addf %4, %6 : vector<16x128xf32>
    %cst = arith.constant 0.000000e+00 : f32
    %8 = vector.broadcast %cst : f32 to vector<16x128xf32>
    %9 = arith.maximumf %7, %8 : vector<16x128xf32>
    %10 = arith.truncf %9 : vector<16x128xf32> to vector<16x128xbf16>
    %c0_5 = arith.constant 0 : index
    %c0_6 = arith.constant 0 : index
    %11 = vector.load %arg4[%c0_5, %c0_6] : memref<128x1024xbf16, #tpu.memory_space<vmem>>, vector<128x1024xbf16>
    %cst_7 = arith.constant dense<0.000000e+00> : vector<16x1024xf32>
    %12 = tpu.matmul %10, %11, %cst_7 {dimension_numbers = #tpu.dot_dimension_numbers<[1], [0], [0], [1], [0, 0, 1, 1], [], []>} : vector<16x128xbf16>, vector<128x1024xbf16>, vector<16x1024xf32> -> vector<16x1024xf32>
    %13 = arith.truncf %12 : vector<16x1024xf32> to vector<16x1024xbf16>
    %c0_8 = arith.constant 0 : index
    %c0_9 = arith.constant 0 : index
    %14 = vector.load %arg5[%c0_8, %c0_9] : memref<16x1024xbf16, #tpu.memory_space<vmem>>, vector<16x1024xbf16>
    tpu.vector_store %arg5[%c0_8, %c0_9], %13 {strides = array<i32>} : memref<16x1024xbf16, #tpu.memory_space<vmem>>, vector<16x1024xbf16>,
    %cst_10 = arith.constant dense<0.000000e+00> : vector<1024xf32>
    %15 = vector.multi_reduction <add>, %12, %cst_10 [0] : vector<16x1024xf32> to vector<1024xf32>
    %16 = vector.shape_cast %15 : vector<1024xf32> to vector<1x1024xf32>
    %17 = arith.mulf %12, %12 : vector<16x1024xf32>
    %cst_11 = arith.constant dense<0.000000e+00> : vector<1024xf32>
    %18 = vector.multi_reduction <add>, %17, %cst_11 [0] : vector<16x1024xf32> to vector<1024xf32>
    %19 = vector.shape_cast %18 : vector<1024xf32> to vector<1x1024xf32>
    %20 = tpu.iota {dimensions = array<i32: 0>} : vector<8x1024xi32>
    %c0_i32 = arith.constant 0 : i32
    %21 = vector.broadcast %c0_i32 : i32 to vector<8x1024xi32>
    %22 = arith.cmpi eq, %20, %21 : vector<8x1024xi32>
    %c1_i32 = arith.constant 1 : i32
    %23 = vector.broadcast %c1_i32 : i32 to vector<8x1024xi32>
    %24 = arith.cmpi eq, %20, %23 : vector<8x1024xi32>
    %c2_i32 = arith.constant 2 : i32
    %25 = vector.broadcast %c2_i32 : i32 to vector<8x1024xi32>
    %26 = arith.cmpi eq, %20, %25 : vector<8x1024xi32>
    %27 = vector.shape_cast %16 : vector<1x1024xf32> to vector<1x1024xf32>
    %28 = vector.broadcast %27 : vector<1x1024xf32> to vector<8x1024xf32>
    %29 = vector.shape_cast %19 : vector<1x1024xf32> to vector<1x1024xf32>
    %30 = vector.broadcast %29 : vector<1x1024xf32> to vector<8x1024xf32>
    %31 = arith.select %26, %28, %30 : vector<8x1024xi1>, vector<8x1024xf32>
    %32 = vector.shape_cast %19 : vector<1x1024xf32> to vector<1x1024xf32>
    %33 = vector.broadcast %32 : vector<1x1024xf32> to vector<8x1024xf32>
    %34 = arith.select %24, %33, %31 : vector<8x1024xi1>, vector<8x1024xf32>
    %35 = vector.shape_cast %16 : vector<1x1024xf32> to vector<1x1024xf32>
    %36 = vector.broadcast %35 : vector<1x1024xf32> to vector<8x1024xf32>
    %37 = arith.select %22, %36, %34 : vector<8x1024xi1>, vector<8x1024xf32>
    %38 = vector.shape_cast %37 : vector<8x1024xf32> to vector<1x8x1024xf32>
    %c0_12 = arith.constant 0 : index
    %c0_13 = arith.constant 0 : index
    %c0_14 = arith.constant 0 : index
    %39 = vector.load %arg6[%c0_12, %c0_13, %c0_14] : memref<1x8x1024xf32, #tpu.memory_space<vmem>>, vector<1x8x1024xf32>
    tpu.vector_store %arg6[%c0_12, %c0_13, %c0_14], %38 {strides = array<i32>} : memref<1x8x1024xf32, #tpu.memory_space<vmem>>, vector<1x8x1024xf32>,
    return
  }
  func.func @transform_0(%arg0: i32) -> (i32, i32) {
    %c0_i32 = arith.constant 0 : i32
    %c0_i32_0 = arith.constant 0 : i32
    return %arg0, %c0_i32 : i32, i32
  }
  func.func @transform_1(%arg0: i32) -> (i32, i32) {
    %c0_i32 = arith.constant 0 : i32
    %c0_i32_0 = arith.constant 0 : i32
    %c0_i32_1 = arith.constant 0 : i32
    return %c0_i32, %c0_i32_0 : i32, i32
  }
  func.func @transform_2(%arg0: i32) -> (i32, i32) {
    %c0_i32 = arith.constant 0 : i32
    %c0_i32_0 = arith.constant 0 : i32
    %c0_i32_1 = arith.constant 0 : i32
    return %c0_i32, %c0_i32_0 : i32, i32
  }
  func.func @transform_3(%arg0: i32) -> (i32, i32) {
    %c0_i32 = arith.constant 0 : i32
    %c0_i32_0 = arith.constant 0 : i32
    %c0_i32_1 = arith.constant 0 : i32
    return %c0_i32, %c0_i32_0 : i32, i32
  }
  func.func @transform_4(%arg0: i32) -> (i32, i32) {
    %c0_i32 = arith.constant 0 : i32
    %c0_i32_0 = arith.constant 0 : i32
    return %arg0, %c0_i32 : i32, i32
  }
  func.func @transform_5(%arg0: i32) -> (i32, i32, i32) {
    %c0_i32 = arith.constant 0 : i32
    %c0_i32_0 = arith.constant 0 : i32
    %c0_i32_1 = arith.constant 0 : i32
    return %arg0, %c0_i32, %c0_i32_0 : i32, i32, i32
  }
}

module attributes {stable_mosaic.version = 11 : i64} {
  func.func @_head_kernel(%arg0: i32, %arg1: i32, %arg2: memref<16x1024xbf16, #tpu.memory_space<vmem>>, %arg3: memref<1x1024xf32, #tpu.memory_space<vmem>>, %arg4: memref<1x1024xf32, #tpu.memory_space<vmem>>, %arg5: memref<1x1x1024xf32, #tpu.memory_space<vmem>>, %arg6: memref<1024x1024xbf16, #tpu.memory_space<vmem>>, %arg7: memref<1024x512xbf16, #tpu.memory_space<vmem>>, %arg8: memref<1x512xf32, #tpu.memory_space<vmem>>, %arg9: memref<512x256xbf16, #tpu.memory_space<vmem>>, %arg10: memref<1x256xf32, #tpu.memory_space<vmem>>, %arg11: memref<256x128xbf16, #tpu.memory_space<vmem>>, %arg12: memref<1x128xf32, #tpu.memory_space<vmem>>, %arg13: memref<128x128xbf16, #tpu.memory_space<vmem>>, %arg14: memref<1x128xf32, #tpu.memory_space<vmem>>, %arg15: memref<16x8xf32, #tpu.memory_space<vmem>>) attributes {dimension_semantics = [#tpu.dimension_semantics<parallel>, #tpu.dimension_semantics<parallel>], iteration_bounds = array<i64: 2, 1>, scalar_prefetch = 0 : i64, scratch_operands = 0 : i64, tpu.core_type = #tpu.core_type<tc>, window_params = [{transform_indices = @transform_0, window_bounds = array<i64: 16, 1024>}, {pipeline_mode = #tpu.pipeline_mode<synchronous>, transform_indices = @transform_1, window_bounds = array<i64: 1, 1024>}, {pipeline_mode = #tpu.pipeline_mode<synchronous>, transform_indices = @transform_2, window_bounds = array<i64: 1, 1024>}, {transform_indices = @transform_3, window_bounds = array<i64: 1, 1, 1024>}, {pipeline_mode = #tpu.pipeline_mode<synchronous>, transform_indices = @transform_4, window_bounds = array<i64: 1024, 1024>}, {pipeline_mode = #tpu.pipeline_mode<synchronous>, transform_indices = @transform_5, window_bounds = array<i64: 1024, 512>}, {pipeline_mode = #tpu.pipeline_mode<synchronous>, transform_indices = @transform_6, window_bounds = array<i64: 1, 512>}, {pipeline_mode = #tpu.pipeline_mode<synchronous>, transform_indices = @transform_7, window_bounds = array<i64: 512, 256>}, {pipeline_mode = #tpu.pipeline_mode<synchronous>, transform_indices = @transform_8, window_bounds = array<i64: 1, 256>}, {pipeline_mode = #tpu.pipeline_mode<synchronous>, transform_indices = @transform_9, window_bounds = array<i64: 256, 128>}, {pipeline_mode = #tpu.pipeline_mode<synchronous>, transform_indices = @transform_10, window_bounds = array<i64: 1, 128>}, {pipeline_mode = #tpu.pipeline_mode<synchronous>, transform_indices = @transform_11, window_bounds = array<i64: 128, 128>}, {pipeline_mode = #tpu.pipeline_mode<synchronous>, transform_indices = @transform_12, window_bounds = array<i64: 1, 128>}, {transform_indices = @transform_13, window_bounds = array<i64: 16, 8>}]} {
    %c0 = arith.constant 0 : index
    %c0_0 = arith.constant 0 : index
    %0 = vector.load %arg2[%c0, %c0_0] : memref<16x1024xbf16, #tpu.memory_space<vmem>>, vector<16x1024xbf16>
    %1 = arith.extf %0 : vector<16x1024xbf16> to vector<16x1024xf32>
    %c0_1 = arith.constant 0 : index
    %c0_2 = arith.constant 0 : index
    %2 = vector.load %arg3[%c0_1, %c0_2] : memref<1x1024xf32, #tpu.memory_space<vmem>>, vector<1x1024xf32>
    %3 = vector.broadcast %2 : vector<1x1024xf32> to vector<16x1024xf32>
    %4 = arith.mulf %1, %3 : vector<16x1024xf32>
    %c0_3 = arith.constant 0 : index
    %c0_4 = arith.constant 0 : index
    %5 = vector.load %arg4[%c0_3, %c0_4] : memref<1x1024xf32, #tpu.memory_space<vmem>>, vector<1x1024xf32>
    %6 = vector.broadcast %5 : vector<1x1024xf32> to vector<16x1024xf32>
    %7 = arith.addf %4, %6 : vector<16x1024xf32>
    %cst = arith.constant 0.000000e+00 : f32
    %8 = vector.broadcast %cst : f32 to vector<16x1024xf32>
    %9 = arith.maximumf %7, %8 : vector<16x1024xf32>
    %10 = arith.truncf %9 : vector<16x1024xf32> to vector<16x1024xbf16>
    %c0_5 = arith.constant 0 : index
    %c0_6 = arith.constant 0 : index
    %11 = vector.load %arg6[%c0_5, %c0_6] : memref<1024x1024xbf16, #tpu.memory_space<vmem>>, vector<1024x1024xbf16>
    %cst_7 = arith.constant dense<0.000000e+00> : vector<16x1024xf32>
    %12 = tpu.matmul %10, %11, %cst_7 {dimension_numbers = #tpu.dot_dimension_numbers<[1], [0], [0], [1], [0, 0, 1, 1], [], []>} : vector<16x1024xbf16>, vector<1024x1024xbf16>, vector<16x1024xf32> -> vector<16x1024xf32>
    %c0_8 = arith.constant 0 : index
    %c0_9 = arith.constant 0 : index
    %c0_10 = arith.constant 0 : index
    %13 = vector.load %arg5[%c0_8, %c0_9, %c0_10] : memref<1x1x1024xf32, #tpu.memory_space<vmem>>, vector<1x1x1024xf32>
    %14 = vector.shape_cast %13 : vector<1x1x1024xf32> to vector<1x1024xf32>
    %15 = vector.broadcast %14 : vector<1x1024xf32> to vector<16x1024xf32>
    %16 = arith.addf %12, %15 : vector<16x1024xf32>
    %cst_11 = arith.constant 0.000000e+00 : f32
    %17 = vector.broadcast %cst_11 : f32 to vector<16x1024xf32>
    %18 = arith.maximumf %16, %17 : vector<16x1024xf32>
    %19 = arith.truncf %18 : vector<16x1024xf32> to vector<16x1024xbf16>
    %c0_12 = arith.constant 0 : index
    %c0_13 = arith.constant 0 : index
    %20 = vector.load %arg7[%c0_12, %c0_13] : memref<1024x512xbf16, #tpu.memory_space<vmem>>, vector<1024x512xbf16>
    %cst_14 = arith.constant dense<0.000000e+00> : vector<16x512xf32>
    %21 = tpu.matmul %19, %20, %cst_14 {dimension_numbers = #tpu.dot_dimension_numbers<[1], [0], [0], [1], [0, 0, 1, 1], [], []>} : vector<16x1024xbf16>, vector<1024x512xbf16>, vector<16x512xf32> -> vector<16x512xf32>
    %c0_15 = arith.constant 0 : index
    %c0_16 = arith.constant 0 : index
    %22 = vector.load %arg8[%c0_15, %c0_16] : memref<1x512xf32, #tpu.memory_space<vmem>>, vector<1x512xf32>
    %23 = vector.broadcast %22 : vector<1x512xf32> to vector<16x512xf32>
    %24 = arith.addf %21, %23 : vector<16x512xf32>
    %cst_17 = arith.constant 0.000000e+00 : f32
    %25 = vector.broadcast %cst_17 : f32 to vector<16x512xf32>
    %26 = arith.maximumf %24, %25 : vector<16x512xf32>
    %27 = arith.truncf %26 : vector<16x512xf32> to vector<16x512xbf16>
    %c0_18 = arith.constant 0 : index
    %c0_19 = arith.constant 0 : index
    %28 = vector.load %arg9[%c0_18, %c0_19] : memref<512x256xbf16, #tpu.memory_space<vmem>>, vector<512x256xbf16>
    %cst_20 = arith.constant dense<0.000000e+00> : vector<16x256xf32>
    %29 = tpu.matmul %27, %28, %cst_20 {dimension_numbers = #tpu.dot_dimension_numbers<[1], [0], [0], [1], [0, 0, 1, 1], [], []>} : vector<16x512xbf16>, vector<512x256xbf16>, vector<16x256xf32> -> vector<16x256xf32>
    %c0_21 = arith.constant 0 : index
    %c0_22 = arith.constant 0 : index
    %30 = vector.load %arg10[%c0_21, %c0_22] : memref<1x256xf32, #tpu.memory_space<vmem>>, vector<1x256xf32>
    %31 = vector.broadcast %30 : vector<1x256xf32> to vector<16x256xf32>
    %32 = arith.addf %29, %31 : vector<16x256xf32>
    %cst_23 = arith.constant 0.000000e+00 : f32
    %33 = vector.broadcast %cst_23 : f32 to vector<16x256xf32>
    %34 = arith.maximumf %32, %33 : vector<16x256xf32>
    %35 = arith.truncf %34 : vector<16x256xf32> to vector<16x256xbf16>
    %c0_24 = arith.constant 0 : index
    %c0_25 = arith.constant 0 : index
    %36 = vector.load %arg11[%c0_24, %c0_25] : memref<256x128xbf16, #tpu.memory_space<vmem>>, vector<256x128xbf16>
    %cst_26 = arith.constant dense<0.000000e+00> : vector<16x128xf32>
    %37 = tpu.matmul %35, %36, %cst_26 {dimension_numbers = #tpu.dot_dimension_numbers<[1], [0], [0], [1], [0, 0, 1, 1], [], []>} : vector<16x256xbf16>, vector<256x128xbf16>, vector<16x128xf32> -> vector<16x128xf32>
    %c0_27 = arith.constant 0 : index
    %c0_28 = arith.constant 0 : index
    %38 = vector.load %arg12[%c0_27, %c0_28] : memref<1x128xf32, #tpu.memory_space<vmem>>, vector<1x128xf32>
    %39 = vector.broadcast %38 : vector<1x128xf32> to vector<16x128xf32>
    %40 = arith.addf %37, %39 : vector<16x128xf32>
    %cst_29 = arith.constant 0.000000e+00 : f32
    %41 = vector.broadcast %cst_29 : f32 to vector<16x128xf32>
    %42 = arith.maximumf %40, %41 : vector<16x128xf32>
    %43 = arith.truncf %42 : vector<16x128xf32> to vector<16x128xbf16>
    %c0_30 = arith.constant 0 : index
    %c0_31 = arith.constant 0 : index
    %44 = vector.load %arg13[%c0_30, %c0_31] : memref<128x128xbf16, #tpu.memory_space<vmem>>, vector<128x128xbf16>
    %cst_32 = arith.constant dense<0.000000e+00> : vector<16x128xf32>
    %45 = tpu.matmul %43, %44, %cst_32 {dimension_numbers = #tpu.dot_dimension_numbers<[1], [0], [0], [1], [0, 0, 1, 1], [], []>} : vector<16x128xbf16>, vector<128x128xbf16>, vector<16x128xf32> -> vector<16x128xf32>
    %c0_33 = arith.constant 0 : index
    %c0_34 = arith.constant 0 : index
    %46 = vector.load %arg14[%c0_33, %c0_34] : memref<1x128xf32, #tpu.memory_space<vmem>>, vector<1x128xf32>
    %47 = vector.broadcast %46 : vector<1x128xf32> to vector<16x128xf32>
    %48 = arith.addf %45, %47 : vector<16x128xf32>
    %49 = vector.extract_strided_slice %48 {offsets = [0, 0], sizes = [16, 8], strides = [1, 1]} : vector<16x128xf32> to vector<16x8xf32>
    %cst_35 = arith.constant 0.000000e+00 : f32
    %50 = vector.broadcast %cst_35 : f32 to vector<16x8xf32>
    %51 = arith.subf %50, %49 : vector<16x8xf32>
    %52 = math.exp %51 : vector<16x8xf32>
    %cst_36 = arith.constant 1.000000e+00 : f32
    %53 = vector.broadcast %cst_36 : f32 to vector<16x8xf32>
    %54 = arith.addf %53, %52 : vector<16x8xf32>
    %55 = tpu.reciprocal %54 {approx = true} : vector<16x8xf32> -> vector<16x8xf32>
    %c0_37 = arith.constant 0 : index
    %c0_38 = arith.constant 0 : index
    %56 = vector.load %arg15[%c0_37, %c0_38] : memref<16x8xf32, #tpu.memory_space<vmem>>, vector<16x8xf32>
    tpu.vector_store %arg15[%c0_37, %c0_38], %55 {strides = array<i32>} : memref<16x8xf32, #tpu.memory_space<vmem>>, vector<16x8xf32>,
    return
  }
  func.func @transform_0(%arg0: i32, %arg1: i32) -> (i32, i32) {
    %c1_i32 = arith.constant 1 : i32
    %0 = arith.muli %arg0, %c1_i32 : i32
    %1 = arith.addi %0, %arg1 : i32
    %c0_i32 = arith.constant 0 : i32
    %c0_i32_0 = arith.constant 0 : i32
    return %1, %c0_i32 : i32, i32
  }
  func.func @transform_1(%arg0: i32, %arg1: i32) -> (i32, i32) {
    %c0_i32 = arith.constant 0 : i32
    %c0_i32_0 = arith.constant 0 : i32
    %c0_i32_1 = arith.constant 0 : i32
    return %c0_i32, %c0_i32_0 : i32, i32
  }
  func.func @transform_2(%arg0: i32, %arg1: i32) -> (i32, i32) {
    %c0_i32 = arith.constant 0 : i32
    %c0_i32_0 = arith.constant 0 : i32
    %c0_i32_1 = arith.constant 0 : i32
    return %c0_i32, %c0_i32_0 : i32, i32
  }
  func.func @transform_3(%arg0: i32, %arg1: i32) -> (i32, i32, i32) {
    %c0_i32 = arith.constant 0 : i32
    %c0_i32_0 = arith.constant 0 : i32
    %c0_i32_1 = arith.constant 0 : i32
    return %arg0, %c0_i32, %c0_i32_0 : i32, i32, i32
  }
  func.func @transform_4(%arg0: i32, %arg1: i32) -> (i32, i32) {
    %c0_i32 = arith.constant 0 : i32
    %c0_i32_0 = arith.constant 0 : i32
    %c0_i32_1 = arith.constant 0 : i32
    return %c0_i32, %c0_i32_0 : i32, i32
  }
  func.func @transform_5(%arg0: i32, %arg1: i32) -> (i32, i32) {
    %c0_i32 = arith.constant 0 : i32
    %c0_i32_0 = arith.constant 0 : i32
    %c0_i32_1 = arith.constant 0 : i32
    return %c0_i32, %c0_i32_0 : i32, i32
  }
  func.func @transform_6(%arg0: i32, %arg1: i32) -> (i32, i32) {
    %c0_i32 = arith.constant 0 : i32
    %c0_i32_0 = arith.constant 0 : i32
    %c0_i32_1 = arith.constant 0 : i32
    return %c0_i32, %c0_i32_0 : i32, i32
  }
  func.func @transform_7(%arg0: i32, %arg1: i32) -> (i32, i32) {
    %c0_i32 = arith.constant 0 : i32
    %c0_i32_0 = arith.constant 0 : i32
    %c0_i32_1 = arith.constant 0 : i32
    return %c0_i32, %c0_i32_0 : i32, i32
  }
  func.func @transform_8(%arg0: i32, %arg1: i32) -> (i32, i32) {
    %c0_i32 = arith.constant 0 : i32
    %c0_i32_0 = arith.constant 0 : i32
    %c0_i32_1 = arith.constant 0 : i32
    return %c0_i32, %c0_i32_0 : i32, i32
  }
  func.func @transform_9(%arg0: i32, %arg1: i32) -> (i32, i32) {
    %c0_i32 = arith.constant 0 : i32
    %c0_i32_0 = arith.constant 0 : i32
    %c0_i32_1 = arith.constant 0 : i32
    return %c0_i32, %c0_i32_0 : i32, i32
  }
  func.func @transform_10(%arg0: i32, %arg1: i32) -> (i32, i32) {
    %c0_i32 = arith.constant 0 : i32
    %c0_i32_0 = arith.constant 0 : i32
    %c0_i32_1 = arith.constant 0 : i32
    return %c0_i32, %c0_i32_0 : i32, i32
  }
  func.func @transform_11(%arg0: i32, %arg1: i32) -> (i32, i32) {
    %c0_i32 = arith.constant 0 : i32
    %c0_i32_0 = arith.constant 0 : i32
    %c0_i32_1 = arith.constant 0 : i32
    return %c0_i32, %c0_i32_0 : i32, i32
  }
  func.func @transform_12(%arg0: i32, %arg1: i32) -> (i32, i32) {
    %c0_i32 = arith.constant 0 : i32
    %c0_i32_0 = arith.constant 0 : i32
    %c0_i32_1 = arith.constant 0 : i32
    return %c0_i32, %c0_i32_0 : i32, i32
  }
  func.func @transform_13(%arg0: i32, %arg1: i32) -> (i32, i32) {
    %c1_i32 = arith.constant 1 : i32
    %0 = arith.muli %arg0, %c1_i32 : i32
    %1 = arith.addi %0, %arg1 : i32
    %c0_i32 = arith.constant 0 : i32
    %c0_i32_0 = arith.constant 0 : i32
    return %1, %c0_i32 : i32, i32
  }
}

</mosaic_0001>

<llo_original>
// kernel: masknet_forward.11
$region0: #{masknet_forward.11}
  #allocation0 [shape = 'u32[]', space=smem, size = 0x4, offset = 0x4, fixed_abs, tag = 'smem constant byte address 0x4 - core index']
  #allocation1 [shape = 'u32[144,128]{1,0:T(1,128)}', space=vmem, size = 0x12000, scoped, tag = 'internal scratch']
  %s0 = inlined_call_operand.vmem [shape: bf16[32,8], index: 0, kind: input, shape index: {}]
  %s1 = inlined_call_operand.vmem [shape: f32[1,8], index: 1, kind: input, shape index: {}]
  %s2 = inlined_call_operand.vmem [shape: f32[1,8], index: 2, kind: input, shape index: {}]
  %s3 = inlined_call_operand.hbm [shape: bf16[8,128], index: 3, kind: input, shape index: {}]
  %s4 = inlined_call_operand.vmem [shape: bf16[32,128], index: 4, kind: output, shape index: {0}]
  %s5 = inlined_call_operand.vmem [shape: f32[2,8,128], index: 5, kind: output, shape index: {1}]
  %6 = xla_tuple %s4, %s5
  %s7 = sld [smem:[#allocation0]]
  $region61: #{masknet_forward.11} parent=0
    _
  %s9 = ssub.s32 1, %s7
  %s10 = scalar_select 0, %s9, %s7
  $region1: #{masknet_forward.11} parent=0
    #allocation2 [shape = 'u8[2048]{0}', space=vmem, size = 0x800, scoped, tag = 'input window, operand 3, single buffered']
    #allocation3 [shape = 's32[2]{0}', space=sflag, size = 0x8, scoped, tag = 'scoped memory for masknet_forward.11']
    %11 = vsyncpa [#allocation3], 0
    loop: start=0, step=1, limit=4
    $region2: #{masknet_forward.11} parent=1 // loop_pre_header
      _
    $region3: #{masknet_forward.11} parent=1 // loop_header
      %s13 = sphi 0, %s17
      %p14 = scmp.ge.s32.totalorder %s13, 4
      %s23 = sphi 0, %s25
      %s26 = sphi 0, %s23
      %s27 = sphi 0, %s26
      %s43 = sphi 0, %s27
      %s47 = sphi 0, %s47
      %s49 = sphi 0, %s47
      %s50 = sphi 0, %s49
      %s64 = sphi 0, %s50
      %s68 = sphi 0, %s68
      %s70 = sphi 0, %s68
      %s71 = sphi 0, %s70
      %s85 = sphi 0, %s71
      %s89 = sphi 0, %s89
      %s91 = sphi 0, %s89
      %s92 = sphi 0, %s91
      %s106 = sphi 0, %s92
      %s112 = sphi 0, %s114
      %s115 = sphi 0, %s112
      %s116 = sphi 0, %s115
      %s132 = sphi 0, %s116
      %s138 = sphi 0, %s140
      %s141 = sphi 0, %s138
      %s142 = sphi 0, %s141
      %s158 = sphi 0, %s142
    $region4: #{masknet_forward.11} parent=1 // loop_header_branch
      %16 = sbr.rel (%p14) target = $region8
    $region5: #{masknet_forward.11} parent=1 // loop_body
      %s18 = ssub.s32 %s13, 1
      %s19 = ssub.s32 %s13, 2
      %s20 = sadd.s32 %s13, 1
      %s21 = ssub.s32 %s13, %s20
      %p22 = scmp.eq.s32.totalorder %s21, 0
      %s24 = sadd.s32 %s23, 1
      %s25 = scalar_select %p22, %s23, %s24
      %p28 = pneg %p22
      %p29 = scmp.eq.s32.totalorder %s13, 1
      %p30 = por %p28, %p29
      %p31 = scmp.ne.s32.totalorder %s23, %s26
      %p32 = scmp.eq.s32.totalorder %s13, 0
      %p33 = por %p31, %p32
      %p34 = scmp.ne.s32.totalorder %s23, %s26
      %p35 = scmp.eq.s32.totalorder %s18, 1
      %p36 = por %p34, %p35
      %p37 = scmp.ne.s32.totalorder %s26, %s27
      %p38 = scmp.eq.s32.totalorder %s18, 0
      %p39 = por %p37, %p38
      %p40 = scmp.ne.s32.totalorder %s26, %s27
      %p41 = scmp.eq.s32.totalorder %s19, 1
      %p42 = por %p40, %p41
      %p44 = scmp.ne.s32.totalorder %s27, %s43
      %p45 = scmp.eq.s32.totalorder %s19, 0
      %p46 = por %p44, %p45
      %s48 = sadd.s32 %s47, 1
      %p51 = scmp.eq.s32.totalorder %s13, 1
      %p52 = scmp.ne.s32.totalorder %s47, %s49
      %p53 = scmp.eq.s32.totalorder %s13, 0
      %p54 = por %p52, %p53
      %p55 = scmp.ne.s32.totalorder %s47, %s49
      %p56 = scmp.eq.s32.totalorder %s18, 1
      %p57 = por %p55, %p56
      %p58 = scmp.ne.s32.totalorder %s49, %s50
      %p59 = scmp.eq.s32.totalorder %s18, 0
      %p60 = por %p58, %p59
      %p61 = scmp.ne.s32.totalorder %s49, %s50
      %p62 = scmp.eq.s32.totalorder %s19, 1
      %p63 = por %p61, %p62
      %p65 = scmp.ne.s32.totalorder %s50, %s64
      %p66 = scmp.eq.s32.totalorder %s19, 0
      %p67 = por %p65, %p66
      %s69 = sadd.s32 %s68, 1
      %p72 = scmp.eq.s32.totalorder %s13, 1
      %p73 = scmp.ne.s32.totalorder %s68, %s70
      %p74 = scmp.eq.s32.totalorder %s13, 0
      %p75 = por %p73, %p74
      %p76 = scmp.ne.s32.totalorder %s68, %s70
      %p77 = scmp.eq.s32.totalorder %s18, 1
      %p78 = por %p76, %p77
      %p79 = scmp.ne.s32.totalorder %s70, %s71
      %p80 = scmp.eq.s32.totalorder %s18, 0
      %p81 = por %p79, %p80
      %p82 = scmp.ne.s32.totalorder %s70, %s71
      %p83 = scmp.eq.s32.totalorder %s19, 1
      %p84 = por %p82, %p83
      %p86 = scmp.ne.s32.totalorder %s71, %s85
      %p87 = scmp.eq.s32.totalorder %s19, 0
      %p88 = por %p86, %p87
      %s90 = sadd.s32 %s89, 1
      %p93 = scmp.eq.s32.totalorder %s13, 1
      %p94 = scmp.ne.s32.totalorder %s89, %s91
      %p95 = scmp.eq.s32.totalorder %s13, 0
      %p96 = por %p94, %p95
      %p97 = scmp.ne.s32.totalorder %s89, %s91
      %p98 = scmp.eq.s32.totalorder %s18, 1
      %p99 = por %p97, %p98
      %p100 = scmp.ne.s32.totalorder %s91, %s92
      %p101 = scmp.eq.s32.totalorder %s18, 0
      %p102 = por %p100, %p101
      %p103 = scmp.ne.s32.totalorder %s91, %s92
      %p104 = scmp.eq.s32.totalorder %s19, 1
      %p105 = por %p103, %p104
      %p107 = scmp.ne.s32.totalorder %s92, %s106
      %p108 = scmp.eq.s32.totalorder %s19, 0
      %p109 = por %p107, %p108
      %s110 = ssub.s32 %s13, %s20
      %p111 = scmp.eq.s32.totalorder %s110, 0
      %s113 = sadd.s32 %s112, 1
      %s114 = scalar_select %p111, %s112, %s113
      %p117 = pneg %p111
      %p118 = scmp.eq.s32.totalorder %s13, 1
      %p119 = por %p117, %p118
      %p120 = scmp.ne.s32.totalorder %s112, %s115
      %p121 = scmp.eq.s32.totalorder %s13, 0
      %p122 = por %p120, %p121
      %p123 = scmp.ne.s32.totalorder %s112, %s115
      %p124 = scmp.eq.s32.totalorder %s18, 1
      %p125 = por %p123, %p124
      %p126 = scmp.ne.s32.totalorder %s115, %s116
      %p127 = scmp.eq.s32.totalorder %s18, 0
      %p128 = por %p126, %p127
      %p129 = scmp.ne.s32.totalorder %s115, %s116
      %p130 = scmp.eq.s32.totalorder %s19, 1
      %p131 = por %p129, %p130
      %p133 = scmp.ne.s32.totalorder %s116, %s132
      %p134 = scmp.eq.s32.totalorder %s19, 0
      %p135 = por %p133, %p134
      %s136 = ssub.s32 %s13, %s20
      %p137 = scmp.eq.s32.totalorder %s136, 0
      %s139 = sadd.s32 %s138, 1
      %s140 = scalar_select %p137, %s138, %s139
      %p143 = pneg %p137
      %p144 = scmp.eq.s32.totalorder %s13, 1
      %p145 = por %p143, %p144
      %p146 = scmp.ne.s32.totalorder %s138, %s141
      %p147 = scmp.eq.s32.totalorder %s13, 0
      %p148 = por %p146, %p147
      %p149 = scmp.ne.s32.totalorder %s138, %s141
      %p150 = scmp.eq.s32.totalorder %s18, 1
      %p151 = por %p149, %p150
      %p152 = scmp.ne.s32.totalorder %s141, %s142
      %p153 = scmp.eq.s32.totalorder %s18, 0
      %p154 = por %p152, %p153
      %p155 = scmp.ne.s32.totalorder %s141, %s142
      %p156 = scmp.eq.s32.totalorder %s19, 1
      %p157 = por %p155, %p156
      %p159 = scmp.ne.s32.totalorder %s142, %s158
      %p160 = scmp.eq.s32.totalorder %s19, 0
      %p161 = por %p159, %p160
      %p162 = scmp.le.s32.totalorder 1, %s13
      %p163 = scmp.lt.s32.totalorder %s13, 3
      %p164 = pnand %p162, %p163
      %p165 = pneg %p164
      // Predicated region
      $region9: #{masknet_forward.11} parent=5 // pred_check
        _
      $region10: #{masknet_forward.11} parent=5 // pred_check_branch
        %167 = sbr.rel (%p164) target = $region12
      $region11: #{masknet_forward.11} parent=5 // pred_region
        %s168 = ssub.s32 %s13, 1
        // Predicated region
        $region13: #{masknet_forward.11} parent=11 // pred_check
          %p169 = pneg %p60
        $region14: #{masknet_forward.11} parent=11 // pred_check_branch
          %171 = sbr.rel (%p169) target = $region16
        $region15: #{masknet_forward.11} parent=11 // pred_region
          _
        $region16: #{masknet_forward.11} parent=11 // pred_fallthru
          _
        // Predicated region
        $region17: #{masknet_forward.11} parent=11 // pred_check
          %p172 = pneg %p81
        $region18: #{masknet_forward.11} parent=11 // pred_check_branch
          %174 = sbr.rel (%p172) target = $region20
        $region19: #{masknet_forward.11} parent=11 // pred_region
          _
        $region20: #{masknet_forward.11} parent=11 // pred_fallthru
          _
        // Predicated region
        $region21: #{masknet_forward.11} parent=11 // pred_check
          %p175 = pneg %p102
        $region22: #{masknet_forward.11} parent=11 // pred_check_branch
          %177 = sbr.rel (%p175) target = $region24
        $region23: #{masknet_forward.11} parent=11 // pred_region
          %s179 = ssub.s32 64, 64
          %180 = vsyncadd [#allocation3], %s179
          %s182 = sshll.u32 [#allocation2], 4
          %s183 = int_to_ptr.vmem [resolvable:$true] %s182
          %185 = dma.hbm_to_vmem [thread:$0]  %s3, 64, %s183, [#allocation3]
        $region24: #{masknet_forward.11} parent=11 // pred_fallthru
          _
      $region12: #{masknet_forward.11} parent=5 // pred_fallthru
        _
      %p186 = scmp.lt.s32.totalorder %s13, 2
      // Predicated region
      $region25: #{masknet_forward.11} parent=5 // pred_check
        %p187 = pneg %p186
      $region26: #{masknet_forward.11} parent=5 // pred_check_branch
        %189 = sbr.rel (%p187) target = $region28
      $region27: #{masknet_forward.11} parent=5 // pred_region
        // Predicated region
        $region29: #{masknet_forward.11} parent=27 // pred_check
          %p190 = pneg %p33
        $region30: #{masknet_forward.11} parent=27 // pred_check_branch
          %192 = sbr.rel (%p190) target = $region32
        $region31: #{masknet_forward.11} parent=27 // pred_region
          %s193 = smul.u32 2, %s13
          %p194 = scmp.lt.s32.totalorder %s193, 3
          %s195 = scalar_select %p194, %s193, 3
          %s196 = smul.addr %s195, 4
          %s197 = scalar_lea.vmem %s0, %s196
          %s198 = smul.u32 2, %s13
        $region32: #{masknet_forward.11} parent=27 // pred_fallthru
          _
      $region28: #{masknet_forward.11} parent=5 // pred_fallthru
        _
      %p199 = scmp.le.s32.totalorder 1, %s13
      %p200 = scmp.lt.s32.totalorder %s13, 3
      %p201 = pnand %p199, %p200
      %p202 = pneg %p201
      // Predicated region
      $region33: #{masknet_forward.11} parent=5 // pred_check
        _
      $region34: #{masknet_forward.11} parent=5 // pred_check_branch
        %204 = sbr.rel (%p201) target = $region36
      $region35: #{masknet_forward.11} parent=5 // pred_region
        %s205 = ssub.s32 %s13, 1
        // Predicated region
        $region37: #{masknet_forward.11} parent=35 // pred_check
          %p206 = pneg %p102
        $region38: #{masknet_forward.11} parent=35 // pred_check_branch
          %208 = sbr.rel (%p206) target = $region40
        $region39: #{masknet_forward.11} parent=35 // pred_region
          %209 = dma.done [#allocation3], 64
        $region40: #{masknet_forward.11} parent=35 // pred_fallthru
          _
        %s210 = smul.u32 2, %s18
        %p211 = scmp.lt.s32.totalorder %s210, 3
        %s212 = scalar_select %p211, %s210, 3
        %s213 = smul.addr %s212, 4
        %s214 = scalar_lea.vmem %s0, %s213
        %p215 = pneg %p39
        %p216 = pneg %p36
        %p217 = pneg %p60
        %p218 = pneg %p57
        %p219 = pneg %p81
        %p220 = pneg %p78
        %p221 = pneg %p102
        %p222 = pneg %p99
        %p223 = pneg %p128
        %p224 = pneg %p125
        %s225 = smul.u32 2, %s18
        %p226 = scmp.lt.s32.totalorder %s225, 3
        %s227 = scalar_select %p226, %s225, 3
        %s228 = smul.addr %s227, 4
        %s229 = scalar_lea.vmem %s4, %s228
        %p230 = pneg %p154
        %p231 = pneg %p151
        %p232 = scmp.lt.s32.totalorder %s18, 1
        %s233 = scalar_select %p232, %s18, 1
        %s234 = smul.addr %s233, 8
        %s235 = scalar_lea.vmem %s5, %s234
        %s236 = smul.u32 2, %s18
        %p237 = scmp.lt.s32.totalorder %s236, 3
        %s238 = scalar_select %p237, %s236, 3
        %s239 = smul.addr %s238, 4
        %s240 = scalar_lea.vmem %s0, %s239
        %s241 = smul.u32 2, %s18
        %s242 = smul.u32 2, %s18
        %p243 = scmp.lt.s32.totalorder %s242, 3
        %s244 = scalar_select %p243, %s242, 3
        %s245 = smul.addr %s244, 4
        %s246 = scalar_lea.vmem %s4, %s245
        %s247 = smul.u32 2, %s18
        %p248 = scmp.lt.s32.totalorder %s18, 1
        %s249 = scalar_select %p248, %s18, 1
        %s250 = smul.addr %s249, 8
        %s251 = scalar_lea.vmem %s5, %s250
        %v253 = vld [vmem:[%s240] sm:$0xf]
        %v254 = vld [vmem:[%s240 + $0x4] sm:$0xf]
        %v255 = vld [vmem:[#allocation2] sm:$0xf]
        %v258 = vunpack.c.l.b16 %v253
        %v259 = vunpack.c.l.b16 %v254
        %v260 = vpack.c.b16 %v259, %v258
        %vm261 = vcmask 64512
        %v263 = vsel %vm261, %v260, 0
        %vm265 = vcmask 1043456
        %v267 = vsel %vm265, %v255, 0
        %269 = vmatprep.subr.bf16.mxu0 0
        %270 = vmatpush1.bf16.msra.mxu0 %v267
        %271 = vmatprep.subr.bf16.mxu0 0
        %272 = vmatpush1.bf16.msra.mxu0 0
        %273 = vmatprep.subr.bf16.mxu0 0
        %274 = vmatpush1.bf16.msra.mxu0 0
        %275 = vmatprep.subr.bf16.mxu0 0
        %276 = vmatpush1.bf16.msra.mxu0 0
        %277 = vmatprep.subr.bf16.mxu0 0
        %278 = vmatpush1.bf16.msra.mxu0 0
        %279 = vmatprep.subr.bf16.mxu0 0
        %280 = vmatpush1.bf16.msra.mxu0 0
        %281 = vmatprep.subr.bf16.mxu0 0
        %282 = vmatpush1.bf16.msra.mxu0 0
        %283 = vmatprep.subr.bf16.mxu0 0
        %284 = vmatpush1.bf16.msra.mxu0 0
        %285 = vmatprep.subr.bf16.mxu0 0
        %286 = vmatpush1.bf16.msra.mxu0 0
        %287 = vmatprep.subr.bf16.mxu0 0
        %288 = vmatpush1.bf16.msra.mxu0 0
        %289 = vmatprep.subr.bf16.mxu0 0
        %290 = vmatpush1.bf16.msra.mxu0 0
        %291 = vmatprep.subr.bf16.mxu0 0
        %292 = vmatpush1.bf16.msra.mxu0 0
        %293 = vmatprep.subr.bf16.mxu0 0
        %294 = vmatpush1.bf16.msra.mxu0 0
        %295 = vmatprep.subr.bf16.mxu0 0
        %296 = vmatpush1.bf16.msra.mxu0 0
        %297 = vmatprep.subr.bf16.mxu0 0
        %298 = vmatpush1.bf16.msra.mxu0 0
        %299 = vmatprep.subr.bf16.mxu0 0
        %300 = vmatpush1.bf16.msra.mxu0 0
        %301 = vmatprep.mubr.bf16.mxu0 0
        %302 = vmatmul.mubr.bf16.gmra.mrb[0].mxu0 %v263
        %v303 = vpop.f32.mrb[0].mxu0
        %v304 = vadd.f32 0.0, %v303
        %v305 = vpop.f32.mrb[0].mxu0
        %v306 = vpop.f32.mrb[0].mxu0
        %v307 = vadd.f32 0.0, %v306
        %v308 = vpop.f32.mrb[0].mxu0
        %309 = vdwg.mxu0
        %v310 = vpack.c.bf16 %v307, %v304
        %v312 = vunpack.c.l.b16 %v310
        %v313 = vunpack.c.h.b16 %v310
        %v314 = vpack.c.b16 %v312, %v312
        %v315 = vpack.c.b16 %v313, %v313
        %318 = vst [vmem:[%s246] sm:$0xf] %v314
        %319 = vst [vmem:[%s246 + $0x4] sm:$0xf] %v315
        %v320 = vadd.f32 %v304, %v307
        %v321 = vrot.slane %v320, 4
        %v322 = vadd.f32 %v320, %v321
        %v323 = vrot.slane %v322, 2
        %v324 = vadd.f32 %v322, %v323
        %v325 = vrot.slane %v324, 1
        %v326 = vadd.f32 %v324, %v325
        %v327 = vmul.f32 %v304, %v304
        %v328 = vmul.f32 %v307, %v307
        %v329 = vadd.f32 %v327, %v328
        %v330 = vrot.slane %v329, 4
        %v331 = vadd.f32 %v329, %v330
        %v332 = vrot.slane %v331, 2
        %v333 = vadd.f32 %v331, %v332
        %v334 = vrot.slane %v333, 1
        %v335 = vadd.f32 %v333, %v334
        %v336 = vlaneseq
        %v337 = vshrl.u32 %v336, 7
        %vm338 = vcmp.eq.s32.totalorder %v337, 0
        %vm339 = vcmp.eq.s32.totalorder %v337, 1
        %vm340 = vcmp.eq.s32.totalorder %v337, 2
        %v341 = vsel %vm340, %v326, %v335
        %v342 = vsel %vm339, %v335, %v341
        %v343 = vsel %vm338, %v326, %v342
        %344 = vst [vmem:[%s251] sm:$0xff] %v343
        %s345 = smul.u32 2, %s18
        %p346 = scmp.lt.s32.totalorder %s345, 3
        %s347 = scalar_select %p346, %s345, 3
        %s348 = smul.addr %s347, 4
        %s349 = scalar_lea.vmem %s4, %s348
        %p350 = scmp.lt.s32.totalorder %s18, 1
        %s351 = scalar_select %p350, %s18, 1
        %s352 = smul.addr %s351, 8
        %s353 = scalar_lea.vmem %s5, %s352
        // Predicated region
        $region41: #{masknet_forward.11} parent=35 // pred_check
          %p354 = pneg %p125
        $region42: #{masknet_forward.11} parent=35 // pred_check_branch
          %356 = sbr.rel (%p354) target = $region44
        $region43: #{masknet_forward.11} parent=35 // pred_region
          %s357 = smul.u32 2, %s18
        $region44: #{masknet_forward.11} parent=35 // pred_fallthru
          _
        // Predicated region
        $region45: #{masknet_forward.11} parent=35 // pred_check
          %p358 = pneg %p151
        $region46: #{masknet_forward.11} parent=35 // pred_check_branch
          %360 = sbr.rel (%p358) target = $region48
        $region47: #{masknet_forward.11} parent=35 // pred_region
          _
        $region48: #{masknet_forward.11} parent=35 // pred_fallthru
          _
      $region36: #{masknet_forward.11} parent=5 // pred_fallthru
        _
      %p361 = scmp.le.s32.totalorder 2, %s13
      // Predicated region
      $region49: #{masknet_forward.11} parent=5 // pred_check
        %p362 = pneg %p361
      $region50: #{masknet_forward.11} parent=5 // pred_check_branch
        %364 = sbr.rel (%p362) target = $region52
      $region51: #{masknet_forward.11} parent=5 // pred_region
        %s365 = ssub.s32 %s13, 2
        // Predicated region
        $region53: #{masknet_forward.11} parent=51 // pred_check
          %p366 = pneg %p131
        $region54: #{masknet_forward.11} parent=51 // pred_check_branch
          %368 = sbr.rel (%p366) target = $region56
        $region55: #{masknet_forward.11} parent=51 // pred_region
          %s369 = smul.u32 2, %s19
          %p370 = scmp.lt.s32.totalorder %s369, 3
          %s371 = scalar_select %p370, %s369, 3
          %s372 = smul.addr %s371, 4
          %s373 = scalar_lea.vmem %s4, %s372
        $region56: #{masknet_forward.11} parent=51 // pred_fallthru
          _
        // Predicated region
        $region57: #{masknet_forward.11} parent=51 // pred_check
          %p374 = pneg %p157
        $region58: #{masknet_forward.11} parent=51 // pred_check_branch
          %376 = sbr.rel (%p374) target = $region60
        $region59: #{masknet_forward.11} parent=51 // pred_region
          %p377 = scmp.lt.s32.totalorder %s19, 1
          %s378 = scalar_select %p377, %s19, 1
          %s379 = smul.addr %s378, 8
          %s380 = scalar_lea.vmem %s5, %s379
        $region60: #{masknet_forward.11} parent=51 // pred_fallthru
          _
      $region52: #{masknet_forward.11} parent=5 // pred_fallthru
        _
    $region6: #{masknet_forward.11} parent=1 // loop_footer
      %s17 = sadd.s32 1, %s13
    $region7: #{masknet_forward.11} parent=1 // loop_footer_branch
      %12 = sbr.rel target = $region3
    $region8: #{masknet_forward.11} parent=1 // loop_exit
      _
    %381 = vsyncpa [#allocation3], 1
    %s382 = scalar_lea.sflag [#allocation3], 1
    %383 = vsyncpa %s382, 1

// kernel: masknet_forward.12
$region0: #{masknet_forward.12}
  #allocation0 [shape = 'u32[]', space=smem, size = 0x4, offset = 0x4, fixed_abs, tag = 'smem constant byte address 0x4 - core index']
  #allocation1 [shape = 'u32[144,128]{1,0:T(1,128)}', space=vmem, size = 0x12000, scoped, tag = 'internal scratch']
  %s0 = inlined_call_operand.vmem [shape: bf16[32,128], index: 0, kind: input, shape index: {}]
  %s1 = inlined_call_operand.vmem [shape: f32[1,128], index: 1, kind: input, shape index: {}]
  %s2 = inlined_call_operand.vmem [shape: f32[1,128], index: 2, kind: input, shape index: {}]
  %s3 = inlined_call_operand.hbm [shape: bf16[128,128], index: 3, kind: input, shape index: {}]
  %s4 = inlined_call_operand.vmem [shape: bf16[32,128], index: 4, kind: output, shape index: {0}]
  %s5 = inlined_call_operand.vmem [shape: f32[2,8,128], index: 5, kind: output, shape index: {1}]
  %6 = xla_tuple %s4, %s5
  %s7 = sld [smem:[#allocation0]]
  $region61: #{masknet_forward.12} parent=0
    _
  %s9 = ssub.s32 1, %s7
  %s10 = scalar_select 0, %s9, %s7
  $region1: #{masknet_forward.12} parent=0
    #allocation2 [shape = 'u8[32768]{0}', space=vmem, size = 0x8000, scoped, tag = 'input window, operand 3, single buffered']
    #allocation3 [shape = 's32[2]{0}', space=sflag, size = 0x8, scoped, tag = 'scoped memory for masknet_forward.12']
    %11 = vsyncpa [#allocation3], 0
    loop: start=0, step=1, limit=4
    $region2: #{masknet_forward.12} parent=1 // loop_pre_header
      _
    $region3: #{masknet_forward.12} parent=1 // loop_header
      %s13 = sphi 0, %s17
      %p14 = scmp.ge.s32.totalorder %s13, 4
      %s23 = sphi 0, %s25
      %s26 = sphi 0, %s23
      %s27 = sphi 0, %s26
      %s43 = sphi 0, %s27
      %s47 = sphi 0, %s47
      %s49 = sphi 0, %s47
      %s50 = sphi 0, %s49
      %s64 = sphi 0, %s50
      %s68 = sphi 0, %s68
      %s70 = sphi 0, %s68
      %s71 = sphi 0, %s70
      %s85 = sphi 0, %s71
      %s89 = sphi 0, %s89
      %s91 = sphi 0, %s89
      %s92 = sphi 0, %s91
      %s106 = sphi 0, %s92
      %s112 = sphi 0, %s114
      %s115 = sphi 0, %s112
      %s116 = sphi 0, %s115
      %s132 = sphi 0, %s116
      %s138 = sphi 0, %s140
      %s141 = sphi 0, %s138
      %s142 = sphi 0, %s141
      %s158 = sphi 0, %s142
    $region4: #{masknet_forward.12} parent=1 // loop_header_branch
      %16 = sbr.rel (%p14) target = $region8
    $region5: #{masknet_forward.12} parent=1 // loop_body
      %s18 = ssub.s32 %s13, 1
      %s19 = ssub.s32 %s13, 2
      %s20 = sadd.s32 %s13, 1
      %s21 = ssub.s32 %s13, %s20
      %p22 = scmp.eq.s32.totalorder %s21, 0
      %s24 = sadd.s32 %s23, 1
      %s25 = scalar_select %p22, %s23, %s24
      %p28 = pneg %p22
      %p29 = scmp.eq.s32.totalorder %s13, 1
      %p30 = por %p28, %p29
      %p31 = scmp.ne.s32.totalorder %s23, %s26
      %p32 = scmp.eq.s32.totalorder %s13, 0
      %p33 = por %p31, %p32
      %p34 = scmp.ne.s32.totalorder %s23, %s26
      %p35 = scmp.eq.s32.totalorder %s18, 1
      %p36 = por %p34, %p35
      %p37 = scmp.ne.s32.totalorder %s26, %s27
      %p38 = scmp.eq.s32.totalorder %s18, 0
      %p39 = por %p37, %p38
      %p40 = scmp.ne.s32.totalorder %s26, %s27
      %p41 = scmp.eq.s32.totalorder %s19, 1
      %p42 = por %p40, %p41
      %p44 = scmp.ne.s32.totalorder %s27, %s43
      %p45 = scmp.eq.s32.totalorder %s19, 0
      %p46 = por %p44, %p45
      %s48 = sadd.s32 %s47, 1
      %p51 = scmp.eq.s32.totalorder %s13, 1
      %p52 = scmp.ne.s32.totalorder %s47, %s49
      %p53 = scmp.eq.s32.totalorder %s13, 0
      %p54 = por %p52, %p53
      %p55 = scmp.ne.s32.totalorder %s47, %s49
      %p56 = scmp.eq.s32.totalorder %s18, 1
      %p57 = por %p55, %p56
      %p58 = scmp.ne.s32.totalorder %s49, %s50
      %p59 = scmp.eq.s32.totalorder %s18, 0
      %p60 = por %p58, %p59
      %p61 = scmp.ne.s32.totalorder %s49, %s50
      %p62 = scmp.eq.s32.totalorder %s19, 1
      %p63 = por %p61, %p62
      %p65 = scmp.ne.s32.totalorder %s50, %s64
      %p66 = scmp.eq.s32.totalorder %s19, 0
      %p67 = por %p65, %p66
      %s69 = sadd.s32 %s68, 1
      %p72 = scmp.eq.s32.totalorder %s13, 1
      %p73 = scmp.ne.s32.totalorder %s68, %s70
      %p74 = scmp.eq.s32.totalorder %s13, 0
      %p75 = por %p73, %p74
      %p76 = scmp.ne.s32.totalorder %s68, %s70
      %p77 = scmp.eq.s32.totalorder %s18, 1
      %p78 = por %p76, %p77
      %p79 = scmp.ne.s32.totalorder %s70, %s71
      %p80 = scmp.eq.s32.totalorder %s18, 0
      %p81 = por %p79, %p80
      %p82 = scmp.ne.s32.totalorder %s70, %s71
      %p83 = scmp.eq.s32.totalorder %s19, 1
      %p84 = por %p82, %p83
      %p86 = scmp.ne.s32.totalorder %s71, %s85
      %p87 = scmp.eq.s32.totalorder %s19, 0
      %p88 = por %p86, %p87
      %s90 = sadd.s32 %s89, 1
      %p93 = scmp.eq.s32.totalorder %s13, 1
      %p94 = scmp.ne.s32.totalorder %s89, %s91
      %p95 = scmp.eq.s32.totalorder %s13, 0
      %p96 = por %p94, %p95
      %p97 = scmp.ne.s32.totalorder %s89, %s91
      %p98 = scmp.eq.s32.totalorder %s18, 1
      %p99 = por %p97, %p98
      %p100 = scmp.ne.s32.totalorder %s91, %s92
      %p101 = scmp.eq.s32.totalorder %s18, 0
      %p102 = por %p100, %p101
      %p103 = scmp.ne.s32.totalorder %s91, %s92
      %p104 = scmp.eq.s32.totalorder %s19, 1
      %p105 = por %p103, %p104
      %p107 = scmp.ne.s32.totalorder %s92, %s106
      %p108 = scmp.eq.s32.totalorder %s19, 0
      %p109 = por %p107, %p108
      %s110 = ssub.s32 %s13, %s20
      %p111 = scmp.eq.s32.totalorder %s110, 0
      %s113 = sadd.s32 %s112, 1
      %s114 = scalar_select %p111, %s112, %s113
      %p117 = pneg %p111
      %p118 = scmp.eq.s32.totalorder %s13, 1
      %p119 = por %p117, %p118
      %p120 = scmp.ne.s32.totalorder %s112, %s115
      %p121 = scmp.eq.s32.totalorder %s13, 0
      %p122 = por %p120, %p121
      %p123 = scmp.ne.s32.totalorder %s112, %s115
      %p124 = scmp.eq.s32.totalorder %s18, 1
      %p125 = por %p123, %p124
      %p126 = scmp.ne.s32.totalorder %s115, %s116
      %p127 = scmp.eq.s32.totalorder %s18, 0
      %p128 = por %p126, %p127
      %p129 = scmp.ne.s32.totalorder %s115, %s116
      %p130 = scmp.eq.s32.totalorder %s19, 1
      %p131 = por %p129, %p130
      %p133 = scmp.ne.s32.totalorder %s116, %s132
      %p134 = scmp.eq.s32.totalorder %s19, 0
      %p135 = por %p133, %p134
      %s136 = ssub.s32 %s13, %s20
      %p137 = scmp.eq.s32.totalorder %s136, 0
      %s139 = sadd.s32 %s138, 1
      %s140 = scalar_select %p137, %s138, %s139
      %p143 = pneg %p137
      %p144 = scmp.eq.s32.totalorder %s13, 1
      %p145 = por %p143, %p144
      %p146 = scmp.ne.s32.totalorder %s138, %s141
      %p147 = scmp.eq.s32.totalorder %s13, 0
      %p148 = por %p146, %p147
      %p149 = scmp.ne.s32.totalorder %s138, %s141
      %p150 = scmp.eq.s32.totalorder %s18, 1
      %p151 = por %p149, %p150
      %p152 = scmp.ne.s32.totalorder %s141, %s142
      %p153 = scmp.eq.s32.totalorder %s18, 0
      %p154 = por %p152, %p153
      %p155 = scmp.ne.s32.totalorder %s141, %s142
      %p156 = scmp.eq.s32.totalorder %s19, 1
      %p157 = por %p155, %p156
      %p159 = scmp.ne.s32.totalorder %s142, %s158
      %p160 = scmp.eq.s32.totalorder %s19, 0
      %p161 = por %p159, %p160
      %p162 = scmp.le.s32.totalorder 1, %s13
      %p163 = scmp.lt.s32.totalorder %s13, 3
      %p164 = pnand %p162, %p163
      %p165 = pneg %p164
      // Predicated region
      $region9: #{masknet_forward.12} parent=5 // pred_check
        _
      $region10: #{masknet_forward.12} parent=5 // pred_check_branch
        %167 = sbr.rel (%p164) target = $region12
      $region11: #{masknet_forward.12} parent=5 // pred_region
        %s168 = ssub.s32 %s13, 1
        // Predicated region
        $region13: #{masknet_forward.12} parent=11 // pred_check
          %p169 = pneg %p60
        $region14: #{masknet_forward.12} parent=11 // pred_check_branch
          %171 = sbr.rel (%p169) target = $region16
        $region15: #{masknet_forward.12} parent=11 // pred_region
          _
        $region16: #{masknet_forward.12} parent=11 // pred_fallthru
          _
        // Predicated region
        $region17: #{masknet_forward.12} parent=11 // pred_check
          %p172 = pneg %p81
        $region18: #{masknet_forward.12} parent=11 // pred_check_branch
          %174 = sbr.rel (%p172) target = $region20
        $region19: #{masknet_forward.12} parent=11 // pred_region
          _
        $region20: #{masknet_forward.12} parent=11 // pred_fallthru
          _
        // Predicated region
        $region21: #{masknet_forward.12} parent=11 // pred_check
          %p175 = pneg %p102
        $region22: #{masknet_forward.12} parent=11 // pred_check_branch
          %177 = sbr.rel (%p175) target = $region24
        $region23: #{masknet_forward.12} parent=11 // pred_region
          %s179 = ssub.s32 1024, 1024
          %180 = vsyncadd [#allocation3], %s179
          %s181 = sshll.u32 [#allocation2], 4
          %s182 = int_to_ptr.vmem [resolvable:$true] %s181
          %187 = dma.hbm_to_vmem [thread:$0]  %s3, 1024, %s182, [#allocation3], 64, 64, 4
        $region24: #{masknet_forward.12} parent=11 // pred_fallthru
          _
      $region12: #{masknet_forward.12} parent=5 // pred_fallthru
        _
      %p188 = scmp.lt.s32.totalorder %s13, 2
      // Predicated region
      $region25: #{masknet_forward.12} parent=5 // pred_check
        %p189 = pneg %p188
      $region26: #{masknet_forward.12} parent=5 // pred_check_branch
        %191 = sbr.rel (%p189) target = $region28
      $region27: #{masknet_forward.12} parent=5 // pred_region
        // Predicated region
        $region29: #{masknet_forward.12} parent=27 // pred_check
          %p192 = pneg %p33
        $region30: #{masknet_forward.12} parent=27 // pred_check_branch
          %194 = sbr.rel (%p192) target = $region32
        $region31: #{masknet_forward.12} parent=27 // pred_region
          %s195 = smul.u32 2, %s13
          %p196 = scmp.lt.s32.totalorder %s195, 3
          %s197 = scalar_select %p196, %s195, 3
          %s198 = smul.addr %s197, 4
          %s199 = scalar_lea.vmem %s0, %s198
          %s200 = smul.u32 2, %s13
        $region32: #{masknet_forward.12} parent=27 // pred_fallthru
          _
      $region28: #{masknet_forward.12} parent=5 // pred_fallthru
        _
      %p201 = scmp.le.s32.totalorder 1, %s13
      %p202 = scmp.lt.s32.totalorder %s13, 3
      %p203 = pnand %p201, %p202
      %p204 = pneg %p203
      // Predicated region
      $region33: #{masknet_forward.12} parent=5 // pred_check
        _
      $region34: #{masknet_forward.12} parent=5 // pred_check_branch
        %206 = sbr.rel (%p203) target = $region36
      $region35: #{masknet_forward.12} parent=5 // pred_region
        %s207 = ssub.s32 %s13, 1
        // Predicated region
        $region37: #{masknet_forward.12} parent=35 // pred_check
          %p208 = pneg %p102
        $region38: #{masknet_forward.12} parent=35 // pred_check_branch
          %210 = sbr.rel (%p208) target = $region40
        $region39: #{masknet_forward.12} parent=35 // pred_region
          %211 = dma.done [#allocation3], 1024
        $region40: #{masknet_forward.12} parent=35 // pred_fallthru
          _
        %s212 = smul.u32 2, %s18
        %p213 = scmp.lt.s32.totalorder %s212, 3
        %s214 = scalar_select %p213, %s212, 3
        %s215 = smul.addr %s214, 4
        %s216 = scalar_lea.vmem %s0, %s215
        %p217 = pneg %p39
        %p218 = pneg %p36
        %p219 = pneg %p60
        %p220 = pneg %p57
        %p221 = pneg %p81
        %p222 = pneg %p78
        %p223 = pneg %p102
        %p224 = pneg %p99
        %p225 = pneg %p128
        %p226 = pneg %p125
        %s227 = smul.u32 2, %s18
        %p228 = scmp.lt.s32.totalorder %s227, 3
        %s229 = scalar_select %p228, %s227, 3
        %s230 = smul.addr %s229, 4
        %s231 = scalar_lea.vmem %s4, %s230
        %p232 = pneg %p154
        %p233 = pneg %p151
        %p234 = scmp.lt.s32.totalorder %s18, 1
        %s235 = scalar_select %p234, %s18, 1
        %s236 = smul.addr %s235, 8
        %s237 = scalar_lea.vmem %s5, %s236
        %s238 = smul.u32 2, %s18
        %p239 = scmp.lt.s32.totalorder %s238, 3
        %s240 = scalar_select %p239, %s238, 3
        %s241 = smul.addr %s240, 4
        %s242 = scalar_lea.vmem %s0, %s241
        %s243 = smul.u32 2, %s18
        %s244 = smul.u32 2, %s18
        %p245 = scmp.lt.s32.totalorder %s244, 3
        %s246 = scalar_select %p245, %s244, 3
        %s247 = smul.addr %s246, 4
        %s248 = scalar_lea.vmem %s4, %s247
        %s249 = smul.u32 2, %s18
        %p250 = scmp.lt.s32.totalorder %s18, 1
        %s251 = scalar_select %p250, %s18, 1
        %s252 = smul.addr %s251, 8
        %s253 = scalar_lea.vmem %s5, %s252
        %v255 = vld [vmem:[%s242] sm:$0xf]
        %v256 = vld [vmem:[%s242 + $0x4] sm:$0xf]
        %v257 = vunpack.c.l.bf16 %v255
        %v258 = vunpack.c.l.bf16 %v256
        %v259 = vld [vmem:[%s1] sm:$0x1]
        %v261 = vlaneseq
        %v262 = vshrl.u32 %v261, 7
        %v263 = vsub.s32 0, %v262
        %v264 = vrot.slane %v259, %v263
        %v266 = vmul.f32 %v257, %v264
        %v267 = vmul.f32 %v258, %v264
        %v268 = vld [vmem:[%s2] sm:$0x1]
        %v270 = vlaneseq
        %v271 = vshrl.u32 %v270, 7
        %v272 = vsub.s32 0, %v271
        %v273 = vrot.slane %v268, %v272
        %v275 = vadd.f32 %v266, %v273
        %v276 = vadd.f32 %v267, %v273
        %v277 = vmax.f32 %v275, 0.0
        %v278 = vmax.f32 %v276, 0.0
        %v279 = vpack.c.bf16 %v278, %v277
        %v280 = vld [vmem:[#allocation2] sm:$0xf]
        %v281 = vld [vmem:[#allocation2 + $0x4] sm:$0xf]
        %v282 = vld [vmem:[#allocation2 + $0x8] sm:$0xf]
        %v283 = vld [vmem:[#allocation2 + $0xc] sm:$0xf]
        %v284 = vld [vmem:[#allocation2 + $0x10] sm:$0xf]
        %v285 = vld [vmem:[#allocation2 + $0x14] sm:$0xf]
        %v286 = vld [vmem:[#allocation2 + $0x18] sm:$0xf]
        %v287 = vld [vmem:[#allocation2 + $0x1c] sm:$0xf]
        %v288 = vld [vmem:[#allocation2 + $0x20] sm:$0xf]
        %v289 = vld [vmem:[#allocation2 + $0x24] sm:$0xf]
        %v290 = vld [vmem:[#allocation2 + $0x28] sm:$0xf]
        %v291 = vld [vmem:[#allocation2 + $0x2c] sm:$0xf]
        %v292 = vld [vmem:[#allocation2 + $0x30] sm:$0xf]
        %v293 = vld [vmem:[#allocation2 + $0x34] sm:$0xf]
        %v294 = vld [vmem:[#allocation2 + $0x38] sm:$0xf]
        %v295 = vld [vmem:[#allocation2 + $0x3c] sm:$0xf]
        %v312 = vunpack.c.l.b16 %v280
        %v313 = vunpack.c.l.b16 %v281
        %v314 = vunpack.c.l.b16 %v282
        %v315 = vunpack.c.l.b16 %v283
        %v316 = vunpack.c.l.b16 %v284
        %v317 = vunpack.c.l.b16 %v285
        %v318 = vunpack.c.l.b16 %v286
        %v319 = vunpack.c.l.b16 %v287
        %v320 = vunpack.c.l.b16 %v288
        %v321 = vunpack.c.l.b16 %v289
        %v322 = vunpack.c.l.b16 %v290
        %v323 = vunpack.c.l.b16 %v291
        %v324 = vunpack.c.l.b16 %v292
        %v325 = vunpack.c.l.b16 %v293
        %v326 = vunpack.c.l.b16 %v294
        %v327 = vunpack.c.l.b16 %v295
        %v328 = vpack.c.b16 %v313, %v312
        %v329 = vpack.c.b16 %v315, %v314
        %v330 = vpack.c.b16 %v317, %v316
        %v331 = vpack.c.b16 %v319, %v318
        %v332 = vpack.c.b16 %v321, %v320
        %v333 = vpack.c.b16 %v323, %v322
        %v334 = vpack.c.b16 %v325, %v324
        %v335 = vpack.c.b16 %v327, %v326
        %344 = vmatprep.subr.bf16.mxu0 0
        %345 = vmatpush1.bf16.msra.mxu0 %v328
        %346 = vmatprep.subr.bf16.mxu0 0
        %347 = vmatpush1.bf16.msra.mxu0 %v329
        %348 = vmatprep.subr.bf16.mxu0 0
        %349 = vmatpush1.bf16.msra.mxu0 %v330
        %350 = vmatprep.subr.bf16.mxu0 0
        %351 = vmatpush1.bf16.msra.mxu0 %v331
        %352 = vmatprep.subr.bf16.mxu0 0
        %353 = vmatpush1.bf16.msra.mxu0 %v332
        %354 = vmatprep.subr.bf16.mxu0 0
        %355 = vmatpush1.bf16.msra.mxu0 %v333
        %356 = vmatprep.subr.bf16.mxu0 0
        %357 = vmatpush1.bf16.msra.mxu0 %v334
        %358 = vmatprep.subr.bf16.mxu0 0
        %359 = vmatpush1.bf16.msra.mxu0 %v335
        %360 = vmatprep.subr.bf16.mxu0 0
        %361 = vmatpush1.bf16.msra.mxu0 0
        %362 = vmatprep.subr.bf16.mxu0 0
        %363 = vmatpush1.bf16.msra.mxu0 0
        %364 = vmatprep.subr.bf16.mxu0 0
        %365 = vmatpush1.bf16.msra.mxu0 0
        %366 = vmatprep.subr.bf16.mxu0 0
        %367 = vmatpush1.bf16.msra.mxu0 0
        %368 = vmatprep.subr.bf16.mxu0 0
        %369 = vmatpush1.bf16.msra.mxu0 0
        %370 = vmatprep.subr.bf16.mxu0 0
        %371 = vmatpush1.bf16.msra.mxu0 0
        %372 = vmatprep.subr.bf16.mxu0 0
        %373 = vmatpush1.bf16.msra.mxu0 0
        %374 = vmatprep.subr.bf16.mxu0 0
        %375 = vmatpush1.bf16.msra.mxu0 0
        %376 = vmatprep.mubr.bf16.mxu0 0
        %377 = vmatmul.mubr.bf16.gmra.mrb[0].mxu0 %v279
        %v378 = vpop.f32.mrb[0].mxu0
        %v379 = vadd.f32 0.0, %v378
        %v380 = vpop.f32.mrb[0].mxu0
        %v381 = vpop.f32.mrb[0].mxu0
        %v382 = vadd.f32 0.0, %v381
        %v383 = vpop.f32.mrb[0].mxu0
        %384 = vdwg.mxu0
        %v385 = vpack.c.bf16 %v382, %v379
        %v387 = vunpack.c.l.b16 %v385
        %v388 = vunpack.c.h.b16 %v385
        %v389 = vpack.c.b16 %v387, %v387
        %v390 = vpack.c.b16 %v388, %v388
        %393 = vst [vmem:[%s248] sm:$0xf] %v389
        %394 = vst [vmem:[%s248 + $0x4] sm:$0xf] %v390
        %v395 = vadd.f32 %v379, %v382
        %v396 = vrot.slane %v395, 4
        %v397 = vadd.f32 %v395, %v396
        %v398 = vrot.slane %v397, 2
        %v399 = vadd.f32 %v397, %v398
        %v400 = vrot.slane %v399, 1
        %v401 = vadd.f32 %v399, %v400
        %v402 = vmul.f32 %v379, %v379
        %v403 = vmul.f32 %v382, %v382
        %v404 = vadd.f32 %v402, %v403
        %v405 = vrot.slane %v404, 4
        %v406 = vadd.f32 %v404, %v405
        %v407 = vrot.slane %v406, 2
        %v408 = vadd.f32 %v406, %v407
        %v409 = vrot.slane %v408, 1
        %v410 = vadd.f32 %v408, %v409
        %v411 = vlaneseq
        %v412 = vshrl.u32 %v411, 7
        %vm413 = vcmp.eq.s32.totalorder %v412, 0
        %vm414 = vcmp.eq.s32.totalorder %v412, 1
        %vm415 = vcmp.eq.s32.totalorder %v412, 2
        %v416 = vsel %vm415, %v401, %v410
        %v417 = vsel %vm414, %v410, %v416
        %v418 = vsel %vm413, %v401, %v417
        %419 = vst [vmem:[%s253] sm:$0xff] %v418
        %s420 = smul.u32 2, %s18
        %p421 = scmp.lt.s32.totalorder %s420, 3
        %s422 = scalar_select %p421, %s420, 3
        %s423 = smul.addr %s422, 4
        %s424 = scalar_lea.vmem %s4, %s423
        %p425 = scmp.lt.s32.totalorder %s18, 1
        %s426 = scalar_select %p425, %s18, 1
        %s427 = smul.addr %s426, 8
        %s428 = scalar_lea.vmem %s5, %s427
        // Predicated region
        $region41: #{masknet_forward.12} parent=35 // pred_check
          %p429 = pneg %p125
        $region42: #{masknet_forward.12} parent=35 // pred_check_branch
          %431 = sbr.rel (%p429) target = $region44
        $region43: #{masknet_forward.12} parent=35 // pred_region
          %s432 = smul.u32 2, %s18
        $region44: #{masknet_forward.12} parent=35 // pred_fallthru
          _
        // Predicated region
        $region45: #{masknet_forward.12} parent=35 // pred_check
          %p433 = pneg %p151
        $region46: #{masknet_forward.12} parent=35 // pred_check_branch
          %435 = sbr.rel (%p433) target = $region48
        $region47: #{masknet_forward.12} parent=35 // pred_region
          _
        $region48: #{masknet_forward.12} parent=35 // pred_fallthru
          _
      $region36: #{masknet_forward.12} parent=5 // pred_fallthru
        _
      %p436 = scmp.le.s32.totalorder 2, %s13
      // Predicated region
      $region49: #{masknet_forward.12} parent=5 // pred_check
        %p437 = pneg %p436
      $region50: #{masknet_forward.12} parent=5 // pred_check_branch
        %439 = sbr.rel (%p437) target = $region52
      $region51: #{masknet_forward.12} parent=5 // pred_region
        %s440 = ssub.s32 %s13, 2
        // Predicated region
        $region53: #{masknet_forward.12} parent=51 // pred_check
          %p441 = pneg %p131
        $region54: #{masknet_forward.12} parent=51 // pred_check_branch
          %443 = sbr.rel (%p441) target = $region56
        $region55: #{masknet_forward.12} parent=51 // pred_region
          %s444 = smul.u32 2, %s19
          %p445 = scmp.lt.s32.totalorder %s444, 3
          %s446 = scalar_select %p445, %s444, 3
          %s447 = smul.addr %s446, 4
          %s448 = scalar_lea.vmem %s4, %s447
        $region56: #{masknet_forward.12} parent=51 // pred_fallthru
          _
        // Predicated region
        $region57: #{masknet_forward.12} parent=51 // pred_check
          %p449 = pneg %p157
        $region58: #{masknet_forward.12} parent=51 // pred_check_branch
          %451 = sbr.rel (%p449) target = $region60
        $region59: #{masknet_forward.12} parent=51 // pred_region
          %p452 = scmp.lt.s32.totalorder %s19, 1
          %s453 = scalar_select %p452, %s19, 1
          %s454 = smul.addr %s453, 8
          %s455 = scalar_lea.vmem %s5, %s454
        $region60: #{masknet_forward.12} parent=51 // pred_fallthru
          _
      $region52: #{masknet_forward.12} parent=5 // pred_fallthru
        _
    $region6: #{masknet_forward.12} parent=1 // loop_footer
      %s17 = sadd.s32 1, %s13
    $region7: #{masknet_forward.12} parent=1 // loop_footer_branch
      %12 = sbr.rel target = $region3
    $region8: #{masknet_forward.12} parent=1 // loop_exit
      _
    %456 = vsyncpa [#allocation3], 1
    %s457 = scalar_lea.sflag [#allocation3], 1
    %458 = vsyncpa %s457, 1

// kernel: masknet_forward.15
$region0: #{masknet_forward.15}
  #allocation0 [shape = 'u32[]', space=smem, size = 0x4, offset = 0x4, fixed_abs, tag = 'smem constant byte address 0x4 - core index']
  #allocation1 [shape = 'u32[144,128]{1,0:T(1,128)}', space=vmem, size = 0x12000, scoped, tag = 'internal scratch']
  %s0 = inlined_call_operand.vmem [shape: bf16[32,128], index: 0, kind: input, shape index: {}]
  %s1 = inlined_call_operand.vmem [shape: f32[1,128], index: 1, kind: input, shape index: {}]
  %s2 = inlined_call_operand.vmem [shape: f32[1,128], index: 2, kind: input, shape index: {}]
  %s3 = inlined_call_operand.hbm [shape: bf16[128,1024], index: 3, kind: input, shape index: {}]
  %s4 = inlined_call_operand.vmem [shape: f32[2,8,1024], index: 4, kind: output, shape index: {}]
  %s5 = sld [smem:[#allocation0]]
  $region53: #{masknet_forward.15} parent=0
    _
  %s7 = ssub.s32 1, %s5
  %s8 = scalar_select 0, %s7, %s5
  $region1: #{masknet_forward.15} parent=0
    #allocation2 [shape = 'u8[262144]{0}', space=vmem, size = 0x40000, scoped, tag = 'input window, operand 3, single buffered']
    #allocation3 [shape = 's32[2]{0}', space=sflag, size = 0x8, scoped, tag = 'scoped memory for masknet_forward.15']
    %9 = vsyncpa [#allocation3], 0
    loop: start=0, step=1, limit=4
    $region2: #{masknet_forward.15} parent=1 // loop_pre_header
      _
    $region3: #{masknet_forward.15} parent=1 // loop_header
      %s11 = sphi 0, %s15
      %p12 = scmp.ge.s32.totalorder %s11, 4
      %s21 = sphi 0, %s23
      %s24 = sphi 0, %s21
      %s25 = sphi 0, %s24
      %s41 = sphi 0, %s25
      %s45 = sphi 0, %s45
      %s47 = sphi 0, %s45
      %s48 = sphi 0, %s47
      %s62 = sphi 0, %s48
      %s66 = sphi 0, %s66
      %s68 = sphi 0, %s66
      %s69 = sphi 0, %s68
      %s83 = sphi 0, %s69
      %s87 = sphi 0, %s87
      %s89 = sphi 0, %s87
      %s90 = sphi 0, %s89
      %s104 = sphi 0, %s90
      %s110 = sphi 0, %s112
      %s113 = sphi 0, %s110
      %s114 = sphi 0, %s113
      %s130 = sphi 0, %s114
    $region4: #{masknet_forward.15} parent=1 // loop_header_branch
      %14 = sbr.rel (%p12) target = $region8
    $region5: #{masknet_forward.15} parent=1 // loop_body
      %s16 = ssub.s32 %s11, 1
      %s17 = ssub.s32 %s11, 2
      %s18 = sadd.s32 %s11, 1
      %s19 = ssub.s32 %s11, %s18
      %p20 = scmp.eq.s32.totalorder %s19, 0
      %s22 = sadd.s32 %s21, 1
      %s23 = scalar_select %p20, %s21, %s22
      %p26 = pneg %p20
      %p27 = scmp.eq.s32.totalorder %s11, 1
      %p28 = por %p26, %p27
      %p29 = scmp.ne.s32.totalorder %s21, %s24
      %p30 = scmp.eq.s32.totalorder %s11, 0
      %p31 = por %p29, %p30
      %p32 = scmp.ne.s32.totalorder %s21, %s24
      %p33 = scmp.eq.s32.totalorder %s16, 1
      %p34 = por %p32, %p33
      %p35 = scmp.ne.s32.totalorder %s24, %s25
      %p36 = scmp.eq.s32.totalorder %s16, 0
      %p37 = por %p35, %p36
      %p38 = scmp.ne.s32.totalorder %s24, %s25
      %p39 = scmp.eq.s32.totalorder %s17, 1
      %p40 = por %p38, %p39
      %p42 = scmp.ne.s32.totalorder %s25, %s41
      %p43 = scmp.eq.s32.totalorder %s17, 0
      %p44 = por %p42, %p43
      %s46 = sadd.s32 %s45, 1
      %p49 = scmp.eq.s32.totalorder %s11, 1
      %p50 = scmp.ne.s32.totalorder %s45, %s47
      %p51 = scmp.eq.s32.totalorder %s11, 0
      %p52 = por %p50, %p51
      %p53 = scmp.ne.s32.totalorder %s45, %s47
      %p54 = scmp.eq.s32.totalorder %s16, 1
      %p55 = por %p53, %p54
      %p56 = scmp.ne.s32.totalorder %s47, %s48
      %p57 = scmp.eq.s32.totalorder %s16, 0
      %p58 = por %p56, %p57
      %p59 = scmp.ne.s32.totalorder %s47, %s48
      %p60 = scmp.eq.s32.totalorder %s17, 1
      %p61 = por %p59, %p60
      %p63 = scmp.ne.s32.totalorder %s48, %s62
      %p64 = scmp.eq.s32.totalorder %s17, 0
      %p65 = por %p63, %p64
      %s67 = sadd.s32 %s66, 1
      %p70 = scmp.eq.s32.totalorder %s11, 1
      %p71 = scmp.ne.s32.totalorder %s66, %s68
      %p72 = scmp.eq.s32.totalorder %s11, 0
      %p73 = por %p71, %p72
      %p74 = scmp.ne.s32.totalorder %s66, %s68
      %p75 = scmp.eq.s32.totalorder %s16, 1
      %p76 = por %p74, %p75
      %p77 = scmp.ne.s32.totalorder %s68, %s69
      %p78 = scmp.eq.s32.totalorder %s16, 0
      %p79 = por %p77, %p78
      %p80 = scmp.ne.s32.totalorder %s68, %s69
      %p81 = scmp.eq.s32.totalorder %s17, 1
      %p82 = por %p80, %p81
      %p84 = scmp.ne.s32.totalorder %s69, %s83
      %p85 = scmp.eq.s32.totalorder %s17, 0
      %p86 = por %p84, %p85
      %s88 = sadd.s32 %s87, 1
      %p91 = scmp.eq.s32.totalorder %s11, 1
      %p92 = scmp.ne.s32.totalorder %s87, %s89
      %p93 = scmp.eq.s32.totalorder %s11, 0
      %p94 = por %p92, %p93
      %p95 = scmp.ne.s32.totalorder %s87, %s89
      %p96 = scmp.eq.s32.totalorder %s16, 1
      %p97 = por %p95, %p96
      %p98 = scmp.ne.s32.totalorder %s89, %s90
      %p99 = scmp.eq.s32.totalorder %s16, 0
      %p100 = por %p98, %p99
      %p101 = scmp.ne.s32.totalorder %s89, %s90
      %p102 = scmp.eq.s32.totalorder %s17, 1
      %p103 = por %p101, %p102
      %p105 = scmp.ne.s32.totalorder %s90, %s104
      %p106 = scmp.eq.s32.totalorder %s17, 0
      %p107 = por %p105, %p106
      %s108 = ssub.s32 %s11, %s18
      %p109 = scmp.eq.s32.totalorder %s108, 0
      %s111 = sadd.s32 %s110, 1
      %s112 = scalar_select %p109, %s110, %s111
      %p115 = pneg %p109
      %p116 = scmp.eq.s32.totalorder %s11, 1
      %p117 = por %p115, %p116
      %p118 = scmp.ne.s32.totalorder %s110, %s113
      %p119 = scmp.eq.s32.totalorder %s11, 0
      %p120 = por %p118, %p119
      %p121 = scmp.ne.s32.totalorder %s110, %s113
      %p122 = scmp.eq.s32.totalorder %s16, 1
      %p123 = por %p121, %p122
      %p124 = scmp.ne.s32.totalorder %s113, %s114
      %p125 = scmp.eq.s32.totalorder %s16, 0
      %p126 = por %p124, %p125
      %p127 = scmp.ne.s32.totalorder %s113, %s114
      %p128 = scmp.eq.s32.totalorder %s17, 1
      %p129 = por %p127, %p128
      %p131 = scmp.ne.s32.totalorder %s114, %s130
      %p132 = scmp.eq.s32.totalorder %s17, 0
      %p133 = por %p131, %p132
      %p134 = scmp.le.s32.totalorder 1, %s11
      %p135 = scmp.lt.s32.totalorder %s11, 3
      %p136 = pnand %p134, %p135
      %p137 = pneg %p136
      // Predicated region
      $region9: #{masknet_forward.15} parent=5 // pred_check
        _
      $region10: #{masknet_forward.15} parent=5 // pred_check_branch
        %139 = sbr.rel (%p136) target = $region12
      $region11: #{masknet_forward.15} parent=5 // pred_region
        %s140 = ssub.s32 %s11, 1
        // Predicated region
        $region13: #{masknet_forward.15} parent=11 // pred_check
          %p141 = pneg %p58
        $region14: #{masknet_forward.15} parent=11 // pred_check_branch
          %143 = sbr.rel (%p141) target = $region16
        $region15: #{masknet_forward.15} parent=11 // pred_region
          _
        $region16: #{masknet_forward.15} parent=11 // pred_fallthru
          _
        // Predicated region
        $region17: #{masknet_forward.15} parent=11 // pred_check
          %p144 = pneg %p79
        $region18: #{masknet_forward.15} parent=11 // pred_check_branch
          %146 = sbr.rel (%p144) target = $region20
        $region19: #{masknet_forward.15} parent=11 // pred_region
          _
        $region20: #{masknet_forward.15} parent=11 // pred_fallthru
          _
        // Predicated region
        $region21: #{masknet_forward.15} parent=11 // pred_check
          %p147 = pneg %p100
        $region22: #{masknet_forward.15} parent=11 // pred_check_branch
          %149 = sbr.rel (%p147) target = $region24
        $region23: #{masknet_forward.15} parent=11 // pred_region
          %s151 = ssub.s32 8192, 8192
          %152 = vsyncadd [#allocation3], %s151
          %s153 = sshll.u32 [#allocation2], 4
          %s154 = int_to_ptr.vmem [resolvable:$true] %s153
          %159 = dma.hbm_to_vmem [thread:$0]  %s3, 8192, %s154, [#allocation3], 512, 512, 32
        $region24: #{masknet_forward.15} parent=11 // pred_fallthru
          _
      $region12: #{masknet_forward.15} parent=5 // pred_fallthru
        _
      %p160 = scmp.lt.s32.totalorder %s11, 2
      // Predicated region
      $region25: #{masknet_forward.15} parent=5 // pred_check
        %p161 = pneg %p160
      $region26: #{masknet_forward.15} parent=5 // pred_check_branch
        %163 = sbr.rel (%p161) target = $region28
      $region27: #{masknet_forward.15} parent=5 // pred_region
        // Predicated region
        $region29: #{masknet_forward.15} parent=27 // pred_check
          %p164 = pneg %p31
        $region30: #{masknet_forward.15} parent=27 // pred_check_branch
          %166 = sbr.rel (%p164) target = $region32
        $region31: #{masknet_forward.15} parent=27 // pred_region
          %s167 = smul.u32 2, %s11
          %p168 = scmp.lt.s32.totalorder %s167, 3
          %s169 = scalar_select %p168, %s167, 3
          %s170 = smul.addr %s169, 4
          %s171 = scalar_lea.vmem %s0, %s170
          %s172 = smul.u32 2, %s11
        $region32: #{masknet_forward.15} parent=27 // pred_fallthru
          _
      $region28: #{masknet_forward.15} parent=5 // pred_fallthru
        _
      %p173 = scmp.le.s32.totalorder 1, %s11
      %p174 = scmp.lt.s32.totalorder %s11, 3
      %p175 = pnand %p173, %p174
      %p176 = pneg %p175
      // Predicated region
      $region33: #{masknet_forward.15} parent=5 // pred_check
        _
      $region34: #{masknet_forward.15} parent=5 // pred_check_branch
        %178 = sbr.rel (%p175) target = $region36
      $region35: #{masknet_forward.15} parent=5 // pred_region
        %s179 = ssub.s32 %s11, 1
        // Predicated region
        $region37: #{masknet_forward.15} parent=35 // pred_check
          %p180 = pneg %p100
        $region38: #{masknet_forward.15} parent=35 // pred_check_branch
          %182 = sbr.rel (%p180) target = $region40
        $region39: #{masknet_forward.15} parent=35 // pred_region
          %183 = dma.done [#allocation3], 8192
        $region40: #{masknet_forward.15} parent=35 // pred_fallthru
          _
        %s184 = smul.u32 2, %s16
        %p185 = scmp.lt.s32.totalorder %s184, 3
        %s186 = scalar_select %p185, %s184, 3
        %s187 = smul.addr %s186, 4
        %s188 = scalar_lea.vmem %s0, %s187
        %p189 = pneg %p37
        %p190 = pneg %p34
        %p191 = pneg %p58
        %p192 = pneg %p55
        %p193 = pneg %p79
        %p194 = pneg %p76
        %p195 = pneg %p100
        %p196 = pneg %p97
        %p197 = pneg %p126
        %p198 = pneg %p123
        %p199 = scmp.lt.s32.totalorder %s16, 1
        %s200 = scalar_select %p199, %s16, 1
        %s201 = smul.addr %s200, 8
        %s202 = smul.addr %s201, 8
        %s203 = scalar_lea.vmem %s4, %s202
        %s204 = smul.u32 2, %s16
        %p205 = scmp.lt.s32.totalorder %s204, 3
        %s206 = scalar_select %p205, %s204, 3
        %s207 = smul.addr %s206, 4
        %s208 = scalar_lea.vmem %s0, %s207
        %s209 = smul.u32 2, %s16
        %p210 = scmp.lt.s32.totalorder %s16, 1
        %s211 = scalar_select %p210, %s16, 1
        %s212 = smul.addr %s211, 8
        %s213 = smul.addr %s212, 8
        %s214 = scalar_lea.vmem %s4, %s213
        %v216 = vld [vmem:[%s208] sm:$0xf]
        %v217 = vld [vmem:[%s208 + $0x4] sm:$0xf]
        %v218 = vunpack.c.l.bf16 %v216
        %v219 = vunpack.c.l.bf16 %v217
        %v220 = vld [vmem:[%s1] sm:$0x1]
        %v222 = vlaneseq
        %v223 = vshrl.u32 %v222, 7
        %v224 = vsub.s32 0, %v223
        %v225 = vrot.slane %v220, %v224
        %v227 = vmul.f32 %v218, %v225
        %v228 = vmul.f32 %v219, %v225
        %v229 = vld [vmem:[%s2] sm:$0x1]
        %v231 = vlaneseq
        %v232 = vshrl.u32 %v231, 7
        %v233 = vsub.s32 0, %v232
        %v234 = vrot.slane %v229, %v233
        %v236 = vadd.f32 %v227, %v234
        %v237 = vadd.f32 %v228, %v234
        %v238 = vmax.f32 %v236, 0.0
        %v239 = vmax.f32 %v237, 0.0
        %v240 = vpack.c.bf16 %v239, %v238
        %v241 = vld [vmem:[#allocation2] sm:$0xff]
        %v242 = vld [vmem:[#allocation2 + $0x8] sm:$0xff]
        %v243 = vld [vmem:[#allocation2 + $0x10] sm:$0xff]
        %v244 = vld [vmem:[#allocation2 + $0x18] sm:$0xff]
        %v245 = vld [vmem:[#allocation2 + $0x20] sm:$0xff]
        %v246 = vld [vmem:[#allocation2 + $0x28] sm:$0xff]
        %v247 = vld [vmem:[#allocation2 + $0x30] sm:$0xff]
        %v248 = vld [vmem:[#allocation2 + $0x38] sm:$0xff]
        %v249 = vld [vmem:[#allocation2 + $0x40] sm:$0xff]
        %v250 = vld [vmem:[#allocation2 + $0x48] sm:$0xff]
        %v251 = vld [vmem:[#allocation2 + $0x50] sm:$0xff]
        %v252 = vld [vmem:[#allocation2 + $0x58] sm:$0xff]
        %v253 = vld [vmem:[#allocation2 + $0x60] sm:$0xff]
        %v254 = vld [vmem:[#allocation2 + $0x68] sm:$0xff]
        %v255 = vld [vmem:[#allocation2 + $0x70] sm:$0xff]
        %v256 = vld [vmem:[#allocation2 + $0x78] sm:$0xff]
        %v257 = vld [vmem:[#allocation2 + $0x80] sm:$0xff]
        %v258 = vld [vmem:[#allocation2 + $0x88] sm:$0xff]
        %v259 = vld [vmem:[#allocation2 + $0x90] sm:$0xff]
        %v260 = vld [vmem:[#allocation2 + $0x98] sm:$0xff]
        %v261 = vld [vmem:[#allocation2 + $0xa0] sm:$0xff]
        %v262 = vld [vmem:[#allocation2 + $0xa8] sm:$0xff]
        %v263 = vld [vmem:[#allocation2 + $0xb0] sm:$0xff]
        %v264 = vld [vmem:[#allocation2 + $0xb8] sm:$0xff]
        %v265 = vld [vmem:[#allocation2 + $0xc0] sm:$0xff]
        %v266 = vld [vmem:[#allocation2 + $0xc8] sm:$0xff]
        %v267 = vld [vmem:[#allocation2 + $0xd0] sm:$0xff]
        %v268 = vld [vmem:[#allocation2 + $0xd8] sm:$0xff]
        %v269 = vld [vmem:[#allocation2 + $0xe0] sm:$0xff]
        %v270 = vld [vmem:[#allocation2 + $0xe8] sm:$0xff]
        %v271 = vld [vmem:[#allocation2 + $0xf0] sm:$0xff]
        %v272 = vld [vmem:[#allocation2 + $0xf8] sm:$0xff]
        %v273 = vld [vmem:[#allocation2 + $0x100] sm:$0xff]
        %v274 = vld [vmem:[#allocation2 + $0x108] sm:$0xff]
        %v275 = vld [vmem:[#allocation2 + $0x110] sm:$0xff]
        %v276 = vld [vmem:[#allocation2 + $0x118] sm:$0xff]
        %v277 = vld [vmem:[#allocation2 + $0x120] sm:$0xff]
        %v278 = vld [vmem:[#allocation2 + $0x128] sm:$0xff]
        %v279 = vld [vmem:[#allocation2 + $0x130] sm:$0xff]
        %v280 = vld [vmem:[#allocation2 + $0x138] sm:$0xff]
        %v281 = vld [vmem:[#allocation2 + $0x140] sm:$0xff]
        %v282 = vld [vmem:[#allocation2 + $0x148] sm:$0xff]
        %v283 = vld [vmem:[#allocation2 + $0x150] sm:$0xff]
        %v284 = vld [vmem:[#allocation2 + $0x158] sm:$0xff]
        %v285 = vld [vmem:[#allocation2 + $0x160] sm:$0xff]
        %v286 = vld [vmem:[#allocation2 + $0x168] sm:$0xff]
        %v287 = vld [vmem:[#allocation2 + $0x170] sm:$0xff]
        %v288 = vld [vmem:[#allocation2 + $0x178] sm:$0xff]
        %v289 = vld [vmem:[#allocation2 + $0x180] sm:$0xff]
        %v290 = vld [vmem:[#allocation2 + $0x188] sm:$0xff]
        %v291 = vld [vmem:[#allocation2 + $0x190] sm:$0xff]
        %v292 = vld [vmem:[#allocation2 + $0x198] sm:$0xff]
        %v293 = vld [vmem:[#allocation2 + $0x1a0] sm:$0xff]
        %v294 = vld [vmem:[#allocation2 + $0x1a8] sm:$0xff]
        %v295 = vld [vmem:[#allocation2 + $0x1b0] sm:$0xff]
        %v296 = vld [vmem:[#allocation2 + $0x1b8] sm:$0xff]
        %v297 = vld [vmem:[#allocation2 + $0x1c0] sm:$0xff]
        %v298 = vld [vmem:[#allocation2 + $0x1c8] sm:$0xff]
        %v299 = vld [vmem:[#allocation2 + $0x1d0] sm:$0xff]
        %v300 = vld [vmem:[#allocation2 + $0x1d8] sm:$0xff]
        %v301 = vld [vmem:[#allocation2 + $0x1e0] sm:$0xff]
        %v302 = vld [vmem:[#allocation2 + $0x1e8] sm:$0xff]
        %v303 = vld [vmem:[#allocation2 + $0x1f0] sm:$0xff]
        %v304 = vld [vmem:[#allocation2 + $0x1f8] sm:$0xff]
        %v369 = vunpack.c.l.b16 %v241
        %v370 = vunpack.c.h.b16 %v241
        %v371 = vunpack.c.l.b16 %v242
        %v372 = vunpack.c.h.b16 %v242
        %v373 = vunpack.c.l.b16 %v243
        %v374 = vunpack.c.h.b16 %v243
        %v375 = vunpack.c.l.b16 %v244
        %v376 = vunpack.c.h.b16 %v244
        %v377 = vunpack.c.l.b16 %v245
        %v378 = vunpack.c.h.b16 %v245
        %v379 = vunpack.c.l.b16 %v246
        %v380 = vunpack.c.h.b16 %v246
        %v381 = vunpack.c.l.b16 %v247
        %v382 = vunpack.c.h.b16 %v247
        %v383 = vunpack.c.l.b16 %v248
        %v384 = vunpack.c.h.b16 %v248
        %v385 = vunpack.c.l.b16 %v249
        %v386 = vunpack.c.h.b16 %v249
        %v387 = vunpack.c.l.b16 %v250
        %v388 = vunpack.c.h.b16 %v250
        %v389 = vunpack.c.l.b16 %v251
        %v390 = vunpack.c.h.b16 %v251
        %v391 = vunpack.c.l.b16 %v252
        %v392 = vunpack.c.h.b16 %v252
        %v393 = vunpack.c.l.b16 %v253
        %v394 = vunpack.c.h.b16 %v253
        %v395 = vunpack.c.l.b16 %v254
        %v396 = vunpack.c.h.b16 %v254
        %v397 = vunpack.c.l.b16 %v255
        %v398 = vunpack.c.h.b16 %v255
        %v399 = vunpack.c.l.b16 %v256
        %v400 = vunpack.c.h.b16 %v256
        %v401 = vunpack.c.l.b16 %v257
        %v402 = vunpack.c.h.b16 %v257
        %v403 = vunpack.c.l.b16 %v258
        %v404 = vunpack.c.h.b16 %v258
        %v405 = vunpack.c.l.b16 %v259
        %v406 = vunpack.c.h.b16 %v259
        %v407 = vunpack.c.l.b16 %v260
        %v408 = vunpack.c.h.b16 %v260
        %v409 = vunpack.c.l.b16 %v261
        %v410 = vunpack.c.h.b16 %v261
        %v411 = vunpack.c.l.b16 %v262
        %v412 = vunpack.c.h.b16 %v262
        %v413 = vunpack.c.l.b16 %v263
        %v414 = vunpack.c.h.b16 %v263
        %v415 = vunpack.c.l.b16 %v264
        %v416 = vunpack.c.h.b16 %v264
        %v417 = vunpack.c.l.b16 %v265
        %v418 = vunpack.c.h.b16 %v265
        %v419 = vunpack.c.l.b16 %v266
        %v420 = vunpack.c.h.b16 %v266
        %v421 = vunpack.c.l.b16 %v267
        %v422 = vunpack.c.h.b16 %v267
        %v423 = vunpack.c.l.b16 %v268
        %v424 = vunpack.c.h.b16 %v268
        %v425 = vunpack.c.l.b16 %v269
        %v426 = vunpack.c.h.b16 %v269
        %v427 = vunpack.c.l.b16 %v270
        %v428 = vunpack.c.h.b16 %v270
        %v429 = vunpack.c.l.b16 %v271
        %v430 = vunpack.c.h.b16 %v271
        %v431 = vunpack.c.l.b16 %v272
        %v432 = vunpack.c.h.b16 %v272
        %v433 = vunpack.c.l.b16 %v273
        %v434 = vunpack.c.h.b16 %v273
        %v435 = vunpack.c.l.b16 %v274
        %v436 = vunpack.c.h.b16 %v274
        %v437 = vunpack.c.l.b16 %v275
        %v438 = vunpack.c.h.b16 %v275
        %v439 = vunpack.c.l.b16 %v276
        %v440 = vunpack.c.h.b16 %v276
        %v441 = vunpack.c.l.b16 %v277
        %v442 = vunpack.c.h.b16 %v277
        %v443 = vunpack.c.l.b16 %v278
        %v444 = vunpack.c.h.b16 %v278
        %v445 = vunpack.c.l.b16 %v279
        %v446 = vunpack.c.h.b16 %v279
        %v447 = vunpack.c.l.b16 %v280
        %v448 = vunpack.c.h.b16 %v280
        %v449 = vunpack.c.l.b16 %v281
        %v450 = vunpack.c.h.b16 %v281
        %v451 = vunpack.c.l.b16 %v282
        %v452 = vunpack.c.h.b16 %v282
        %v453 = vunpack.c.l.b16 %v283
        %v454 = vunpack.c.h.b16 %v283
        %v455 = vunpack.c.l.b16 %v284
        %v456 = vunpack.c.h.b16 %v284
        %v457 = vunpack.c.l.b16 %v285
        %v458 = vunpack.c.h.b16 %v285
        %v459 = vunpack.c.l.b16 %v286
        %v460 = vunpack.c.h.b16 %v286
        %v461 = vunpack.c.l.b16 %v287
        %v462 = vunpack.c.h.b16 %v287
        %v463 = vunpack.c.l.b16 %v288
        %v464 = vunpack.c.h.b16 %v288
        %v465 = vunpack.c.l.b16 %v289
        %v466 = vunpack.c.h.b16 %v289
        %v467 = vunpack.c.l.b16 %v290
        %v468 = vunpack.c.h.b16 %v290
        %v469 = vunpack.c.l.b16 %v291
        %v470 = vunpack.c.h.b16 %v291
        %v471 = vunpack.c.l.b16 %v292
        %v472 = vunpack.c.h.b16 %v292
        %v473 = vunpack.c.l.b16 %v293
        %v474 = vunpack.c.h.b16 %v293
        %v475 = vunpack.c.l.b16 %v294
        %v476 = vunpack.c.h.b16 %v294
        %v477 = vunpack.c.l.b16 %v295
        %v478 = vunpack.c.h.b16 %v295
        %v479 = vunpack.c.l.b16 %v296
        %v480 = vunpack.c.h.b16 %v296
        %v481 = vunpack.c.l.b16 %v297
        %v482 = vunpack.c.h.b16 %v297
        %v483 = vunpack.c.l.b16 %v298
        %v484 = vunpack.c.h.b16 %v298
        %v485 = vunpack.c.l.b16 %v299
        %v486 = vunpack.c.h.b16 %v299
        %v487 = vunpack.c.l.b16 %v300
        %v488 = vunpack.c.h.b16 %v300
        %v489 = vunpack.c.l.b16 %v301
        %v490 = vunpack.c.h.b16 %v301
        %v491 = vunpack.c.l.b16 %v302
        %v492 = vunpack.c.h.b16 %v302
        %v493 = vunpack.c.l.b16 %v303
        %v494 = vunpack.c.h.b16 %v303
        %v495 = vunpack.c.l.b16 %v304
        %v496 = vunpack.c.h.b16 %v304
        %v497 = vpack.c.b16 %v377, %v369
        %v498 = vpack.c.b16 %v378, %v370
        %v499 = vpack.c.b16 %v379, %v371
        %v500 = vpack.c.b16 %v380, %v372
        %v501 = vpack.c.b16 %v381, %v373
        %v502 = vpack.c.b16 %v382, %v374
        %v503 = vpack.c.b16 %v383, %v375
        %v504 = vpack.c.b16 %v384, %v376
        %v505 = vpack.c.b16 %v393, %v385
        %v506 = vpack.c.b16 %v394, %v386
        %v507 = vpack.c.b16 %v395, %v387
        %v508 = vpack.c.b16 %v396, %v388
        %v509 = vpack.c.b16 %v397, %v389
        %v510 = vpack.c.b16 %v398, %v390
        %v511 = vpack.c.b16 %v399, %v391
        %v512 = vpack.c.b16 %v400, %v392
        %v513 = vpack.c.b16 %v409, %v401
        %v514 = vpack.c.b16 %v410, %v402
        %v515 = vpack.c.b16 %v411, %v403
        %v516 = vpack.c.b16 %v412, %v404
        %v517 = vpack.c.b16 %v413, %v405
        %v518 = vpack.c.b16 %v414, %v406
        %v519 = vpack.c.b16 %v415, %v407
        %v520 = vpack.c.b16 %v416, %v408
        %v521 = vpack.c.b16 %v425, %v417
        %v522 = vpack.c.b16 %v426, %v418
        %v523 = vpack.c.b16 %v427, %v419
        %v524 = vpack.c.b16 %v428, %v420
        %v525 = vpack.c.b16 %v429, %v421
        %v526 = vpack.c.b16 %v430, %v422
        %v527 = vpack.c.b16 %v431, %v423
        %v528 = vpack.c.b16 %v432, %v424
        %v529 = vpack.c.b16 %v441, %v433
        %v530 = vpack.c.b16 %v442, %v434
        %v531 = vpack.c.b16 %v443, %v435
        %v532 = vpack.c.b16 %v444, %v436
        %v533 = vpack.c.b16 %v445, %v437
        %v534 = vpack.c.b16 %v446, %v438
        %v535 = vpack.c.b16 %v447, %v439
        %v536 = vpack.c.b16 %v448, %v440
        %v537 = vpack.c.b16 %v457, %v449
        %v538 = vpack.c.b16 %v458, %v450
        %v539 = vpack.c.b16 %v459, %v451
        %v540 = vpack.c.b16 %v460, %v452
        %v541 = vpack.c.b16 %v461, %v453
        %v542 = vpack.c.b16 %v462, %v454
        %v543 = vpack.c.b16 %v463, %v455
        %v544 = vpack.c.b16 %v464, %v456
        %v545 = vpack.c.b16 %v473, %v465
        %v546 = vpack.c.b16 %v474, %v466
        %v547 = vpack.c.b16 %v475, %v467
        %v548 = vpack.c.b16 %v476, %v468
        %v549 = vpack.c.b16 %v477, %v469
        %v550 = vpack.c.b16 %v478, %v470
        %v551 = vpack.c.b16 %v479, %v471
        %v552 = vpack.c.b16 %v480, %v472
        %v553 = vpack.c.b16 %v489, %v481
        %v554 = vpack.c.b16 %v490, %v482
        %v555 = vpack.c.b16 %v491, %v483
        %v556 = vpack.c.b16 %v492, %v484
        %v557 = vpack.c.b16 %v493, %v485
        %v558 = vpack.c.b16 %v494, %v486
        %v559 = vpack.c.b16 %v495, %v487
        %v560 = vpack.c.b16 %v496, %v488
        %625 = vmatprep.subr.bf16.mxu0 %v498
        %626 = vmatpush1.bf16.msra.mxu0 %v497
        %627 = vmatprep.subr.bf16.mxu0 %v506
        %628 = vmatpush1.bf16.msra.mxu0 %v505
        %629 = vmatprep.subr.bf16.mxu0 %v514
        %630 = vmatpush1.bf16.msra.mxu0 %v513
        %631 = vmatprep.subr.bf16.mxu0 %v522
        %632 = vmatpush1.bf16.msra.mxu0 %v521
        %633 = vmatprep.subr.bf16.mxu0 %v530
        %634 = vmatpush1.bf16.msra.mxu0 %v529
        %635 = vmatprep.subr.bf16.mxu0 %v538
        %636 = vmatpush1.bf16.msra.mxu0 %v537
        %637 = vmatprep.subr.bf16.mxu0 %v546
        %638 = vmatpush1.bf16.msra.mxu0 %v545
        %639 = vmatprep.subr.bf16.mxu0 %v554
        %640 = vmatpush1.bf16.msra.mxu0 %v553
        %641 = vmatprep.subr.bf16.mxu0 0
        %642 = vmatpush1.bf16.msra.mxu0 0
        %643 = vmatprep.subr.bf16.mxu0 0
        %644 = vmatpush1.bf16.msra.mxu0 0
        %645 = vmatprep.subr.bf16.mxu0 0
        %646 = vmatpush1.bf16.msra.mxu0 0
        %647 = vmatprep.subr.bf16.mxu0 0
        %648 = vmatpush1.bf16.msra.mxu0 0
        %649 = vmatprep.subr.bf16.mxu0 0
        %650 = vmatpush1.bf16.msra.mxu0 0
        %651 = vmatprep.subr.bf16.mxu0 0
        %652 = vmatpush1.bf16.msra.mxu0 0
        %653 = vmatprep.subr.bf16.mxu0 0
        %654 = vmatpush1.bf16.msra.mxu0 0
        %655 = vmatprep.subr.bf16.mxu0 0
        %656 = vmatpush1.bf16.msra.mxu0 0
        %657 = vmatprep.mubr.bf16.mxu0 0
        %658 = vmatmul.mubr.bf16.gmra.mrb[0].mxu0 %v240
        %v659 = vpop.f32.mrb[0].mxu0
        %v660 = vadd.f32 0.0, %v659
        %v661 = vpop.f32.mrb[0].mxu0
        %v662 = vadd.f32 0.0, %v661
        %v663 = vpop.f32.mrb[0].mxu0
        %v664 = vadd.f32 0.0, %v663
        %v665 = vpop.f32.mrb[0].mxu0
        %v666 = vadd.f32 0.0, %v665
        %667 = vdwg.mxu0
        %668 = vmatprep.subr.bf16.mxu0 %v500
        %669 = vmatpush1.bf16.msra.mxu0 %v499
        %670 = vmatprep.subr.bf16.mxu0 %v508
        %671 = vmatpush1.bf16.msra.mxu0 %v507
        %672 = vmatprep.subr.bf16.mxu0 %v516
        %673 = vmatpush1.bf16.msra.mxu0 %v515
        %674 = vmatprep.subr.bf16.mxu0 %v524
        %675 = vmatpush1.bf16.msra.mxu0 %v523
        %676 = vmatprep.subr.bf16.mxu0 %v532
        %677 = vmatpush1.bf16.msra.mxu0 %v531
        %678 = vmatprep.subr.bf16.mxu0 %v540
        %679 = vmatpush1.bf16.msra.mxu0 %v539
        %680 = vmatprep.subr.bf16.mxu0 %v548
        %681 = vmatpush1.bf16.msra.mxu0 %v547
        %682 = vmatprep.subr.bf16.mxu0 %v556
        %683 = vmatpush1.bf16.msra.mxu0 %v555
        %684 = vmatprep.subr.bf16.mxu0 0
        %685 = vmatpush1.bf16.msra.mxu0 0
        %686 = vmatprep.subr.bf16.mxu0 0
        %687 = vmatpush1.bf16.msra.mxu0 0
        %688 = vmatprep.subr.bf16.mxu0 0
        %689 = vmatpush1.bf16.msra.mxu0 0
        %690 = vmatprep.subr.bf16.mxu0 0
        %691 = vmatpush1.bf16.msra.mxu0 0
        %692 = vmatprep.subr.bf16.mxu0 0
        %693 = vmatpush1.bf16.msra.mxu0 0
        %694 = vmatprep.subr.bf16.mxu0 0
        %695 = vmatpush1.bf16.msra.mxu0 0
        %696 = vmatprep.subr.bf16.mxu0 0
        %697 = vmatpush1.bf16.msra.mxu0 0
        %698 = vmatprep.subr.bf16.mxu0 0
        %699 = vmatpush1.bf16.msra.mxu0 0
        %700 = vmatprep.mubr.bf16.mxu0 0
        %701 = vmatmul.mubr.bf16.gmra.mrb[0].mxu0 %v240
        %v702 = vpop.f32.mrb[0].mxu0
        %v703 = vadd.f32 0.0, %v702
        %v704 = vpop.f32.mrb[0].mxu0
        %v705 = vadd.f32 0.0, %v704
        %v706 = vpop.f32.mrb[0].mxu0
        %v707 = vadd.f32 0.0, %v706
        %v708 = vpop.f32.mrb[0].mxu0
        %v709 = vadd.f32 0.0, %v708
        %710 = vdwg.mxu0
        %711 = vmatprep.subr.bf16.mxu0 %v502
        %712 = vmatpush1.bf16.msra.mxu0 %v501
        %713 = vmatprep.subr.bf16.mxu0 %v510
        %714 = vmatpush1.bf16.msra.mxu0 %v509
        %715 = vmatprep.subr.bf16.mxu0 %v518
        %716 = vmatpush1.bf16.msra.mxu0 %v517
        %717 = vmatprep.subr.bf16.mxu0 %v526
        %718 = vmatpush1.bf16.msra.mxu0 %v525
        %719 = vmatprep.subr.bf16.mxu0 %v534
        %720 = vmatpush1.bf16.msra.mxu0 %v533
        %721 = vmatprep.subr.bf16.mxu0 %v542
        %722 = vmatpush1.bf16.msra.mxu0 %v541
        %723 = vmatprep.subr.bf16.mxu0 %v550
        %724 = vmatpush1.bf16.msra.mxu0 %v549
        %725 = vmatprep.subr.bf16.mxu0 %v558
        %726 = vmatpush1.bf16.msra.mxu0 %v557
        %727 = vmatprep.subr.bf16.mxu0 0
        %728 = vmatpush1.bf16.msra.mxu0 0
        %729 = vmatprep.subr.bf16.mxu0 0
        %730 = vmatpush1.bf16.msra.mxu0 0
        %731 = vmatprep.subr.bf16.mxu0 0
        %732 = vmatpush1.bf16.msra.mxu0 0
        %733 = vmatprep.subr.bf16.mxu0 0
        %734 = vmatpush1.bf16.msra.mxu0 0
        %735 = vmatprep.subr.bf16.mxu0 0
        %736 = vmatpush1.bf16.msra.mxu0 0
        %737 = vmatprep.subr.bf16.mxu0 0
        %738 = vmatpush1.bf16.msra.mxu0 0
        %739 = vmatprep.subr.bf16.mxu0 0
        %740 = vmatpush1.bf16.msra.mxu0 0
        %741 = vmatprep.subr.bf16.mxu0 0
        %742 = vmatpush1.bf16.msra.mxu0 0
        %743 = vmatprep.mubr.bf16.mxu0 0
        %744 = vmatmul.mubr.bf16.gmra.mrb[0].mxu0 %v240
        %v745 = vpop.f32.mrb[0].mxu0
        %v746 = vadd.f32 0.0, %v745
        %v747 = vpop.f32.mrb[0].mxu0
        %v748 = vadd.f32 0.0, %v747
        %v749 = vpop.f32.mrb[0].mxu0
        %v750 = vadd.f32 0.0, %v749
        %v751 = vpop.f32.mrb[0].mxu0
        %v752 = vadd.f32 0.0, %v751
        %753 = vdwg.mxu0
        %754 = vmatprep.subr.bf16.mxu0 %v504
        %755 = vmatpush1.bf16.msra.mxu0 %v503
        %756 = vmatprep.subr.bf16.mxu0 %v512
        %757 = vmatpush1.bf16.msra.mxu0 %v511
        %758 = vmatprep.subr.bf16.mxu0 %v520
        %759 = vmatpush1.bf16.msra.mxu0 %v519
        %760 = vmatprep.subr.bf16.mxu0 %v528
        %761 = vmatpush1.bf16.msra.mxu0 %v527
        %762 = vmatprep.subr.bf16.mxu0 %v536
        %763 = vmatpush1.bf16.msra.mxu0 %v535
        %764 = vmatprep.subr.bf16.mxu0 %v544
        %765 = vmatpush1.bf16.msra.mxu0 %v543
        %766 = vmatprep.subr.bf16.mxu0 %v552
        %767 = vmatpush1.bf16.msra.mxu0 %v551
        %768 = vmatprep.subr.bf16.mxu0 %v560
        %769 = vmatpush1.bf16.msra.mxu0 %v559
        %770 = vmatprep.subr.bf16.mxu0 0
        %771 = vmatpush1.bf16.msra.mxu0 0
        %772 = vmatprep.subr.bf16.mxu0 0
        %773 = vmatpush1.bf16.msra.mxu0 0
        %774 = vmatprep.subr.bf16.mxu0 0
        %775 = vmatpush1.bf16.msra.mxu0 0
        %776 = vmatprep.subr.bf16.mxu0 0
        %777 = vmatpush1.bf16.msra.mxu0 0
        %778 = vmatprep.subr.bf16.mxu0 0
        %779 = vmatpush1.bf16.msra.mxu0 0
        %780 = vmatprep.subr.bf16.mxu0 0
        %781 = vmatpush1.bf16.msra.mxu0 0
        %782 = vmatprep.subr.bf16.mxu0 0
        %783 = vmatpush1.bf16.msra.mxu0 0
        %784 = vmatprep.subr.bf16.mxu0 0
        %785 = vmatpush1.bf16.msra.mxu0 0
        %786 = vmatprep.mubr.bf16.mxu0 0
        %787 = vmatmul.mubr.bf16.gmra.mrb[0].mxu0 %v240
        %v788 = vpop.f32.mrb[0].mxu0
        %v789 = vadd.f32 0.0, %v788
        %v790 = vpop.f32.mrb[0].mxu0
        %v791 = vadd.f32 0.0, %v790
        %v792 = vpop.f32.mrb[0].mxu0
        %v793 = vadd.f32 0.0, %v792
        %v794 = vpop.f32.mrb[0].mxu0
        %v795 = vadd.f32 0.0, %v794
        %796 = vdwg.mxu0
        %v797 = vadd.f32 %v660, %v664
        %v798 = vrot.slane %v797, 4
        %v799 = vadd.f32 %v797, %v798
        %v800 = vrot.slane %v799, 2
        %v801 = vadd.f32 %v799, %v800
        %v802 = vrot.slane %v801, 1
        %v803 = vadd.f32 %v801, %v802
        %v804 = vadd.f32 %v662, %v666
        %v805 = vrot.slane %v804, 4
        %v806 = vadd.f32 %v804, %v805
        %v807 = vrot.slane %v806, 2
        %v808 = vadd.f32 %v806, %v807
        %v809 = vrot.slane %v808, 1
        %v810 = vadd.f32 %v808, %v809
        %v811 = vadd.f32 %v703, %v707
        %v812 = vrot.slane %v811, 4
        %v813 = vadd.f32 %v811, %v812
        %v814 = vrot.slane %v813, 2
        %v815 = vadd.f32 %v813, %v814
        %v816 = vrot.slane %v815, 1
        %v817 = vadd.f32 %v815, %v816
        %v818 = vadd.f32 %v705, %v709
        %v819 = vrot.slane %v818, 4
        %v820 = vadd.f32 %v818, %v819
        %v821 = vrot.slane %v820, 2
        %v822 = vadd.f32 %v820, %v821
        %v823 = vrot.slane %v822, 1
        %v824 = vadd.f32 %v822, %v823
        %v825 = vadd.f32 %v746, %v750
        %v826 = vrot.slane %v825, 4
        %v827 = vadd.f32 %v825, %v826
        %v828 = vrot.slane %v827, 2
        %v829 = vadd.f32 %v827, %v828
        %v830 = vrot.slane %v829, 1
        %v831 = vadd.f32 %v829, %v830
        %v832 = vadd.f32 %v748, %v752
        %v833 = vrot.slane %v832, 4
        %v834 = vadd.f32 %v832, %v833
        %v835 = vrot.slane %v834, 2
        %v836 = vadd.f32 %v834, %v835
        %v837 = vrot.slane %v836, 1
        %v838 = vadd.f32 %v836, %v837
        %v839 = vadd.f32 %v789, %v793
        %v840 = vrot.slane %v839, 4
        %v841 = vadd.f32 %v839, %v840
        %v842 = vrot.slane %v841, 2
        %v843 = vadd.f32 %v841, %v842
        %v844 = vrot.slane %v843, 1
        %v845 = vadd.f32 %v843, %v844
        %v846 = vadd.f32 %v791, %v795
        %v847 = vrot.slane %v846, 4
        %v848 = vadd.f32 %v846, %v847
        %v849 = vrot.slane %v848, 2
        %v850 = vadd.f32 %v848, %v849
        %v851 = vrot.slane %v850, 1
        %v852 = vadd.f32 %v850, %v851
        %v853 = vmul.f32 %v660, %v660
        %v854 = vmul.f32 %v662, %v662
        %v855 = vmul.f32 %v703, %v703
        %v856 = vmul.f32 %v705, %v705
        %v857 = vmul.f32 %v746, %v746
        %v858 = vmul.f32 %v748, %v748
        %v859 = vmul.f32 %v789, %v789
        %v860 = vmul.f32 %v791, %v791
        %v861 = vmul.f32 %v664, %v664
        %v862 = vmul.f32 %v666, %v666
        %v863 = vmul.f32 %v707, %v707
        %v864 = vmul.f32 %v709, %v709
        %v865 = vmul.f32 %v750, %v750
        %v866 = vmul.f32 %v752, %v752
        %v867 = vmul.f32 %v793, %v793
        %v868 = vmul.f32 %v795, %v795
        %v869 = vadd.f32 %v853, %v861
        %v870 = vrot.slane %v869, 4
        %v871 = vadd.f32 %v869, %v870
        %v872 = vrot.slane %v871, 2
        %v873 = vadd.f32 %v871, %v872
        %v874 = vrot.slane %v873, 1
        %v875 = vadd.f32 %v873, %v874
        %v876 = vadd.f32 %v854, %v862
        %v877 = vrot.slane %v876, 4
        %v878 = vadd.f32 %v876, %v877
        %v879 = vrot.slane %v878, 2
        %v880 = vadd.f32 %v878, %v879
        %v881 = vrot.slane %v880, 1
        %v882 = vadd.f32 %v880, %v881
        %v883 = vadd.f32 %v855, %v863
        %v884 = vrot.slane %v883, 4
        %v885 = vadd.f32 %v883, %v884
        %v886 = vrot.slane %v885, 2
        %v887 = vadd.f32 %v885, %v886
        %v888 = vrot.slane %v887, 1
        %v889 = vadd.f32 %v887, %v888
        %v890 = vadd.f32 %v856, %v864
        %v891 = vrot.slane %v890, 4
        %v892 = vadd.f32 %v890, %v891
        %v893 = vrot.slane %v892, 2
        %v894 = vadd.f32 %v892, %v893
        %v895 = vrot.slane %v894, 1
        %v896 = vadd.f32 %v894, %v895
        %v897 = vadd.f32 %v857, %v865
        %v898 = vrot.slane %v897, 4
        %v899 = vadd.f32 %v897, %v898
        %v900 = vrot.slane %v899, 2
        %v901 = vadd.f32 %v899, %v900
        %v902 = vrot.slane %v901, 1
        %v903 = vadd.f32 %v901, %v902
        %v904 = vadd.f32 %v858, %v866
        %v905 = vrot.slane %v904, 4
        %v906 = vadd.f32 %v904, %v905
        %v907 = vrot.slane %v906, 2
        %v908 = vadd.f32 %v906, %v907
        %v909 = vrot.slane %v908, 1
        %v910 = vadd.f32 %v908, %v909
        %v911 = vadd.f32 %v859, %v867
        %v912 = vrot.slane %v911, 4
        %v913 = vadd.f32 %v911, %v912
        %v914 = vrot.slane %v913, 2
        %v915 = vadd.f32 %v913, %v914
        %v916 = vrot.slane %v915, 1
        %v917 = vadd.f32 %v915, %v916
        %v918 = vadd.f32 %v860, %v868
        %v919 = vrot.slane %v918, 4
        %v920 = vadd.f32 %v918, %v919
        %v921 = vrot.slane %v920, 2
        %v922 = vadd.f32 %v920, %v921
        %v923 = vrot.slane %v922, 1
        %v924 = vadd.f32 %v922, %v923
        %v925 = vmax.f32 %v660, %v664
        %v926 = vrot.slane %v925, 4
        %v927 = vmax.f32 %v925, %v926
        %v928 = vrot.slane %v927, 2
        %v929 = vmax.f32 %v927, %v928
        %v930 = vrot.slane %v929, 1
        %v931 = vmax.f32 %v929, %v930
        %v932 = vmax.f32 %v662, %v666
        %v933 = vrot.slane %v932, 4
        %v934 = vmax.f32 %v932, %v933
        %v935 = vrot.slane %v934, 2
        %v936 = vmax.f32 %v934, %v935
        %v937 = vrot.slane %v936, 1
        %v938 = vmax.f32 %v936, %v937
        %v939 = vmax.f32 %v703, %v707
        %v940 = vrot.slane %v939, 4
        %v941 = vmax.f32 %v939, %v940
        %v942 = vrot.slane %v941, 2
        %v943 = vmax.f32 %v941, %v942
        %v944 = vrot.slane %v943, 1
        %v945 = vmax.f32 %v943, %v944
        %v946 = vmax.f32 %v705, %v709
        %v947 = vrot.slane %v946, 4
        %v948 = vmax.f32 %v946, %v947
        %v949 = vrot.slane %v948, 2
        %v950 = vmax.f32 %v948, %v949
        %v951 = vrot.slane %v950, 1
        %v952 = vmax.f32 %v950, %v951
        %v953 = vmax.f32 %v746, %v750
        %v954 = vrot.slane %v953, 4
        %v955 = vmax.f32 %v953, %v954
        %v956 = vrot.slane %v955, 2
        %v957 = vmax.f32 %v955, %v956
        %v958 = vrot.slane %v957, 1
        %v959 = vmax.f32 %v957, %v958
        %v960 = vmax.f32 %v748, %v752
        %v961 = vrot.slane %v960, 4
        %v962 = vmax.f32 %v960, %v961
        %v963 = vrot.slane %v962, 2
        %v964 = vmax.f32 %v962, %v963
        %v965 = vrot.slane %v964, 1
        %v966 = vmax.f32 %v964, %v965
        %v967 = vmax.f32 %v789, %v793
        %v968 = vrot.slane %v967, 4
        %v969 = vmax.f32 %v967, %v968
        %v970 = vrot.slane %v969, 2
        %v971 = vmax.f32 %v969, %v970
        %v972 = vrot.slane %v971, 1
        %v973 = vmax.f32 %v971, %v972
        %v974 = vmax.f32 %v791, %v795
        %v975 = vrot.slane %v974, 4
        %v976 = vmax.f32 %v974, %v975
        %v977 = vrot.slane %v976, 2
        %v978 = vmax.f32 %v976, %v977
        %v979 = vrot.slane %v978, 1
        %v980 = vmax.f32 %v978, %v979
        %v981 = vmin.f32 %v660, %v664
        %v982 = vrot.slane %v981, 4
        %v983 = vmin.f32 %v981, %v982
        %v984 = vrot.slane %v983, 2
        %v985 = vmin.f32 %v983, %v984
        %v986 = vrot.slane %v985, 1
        %v987 = vmin.f32 %v985, %v986
        %v988 = vmin.f32 %v662, %v666
        %v989 = vrot.slane %v988, 4
        %v990 = vmin.f32 %v988, %v989
        %v991 = vrot.slane %v990, 2
        %v992 = vmin.f32 %v990, %v991
        %v993 = vrot.slane %v992, 1
        %v994 = vmin.f32 %v992, %v993
        %v995 = vmin.f32 %v703, %v707
        %v996 = vrot.slane %v995, 4
        %v997 = vmin.f32 %v995, %v996
        %v998 = vrot.slane %v997, 2
        %v999 = vmin.f32 %v997, %v998
        %v1000 = vrot.slane %v999, 1
        %v1001 = vmin.f32 %v999, %v1000
        %v1002 = vmin.f32 %v705, %v709
        %v1003 = vrot.slane %v1002, 4
        %v1004 = vmin.f32 %v1002, %v1003
        %v1005 = vrot.slane %v1004, 2
        %v1006 = vmin.f32 %v1004, %v1005
        %v1007 = vrot.slane %v1006, 1
        %v1008 = vmin.f32 %v1006, %v1007
        %v1009 = vmin.f32 %v746, %v750
        %v1010 = vrot.slane %v1009, 4
        %v1011 = vmin.f32 %v1009, %v1010
        %v1012 = vrot.slane %v1011, 2
        %v1013 = vmin.f32 %v1011, %v1012
        %v1014 = vrot.slane %v1013, 1
        %v1015 = vmin.f32 %v1013, %v1014
        %v1016 = vmin.f32 %v748, %v752
        %v1017 = vrot.slane %v1016, 4
        %v1018 = vmin.f32 %v1016, %v1017
        %v1019 = vrot.slane %v1018, 2
        %v1020 = vmin.f32 %v1018, %v1019
        %v1021 = vrot.slane %v1020, 1
        %v1022 = vmin.f32 %v1020, %v1021
        %v1023 = vmin.f32 %v789, %v793
        %v1024 = vrot.slane %v1023, 4
        %v1025 = vmin.f32 %v1023, %v1024
        %v1026 = vrot.slane %v1025, 2
        %v1027 = vmin.f32 %v1025, %v1026
        %v1028 = vrot.slane %v1027, 1
        %v1029 = vmin.f32 %v1027, %v1028
        %v1030 = vmin.f32 %v791, %v795
        %v1031 = vrot.slane %v1030, 4
        %v1032 = vmin.f32 %v1030, %v1031
        %v1033 = vrot.slane %v1032, 2
        %v1034 = vmin.f32 %v1032, %v1033
        %v1035 = vrot.slane %v1034, 1
        %v1036 = vmin.f32 %v1034, %v1035
        %v1037 = vlaneseq
        %v1038 = vshrl.u32 %v1037, 7
        %vm1039 = vcmp.eq.s32.totalorder %v1038, 0
        %vm1040 = vcmp.eq.s32.totalorder %v1038, 1
        %vm1041 = vcmp.eq.s32.totalorder %v1038, 2
        %v1042 = vsel %vm1041, %v931, %v987
        %v1043 = vsel %vm1041, %v938, %v994
        %v1044 = vsel %vm1041, %v945, %v1001
        %v1045 = vsel %vm1041, %v952, %v1008
        %v1046 = vsel %vm1041, %v959, %v1015
        %v1047 = vsel %vm1041, %v966, %v1022
        %v1048 = vsel %vm1041, %v973, %v1029
        %v1049 = vsel %vm1041, %v980, %v1036
        %v1050 = vsel %vm1040, %v875, %v1042
        %v1051 = vsel %vm1040, %v882, %v1043
        %v1052 = vsel %vm1040, %v889, %v1044
        %v1053 = vsel %vm1040, %v896, %v1045
        %v1054 = vsel %vm1040, %v903, %v1046
        %v1055 = vsel %vm1040, %v910, %v1047
        %v1056 = vsel %vm1040, %v917, %v1048
        %v1057 = vsel %vm1040, %v924, %v1049
        %v1058 = vsel %vm1039, %v803, %v1050
        %v1059 = vsel %vm1039, %v810, %v1051
        %v1060 = vsel %vm1039, %v817, %v1052
        %v1061 = vsel %vm1039, %v824, %v1053
        %v1062 = vsel %vm1039, %v831, %v1054
        %v1063 = vsel %vm1039, %v838, %v1055
        %v1064 = vsel %vm1039, %v845, %v1056
        %v1065 = vsel %vm1039, %v852, %v1057
        %1066 = vst [vmem:[%s214] sm:$0xff] %v1058
        %1067 = vst [vmem:[%s214 + $0x8] sm:$0xff] %v1059
        %1068 = vst [vmem:[%s214 + $0x10] sm:$0xff] %v1060
        %1069 = vst [vmem:[%s214 + $0x18] sm:$0xff] %v1061
        %1070 = vst [vmem:[%s214 + $0x20] sm:$0xff] %v1062
        %1071 = vst [vmem:[%s214 + $0x28] sm:$0xff] %v1063
        %1072 = vst [vmem:[%s214 + $0x30] sm:$0xff] %v1064
        %1073 = vst [vmem:[%s214 + $0x38] sm:$0xff] %v1065
        %p1074 = scmp.lt.s32.totalorder %s16, 1
        %s1075 = scalar_select %p1074, %s16, 1
        %s1076 = smul.addr %s1075, 8
        %s1077 = smul.addr %s1076, 8
        %s1078 = scalar_lea.vmem %s4, %s1077
        // Predicated region
        $region41: #{masknet_forward.15} parent=35 // pred_check
          %p1079 = pneg %p123
        $region42: #{masknet_forward.15} parent=35 // pred_check_branch
          %1081 = sbr.rel (%p1079) target = $region44
        $region43: #{masknet_forward.15} parent=35 // pred_region
          _
        $region44: #{masknet_forward.15} parent=35 // pred_fallthru
          _
      $region36: #{masknet_forward.15} parent=5 // pred_fallthru
        _
      %p1082 = scmp.le.s32.totalorder 2, %s11
      // Predicated region
      $region45: #{masknet_forward.15} parent=5 // pred_check
        %p1083 = pneg %p1082
      $region46: #{masknet_forward.15} parent=5 // pred_check_branch
        %1085 = sbr.rel (%p1083) target = $region48
      $region47: #{masknet_forward.15} parent=5 // pred_region
        %s1086 = ssub.s32 %s11, 2
        // Predicated region
        $region49: #{masknet_forward.15} parent=47 // pred_check
          %p1087 = pneg %p129
        $region50: #{masknet_forward.15} parent=47 // pred_check_branch
          %1089 = sbr.rel (%p1087) target = $region52
        $region51: #{masknet_forward.15} parent=47 // pred_region
          %p1090 = scmp.lt.s32.totalorder %s17, 1
          %s1091 = scalar_select %p1090, %s17, 1
          %s1092 = smul.addr %s1091, 8
          %s1093 = smul.addr %s1092, 8
          %s1094 = scalar_lea.vmem %s4, %s1093
        $region52: #{masknet_forward.15} parent=47 // pred_fallthru
          _
      $region48: #{masknet_forward.15} parent=5 // pred_fallthru
        _
    $region6: #{masknet_forward.15} parent=1 // loop_footer
      %s15 = sadd.s32 1, %s11
    $region7: #{masknet_forward.15} parent=1 // loop_footer_branch
      %10 = sbr.rel target = $region3
    $region8: #{masknet_forward.15} parent=1 // loop_exit
      _
    %1095 = vsyncpa [#allocation3], 1
    %s1096 = scalar_lea.sflag [#allocation3], 1
    %1097 = vsyncpa %s1096, 1

// kernel: squeeze.45
$region0: #{squeeze.45}
  %s0 = inlined_call_operand.vmem [shape: f32[32], index: 0, kind: input, shape index: {}]
  %s1 = inlined_call_operand.vmem [shape: f32[2,16], index: 1, kind: output, shape index: {}]
  $region1: #{squeeze.45} parent=0
    #allocation0 [shape = 'u8[4096]{0}', space=vmem, size = 0x1000, scoped, tag = 'scoped mem for output reshape']
    #allocation1 [shape = 'u8[4096]{0}', space=vmem, size = 0x1000, scoped, tag = 'scoped mem for input reshape']
    %s3 = sshllo.u32 0, 1
    %v4 = vld [vmem:[%s0] sm:%s3]
    %5 = vst [vmem:[#allocation1] sm:%s3] %v4
    %v6 = vld [vmem:[#allocation1] sm:$0x1]
    %vm7 = vcmask 130048
    %8 = vst.msk [vmem:[#allocation0] sm:$0x1] %vm7, %v6
    %v9 = vld [vmem:[#allocation1] sm:$0x1]
    %10 = vrot.lane.b32.xlu0 %v9, 112
    %v11 = vpop.permute.xlu0 %10
    %vm12 = vcmask 130048
    %s13 = scalar_lea.vmem [#allocation0], 1
    %14 = vst.msk [vmem:[%s13] sm:$0x1] %vm12, %v11
    %s16 = sshllo.u32 0, 2
    %v18 = vld [vmem:[#allocation0] sm:%s16]
    %s19 = sshllo.u32 0, 2
    %20 = vst [vmem:[%s1] sm:%s19] %v18

// kernel: masknet_forward.20
$region0: #{masknet_forward.20}
  #allocation0 [shape = 'u32[]', space=smem, size = 0x4, offset = 0x4, fixed_abs, tag = 'smem constant byte address 0x4 - core index']
  #allocation1 [shape = 'u32[144,128]{1,0:T(1,128)}', space=vmem, size = 0x12000, scoped, tag = 'internal scratch']
  %s0 = inlined_call_operand.vmem [shape: bf16[32,128], index: 0, kind: input, shape index: {}]
  %s1 = inlined_call_operand.vmem [shape: f32[1,128], index: 1, kind: input, shape index: {}]
  %s2 = inlined_call_operand.vmem [shape: f32[1,128], index: 2, kind: input, shape index: {}]
  %s3 = inlined_call_operand.hbm [shape: bf16[128,1024], index: 3, kind: input, shape index: {}]
  %s4 = inlined_call_operand.vmem [shape: bf16[32,1024], index: 4, kind: output, shape index: {0}]
  %s5 = inlined_call_operand.vmem [shape: f32[2,8,1024], index: 5, kind: output, shape index: {1}]
  %6 = xla_tuple %s4, %s5
  %s7 = sld [smem:[#allocation0]]
  $region61: #{masknet_forward.20} parent=0
    _
  %s9 = ssub.s32 1, %s7
  %s10 = scalar_select 0, %s9, %s7
  $region1: #{masknet_forward.20} parent=0
    #allocation2 [shape = 'u8[262144]{0}', space=vmem, size = 0x40000, scoped, tag = 'input window, operand 3, single buffered']
    #allocation3 [shape = 's32[2]{0}', space=sflag, size = 0x8, scoped, tag = 'scoped memory for masknet_forward.20']
    %11 = vsyncpa [#allocation3], 0
    loop: start=0, step=1, limit=4
    $region2: #{masknet_forward.20} parent=1 // loop_pre_header
      _
    $region3: #{masknet_forward.20} parent=1 // loop_header
      %s13 = sphi 0, %s17
      %p14 = scmp.ge.s32.totalorder %s13, 4
      %s23 = sphi 0, %s25
      %s26 = sphi 0, %s23
      %s27 = sphi 0, %s26
      %s43 = sphi 0, %s27
      %s47 = sphi 0, %s47
      %s49 = sphi 0, %s47
      %s50 = sphi 0, %s49
      %s64 = sphi 0, %s50
      %s68 = sphi 0, %s68
      %s70 = sphi 0, %s68
      %s71 = sphi 0, %s70
      %s85 = sphi 0, %s71
      %s89 = sphi 0, %s89
      %s91 = sphi 0, %s89
      %s92 = sphi 0, %s91
      %s106 = sphi 0, %s92
      %s112 = sphi 0, %s114
      %s115 = sphi 0, %s112
      %s116 = sphi 0, %s115
      %s132 = sphi 0, %s116
      %s138 = sphi 0, %s140
      %s141 = sphi 0, %s138
      %s142 = sphi 0, %s141
      %s158 = sphi 0, %s142
    $region4: #{masknet_forward.20} parent=1 // loop_header_branch
      %16 = sbr.rel (%p14) target = $region8
    $region5: #{masknet_forward.20} parent=1 // loop_body
      %s18 = ssub.s32 %s13, 1
      %s19 = ssub.s32 %s13, 2
      %s20 = sadd.s32 %s13, 1
      %s21 = ssub.s32 %s13, %s20
      %p22 = scmp.eq.s32.totalorder %s21, 0
      %s24 = sadd.s32 %s23, 1
      %s25 = scalar_select %p22, %s23, %s24
      %p28 = pneg %p22
      %p29 = scmp.eq.s32.totalorder %s13, 1
      %p30 = por %p28, %p29
      %p31 = scmp.ne.s32.totalorder %s23, %s26
      %p32 = scmp.eq.s32.totalorder %s13, 0
      %p33 = por %p31, %p32
      %p34 = scmp.ne.s32.totalorder %s23, %s26
      %p35 = scmp.eq.s32.totalorder %s18, 1
      %p36 = por %p34, %p35
      %p37 = scmp.ne.s32.totalorder %s26, %s27
      %p38 = scmp.eq.s32.totalorder %s18, 0
      %p39 = por %p37, %p38
      %p40 = scmp.ne.s32.totalorder %s26, %s27
      %p41 = scmp.eq.s32.totalorder %s19, 1
      %p42 = por %p40, %p41
      %p44 = scmp.ne.s32.totalorder %s27, %s43
      %p45 = scmp.eq.s32.totalorder %s19, 0
      %p46 = por %p44, %p45
      %s48 = sadd.s32 %s47, 1
      %p51 = scmp.eq.s32.totalorder %s13, 1
      %p52 = scmp.ne.s32.totalorder %s47, %s49
      %p53 = scmp.eq.s32.totalorder %s13, 0
      %p54 = por %p52, %p53
      %p55 = scmp.ne.s32.totalorder %s47, %s49
      %p56 = scmp.eq.s32.totalorder %s18, 1
      %p57 = por %p55, %p56
      %p58 = scmp.ne.s32.totalorder %s49, %s50
      %p59 = scmp.eq.s32.totalorder %s18, 0
      %p60 = por %p58, %p59
      %p61 = scmp.ne.s32.totalorder %s49, %s50
      %p62 = scmp.eq.s32.totalorder %s19, 1
      %p63 = por %p61, %p62
      %p65 = scmp.ne.s32.totalorder %s50, %s64
      %p66 = scmp.eq.s32.totalorder %s19, 0
      %p67 = por %p65, %p66
      %s69 = sadd.s32 %s68, 1
      %p72 = scmp.eq.s32.totalorder %s13, 1
      %p73 = scmp.ne.s32.totalorder %s68, %s70
      %p74 = scmp.eq.s32.totalorder %s13, 0
      %p75 = por %p73, %p74
      %p76 = scmp.ne.s32.totalorder %s68, %s70
      %p77 = scmp.eq.s32.totalorder %s18, 1
      %p78 = por %p76, %p77
      %p79 = scmp.ne.s32.totalorder %s70, %s71
      %p80 = scmp.eq.s32.totalorder %s18, 0
      %p81 = por %p79, %p80
      %p82 = scmp.ne.s32.totalorder %s70, %s71
      %p83 = scmp.eq.s32.totalorder %s19, 1
      %p84 = por %p82, %p83
      %p86 = scmp.ne.s32.totalorder %s71, %s85
      %p87 = scmp.eq.s32.totalorder %s19, 0
      %p88 = por %p86, %p87
      %s90 = sadd.s32 %s89, 1
      %p93 = scmp.eq.s32.totalorder %s13, 1
      %p94 = scmp.ne.s32.totalorder %s89, %s91
      %p95 = scmp.eq.s32.totalorder %s13, 0
      %p96 = por %p94, %p95
      %p97 = scmp.ne.s32.totalorder %s89, %s91
      %p98 = scmp.eq.s32.totalorder %s18, 1
      %p99 = por %p97, %p98
      %p100 = scmp.ne.s32.totalorder %s91, %s92
      %p101 = scmp.eq.s32.totalorder %s18, 0
      %p102 = por %p100, %p101
      %p103 = scmp.ne.s32.totalorder %s91, %s92
      %p104 = scmp.eq.s32.totalorder %s19, 1
      %p105 = por %p103, %p104
      %p107 = scmp.ne.s32.totalorder %s92, %s106
      %p108 = scmp.eq.s32.totalorder %s19, 0
      %p109 = por %p107, %p108
      %s110 = ssub.s32 %s13, %s20
      %p111 = scmp.eq.s32.totalorder %s110, 0
      %s113 = sadd.s32 %s112, 1
      %s114 = scalar_select %p111, %s112, %s113
      %p117 = pneg %p111
      %p118 = scmp.eq.s32.totalorder %s13, 1
      %p119 = por %p117, %p118
      %p120 = scmp.ne.s32.totalorder %s112, %s115
      %p121 = scmp.eq.s32.totalorder %s13, 0
      %p122 = por %p120, %p121
      %p123 = scmp.ne.s32.totalorder %s112, %s115
      %p124 = scmp.eq.s32.totalorder %s18, 1
      %p125 = por %p123, %p124
      %p126 = scmp.ne.s32.totalorder %s115, %s116
      %p127 = scmp.eq.s32.totalorder %s18, 0
      %p128 = por %p126, %p127
      %p129 = scmp.ne.s32.totalorder %s115, %s116
      %p130 = scmp.eq.s32.totalorder %s19, 1
      %p131 = por %p129, %p130
      %p133 = scmp.ne.s32.totalorder %s116, %s132
      %p134 = scmp.eq.s32.totalorder %s19, 0
      %p135 = por %p133, %p134
      %s136 = ssub.s32 %s13, %s20
      %p137 = scmp.eq.s32.totalorder %s136, 0
      %s139 = sadd.s32 %s138, 1
      %s140 = scalar_select %p137, %s138, %s139
      %p143 = pneg %p137
      %p144 = scmp.eq.s32.totalorder %s13, 1
      %p145 = por %p143, %p144
      %p146 = scmp.ne.s32.totalorder %s138, %s141
      %p147 = scmp.eq.s32.totalorder %s13, 0
      %p148 = por %p146, %p147
      %p149 = scmp.ne.s32.totalorder %s138, %s141
      %p150 = scmp.eq.s32.totalorder %s18, 1
      %p151 = por %p149, %p150
      %p152 = scmp.ne.s32.totalorder %s141, %s142
      %p153 = scmp.eq.s32.totalorder %s18, 0
      %p154 = por %p152, %p153
      %p155 = scmp.ne.s32.totalorder %s141, %s142
      %p156 = scmp.eq.s32.totalorder %s19, 1
      %p157 = por %p155, %p156
      %p159 = scmp.ne.s32.totalorder %s142, %s158
      %p160 = scmp.eq.s32.totalorder %s19, 0
      %p161 = por %p159, %p160
      %p162 = scmp.le.s32.totalorder 1, %s13
      %p163 = scmp.lt.s32.totalorder %s13, 3
      %p164 = pnand %p162, %p163
      %p165 = pneg %p164
      // Predicated region
      $region9: #{masknet_forward.20} parent=5 // pred_check
        _
      $region10: #{masknet_forward.20} parent=5 // pred_check_branch
        %167 = sbr.rel (%p164) target = $region12
      $region11: #{masknet_forward.20} parent=5 // pred_region
        %s168 = ssub.s32 %s13, 1
        // Predicated region
        $region13: #{masknet_forward.20} parent=11 // pred_check
          %p169 = pneg %p60
        $region14: #{masknet_forward.20} parent=11 // pred_check_branch
          %171 = sbr.rel (%p169) target = $region16
        $region15: #{masknet_forward.20} parent=11 // pred_region
          _
        $region16: #{masknet_forward.20} parent=11 // pred_fallthru
          _
        // Predicated region
        $region17: #{masknet_forward.20} parent=11 // pred_check
          %p172 = pneg %p81
        $region18: #{masknet_forward.20} parent=11 // pred_check_branch
          %174 = sbr.rel (%p172) target = $region20
        $region19: #{masknet_forward.20} parent=11 // pred_region
          _
        $region20: #{masknet_forward.20} parent=11 // pred_fallthru
          _
        // Predicated region
        $region21: #{masknet_forward.20} parent=11 // pred_check
          %p175 = pneg %p102
        $region22: #{masknet_forward.20} parent=11 // pred_check_branch
          %177 = sbr.rel (%p175) target = $region24
        $region23: #{masknet_forward.20} parent=11 // pred_region
          %s179 = ssub.s32 8192, 8192
          %180 = vsyncadd [#allocation3], %s179
          %s181 = sshll.u32 [#allocation2], 4
          %s182 = int_to_ptr.vmem [resolvable:$true] %s181
          %187 = dma.hbm_to_vmem [thread:$0]  %s3, 8192, %s182, [#allocation3], 512, 512, 32
        $region24: #{masknet_forward.20} parent=11 // pred_fallthru
          _
      $region12: #{masknet_forward.20} parent=5 // pred_fallthru
        _
      %p188 = scmp.lt.s32.totalorder %s13, 2
      // Predicated region
      $region25: #{masknet_forward.20} parent=5 // pred_check
        %p189 = pneg %p188
      $region26: #{masknet_forward.20} parent=5 // pred_check_branch
        %191 = sbr.rel (%p189) target = $region28
      $region27: #{masknet_forward.20} parent=5 // pred_region
        // Predicated region
        $region29: #{masknet_forward.20} parent=27 // pred_check
          %p192 = pneg %p33
        $region30: #{masknet_forward.20} parent=27 // pred_check_branch
          %194 = sbr.rel (%p192) target = $region32
        $region31: #{masknet_forward.20} parent=27 // pred_region
          %s195 = smul.u32 2, %s13
          %p196 = scmp.lt.s32.totalorder %s195, 3
          %s197 = scalar_select %p196, %s195, 3
          %s198 = smul.addr %s197, 4
          %s199 = scalar_lea.vmem %s0, %s198
          %s200 = smul.u32 2, %s13
        $region32: #{masknet_forward.20} parent=27 // pred_fallthru
          _
      $region28: #{masknet_forward.20} parent=5 // pred_fallthru
        _
      %p201 = scmp.le.s32.totalorder 1, %s13
      %p202 = scmp.lt.s32.totalorder %s13, 3
      %p203 = pnand %p201, %p202
      %p204 = pneg %p203
      // Predicated region
      $region33: #{masknet_forward.20} parent=5 // pred_check
        _
      $region34: #{masknet_forward.20} parent=5 // pred_check_branch
        %206 = sbr.rel (%p203) target = $region36
      $region35: #{masknet_forward.20} parent=5 // pred_region
        %s207 = ssub.s32 %s13, 1
        // Predicated region
        $region37: #{masknet_forward.20} parent=35 // pred_check
          %p208 = pneg %p102
        $region38: #{masknet_forward.20} parent=35 // pred_check_branch
          %210 = sbr.rel (%p208) target = $region40
        $region39: #{masknet_forward.20} parent=35 // pred_region
          %211 = dma.done [#allocation3], 8192
        $region40: #{masknet_forward.20} parent=35 // pred_fallthru
          _
        %s212 = smul.u32 2, %s18
        %p213 = scmp.lt.s32.totalorder %s212, 3
        %s214 = scalar_select %p213, %s212, 3
        %s215 = smul.addr %s214, 4
        %s216 = scalar_lea.vmem %s0, %s215
        %p217 = pneg %p39
        %p218 = pneg %p36
        %p219 = pneg %p60
        %p220 = pneg %p57
        %p221 = pneg %p81
        %p222 = pneg %p78
        %p223 = pneg %p102
        %p224 = pneg %p99
        %p225 = pneg %p128
        %p226 = pneg %p125
        %s227 = smul.u32 2, %s18
        %p228 = scmp.lt.s32.totalorder %s227, 3
        %s229 = scalar_select %p228, %s227, 3
        %s230 = smul.addr %s229, 8
        %s231 = smul.addr %s230, 4
        %s232 = scalar_lea.vmem %s4, %s231
        %p233 = pneg %p154
        %p234 = pneg %p151
        %p235 = scmp.lt.s32.totalorder %s18, 1
        %s236 = scalar_select %p235, %s18, 1
        %s237 = smul.addr %s236, 8
        %s238 = smul.addr %s237, 8
        %s239 = scalar_lea.vmem %s5, %s238
        %s240 = smul.u32 2, %s18
        %p241 = scmp.lt.s32.totalorder %s240, 3
        %s242 = scalar_select %p241, %s240, 3
        %s243 = smul.addr %s242, 4
        %s244 = scalar_lea.vmem %s0, %s243
        %s245 = smul.u32 2, %s18
        %s246 = smul.u32 2, %s18
        %p247 = scmp.lt.s32.totalorder %s246, 3
        %s248 = scalar_select %p247, %s246, 3
        %s249 = smul.addr %s248, 8
        %s250 = smul.addr %s249, 4
        %s251 = scalar_lea.vmem %s4, %s250
        %s252 = smul.u32 2, %s18
        %p253 = scmp.lt.s32.totalorder %s18, 1
        %s254 = scalar_select %p253, %s18, 1
        %s255 = smul.addr %s254, 8
        %s256 = smul.addr %s255, 8
        %s257 = scalar_lea.vmem %s5, %s256
        %v259 = vld [vmem:[%s244] sm:$0xf]
        %v260 = vld [vmem:[%s244 + $0x4] sm:$0xf]
        %v261 = vunpack.c.l.bf16 %v259
        %v262 = vunpack.c.l.bf16 %v260
        %v263 = vld [vmem:[%s1] sm:$0x1]
        %v265 = vlaneseq
        %v266 = vshrl.u32 %v265, 7
        %v267 = vsub.s32 0, %v266
        %v268 = vrot.slane %v263, %v267
        %v270 = vmul.f32 %v261, %v268
        %v271 = vmul.f32 %v262, %v268
        %v272 = vld [vmem:[%s2] sm:$0x1]
        %v274 = vlaneseq
        %v275 = vshrl.u32 %v274, 7
        %v276 = vsub.s32 0, %v275
        %v277 = vrot.slane %v272, %v276
        %v279 = vadd.f32 %v270, %v277
        %v280 = vadd.f32 %v271, %v277
        %v281 = vmax.f32 %v279, 0.0
        %v282 = vmax.f32 %v280, 0.0
        %v283 = vpack.c.bf16 %v282, %v281
        %v284 = vld [vmem:[#allocation2] sm:$0xff]
        %v285 = vld [vmem:[#allocation2 + $0x8] sm:$0xff]
        %v286 = vld [vmem:[#allocation2 + $0x10] sm:$0xff]
        %v287 = vld [vmem:[#allocation2 + $0x18] sm:$0xff]
        %v288 = vld [vmem:[#allocation2 + $0x20] sm:$0xff]
        %v289 = vld [vmem:[#allocation2 + $0x28] sm:$0xff]
        %v290 = vld [vmem:[#allocation2 + $0x30] sm:$0xff]
        %v291 = vld [vmem:[#allocation2 + $0x38] sm:$0xff]
        %v292 = vld [vmem:[#allocation2 + $0x40] sm:$0xff]
        %v293 = vld [vmem:[#allocation2 + $0x48] sm:$0xff]
        %v294 = vld [vmem:[#allocation2 + $0x50] sm:$0xff]
        %v295 = vld [vmem:[#allocation2 + $0x58] sm:$0xff]
        %v296 = vld [vmem:[#allocation2 + $0x60] sm:$0xff]
        %v297 = vld [vmem:[#allocation2 + $0x68] sm:$0xff]
        %v298 = vld [vmem:[#allocation2 + $0x70] sm:$0xff]
        %v299 = vld [vmem:[#allocation2 + $0x78] sm:$0xff]
        %v300 = vld [vmem:[#allocation2 + $0x80] sm:$0xff]
        %v301 = vld [vmem:[#allocation2 + $0x88] sm:$0xff]
        %v302 = vld [vmem:[#allocation2 + $0x90] sm:$0xff]
        %v303 = vld [vmem:[#allocation2 + $0x98] sm:$0xff]
        %v304 = vld [vmem:[#allocation2 + $0xa0] sm:$0xff]
        %v305 = vld [vmem:[#allocation2 + $0xa8] sm:$0xff]
        %v306 = vld [vmem:[#allocation2 + $0xb0] sm:$0xff]
        %v307 = vld [vmem:[#allocation2 + $0xb8] sm:$0xff]
        %v308 = vld [vmem:[#allocation2 + $0xc0] sm:$0xff]
        %v309 = vld [vmem:[#allocation2 + $0xc8] sm:$0xff]
        %v310 = vld [vmem:[#allocation2 + $0xd0] sm:$0xff]
        %v311 = vld [vmem:[#allocation2 + $0xd8] sm:$0xff]
        %v312 = vld [vmem:[#allocation2 + $0xe0] sm:$0xff]
        %v313 = vld [vmem:[#allocation2 + $0xe8] sm:$0xff]
        %v314 = vld [vmem:[#allocation2 + $0xf0] sm:$0xff]
        %v315 = vld [vmem:[#allocation2 + $0xf8] sm:$0xff]
        %v316 = vld [vmem:[#allocation2 + $0x100] sm:$0xff]
        %v317 = vld [vmem:[#allocation2 + $0x108] sm:$0xff]
        %v318 = vld [vmem:[#allocation2 + $0x110] sm:$0xff]
        %v319 = vld [vmem:[#allocation2 + $0x118] sm:$0xff]
        %v320 = vld [vmem:[#allocation2 + $0x120] sm:$0xff]
        %v321 = vld [vmem:[#allocation2 + $0x128] sm:$0xff]
        %v322 = vld [vmem:[#allocation2 + $0x130] sm:$0xff]
        %v323 = vld [vmem:[#allocation2 + $0x138] sm:$0xff]
        %v324 = vld [vmem:[#allocation2 + $0x140] sm:$0xff]
        %v325 = vld [vmem:[#allocation2 + $0x148] sm:$0xff]
        %v326 = vld [vmem:[#allocation2 + $0x150] sm:$0xff]
        %v327 = vld [vmem:[#allocation2 + $0x158] sm:$0xff]
        %v328 = vld [vmem:[#allocation2 + $0x160] sm:$0xff]
        %v329 = vld [vmem:[#allocation2 + $0x168] sm:$0xff]
        %v330 = vld [vmem:[#allocation2 + $0x170] sm:$0xff]
        %v331 = vld [vmem:[#allocation2 + $0x178] sm:$0xff]
        %v332 = vld [vmem:[#allocation2 + $0x180] sm:$0xff]
        %v333 = vld [vmem:[#allocation2 + $0x188] sm:$0xff]
        %v334 = vld [vmem:[#allocation2 + $0x190] sm:$0xff]
        %v335 = vld [vmem:[#allocation2 + $0x198] sm:$0xff]
        %v336 = vld [vmem:[#allocation2 + $0x1a0] sm:$0xff]
        %v337 = vld [vmem:[#allocation2 + $0x1a8] sm:$0xff]
        %v338 = vld [vmem:[#allocation2 + $0x1b0] sm:$0xff]
        %v339 = vld [vmem:[#allocation2 + $0x1b8] sm:$0xff]
        %v340 = vld [vmem:[#allocation2 + $0x1c0] sm:$0xff]
        %v341 = vld [vmem:[#allocation2 + $0x1c8] sm:$0xff]
        %v342 = vld [vmem:[#allocation2 + $0x1d0] sm:$0xff]
        %v343 = vld [vmem:[#allocation2 + $0x1d8] sm:$0xff]
        %v344 = vld [vmem:[#allocation2 + $0x1e0] sm:$0xff]
        %v345 = vld [vmem:[#allocation2 + $0x1e8] sm:$0xff]
        %v346 = vld [vmem:[#allocation2 + $0x1f0] sm:$0xff]
        %v347 = vld [vmem:[#allocation2 + $0x1f8] sm:$0xff]
        %v412 = vunpack.c.l.b16 %v284
        %v413 = vunpack.c.h.b16 %v284
        %v414 = vunpack.c.l.b16 %v285
        %v415 = vunpack.c.h.b16 %v285
        %v416 = vunpack.c.l.b16 %v286
        %v417 = vunpack.c.h.b16 %v286
        %v418 = vunpack.c.l.b16 %v287
        %v419 = vunpack.c.h.b16 %v287
        %v420 = vunpack.c.l.b16 %v288
        %v421 = vunpack.c.h.b16 %v288
        %v422 = vunpack.c.l.b16 %v289
        %v423 = vunpack.c.h.b16 %v289
        %v424 = vunpack.c.l.b16 %v290
        %v425 = vunpack.c.h.b16 %v290
        %v426 = vunpack.c.l.b16 %v291
        %v427 = vunpack.c.h.b16 %v291
        %v428 = vunpack.c.l.b16 %v292
        %v429 = vunpack.c.h.b16 %v292
        %v430 = vunpack.c.l.b16 %v293
        %v431 = vunpack.c.h.b16 %v293
        %v432 = vunpack.c.l.b16 %v294
        %v433 = vunpack.c.h.b16 %v294
        %v434 = vunpack.c.l.b16 %v295
        %v435 = vunpack.c.h.b16 %v295
        %v436 = vunpack.c.l.b16 %v296
        %v437 = vunpack.c.h.b16 %v296
        %v438 = vunpack.c.l.b16 %v297
        %v439 = vunpack.c.h.b16 %v297
        %v440 = vunpack.c.l.b16 %v298
        %v441 = vunpack.c.h.b16 %v298
        %v442 = vunpack.c.l.b16 %v299
        %v443 = vunpack.c.h.b16 %v299
        %v444 = vunpack.c.l.b16 %v300
        %v445 = vunpack.c.h.b16 %v300
        %v446 = vunpack.c.l.b16 %v301
        %v447 = vunpack.c.h.b16 %v301
        %v448 = vunpack.c.l.b16 %v302
        %v449 = vunpack.c.h.b16 %v302
        %v450 = vunpack.c.l.b16 %v303
        %v451 = vunpack.c.h.b16 %v303
        %v452 = vunpack.c.l.b16 %v304
        %v453 = vunpack.c.h.b16 %v304
        %v454 = vunpack.c.l.b16 %v305
        %v455 = vunpack.c.h.b16 %v305
        %v456 = vunpack.c.l.b16 %v306
        %v457 = vunpack.c.h.b16 %v306
        %v458 = vunpack.c.l.b16 %v307
        %v459 = vunpack.c.h.b16 %v307
        %v460 = vunpack.c.l.b16 %v308
        %v461 = vunpack.c.h.b16 %v308
        %v462 = vunpack.c.l.b16 %v309
        %v463 = vunpack.c.h.b16 %v309
        %v464 = vunpack.c.l.b16 %v310
        %v465 = vunpack.c.h.b16 %v310
        %v466 = vunpack.c.l.b16 %v311
        %v467 = vunpack.c.h.b16 %v311
        %v468 = vunpack.c.l.b16 %v312
        %v469 = vunpack.c.h.b16 %v312
        %v470 = vunpack.c.l.b16 %v313
        %v471 = vunpack.c.h.b16 %v313
        %v472 = vunpack.c.l.b16 %v314
        %v473 = vunpack.c.h.b16 %v314
        %v474 = vunpack.c.l.b16 %v315
        %v475 = vunpack.c.h.b16 %v315
        %v476 = vunpack.c.l.b16 %v316
        %v477 = vunpack.c.h.b16 %v316
        %v478 = vunpack.c.l.b16 %v317
        %v479 = vunpack.c.h.b16 %v317
        %v480 = vunpack.c.l.b16 %v318
        %v481 = vunpack.c.h.b16 %v318
        %v482 = vunpack.c.l.b16 %v319
        %v483 = vunpack.c.h.b16 %v319
        %v484 = vunpack.c.l.b16 %v320
        %v485 = vunpack.c.h.b16 %v320
        %v486 = vunpack.c.l.b16 %v321
        %v487 = vunpack.c.h.b16 %v321
        %v488 = vunpack.c.l.b16 %v322
        %v489 = vunpack.c.h.b16 %v322
        %v490 = vunpack.c.l.b16 %v323
        %v491 = vunpack.c.h.b16 %v323
        %v492 = vunpack.c.l.b16 %v324
        %v493 = vunpack.c.h.b16 %v324
        %v494 = vunpack.c.l.b16 %v325
        %v495 = vunpack.c.h.b16 %v325
        %v496 = vunpack.c.l.b16 %v326
        %v497 = vunpack.c.h.b16 %v326
        %v498 = vunpack.c.l.b16 %v327
        %v499 = vunpack.c.h.b16 %v327
        %v500 = vunpack.c.l.b16 %v328
        %v501 = vunpack.c.h.b16 %v328
        %v502 = vunpack.c.l.b16 %v329
        %v503 = vunpack.c.h.b16 %v329
        %v504 = vunpack.c.l.b16 %v330
        %v505 = vunpack.c.h.b16 %v330
        %v506 = vunpack.c.l.b16 %v331
        %v507 = vunpack.c.h.b16 %v331
        %v508 = vunpack.c.l.b16 %v332
        %v509 = vunpack.c.h.b16 %v332
        %v510 = vunpack.c.l.b16 %v333
        %v511 = vunpack.c.h.b16 %v333
        %v512 = vunpack.c.l.b16 %v334
        %v513 = vunpack.c.h.b16 %v334
        %v514 = vunpack.c.l.b16 %v335
        %v515 = vunpack.c.h.b16 %v335
        %v516 = vunpack.c.l.b16 %v336
        %v517 = vunpack.c.h.b16 %v336
        %v518 = vunpack.c.l.b16 %v337
        %v519 = vunpack.c.h.b16 %v337
        %v520 = vunpack.c.l.b16 %v338
        %v521 = vunpack.c.h.b16 %v338
        %v522 = vunpack.c.l.b16 %v339
        %v523 = vunpack.c.h.b16 %v339
        %v524 = vunpack.c.l.b16 %v340
        %v525 = vunpack.c.h.b16 %v340
        %v526 = vunpack.c.l.b16 %v341
        %v527 = vunpack.c.h.b16 %v341
        %v528 = vunpack.c.l.b16 %v342
        %v529 = vunpack.c.h.b16 %v342
        %v530 = vunpack.c.l.b16 %v343
        %v531 = vunpack.c.h.b16 %v343
        %v532 = vunpack.c.l.b16 %v344
        %v533 = vunpack.c.h.b16 %v344
        %v534 = vunpack.c.l.b16 %v345
        %v535 = vunpack.c.h.b16 %v345
        %v536 = vunpack.c.l.b16 %v346
        %v537 = vunpack.c.h.b16 %v346
        %v538 = vunpack.c.l.b16 %v347
        %v539 = vunpack.c.h.b16 %v347
        %v540 = vpack.c.b16 %v420, %v412
        %v541 = vpack.c.b16 %v421, %v413
        %v542 = vpack.c.b16 %v422, %v414
        %v543 = vpack.c.b16 %v423, %v415
        %v544 = vpack.c.b16 %v424, %v416
        %v545 = vpack.c.b16 %v425, %v417
        %v546 = vpack.c.b16 %v426, %v418
        %v547 = vpack.c.b16 %v427, %v419
        %v548 = vpack.c.b16 %v436, %v428
        %v549 = vpack.c.b16 %v437, %v429
        %v550 = vpack.c.b16 %v438, %v430
        %v551 = vpack.c.b16 %v439, %v431
        %v552 = vpack.c.b16 %v440, %v432
        %v553 = vpack.c.b16 %v441, %v433
        %v554 = vpack.c.b16 %v442, %v434
        %v555 = vpack.c.b16 %v443, %v435
        %v556 = vpack.c.b16 %v452, %v444
        %v557 = vpack.c.b16 %v453, %v445
        %v558 = vpack.c.b16 %v454, %v446
        %v559 = vpack.c.b16 %v455, %v447
        %v560 = vpack.c.b16 %v456, %v448
        %v561 = vpack.c.b16 %v457, %v449
        %v562 = vpack.c.b16 %v458, %v450
        %v563 = vpack.c.b16 %v459, %v451
        %v564 = vpack.c.b16 %v468, %v460
        %v565 = vpack.c.b16 %v469, %v461
        %v566 = vpack.c.b16 %v470, %v462
        %v567 = vpack.c.b16 %v471, %v463
        %v568 = vpack.c.b16 %v472, %v464
        %v569 = vpack.c.b16 %v473, %v465
        %v570 = vpack.c.b16 %v474, %v466
        %v571 = vpack.c.b16 %v475, %v467
        %v572 = vpack.c.b16 %v484, %v476
        %v573 = vpack.c.b16 %v485, %v477
        %v574 = vpack.c.b16 %v486, %v478
        %v575 = vpack.c.b16 %v487, %v479
        %v576 = vpack.c.b16 %v488, %v480
        %v577 = vpack.c.b16 %v489, %v481
        %v578 = vpack.c.b16 %v490, %v482
        %v579 = vpack.c.b16 %v491, %v483
        %v580 = vpack.c.b16 %v500, %v492
        %v581 = vpack.c.b16 %v501, %v493
        %v582 = vpack.c.b16 %v502, %v494
        %v583 = vpack.c.b16 %v503, %v495
        %v584 = vpack.c.b16 %v504, %v496
        %v585 = vpack.c.b16 %v505, %v497
        %v586 = vpack.c.b16 %v506, %v498
        %v587 = vpack.c.b16 %v507, %v499
        %v588 = vpack.c.b16 %v516, %v508
        %v589 = vpack.c.b16 %v517, %v509
        %v590 = vpack.c.b16 %v518, %v510
        %v591 = vpack.c.b16 %v519, %v511
        %v592 = vpack.c.b16 %v520, %v512
        %v593 = vpack.c.b16 %v521, %v513
        %v594 = vpack.c.b16 %v522, %v514
        %v595 = vpack.c.b16 %v523, %v515
        %v596 = vpack.c.b16 %v532, %v524
        %v597 = vpack.c.b16 %v533, %v525
        %v598 = vpack.c.b16 %v534, %v526
        %v599 = vpack.c.b16 %v535, %v527
        %v600 = vpack.c.b16 %v536, %v528
        %v601 = vpack.c.b16 %v537, %v529
        %v602 = vpack.c.b16 %v538, %v530
        %v603 = vpack.c.b16 %v539, %v531
        %668 = vmatprep.subr.bf16.mxu0 %v541
        %669 = vmatpush1.bf16.msra.mxu0 %v540
        %670 = vmatprep.subr.bf16.mxu0 %v549
        %671 = vmatpush1.bf16.msra.mxu0 %v548
        %672 = vmatprep.subr.bf16.mxu0 %v557
        %673 = vmatpush1.bf16.msra.mxu0 %v556
        %674 = vmatprep.subr.bf16.mxu0 %v565
        %675 = vmatpush1.bf16.msra.mxu0 %v564
        %676 = vmatprep.subr.bf16.mxu0 %v573
        %677 = vmatpush1.bf16.msra.mxu0 %v572
        %678 = vmatprep.subr.bf16.mxu0 %v581
        %679 = vmatpush1.bf16.msra.mxu0 %v580
        %680 = vmatprep.subr.bf16.mxu0 %v589
        %681 = vmatpush1.bf16.msra.mxu0 %v588
        %682 = vmatprep.subr.bf16.mxu0 %v597
        %683 = vmatpush1.bf16.msra.mxu0 %v596
        %684 = vmatprep.subr.bf16.mxu0 0
        %685 = vmatpush1.bf16.msra.mxu0 0
        %686 = vmatprep.subr.bf16.mxu0 0
        %687 = vmatpush1.bf16.msra.mxu0 0
        %688 = vmatprep.subr.bf16.mxu0 0
        %689 = vmatpush1.bf16.msra.mxu0 0
        %690 = vmatprep.subr.bf16.mxu0 0
        %691 = vmatpush1.bf16.msra.mxu0 0
        %692 = vmatprep.subr.bf16.mxu0 0
        %693 = vmatpush1.bf16.msra.mxu0 0
        %694 = vmatprep.subr.bf16.mxu0 0
        %695 = vmatpush1.bf16.msra.mxu0 0
        %696 = vmatprep.subr.bf16.mxu0 0
        %697 = vmatpush1.bf16.msra.mxu0 0
        %698 = vmatprep.subr.bf16.mxu0 0
        %699 = vmatpush1.bf16.msra.mxu0 0
        %700 = vmatprep.mubr.bf16.mxu0 0
        %701 = vmatmul.mubr.bf16.gmra.mrb[0].mxu0 %v283
        %v702 = vpop.f32.mrb[0].mxu0
        %v703 = vadd.f32 0.0, %v702
        %v704 = vpop.f32.mrb[0].mxu0
        %v705 = vadd.f32 0.0, %v704
        %v706 = vpop.f32.mrb[0].mxu0
        %v707 = vadd.f32 0.0, %v706
        %v708 = vpop.f32.mrb[0].mxu0
        %v709 = vadd.f32 0.0, %v708
        %710 = vdwg.mxu0
        %711 = vmatprep.subr.bf16.mxu0 %v543
        %712 = vmatpush1.bf16.msra.mxu0 %v542
        %713 = vmatprep.subr.bf16.mxu0 %v551
        %714 = vmatpush1.bf16.msra.mxu0 %v550
        %715 = vmatprep.subr.bf16.mxu0 %v559
        %716 = vmatpush1.bf16.msra.mxu0 %v558
        %717 = vmatprep.subr.bf16.mxu0 %v567
        %718 = vmatpush1.bf16.msra.mxu0 %v566
        %719 = vmatprep.subr.bf16.mxu0 %v575
        %720 = vmatpush1.bf16.msra.mxu0 %v574
        %721 = vmatprep.subr.bf16.mxu0 %v583
        %722 = vmatpush1.bf16.msra.mxu0 %v582
        %723 = vmatprep.subr.bf16.mxu0 %v591
        %724 = vmatpush1.bf16.msra.mxu0 %v590
        %725 = vmatprep.subr.bf16.mxu0 %v599
        %726 = vmatpush1.bf16.msra.mxu0 %v598
        %727 = vmatprep.subr.bf16.mxu0 0
        %728 = vmatpush1.bf16.msra.mxu0 0
        %729 = vmatprep.subr.bf16.mxu0 0
        %730 = vmatpush1.bf16.msra.mxu0 0
        %731 = vmatprep.subr.bf16.mxu0 0
        %732 = vmatpush1.bf16.msra.mxu0 0
        %733 = vmatprep.subr.bf16.mxu0 0
        %734 = vmatpush1.bf16.msra.mxu0 0
        %735 = vmatprep.subr.bf16.mxu0 0
        %736 = vmatpush1.bf16.msra.mxu0 0
        %737 = vmatprep.subr.bf16.mxu0 0
        %738 = vmatpush1.bf16.msra.mxu0 0
        %739 = vmatprep.subr.bf16.mxu0 0
        %740 = vmatpush1.bf16.msra.mxu0 0
        %741 = vmatprep.subr.bf16.mxu0 0
        %742 = vmatpush1.bf16.msra.mxu0 0
        %743 = vmatprep.mubr.bf16.mxu0 0
        %744 = vmatmul.mubr.bf16.gmra.mrb[0].mxu0 %v283
        %v745 = vpop.f32.mrb[0].mxu0
        %v746 = vadd.f32 0.0, %v745
        %v747 = vpop.f32.mrb[0].mxu0
        %v748 = vadd.f32 0.0, %v747
        %v749 = vpop.f32.mrb[0].mxu0
        %v750 = vadd.f32 0.0, %v749
        %v751 = vpop.f32.mrb[0].mxu0
        %v752 = vadd.f32 0.0, %v751
        %753 = vdwg.mxu0
        %754 = vmatprep.subr.bf16.mxu0 %v545
        %755 = vmatpush1.bf16.msra.mxu0 %v544
        %756 = vmatprep.subr.bf16.mxu0 %v553
        %757 = vmatpush1.bf16.msra.mxu0 %v552
        %758 = vmatprep.subr.bf16.mxu0 %v561
        %759 = vmatpush1.bf16.msra.mxu0 %v560
        %760 = vmatprep.subr.bf16.mxu0 %v569
        %761 = vmatpush1.bf16.msra.mxu0 %v568
        %762 = vmatprep.subr.bf16.mxu0 %v577
        %763 = vmatpush1.bf16.msra.mxu0 %v576
        %764 = vmatprep.subr.bf16.mxu0 %v585
        %765 = vmatpush1.bf16.msra.mxu0 %v584
        %766 = vmatprep.subr.bf16.mxu0 %v593
        %767 = vmatpush1.bf16.msra.mxu0 %v592
        %768 = vmatprep.subr.bf16.mxu0 %v601
        %769 = vmatpush1.bf16.msra.mxu0 %v600
        %770 = vmatprep.subr.bf16.mxu0 0
        %771 = vmatpush1.bf16.msra.mxu0 0
        %772 = vmatprep.subr.bf16.mxu0 0
        %773 = vmatpush1.bf16.msra.mxu0 0
        %774 = vmatprep.subr.bf16.mxu0 0
        %775 = vmatpush1.bf16.msra.mxu0 0
        %776 = vmatprep.subr.bf16.mxu0 0
        %777 = vmatpush1.bf16.msra.mxu0 0
        %778 = vmatprep.subr.bf16.mxu0 0
        %779 = vmatpush1.bf16.msra.mxu0 0
        %780 = vmatprep.subr.bf16.mxu0 0
        %781 = vmatpush1.bf16.msra.mxu0 0
        %782 = vmatprep.subr.bf16.mxu0 0
        %783 = vmatpush1.bf16.msra.mxu0 0
        %784 = vmatprep.subr.bf16.mxu0 0
        %785 = vmatpush1.bf16.msra.mxu0 0
        %786 = vmatprep.mubr.bf16.mxu0 0
        %787 = vmatmul.mubr.bf16.gmra.mrb[0].mxu0 %v283
        %v788 = vpop.f32.mrb[0].mxu0
        %v789 = vadd.f32 0.0, %v788
        %v790 = vpop.f32.mrb[0].mxu0
        %v791 = vadd.f32 0.0, %v790
        %v792 = vpop.f32.mrb[0].mxu0
        %v793 = vadd.f32 0.0, %v792
        %v794 = vpop.f32.mrb[0].mxu0
        %v795 = vadd.f32 0.0, %v794
        %796 = vdwg.mxu0
        %797 = vmatprep.subr.bf16.mxu0 %v547
        %798 = vmatpush1.bf16.msra.mxu0 %v546
        %799 = vmatprep.subr.bf16.mxu0 %v555
        %800 = vmatpush1.bf16.msra.mxu0 %v554
        %801 = vmatprep.subr.bf16.mxu0 %v563
        %802 = vmatpush1.bf16.msra.mxu0 %v562
        %803 = vmatprep.subr.bf16.mxu0 %v571
        %804 = vmatpush1.bf16.msra.mxu0 %v570
        %805 = vmatprep.subr.bf16.mxu0 %v579
        %806 = vmatpush1.bf16.msra.mxu0 %v578
        %807 = vmatprep.subr.bf16.mxu0 %v587
        %808 = vmatpush1.bf16.msra.mxu0 %v586
        %809 = vmatprep.subr.bf16.mxu0 %v595
        %810 = vmatpush1.bf16.msra.mxu0 %v594
        %811 = vmatprep.subr.bf16.mxu0 %v603
        %812 = vmatpush1.bf16.msra.mxu0 %v602
        %813 = vmatprep.subr.bf16.mxu0 0
        %814 = vmatpush1.bf16.msra.mxu0 0
        %815 = vmatprep.subr.bf16.mxu0 0
        %816 = vmatpush1.bf16.msra.mxu0 0
        %817 = vmatprep.subr.bf16.mxu0 0
        %818 = vmatpush1.bf16.msra.mxu0 0
        %819 = vmatprep.subr.bf16.mxu0 0
        %820 = vmatpush1.bf16.msra.mxu0 0
        %821 = vmatprep.subr.bf16.mxu0 0
        %822 = vmatpush1.bf16.msra.mxu0 0
        %823 = vmatprep.subr.bf16.mxu0 0
        %824 = vmatpush1.bf16.msra.mxu0 0
        %825 = vmatprep.subr.bf16.mxu0 0
        %826 = vmatpush1.bf16.msra.mxu0 0
        %827 = vmatprep.subr.bf16.mxu0 0
        %828 = vmatpush1.bf16.msra.mxu0 0
        %829 = vmatprep.mubr.bf16.mxu0 0
        %830 = vmatmul.mubr.bf16.gmra.mrb[0].mxu0 %v283
        %v831 = vpop.f32.mrb[0].mxu0
        %v832 = vadd.f32 0.0, %v831
        %v833 = vpop.f32.mrb[0].mxu0
        %v834 = vadd.f32 0.0, %v833
        %v835 = vpop.f32.mrb[0].mxu0
        %v836 = vadd.f32 0.0, %v835
        %v837 = vpop.f32.mrb[0].mxu0
        %v838 = vadd.f32 0.0, %v837
        %839 = vdwg.mxu0
        %v840 = vpack.c.bf16 %v707, %v703
        %v841 = vpack.c.bf16 %v709, %v705
        %v842 = vpack.c.bf16 %v750, %v746
        %v843 = vpack.c.bf16 %v752, %v748
        %v844 = vpack.c.bf16 %v793, %v789
        %v845 = vpack.c.bf16 %v795, %v791
        %v846 = vpack.c.bf16 %v836, %v832
        %v847 = vpack.c.bf16 %v838, %v834
        %v856 = vunpack.c.l.b16 %v840
        %v857 = vunpack.c.l.b16 %v841
        %v858 = vunpack.c.l.b16 %v842
        %v859 = vunpack.c.l.b16 %v843
        %v860 = vunpack.c.l.b16 %v844
        %v861 = vunpack.c.l.b16 %v845
        %v862 = vunpack.c.l.b16 %v846
        %v863 = vunpack.c.l.b16 %v847
        %v864 = vunpack.c.h.b16 %v840
        %v865 = vunpack.c.h.b16 %v841
        %v866 = vunpack.c.h.b16 %v842
        %v867 = vunpack.c.h.b16 %v843
        %v868 = vunpack.c.h.b16 %v844
        %v869 = vunpack.c.h.b16 %v845
        %v870 = vunpack.c.h.b16 %v846
        %v871 = vunpack.c.h.b16 %v847
        %v872 = vpack.c.b16 %v857, %v856
        %v873 = vpack.c.b16 %v859, %v858
        %v874 = vpack.c.b16 %v861, %v860
        %v875 = vpack.c.b16 %v863, %v862
        %v876 = vpack.c.b16 %v865, %v864
        %v877 = vpack.c.b16 %v867, %v866
        %v878 = vpack.c.b16 %v869, %v868
        %v879 = vpack.c.b16 %v871, %v870
        %888 = vst [vmem:[%s251] sm:$0xff] %v872
        %889 = vst [vmem:[%s251 + $0x8] sm:$0xff] %v873
        %890 = vst [vmem:[%s251 + $0x10] sm:$0xff] %v874
        %891 = vst [vmem:[%s251 + $0x18] sm:$0xff] %v875
        %892 = vst [vmem:[%s251 + $0x20] sm:$0xff] %v876
        %893 = vst [vmem:[%s251 + $0x28] sm:$0xff] %v877
        %894 = vst [vmem:[%s251 + $0x30] sm:$0xff] %v878
        %895 = vst [vmem:[%s251 + $0x38] sm:$0xff] %v879
        %v896 = vadd.f32 %v703, %v707
        %v897 = vrot.slane %v896, 4
        %v898 = vadd.f32 %v896, %v897
        %v899 = vrot.slane %v898, 2
        %v900 = vadd.f32 %v898, %v899
        %v901 = vrot.slane %v900, 1
        %v902 = vadd.f32 %v900, %v901
        %v903 = vadd.f32 %v705, %v709
        %v904 = vrot.slane %v903, 4
        %v905 = vadd.f32 %v903, %v904
        %v906 = vrot.slane %v905, 2
        %v907 = vadd.f32 %v905, %v906
        %v908 = vrot.slane %v907, 1
        %v909 = vadd.f32 %v907, %v908
        %v910 = vadd.f32 %v746, %v750
        %v911 = vrot.slane %v910, 4
        %v912 = vadd.f32 %v910, %v911
        %v913 = vrot.slane %v912, 2
        %v914 = vadd.f32 %v912, %v913
        %v915 = vrot.slane %v914, 1
        %v916 = vadd.f32 %v914, %v915
        %v917 = vadd.f32 %v748, %v752
        %v918 = vrot.slane %v917, 4
        %v919 = vadd.f32 %v917, %v918
        %v920 = vrot.slane %v919, 2
        %v921 = vadd.f32 %v919, %v920
        %v922 = vrot.slane %v921, 1
        %v923 = vadd.f32 %v921, %v922
        %v924 = vadd.f32 %v789, %v793
        %v925 = vrot.slane %v924, 4
        %v926 = vadd.f32 %v924, %v925
        %v927 = vrot.slane %v926, 2
        %v928 = vadd.f32 %v926, %v927
        %v929 = vrot.slane %v928, 1
        %v930 = vadd.f32 %v928, %v929
        %v931 = vadd.f32 %v791, %v795
        %v932 = vrot.slane %v931, 4
        %v933 = vadd.f32 %v931, %v932
        %v934 = vrot.slane %v933, 2
        %v935 = vadd.f32 %v933, %v934
        %v936 = vrot.slane %v935, 1
        %v937 = vadd.f32 %v935, %v936
        %v938 = vadd.f32 %v832, %v836
        %v939 = vrot.slane %v938, 4
        %v940 = vadd.f32 %v938, %v939
        %v941 = vrot.slane %v940, 2
        %v942 = vadd.f32 %v940, %v941
        %v943 = vrot.slane %v942, 1
        %v944 = vadd.f32 %v942, %v943
        %v945 = vadd.f32 %v834, %v838
        %v946 = vrot.slane %v945, 4
        %v947 = vadd.f32 %v945, %v946
        %v948 = vrot.slane %v947, 2
        %v949 = vadd.f32 %v947, %v948
        %v950 = vrot.slane %v949, 1
        %v951 = vadd.f32 %v949, %v950
        %v952 = vmul.f32 %v703, %v703
        %v953 = vmul.f32 %v705, %v705
        %v954 = vmul.f32 %v746, %v746
        %v955 = vmul.f32 %v748, %v748
        %v956 = vmul.f32 %v789, %v789
        %v957 = vmul.f32 %v791, %v791
        %v958 = vmul.f32 %v832, %v832
        %v959 = vmul.f32 %v834, %v834
        %v960 = vmul.f32 %v707, %v707
        %v961 = vmul.f32 %v709, %v709
        %v962 = vmul.f32 %v750, %v750
        %v963 = vmul.f32 %v752, %v752
        %v964 = vmul.f32 %v793, %v793
        %v965 = vmul.f32 %v795, %v795
        %v966 = vmul.f32 %v836, %v836
        %v967 = vmul.f32 %v838, %v838
        %v968 = vadd.f32 %v952, %v960
        %v969 = vrot.slane %v968, 4
        %v970 = vadd.f32 %v968, %v969
        %v971 = vrot.slane %v970, 2
        %v972 = vadd.f32 %v970, %v971
        %v973 = vrot.slane %v972, 1
        %v974 = vadd.f32 %v972, %v973
        %v975 = vadd.f32 %v953, %v961
        %v976 = vrot.slane %v975, 4
        %v977 = vadd.f32 %v975, %v976
        %v978 = vrot.slane %v977, 2
        %v979 = vadd.f32 %v977, %v978
        %v980 = vrot.slane %v979, 1
        %v981 = vadd.f32 %v979, %v980
        %v982 = vadd.f32 %v954, %v962
        %v983 = vrot.slane %v982, 4
        %v984 = vadd.f32 %v982, %v983
        %v985 = vrot.slane %v984, 2
        %v986 = vadd.f32 %v984, %v985
        %v987 = vrot.slane %v986, 1
        %v988 = vadd.f32 %v986, %v987
        %v989 = vadd.f32 %v955, %v963
        %v990 = vrot.slane %v989, 4
        %v991 = vadd.f32 %v989, %v990
        %v992 = vrot.slane %v991, 2
        %v993 = vadd.f32 %v991, %v992
        %v994 = vrot.slane %v993, 1
        %v995 = vadd.f32 %v993, %v994
        %v996 = vadd.f32 %v956, %v964
        %v997 = vrot.slane %v996, 4
        %v998 = vadd.f32 %v996, %v997
        %v999 = vrot.slane %v998, 2
        %v1000 = vadd.f32 %v998, %v999
        %v1001 = vrot.slane %v1000, 1
        %v1002 = vadd.f32 %v1000, %v1001
        %v1003 = vadd.f32 %v957, %v965
        %v1004 = vrot.slane %v1003, 4
        %v1005 = vadd.f32 %v1003, %v1004
        %v1006 = vrot.slane %v1005, 2
        %v1007 = vadd.f32 %v1005, %v1006
        %v1008 = vrot.slane %v1007, 1
        %v1009 = vadd.f32 %v1007, %v1008
        %v1010 = vadd.f32 %v958, %v966
        %v1011 = vrot.slane %v1010, 4
        %v1012 = vadd.f32 %v1010, %v1011
        %v1013 = vrot.slane %v1012, 2
        %v1014 = vadd.f32 %v1012, %v1013
        %v1015 = vrot.slane %v1014, 1
        %v1016 = vadd.f32 %v1014, %v1015
        %v1017 = vadd.f32 %v959, %v967
        %v1018 = vrot.slane %v1017, 4
        %v1019 = vadd.f32 %v1017, %v1018
        %v1020 = vrot.slane %v1019, 2
        %v1021 = vadd.f32 %v1019, %v1020
        %v1022 = vrot.slane %v1021, 1
        %v1023 = vadd.f32 %v1021, %v1022
        %v1024 = vlaneseq
        %v1025 = vshrl.u32 %v1024, 7
        %vm1026 = vcmp.eq.s32.totalorder %v1025, 0
        %vm1027 = vcmp.eq.s32.totalorder %v1025, 1
        %vm1028 = vcmp.eq.s32.totalorder %v1025, 2
        %v1029 = vsel %vm1028, %v902, %v974
        %v1030 = vsel %vm1028, %v909, %v981
        %v1031 = vsel %vm1028, %v916, %v988
        %v1032 = vsel %vm1028, %v923, %v995
        %v1033 = vsel %vm1028, %v930, %v1002
        %v1034 = vsel %vm1028, %v937, %v1009
        %v1035 = vsel %vm1028, %v944, %v1016
        %v1036 = vsel %vm1028, %v951, %v1023
        %v1037 = vsel %vm1027, %v974, %v1029
        %v1038 = vsel %vm1027, %v981, %v1030
        %v1039 = vsel %vm1027, %v988, %v1031
        %v1040 = vsel %vm1027, %v995, %v1032
        %v1041 = vsel %vm1027, %v1002, %v1033
        %v1042 = vsel %vm1027, %v1009, %v1034
        %v1043 = vsel %vm1027, %v1016, %v1035
        %v1044 = vsel %vm1027, %v1023, %v1036
        %v1045 = vsel %vm1026, %v902, %v1037
        %v1046 = vsel %vm1026, %v909, %v1038
        %v1047 = vsel %vm1026, %v916, %v1039
        %v1048 = vsel %vm1026, %v923, %v1040
        %v1049 = vsel %vm1026, %v930, %v1041
        %v1050 = vsel %vm1026, %v937, %v1042
        %v1051 = vsel %vm1026, %v944, %v1043
        %v1052 = vsel %vm1026, %v951, %v1044
        %1053 = vst [vmem:[%s257] sm:$0xff] %v1045
        %1054 = vst [vmem:[%s257 + $0x8] sm:$0xff] %v1046
        %1055 = vst [vmem:[%s257 + $0x10] sm:$0xff] %v1047
        %1056 = vst [vmem:[%s257 + $0x18] sm:$0xff] %v1048
        %1057 = vst [vmem:[%s257 + $0x20] sm:$0xff] %v1049
        %1058 = vst [vmem:[%s257 + $0x28] sm:$0xff] %v1050
        %1059 = vst [vmem:[%s257 + $0x30] sm:$0xff] %v1051
        %1060 = vst [vmem:[%s257 + $0x38] sm:$0xff] %v1052
        %s1061 = smul.u32 2, %s18
        %p1062 = scmp.lt.s32.totalorder %s1061, 3
        %s1063 = scalar_select %p1062, %s1061, 3
        %s1064 = smul.addr %s1063, 8
        %s1065 = smul.addr %s1064, 4
        %s1066 = scalar_lea.vmem %s4, %s1065
        %p1067 = scmp.lt.s32.totalorder %s18, 1
        %s1068 = scalar_select %p1067, %s18, 1
        %s1069 = smul.addr %s1068, 8
        %s1070 = smul.addr %s1069, 8
        %s1071 = scalar_lea.vmem %s5, %s1070
        // Predicated region
        $region41: #{masknet_forward.20} parent=35 // pred_check
          %p1072 = pneg %p125
        $region42: #{masknet_forward.20} parent=35 // pred_check_branch
          %1074 = sbr.rel (%p1072) target = $region44
        $region43: #{masknet_forward.20} parent=35 // pred_region
          %s1075 = smul.u32 2, %s18
        $region44: #{masknet_forward.20} parent=35 // pred_fallthru
          _
        // Predicated region
        $region45: #{masknet_forward.20} parent=35 // pred_check
          %p1076 = pneg %p151
        $region46: #{masknet_forward.20} parent=35 // pred_check_branch
          %1078 = sbr.rel (%p1076) target = $region48
        $region47: #{masknet_forward.20} parent=35 // pred_region
          _
        $region48: #{masknet_forward.20} parent=35 // pred_fallthru
          _
      $region36: #{masknet_forward.20} parent=5 // pred_fallthru
        _
      %p1079 = scmp.le.s32.totalorder 2, %s13
      // Predicated region
      $region49: #{masknet_forward.20} parent=5 // pred_check
        %p1080 = pneg %p1079
      $region50: #{masknet_forward.20} parent=5 // pred_check_branch
        %1082 = sbr.rel (%p1080) target = $region52
      $region51: #{masknet_forward.20} parent=5 // pred_region
        %s1083 = ssub.s32 %s13, 2
        // Predicated region
        $region53: #{masknet_forward.20} parent=51 // pred_check
          %p1084 = pneg %p131
        $region54: #{masknet_forward.20} parent=51 // pred_check_branch
          %1086 = sbr.rel (%p1084) target = $region56
        $region55: #{masknet_forward.20} parent=51 // pred_region
          %s1087 = smul.u32 2, %s19
          %p1088 = scmp.lt.s32.totalorder %s1087, 3
          %s1089 = scalar_select %p1088, %s1087, 3
          %s1090 = smul.addr %s1089, 8
          %s1091 = smul.addr %s1090, 4
          %s1092 = scalar_lea.vmem %s4, %s1091
        $region56: #{masknet_forward.20} parent=51 // pred_fallthru
          _
        // Predicated region
        $region57: #{masknet_forward.20} parent=51 // pred_check
          %p1093 = pneg %p157
        $region58: #{masknet_forward.20} parent=51 // pred_check_branch
          %1095 = sbr.rel (%p1093) target = $region60
        $region59: #{masknet_forward.20} parent=51 // pred_region
          %p1096 = scmp.lt.s32.totalorder %s19, 1
          %s1097 = scalar_select %p1096, %s19, 1
          %s1098 = smul.addr %s1097, 8
          %s1099 = smul.addr %s1098, 8
          %s1100 = scalar_lea.vmem %s5, %s1099
        $region60: #{masknet_forward.20} parent=51 // pred_fallthru
          _
      $region52: #{masknet_forward.20} parent=5 // pred_fallthru
        _
    $region6: #{masknet_forward.20} parent=1 // loop_footer
      %s17 = sadd.s32 1, %s13
    $region7: #{masknet_forward.20} parent=1 // loop_footer_branch
      %12 = sbr.rel target = $region3
    $region8: #{masknet_forward.20} parent=1 // loop_exit
      _
    %1101 = vsyncpa [#allocation3], 1
    %s1102 = scalar_lea.sflag [#allocation3], 1
    %1103 = vsyncpa %s1102, 1

// kernel: masknet_forward.21
$region0: #{masknet_forward.21}
  #allocation0 [shape = 'u32[]', space=smem, size = 0x4, offset = 0x4, fixed_abs, tag = 'smem constant byte address 0x4 - core index']
  #allocation1 [shape = 'u32[144,128]{1,0:T(1,128)}', space=vmem, size = 0x12000, scoped, tag = 'internal scratch']
  %s0 = inlined_call_operand.vmem [shape: bf16[32,1024], index: 0, kind: input, shape index: {}]
  %s1 = inlined_call_operand.vmem [shape: f32[1,1024], index: 1, kind: input, shape index: {}]
  %s2 = inlined_call_operand.vmem [shape: f32[1,1024], index: 2, kind: input, shape index: {}]
  %s3 = inlined_call_operand.vmem [shape: f32[2,1,1024], index: 3, kind: input, shape index: {}]
  %s4 = inlined_call_operand.vmem [shape: bf16[1024,1024], index: 4, kind: input, shape index: {}]
  %s5 = inlined_call_operand.vmem [shape: bf16[1024,512], index: 5, kind: input, shape index: {}]
  %s6 = inlined_call_operand.vmem [shape: f32[1,512], index: 6, kind: input, shape index: {}]
  %s7 = inlined_call_operand.vmem [shape: bf16[512,256], index: 7, kind: input, shape index: {}]
  %s8 = inlined_call_operand.vmem [shape: f32[1,256], index: 8, kind: input, shape index: {}]
  %s9 = inlined_call_operand.vmem [shape: bf16[256,128], index: 9, kind: input, shape index: {}]
  %s10 = inlined_call_operand.vmem [shape: f32[1,128], index: 10, kind: input, shape index: {}]
  %s11 = inlined_call_operand.hbm [shape: bf16[128,128], index: 11, kind: input, shape index: {}]
  %s12 = inlined_call_operand.vmem [shape: f32[1,128], index: 12, kind: input, shape index: {}]
  %s13 = inlined_call_operand.vmem [shape: f32[32,8], index: 13, kind: output, shape index: {}]
  %s14 = sld [smem:[#allocation0]]
  $region89: #{masknet_forward.21} parent=0
    _
  %s16 = ssub.s32 1, %s14
  %s17 = scalar_select 0, %s16, %s14
  $region1: #{masknet_forward.21} parent=0
    #allocation2 [shape = 'u8[32768]{0}', space=vmem, size = 0x8000, scoped, tag = 'input window, operand 11, single buffered']
    #allocation3 [shape = 's32[2]{0}', space=sflag, size = 0x8, scoped, tag = 'scoped memory for masknet_forward.21']
    %18 = vsyncpa [#allocation3], 0
    loop: start=0, step=1, limit=4
    $region2: #{masknet_forward.21} parent=1 // loop_pre_header
      _
    $region3: #{masknet_forward.21} parent=1 // loop_header
      %s20 = sphi 0, %s24
      %p21 = scmp.ge.s32.totalorder %s20, 4
      %s27 = sphi 0, %s39
      %s28 = sphi 0, %s35
      %s29 = sphi 0, %s27
      %s30 = sphi 0, %s28
      %s31 = sphi 0, %s29
      %s32 = sphi 0, %s30
      %s44 = sphi 0, %s46
      %s47 = sphi 0, %s44
      %s48 = sphi 0, %s47
      %s64 = sphi 0, %s48
      %s68 = sphi 0, %s68
      %s70 = sphi 0, %s68
      %s71 = sphi 0, %s70
      %s85 = sphi 0, %s71
      %s89 = sphi 0, %s89
      %s91 = sphi 0, %s89
      %s92 = sphi 0, %s91
      %s106 = sphi 0, %s92
      %s112 = sphi 0, %s114
      %s115 = sphi 0, %s112
      %s116 = sphi 0, %s115
      %s132 = sphi 0, %s116
      %s136 = sphi 0, %s136
      %s138 = sphi 0, %s136
      %s139 = sphi 0, %s138
      %s153 = sphi 0, %s139
      %s157 = sphi 0, %s157
      %s159 = sphi 0, %s157
      %s160 = sphi 0, %s159
      %s174 = sphi 0, %s160
      %s178 = sphi 0, %s178
      %s180 = sphi 0, %s178
      %s181 = sphi 0, %s180
      %s195 = sphi 0, %s181
      %s199 = sphi 0, %s199
      %s201 = sphi 0, %s199
      %s202 = sphi 0, %s201
      %s216 = sphi 0, %s202
      %s220 = sphi 0, %s220
      %s222 = sphi 0, %s220
      %s223 = sphi 0, %s222
      %s237 = sphi 0, %s223
      %s241 = sphi 0, %s241
      %s243 = sphi 0, %s241
      %s244 = sphi 0, %s243
      %s258 = sphi 0, %s244
      %s262 = sphi 0, %s262
      %s264 = sphi 0, %s262
      %s265 = sphi 0, %s264
      %s279 = sphi 0, %s265
      %s283 = sphi 0, %s283
      %s285 = sphi 0, %s283
      %s286 = sphi 0, %s285
      %s300 = sphi 0, %s286
      %s304 = sphi 0, %s304
      %s306 = sphi 0, %s304
      %s307 = sphi 0, %s306
      %s321 = sphi 0, %s307
      %s329 = sphi 0, %s331
      %s332 = sphi 0, %s329
      %s333 = sphi 0, %s332
      %s349 = sphi 0, %s333
    $region4: #{masknet_forward.21} parent=1 // loop_header_branch
      %23 = sbr.rel (%p21) target = $region8
    $region5: #{masknet_forward.21} parent=1 // loop_body
      %s25 = ssub.s32 %s20, 1
      %s26 = ssub.s32 %s20, 2
      %s33 = sadd.s32 1, %s28
      %p34 = scmp.ge.s32.totalorder %s33, 1
      %s35 = scalar_select %p34, 0, %s33
      %s36 = sadd.s32 1, %s27
      %s37 = scalar_select %p34, %s36, %s27
      %p38 = scmp.ge.s32.totalorder %s37, 2
      %s39 = scalar_select %p38, 0, %s37
      %s40 = sadd.s32 %s27, %s28
      %s41 = sadd.s32 %s39, %s35
      %s42 = ssub.s32 %s40, %s41
      %p43 = scmp.eq.s32.totalorder %s42, 0
      %s45 = sadd.s32 %s44, 1
      %s46 = scalar_select %p43, %s44, %s45
      %p49 = pneg %p43
      %p50 = scmp.eq.s32.totalorder %s20, 1
      %p51 = por %p49, %p50
      %p52 = scmp.ne.s32.totalorder %s44, %s47
      %p53 = scmp.eq.s32.totalorder %s20, 0
      %p54 = por %p52, %p53
      %p55 = scmp.ne.s32.totalorder %s44, %s47
      %p56 = scmp.eq.s32.totalorder %s25, 1
      %p57 = por %p55, %p56
      %p58 = scmp.ne.s32.totalorder %s47, %s48
      %p59 = scmp.eq.s32.totalorder %s25, 0
      %p60 = por %p58, %p59
      %p61 = scmp.ne.s32.totalorder %s47, %s48
      %p62 = scmp.eq.s32.totalorder %s26, 1
      %p63 = por %p61, %p62
      %p65 = scmp.ne.s32.totalorder %s48, %s64
      %p66 = scmp.eq.s32.totalorder %s26, 0
      %p67 = por %p65, %p66
      %s69 = sadd.s32 %s68, 1
      %p72 = scmp.eq.s32.totalorder %s20, 1
      %p73 = scmp.ne.s32.totalorder %s68, %s70
      %p74 = scmp.eq.s32.totalorder %s20, 0
      %p75 = por %p73, %p74
      %p76 = scmp.ne.s32.totalorder %s68, %s70
      %p77 = scmp.eq.s32.totalorder %s25, 1
      %p78 = por %p76, %p77
      %p79 = scmp.ne.s32.totalorder %s70, %s71
      %p80 = scmp.eq.s32.totalorder %s25, 0
      %p81 = por %p79, %p80
      %p82 = scmp.ne.s32.totalorder %s70, %s71
      %p83 = scmp.eq.s32.totalorder %s26, 1
      %p84 = por %p82, %p83
      %p86 = scmp.ne.s32.totalorder %s71, %s85
      %p87 = scmp.eq.s32.totalorder %s26, 0
      %p88 = por %p86, %p87
      %s90 = sadd.s32 %s89, 1
      %p93 = scmp.eq.s32.totalorder %s20, 1
      %p94 = scmp.ne.s32.totalorder %s89, %s91
      %p95 = scmp.eq.s32.totalorder %s20, 0
      %p96 = por %p94, %p95
      %p97 = scmp.ne.s32.totalorder %s89, %s91
      %p98 = scmp.eq.s32.totalorder %s25, 1
      %p99 = por %p97, %p98
      %p100 = scmp.ne.s32.totalorder %s91, %s92
      %p101 = scmp.eq.s32.totalorder %s25, 0
      %p102 = por %p100, %p101
      %p103 = scmp.ne.s32.totalorder %s91, %s92
      %p104 = scmp.eq.s32.totalorder %s26, 1
      %p105 = por %p103, %p104
      %p107 = scmp.ne.s32.totalorder %s92, %s106
      %p108 = scmp.eq.s32.totalorder %s26, 0
      %p109 = por %p107, %p108
      %s110 = ssub.s32 %s27, %s39
      %p111 = scmp.eq.s32.totalorder %s110, 0
      %s113 = sadd.s32 %s112, 1
      %s114 = scalar_select %p111, %s112, %s113
      %p117 = pneg %p111
      %p118 = scmp.eq.s32.totalorder %s20, 1
      %p119 = por %p117, %p118
      %p120 = scmp.ne.s32.totalorder %s112, %s115
      %p121 = scmp.eq.s32.totalorder %s20, 0
      %p122 = por %p120, %p121
      %p123 = scmp.ne.s32.totalorder %s112, %s115
      %p124 = scmp.eq.s32.totalorder %s25, 1
      %p125 = por %p123, %p124
      %p126 = scmp.ne.s32.totalorder %s115, %s116
      %p127 = scmp.eq.s32.totalorder %s25, 0
      %p128 = por %p126, %p127
      %p129 = scmp.ne.s32.totalorder %s115, %s116
      %p130 = scmp.eq.s32.totalorder %s26, 1
      %p131 = por %p129, %p130
      %p133 = scmp.ne.s32.totalorder %s116, %s132
      %p134 = scmp.eq.s32.totalorder %s26, 0
      %p135 = por %p133, %p134
      %s137 = sadd.s32 %s136, 1
      %p140 = scmp.eq.s32.totalorder %s20, 1
      %p141 = scmp.ne.s32.totalorder %s136, %s138
      %p142 = scmp.eq.s32.totalorder %s20, 0
      %p143 = por %p141, %p142
      %p144 = scmp.ne.s32.totalorder %s136, %s138
      %p145 = scmp.eq.s32.totalorder %s25, 1
      %p146 = por %p144, %p145
      %p147 = scmp.ne.s32.totalorder %s138, %s139
      %p148 = scmp.eq.s32.totalorder %s25, 0
      %p149 = por %p147, %p148
      %p150 = scmp.ne.s32.totalorder %s138, %s139
      %p151 = scmp.eq.s32.totalorder %s26, 1
      %p152 = por %p150, %p151
      %p154 = scmp.ne.s32.totalorder %s139, %s153
      %p155 = scmp.eq.s32.totalorder %s26, 0
      %p156 = por %p154, %p155
      %s158 = sadd.s32 %s157, 1
      %p161 = scmp.eq.s32.totalorder %s20, 1
      %p162 = scmp.ne.s32.totalorder %s157, %s159
      %p163 = scmp.eq.s32.totalorder %s20, 0
      %p164 = por %p162, %p163
      %p165 = scmp.ne.s32.totalorder %s157, %s159
      %p166 = scmp.eq.s32.totalorder %s25, 1
      %p167 = por %p165, %p166
      %p168 = scmp.ne.s32.totalorder %s159, %s160
      %p169 = scmp.eq.s32.totalorder %s25, 0
      %p170 = por %p168, %p169
      %p171 = scmp.ne.s32.totalorder %s159, %s160
      %p172 = scmp.eq.s32.totalorder %s26, 1
      %p173 = por %p171, %p172
      %p175 = scmp.ne.s32.totalorder %s160, %s174
      %p176 = scmp.eq.s32.totalorder %s26, 0
      %p177 = por %p175, %p176
      %s179 = sadd.s32 %s178, 1
      %p182 = scmp.eq.s32.totalorder %s20, 1
      %p183 = scmp.ne.s32.totalorder %s178, %s180
      %p184 = scmp.eq.s32.totalorder %s20, 0
      %p185 = por %p183, %p184
      %p186 = scmp.ne.s32.totalorder %s178, %s180
      %p187 = scmp.eq.s32.totalorder %s25, 1
      %p188 = por %p186, %p187
      %p189 = scmp.ne.s32.totalorder %s180, %s181
      %p190 = scmp.eq.s32.totalorder %s25, 0
      %p191 = por %p189, %p190
      %p192 = scmp.ne.s32.totalorder %s180, %s181
      %p193 = scmp.eq.s32.totalorder %s26, 1
      %p194 = por %p192, %p193
      %p196 = scmp.ne.s32.totalorder %s181, %s195
      %p197 = scmp.eq.s32.totalorder %s26, 0
      %p198 = por %p196, %p197
      %s200 = sadd.s32 %s199, 1
      %p203 = scmp.eq.s32.totalorder %s20, 1
      %p204 = scmp.ne.s32.totalorder %s199, %s201
      %p205 = scmp.eq.s32.totalorder %s20, 0
      %p206 = por %p204, %p205
      %p207 = scmp.ne.s32.totalorder %s199, %s201
      %p208 = scmp.eq.s32.totalorder %s25, 1
      %p209 = por %p207, %p208
      %p210 = scmp.ne.s32.totalorder %s201, %s202
      %p211 = scmp.eq.s32.totalorder %s25, 0
      %p212 = por %p210, %p211
      %p213 = scmp.ne.s32.totalorder %s201, %s202
      %p214 = scmp.eq.s32.totalorder %s26, 1
      %p215 = por %p213, %p214
      %p217 = scmp.ne.s32.totalorder %s202, %s216
      %p218 = scmp.eq.s32.totalorder %s26, 0
      %p219 = por %p217, %p218
      %s221 = sadd.s32 %s220, 1
      %p224 = scmp.eq.s32.totalorder %s20, 1
      %p225 = scmp.ne.s32.totalorder %s220, %s222
      %p226 = scmp.eq.s32.totalorder %s20, 0
      %p227 = por %p225, %p226
      %p228 = scmp.ne.s32.totalorder %s220, %s222
      %p229 = scmp.eq.s32.totalorder %s25, 1
      %p230 = por %p228, %p229
      %p231 = scmp.ne.s32.totalorder %s222, %s223
      %p232 = scmp.eq.s32.totalorder %s25, 0
      %p233 = por %p231, %p232
      %p234 = scmp.ne.s32.totalorder %s222, %s223
      %p235 = scmp.eq.s32.totalorder %s26, 1
      %p236 = por %p234, %p235
      %p238 = scmp.ne.s32.totalorder %s223, %s237
      %p239 = scmp.eq.s32.totalorder %s26, 0
      %p240 = por %p238, %p239
      %s242 = sadd.s32 %s241, 1
      %p245 = scmp.eq.s32.totalorder %s20, 1
      %p246 = scmp.ne.s32.totalorder %s241, %s243
      %p247 = scmp.eq.s32.totalorder %s20, 0
      %p248 = por %p246, %p247
      %p249 = scmp.ne.s32.totalorder %s241, %s243
      %p250 = scmp.eq.s32.totalorder %s25, 1
      %p251 = por %p249, %p250
      %p252 = scmp.ne.s32.totalorder %s243, %s244
      %p253 = scmp.eq.s32.totalorder %s25, 0
      %p254 = por %p252, %p253
      %p255 = scmp.ne.s32.totalorder %s243, %s244
      %p256 = scmp.eq.s32.totalorder %s26, 1
      %p257 = por %p255, %p256
      %p259 = scmp.ne.s32.totalorder %s244, %s258
      %p260 = scmp.eq.s32.totalorder %s26, 0
      %p261 = por %p259, %p260
      %s263 = sadd.s32 %s262, 1
      %p266 = scmp.eq.s32.totalorder %s20, 1
      %p267 = scmp.ne.s32.totalorder %s262, %s264
      %p268 = scmp.eq.s32.totalorder %s20, 0
      %p269 = por %p267, %p268
      %p270 = scmp.ne.s32.totalorder %s262, %s264
      %p271 = scmp.eq.s32.totalorder %s25, 1
      %p272 = por %p270, %p271
      %p273 = scmp.ne.s32.totalorder %s264, %s265
      %p274 = scmp.eq.s32.totalorder %s25, 0
      %p275 = por %p273, %p274
      %p276 = scmp.ne.s32.totalorder %s264, %s265
      %p277 = scmp.eq.s32.totalorder %s26, 1
      %p278 = por %p276, %p277
      %p280 = scmp.ne.s32.totalorder %s265, %s279
      %p281 = scmp.eq.s32.totalorder %s26, 0
      %p282 = por %p280, %p281
      %s284 = sadd.s32 %s283, 1
      %p287 = scmp.eq.s32.totalorder %s20, 1
      %p288 = scmp.ne.s32.totalorder %s283, %s285
      %p289 = scmp.eq.s32.totalorder %s20, 0
      %p290 = por %p288, %p289
      %p291 = scmp.ne.s32.totalorder %s283, %s285
      %p292 = scmp.eq.s32.totalorder %s25, 1
      %p293 = por %p291, %p292
      %p294 = scmp.ne.s32.totalorder %s285, %s286
      %p295 = scmp.eq.s32.totalorder %s25, 0
      %p296 = por %p294, %p295
      %p297 = scmp.ne.s32.totalorder %s285, %s286
      %p298 = scmp.eq.s32.totalorder %s26, 1
      %p299 = por %p297, %p298
      %p301 = scmp.ne.s32.totalorder %s286, %s300
      %p302 = scmp.eq.s32.totalorder %s26, 0
      %p303 = por %p301, %p302
      %s305 = sadd.s32 %s304, 1
      %p308 = scmp.eq.s32.totalorder %s20, 1
      %p309 = scmp.ne.s32.totalorder %s304, %s306
      %p310 = scmp.eq.s32.totalorder %s20, 0
      %p311 = por %p309, %p310
      %p312 = scmp.ne.s32.totalorder %s304, %s306
      %p313 = scmp.eq.s32.totalorder %s25, 1
      %p314 = por %p312, %p313
      %p315 = scmp.ne.s32.totalorder %s306, %s307
      %p316 = scmp.eq.s32.totalorder %s25, 0
      %p317 = por %p315, %p316
      %p318 = scmp.ne.s32.totalorder %s306, %s307
      %p319 = scmp.eq.s32.totalorder %s26, 1
      %p320 = por %p318, %p319
      %p322 = scmp.ne.s32.totalorder %s307, %s321
      %p323 = scmp.eq.s32.totalorder %s26, 0
      %p324 = por %p322, %p323
      %s325 = sadd.s32 %s27, %s28
      %s326 = sadd.s32 %s39, %s35
      %s327 = ssub.s32 %s325, %s326
      %p328 = scmp.eq.s32.totalorder %s327, 0
      %s330 = sadd.s32 %s329, 1
      %s331 = scalar_select %p328, %s329, %s330
      %p334 = pneg %p328
      %p335 = scmp.eq.s32.totalorder %s20, 1
      %p336 = por %p334, %p335
      %p337 = scmp.ne.s32.totalorder %s329, %s332
      %p338 = scmp.eq.s32.totalorder %s20, 0
      %p339 = por %p337, %p338
      %p340 = scmp.ne.s32.totalorder %s329, %s332
      %p341 = scmp.eq.s32.totalorder %s25, 1
      %p342 = por %p340, %p341
      %p343 = scmp.ne.s32.totalorder %s332, %s333
      %p344 = scmp.eq.s32.totalorder %s25, 0
      %p345 = por %p343, %p344
      %p346 = scmp.ne.s32.totalorder %s332, %s333
      %p347 = scmp.eq.s32.totalorder %s26, 1
      %p348 = por %p346, %p347
      %p350 = scmp.ne.s32.totalorder %s333, %s349
      %p351 = scmp.eq.s32.totalorder %s26, 0
      %p352 = por %p350, %p351
      %p353 = scmp.le.s32.totalorder 1, %s20
      %p354 = scmp.lt.s32.totalorder %s20, 3
      %p355 = pnand %p353, %p354
      %p356 = pneg %p355
      // Predicated region
      $region9: #{masknet_forward.21} parent=5 // pred_check
        _
      $region10: #{masknet_forward.21} parent=5 // pred_check_branch
        %358 = sbr.rel (%p355) target = $region12
      $region11: #{masknet_forward.21} parent=5 // pred_region
        %s359 = ssub.s32 %s20, 1
        // Predicated region
        $region13: #{masknet_forward.21} parent=11 // pred_check
          %p360 = pneg %p81
        $region14: #{masknet_forward.21} parent=11 // pred_check_branch
          %362 = sbr.rel (%p360) target = $region16
        $region15: #{masknet_forward.21} parent=11 // pred_region
          _
        $region16: #{masknet_forward.21} parent=11 // pred_fallthru
          _
        // Predicated region
        $region17: #{masknet_forward.21} parent=11 // pred_check
          %p363 = pneg %p102
        $region18: #{masknet_forward.21} parent=11 // pred_check_branch
          %365 = sbr.rel (%p363) target = $region20
        $region19: #{masknet_forward.21} parent=11 // pred_region
          _
        $region20: #{masknet_forward.21} parent=11 // pred_fallthru
          _
        // Predicated region
        $region21: #{masknet_forward.21} parent=11 // pred_check
          %p366 = pneg %p149
        $region22: #{masknet_forward.21} parent=11 // pred_check_branch
          %368 = sbr.rel (%p366) target = $region24
        $region23: #{masknet_forward.21} parent=11 // pred_region
          _
        $region24: #{masknet_forward.21} parent=11 // pred_fallthru
          _
        // Predicated region
        $region25: #{masknet_forward.21} parent=11 // pred_check
          %p369 = pneg %p170
        $region26: #{masknet_forward.21} parent=11 // pred_check_branch
          %371 = sbr.rel (%p369) target = $region28
        $region27: #{masknet_forward.21} parent=11 // pred_region
          _
        $region28: #{masknet_forward.21} parent=11 // pred_fallthru
          _
        // Predicated region
        $region29: #{masknet_forward.21} parent=11 // pred_check
          %p372 = pneg %p191
        $region30: #{masknet_forward.21} parent=11 // pred_check_branch
          %374 = sbr.rel (%p372) target = $region32
        $region31: #{masknet_forward.21} parent=11 // pred_region
          _
        $region32: #{masknet_forward.21} parent=11 // pred_fallthru
          _
        // Predicated region
        $region33: #{masknet_forward.21} parent=11 // pred_check
          %p375 = pneg %p212
        $region34: #{masknet_forward.21} parent=11 // pred_check_branch
          %377 = sbr.rel (%p375) target = $region36
        $region35: #{masknet_forward.21} parent=11 // pred_region
          _
        $region36: #{masknet_forward.21} parent=11 // pred_fallthru
          _
        // Predicated region
        $region37: #{masknet_forward.21} parent=11 // pred_check
          %p378 = pneg %p233
        $region38: #{masknet_forward.21} parent=11 // pred_check_branch
          %380 = sbr.rel (%p378) target = $region40
        $region39: #{masknet_forward.21} parent=11 // pred_region
          _
        $region40: #{masknet_forward.21} parent=11 // pred_fallthru
          _
        // Predicated region
        $region41: #{masknet_forward.21} parent=11 // pred_check
          %p381 = pneg %p254
        $region42: #{masknet_forward.21} parent=11 // pred_check_branch
          %383 = sbr.rel (%p381) target = $region44
        $region43: #{masknet_forward.21} parent=11 // pred_region
          _
        $region44: #{masknet_forward.21} parent=11 // pred_fallthru
          _
        // Predicated region
        $region45: #{masknet_forward.21} parent=11 // pred_check
          %p384 = pneg %p275
        $region46: #{masknet_forward.21} parent=11 // pred_check_branch
          %386 = sbr.rel (%p384) target = $region48
        $region47: #{masknet_forward.21} parent=11 // pred_region
          _
        $region48: #{masknet_forward.21} parent=11 // pred_fallthru
          _
        // Predicated region
        $region49: #{masknet_forward.21} parent=11 // pred_check
          %p387 = pneg %p296
        $region50: #{masknet_forward.21} parent=11 // pred_check_branch
          %389 = sbr.rel (%p387) target = $region52
        $region51: #{masknet_forward.21} parent=11 // pred_region
          %s391 = ssub.s32 1024, 1024
          %392 = vsyncadd [#allocation3], %s391
          %s393 = sshll.u32 [#allocation2], 4
          %s394 = int_to_ptr.vmem [resolvable:$true] %s393
          %399 = dma.hbm_to_vmem [thread:$0]  %s11, 1024, %s394, [#allocation3], 64, 64, 4
        $region52: #{masknet_forward.21} parent=11 // pred_fallthru
          _
        // Predicated region
        $region53: #{masknet_forward.21} parent=11 // pred_check
          %p400 = pneg %p317
        $region54: #{masknet_forward.21} parent=11 // pred_check_branch
          %402 = sbr.rel (%p400) target = $region56
        $region55: #{masknet_forward.21} parent=11 // pred_region
          _
        $region56: #{masknet_forward.21} parent=11 // pred_fallthru
          _
      $region12: #{masknet_forward.21} parent=5 // pred_fallthru
        _
      %p403 = scmp.lt.s32.totalorder %s20, 2
      // Predicated region
      $region57: #{masknet_forward.21} parent=5 // pred_check
        %p404 = pneg %p403
      $region58: #{masknet_forward.21} parent=5 // pred_check_branch
        %406 = sbr.rel (%p404) target = $region60
      $region59: #{masknet_forward.21} parent=5 // pred_region
        // Predicated region
        $region61: #{masknet_forward.21} parent=59 // pred_check
          %p407 = pneg %p54
        $region62: #{masknet_forward.21} parent=59 // pred_check_branch
          %409 = sbr.rel (%p407) target = $region64
        $region63: #{masknet_forward.21} parent=59 // pred_region
          %s410 = sadd.s32 %s27, %s28
          %s411 = smul.u32 2, %s410
          %p412 = scmp.lt.s32.totalorder %s411, 3
          %s413 = scalar_select %p412, %s411, 3
          %s414 = smul.addr %s413, 8
          %s415 = smul.addr %s414, 4
          %s416 = scalar_lea.vmem %s0, %s415
          %s417 = sadd.s32 %s27, %s28
          %s418 = smul.u32 2, %s417
        $region64: #{masknet_forward.21} parent=59 // pred_fallthru
          _
        // Predicated region
        $region65: #{masknet_forward.21} parent=59 // pred_check
          %p419 = pneg %p122
        $region66: #{masknet_forward.21} parent=59 // pred_check_branch
          %421 = sbr.rel (%p419) target = $region68
        $region67: #{masknet_forward.21} parent=59 // pred_region
          %p422 = scmp.lt.s32.totalorder %s27, 1
          %s423 = scalar_select %p422, %s27, 1
          %s424 = smul.addr %s423, 8
          %s425 = scalar_lea.vmem %s3, %s424
        $region68: #{masknet_forward.21} parent=59 // pred_fallthru
          _
      $region60: #{masknet_forward.21} parent=5 // pred_fallthru
        _
      %p426 = scmp.le.s32.totalorder 1, %s20
      %p427 = scmp.lt.s32.totalorder %s20, 3
      %p428 = pnand %p426, %p427
      %p429 = pneg %p428
      // Predicated region
      $region69: #{masknet_forward.21} parent=5 // pred_check
        _
      $region70: #{masknet_forward.21} parent=5 // pred_check_branch
        %431 = sbr.rel (%p428) target = $region72
      $region71: #{masknet_forward.21} parent=5 // pred_region
        %s432 = ssub.s32 %s20, 1
        // Predicated region
        $region73: #{masknet_forward.21} parent=71 // pred_check
          %p433 = pneg %p296
        $region74: #{masknet_forward.21} parent=71 // pred_check_branch
          %435 = sbr.rel (%p433) target = $region76
        $region75: #{masknet_forward.21} parent=71 // pred_region
          %436 = dma.done [#allocation3], 1024
        $region76: #{masknet_forward.21} parent=71 // pred_fallthru
          _
        %s437 = sadd.s32 %s29, %s30
        %s438 = smul.u32 2, %s437
        %p439 = scmp.lt.s32.totalorder %s438, 3
        %s440 = scalar_select %p439, %s438, 3
        %s441 = smul.addr %s440, 8
        %s442 = smul.addr %s441, 4
        %s443 = scalar_lea.vmem %s0, %s442
        %p444 = pneg %p60
        %p445 = pneg %p57
        %p446 = pneg %p81
        %p447 = pneg %p78
        %p448 = pneg %p102
        %p449 = pneg %p99
        %p450 = scmp.lt.s32.totalorder %s29, 1
        %s451 = scalar_select %p450, %s29, 1
        %s452 = smul.addr %s451, 8
        %s453 = scalar_lea.vmem %s3, %s452
        %p454 = pneg %p128
        %p455 = pneg %p125
        %p456 = pneg %p149
        %p457 = pneg %p146
        %p458 = pneg %p170
        %p459 = pneg %p167
        %p460 = pneg %p191
        %p461 = pneg %p188
        %p462 = pneg %p212
        %p463 = pneg %p209
        %p464 = pneg %p233
        %p465 = pneg %p230
        %p466 = pneg %p254
        %p467 = pneg %p251
        %p468 = pneg %p275
        %p469 = pneg %p272
        %p470 = pneg %p296
        %p471 = pneg %p293
        %p472 = pneg %p317
        %p473 = pneg %p314
        %p474 = pneg %p345
        %p475 = pneg %p342
        %s476 = sadd.s32 %s29, %s30
        %s477 = smul.u32 2, %s476
        %p478 = scmp.lt.s32.totalorder %s477, 3
        %s479 = scalar_select %p478, %s477, 3
        %s480 = smul.addr %s479, 8
        %s481 = scalar_lea.vmem %s13, %s480
        %s482 = sadd.s32 %s29, %s30
        %s483 = smul.u32 2, %s482
        %p484 = scmp.lt.s32.totalorder %s483, 3
        %s485 = scalar_select %p484, %s483, 3
        %s486 = smul.addr %s485, 8
        %s487 = smul.addr %s486, 4
        %s488 = scalar_lea.vmem %s0, %s487
        %s489 = sadd.s32 %s29, %s30
        %s490 = smul.u32 2, %s489
        %p491 = scmp.lt.s32.totalorder %s29, 1
        %s492 = scalar_select %p491, %s29, 1
        %s493 = smul.addr %s492, 8
        %s494 = scalar_lea.vmem %s3, %s493
        %s495 = sadd.s32 %s29, %s30
        %s496 = smul.u32 2, %s495
        %p497 = scmp.lt.s32.totalorder %s496, 3
        %s498 = scalar_select %p497, %s496, 3
        %s499 = smul.addr %s498, 8
        %s500 = scalar_lea.vmem %s13, %s499
        %s501 = sadd.s32 %s29, %s30
        %s502 = smul.u32 2, %s501
        %v504 = vld [vmem:[%s488] sm:$0xff]
        %v505 = vld [vmem:[%s488 + $0x8] sm:$0xff]
        %v506 = vld [vmem:[%s488 + $0x10] sm:$0xff]
        %v507 = vld [vmem:[%s488 + $0x18] sm:$0xff]
        %v508 = vld [vmem:[%s488 + $0x20] sm:$0xff]
        %v509 = vld [vmem:[%s488 + $0x28] sm:$0xff]
        %v510 = vld [vmem:[%s488 + $0x30] sm:$0xff]
        %v511 = vld [vmem:[%s488 + $0x38] sm:$0xff]
        %v512 = vunpack.c.l.bf16 %v504
        %v513 = vunpack.c.h.bf16 %v504
        %v514 = vunpack.c.l.bf16 %v505
        %v515 = vunpack.c.h.bf16 %v505
        %v516 = vunpack.c.l.bf16 %v506
        %v517 = vunpack.c.h.bf16 %v506
        %v518 = vunpack.c.l.bf16 %v507
        %v519 = vunpack.c.h.bf16 %v507
        %v520 = vunpack.c.l.bf16 %v508
        %v521 = vunpack.c.h.bf16 %v508
        %v522 = vunpack.c.l.bf16 %v509
        %v523 = vunpack.c.h.bf16 %v509
        %v524 = vunpack.c.l.bf16 %v510
        %v525 = vunpack.c.h.bf16 %v510
        %v526 = vunpack.c.l.bf16 %v511
        %v527 = vunpack.c.h.bf16 %v511
        %v528 = vld [vmem:[%s1] sm:$0xff]
        %v530 = vlaneseq
        %v531 = vshrl.u32 %v530, 7
        %v532 = vsub.s32 0, %v531
        %v533 = vrot.slane %v528, %v532
        %v534 = vlaneseq
        %v535 = vshrl.u32 %v534, 7
        %v536 = vsub.s32 1, %v535
        %v537 = vrot.slane %v528, %v536
        %v538 = vlaneseq
        %v539 = vshrl.u32 %v538, 7
        %v540 = vsub.s32 2, %v539
        %v541 = vrot.slane %v528, %v540
        %v542 = vlaneseq
        %v543 = vshrl.u32 %v542, 7
        %v544 = vsub.s32 3, %v543
        %v545 = vrot.slane %v528, %v544
        %v546 = vlaneseq
        %v547 = vshrl.u32 %v546, 7
        %v548 = vsub.s32 4, %v547
        %v549 = vrot.slane %v528, %v548
        %v550 = vlaneseq
        %v551 = vshrl.u32 %v550, 7
        %v552 = vsub.s32 5, %v551
        %v553 = vrot.slane %v528, %v552
        %v554 = vlaneseq
        %v555 = vshrl.u32 %v554, 7
        %v556 = vsub.s32 6, %v555
        %v557 = vrot.slane %v528, %v556
        %v558 = vlaneseq
        %v559 = vshrl.u32 %v558, 7
        %v560 = vsub.s32 7, %v559
        %v561 = vrot.slane %v528, %v560
        %v570 = vmul.f32 %v512, %v533
        %v571 = vmul.f32 %v513, %v537
        %v572 = vmul.f32 %v514, %v541
        %v573 = vmul.f32 %v515, %v545
        %v574 = vmul.f32 %v516, %v549
        %v575 = vmul.f32 %v517, %v553
        %v576 = vmul.f32 %v518, %v557
        %v577 = vmul.f32 %v519, %v561
        %v578 = vmul.f32 %v520, %v533
        %v579 = vmul.f32 %v521, %v537
        %v580 = vmul.f32 %v522, %v541
        %v581 = vmul.f32 %v523, %v545
        %v582 = vmul.f32 %v524, %v549
        %v583 = vmul.f32 %v525, %v553
        %v584 = vmul.f32 %v526, %v557
        %v585 = vmul.f32 %v527, %v561
        %v586 = vld [vmem:[%s2] sm:$0xff]
        %v588 = vlaneseq
        %v589 = vshrl.u32 %v588, 7
        %v590 = vsub.s32 0, %v589
        %v591 = vrot.slane %v586, %v590
        %v592 = vlaneseq
        %v593 = vshrl.u32 %v592, 7
        %v594 = vsub.s32 1, %v593
        %v595 = vrot.slane %v586, %v594
        %v596 = vlaneseq
        %v597 = vshrl.u32 %v596, 7
        %v598 = vsub.s32 2, %v597
        %v599 = vrot.slane %v586, %v598
        %v600 = vlaneseq
        %v601 = vshrl.u32 %v600, 7
        %v602 = vsub.s32 3, %v601
        %v603 = vrot.slane %v586, %v602
        %v604 = vlaneseq
        %v605 = vshrl.u32 %v604, 7
        %v606 = vsub.s32 4, %v605
        %v607 = vrot.slane %v586, %v606
        %v608 = vlaneseq
        %v609 = vshrl.u32 %v608, 7
        %v610 = vsub.s32 5, %v609
        %v611 = vrot.slane %v586, %v610
        %v612 = vlaneseq
        %v613 = vshrl.u32 %v612, 7
        %v614 = vsub.s32 6, %v613
        %v615 = vrot.slane %v586, %v614
        %v616 = vlaneseq
        %v617 = vshrl.u32 %v616, 7
        %v618 = vsub.s32 7, %v617
        %v619 = vrot.slane %v586, %v618
        %v628 = vadd.f32 %v570, %v591
        %v629 = vadd.f32 %v571, %v595
        %v630 = vadd.f32 %v572, %v599
        %v631 = vadd.f32 %v573, %v603
        %v632 = vadd.f32 %v574, %v607
        %v633 = vadd.f32 %v575, %v611
        %v634 = vadd.f32 %v576, %v615
        %v635 = vadd.f32 %v577, %v619
        %v636 = vadd.f32 %v578, %v591
        %v637 = vadd.f32 %v579, %v595
        %v638 = vadd.f32 %v580, %v599
        %v639 = vadd.f32 %v581, %v603
        %v640 = vadd.f32 %v582, %v607
        %v641 = vadd.f32 %v583, %v611
        %v642 = vadd.f32 %v584, %v615
        %v643 = vadd.f32 %v585, %v619
        %v644 = vmax.f32 %v628, 0.0
        %v645 = vmax.f32 %v629, 0.0
        %v646 = vmax.f32 %v630, 0.0
        %v647 = vmax.f32 %v631, 0.0
        %v648 = vmax.f32 %v632, 0.0
        %v649 = vmax.f32 %v633, 0.0
        %v650 = vmax.f32 %v634, 0.0
        %v651 = vmax.f32 %v635, 0.0
        %v652 = vmax.f32 %v636, 0.0
        %v653 = vmax.f32 %v637, 0.0
        %v654 = vmax.f32 %v638, 0.0
        %v655 = vmax.f32 %v639, 0.0
        %v656 = vmax.f32 %v640, 0.0
        %v657 = vmax.f32 %v641, 0.0
        %v658 = vmax.f32 %v642, 0.0
        %v659 = vmax.f32 %v643, 0.0
        %v660 = vpack.c.bf16 %v652, %v644
        %v661 = vpack.c.bf16 %v653, %v645
        %v662 = vpack.c.bf16 %v654, %v646
        %v663 = vpack.c.bf16 %v655, %v647
        %v664 = vpack.c.bf16 %v656, %v648
        %v665 = vpack.c.bf16 %v657, %v649
        %v666 = vpack.c.bf16 %v658, %v650
        %v667 = vpack.c.bf16 %v659, %v651
        %v668 = vld [vmem:[%s4] sm:$0xff]
        %v669 = vld [vmem:[%s4 + $0x8] sm:$0xff]
        %v670 = vld [vmem:[%s4 + $0x10] sm:$0xff]
        %v671 = vld [vmem:[%s4 + $0x18] sm:$0xff]
        %v672 = vld [vmem:[%s4 + $0x20] sm:$0xff]
        %v673 = vld [vmem:[%s4 + $0x28] sm:$0xff]
        %v674 = vld [vmem:[%s4 + $0x30] sm:$0xff]
        %v675 = vld [vmem:[%s4 + $0x38] sm:$0xff]
        %v676 = vld [vmem:[%s4 + $0x40] sm:$0xff]
        %v677 = vld [vmem:[%s4 + $0x48] sm:$0xff]
        %v678 = vld [vmem:[%s4 + $0x50] sm:$0xff]
        %v679 = vld [vmem:[%s4 + $0x58] sm:$0xff]
        %v680 = vld [vmem:[%s4 + $0x60] sm:$0xff]
        %v681 = vld [vmem:[%s4 + $0x68] sm:$0xff]
        %v682 = vld [vmem:[%s4 + $0x70] sm:$0xff]
        %v683 = vld [vmem:[%s4 + $0x78] sm:$0xff]
        %v684 = vld [vmem:[%s4 + $0x80] sm:$0xff]
        %v685 = vld [vmem:[%s4 + $0x88] sm:$0xff]
        %v686 = vld [vmem:[%s4 + $0x90] sm:$0xff]
        %v687 = vld [vmem:[%s4 + $0x98] sm:$0xff]
        %v688 = vld [vmem:[%s4 + $0xa0] sm:$0xff]
        %v689 = vld [vmem:[%s4 + $0xa8] sm:$0xff]
        %v690 = vld [vmem:[%s4 + $0xb0] sm:$0xff]
        %v691 = vld [vmem:[%s4 + $0xb8] sm:$0xff]
        %v692 = vld [vmem:[%s4 + $0xc0] sm:$0xff]
        %v693 = vld [vmem:[%s4 + $0xc8] sm:$0xff]
        %v694 = vld [vmem:[%s4 + $0xd0] sm:$0xff]
        %v695 = vld [vmem:[%s4 + $0xd8] sm:$0xff]
        %v696 = vld [vmem:[%s4 + $0xe0] sm:$0xff]
        %v697 = vld [vmem:[%s4 + $0xe8] sm:$0xff]
        %v698 = vld [vmem:[%s4 + $0xf0] sm:$0xff]
        %v699 = vld [vmem:[%s4 + $0xf8] sm:$0xff]
        %v700 = vld [vmem:[%s4 + $0x100] sm:$0xff]
        %v701 = vld [vmem:[%s4 + $0x108] sm:$0xff]
        %v702 = vld [vmem:[%s4 + $0x110] sm:$0xff]
        %v703 = vld [vmem:[%s4 + $0x118] sm:$0xff]
        %v704 = vld [vmem:[%s4 + $0x120] sm:$0xff]
        %v705 = vld [vmem:[%s4 + $0x128] sm:$0xff]
        %v706 = vld [vmem:[%s4 + $0x130] sm:$0xff]
        %v707 = vld [vmem:[%s4 + $0x138] sm:$0xff]
        %v708 = vld [vmem:[%s4 + $0x140] sm:$0xff]
        %v709 = vld [vmem:[%s4 + $0x148] sm:$0xff]
        %v710 = vld [vmem:[%s4 + $0x150] sm:$0xff]
        %v711 = vld [vmem:[%s4 + $0x158] sm:$0xff]
        %v712 = vld [vmem:[%s4 + $0x160] sm:$0xff]
        %v713 = vld [vmem:[%s4 + $0x168] sm:$0xff]
        %v714 = vld [vmem:[%s4 + $0x170] sm:$0xff]
        %v715 = vld [vmem:[%s4 + $0x178] sm:$0xff]
        %v716 = vld [vmem:[%s4 + $0x180] sm:$0xff]
        %v717 = vld [vmem:[%s4 + $0x188] sm:$0xff]
        %v718 = vld [vmem:[%s4 + $0x190] sm:$0xff]
        %v719 = vld [vmem:[%s4 + $0x198] sm:$0xff]
        %v720 = vld [vmem:[%s4 + $0x1a0] sm:$0xff]
        %v721 = vld [vmem:[%s4 + $0x1a8] sm:$0xff]
        %v722 = vld [vmem:[%s4 + $0x1b0] sm:$0xff]
        %v723 = vld [vmem:[%s4 + $0x1b8] sm:$0xff]
        %v724 = vld [vmem:[%s4 + $0x1c0] sm:$0xff]
        %v725 = vld [vmem:[%s4 + $0x1c8] sm:$0xff]
        %v726 = vld [vmem:[%s4 + $0x1d0] sm:$0xff]
        %v727 = vld [vmem:[%s4 + $0x1d8] sm:$0xff]
        %v728 = vld [vmem:[%s4 + $0x1e0] sm:$0xff]
        %v729 = vld [vmem:[%s4 + $0x1e8] sm:$0xff]
        %v730 = vld [vmem:[%s4 + $0x1f0] sm:$0xff]
        %v731 = vld [vmem:[%s4 + $0x1f8] sm:$0xff]
        %v732 = vld [vmem:[%s4 + $0x200] sm:$0xff]
        %v733 = vld [vmem:[%s4 + $0x208] sm:$0xff]
        %v734 = vld [vmem:[%s4 + $0x210] sm:$0xff]
        %v735 = vld [vmem:[%s4 + $0x218] sm:$0xff]
        %v736 = vld [vmem:[%s4 + $0x220] sm:$0xff]
        %v737 = vld [vmem:[%s4 + $0x228] sm:$0xff]
        %v738 = vld [vmem:[%s4 + $0x230] sm:$0xff]
        %v739 = vld [vmem:[%s4 + $0x238] sm:$0xff]
        %v740 = vld [vmem:[%s4 + $0x240] sm:$0xff]
        %v741 = vld [vmem:[%s4 + $0x248] sm:$0xff]
        %v742 = vld [vmem:[%s4 + $0x250] sm:$0xff]
        %v743 = vld [vmem:[%s4 + $0x258] sm:$0xff]
        %v744 = vld [vmem:[%s4 + $0x260] sm:$0xff]
        %v745 = vld [vmem:[%s4 + $0x268] sm:$0xff]
        %v746 = vld [vmem:[%s4 + $0x270] sm:$0xff]
        %v747 = vld [vmem:[%s4 + $0x278] sm:$0xff]
        %v748 = vld [vmem:[%s4 + $0x280] sm:$0xff]
        %v749 = vld [vmem:[%s4 + $0x288] sm:$0xff]
        %v750 = vld [vmem:[%s4 + $0x290] sm:$0xff]
        %v751 = vld [vmem:[%s4 + $0x298] sm:$0xff]
        %v752 = vld [vmem:[%s4 + $0x2a0] sm:$0xff]
        %v753 = vld [vmem:[%s4 + $0x2a8] sm:$0xff]
        %v754 = vld [vmem:[%s4 + $0x2b0] sm:$0xff]
        %v755 = vld [vmem:[%s4 + $0x2b8] sm:$0xff]
        %v756 = vld [vmem:[%s4 + $0x2c0] sm:$0xff]
        %v757 = vld [vmem:[%s4 + $0x2c8] sm:$0xff]
        %v758 = vld [vmem:[%s4 + $0x2d0] sm:$0xff]
        %v759 = vld [vmem:[%s4 + $0x2d8] sm:$0xff]
        %v760 = vld [vmem:[%s4 + $0x2e0] sm:$0xff]
        %v761 = vld [vmem:[%s4 + $0x2e8] sm:$0xff]
        %v762 = vld [vmem:[%s4 + $0x2f0] sm:$0xff]
        %v763 = vld [vmem:[%s4 + $0x2f8] sm:$0xff]
        %v764 = vld [vmem:[%s4 + $0x300] sm:$0xff]
        %v765 = vld [vmem:[%s4 + $0x308] sm:$0xff]
        %v766 = vld [vmem:[%s4 + $0x310] sm:$0xff]
        %v767 = vld [vmem:[%s4 + $0x318] sm:$0xff]
        %v768 = vld [vmem:[%s4 + $0x320] sm:$0xff]
        %v769 = vld [vmem:[%s4 + $0x328] sm:$0xff]
        %v770 = vld [vmem:[%s4 + $0x330] sm:$0xff]
        %v771 = vld [vmem:[%s4 + $0x338] sm:$0xff]
        %v772 = vld [vmem:[%s4 + $0x340] sm:$0xff]
        %v773 = vld [vmem:[%s4 + $0x348] sm:$0xff]
        %v774 = vld [vmem:[%s4 + $0x350] sm:$0xff]
        %v775 = vld [vmem:[%s4 + $0x358] sm:$0xff]
        %v776 = vld [vmem:[%s4 + $0x360] sm:$0xff]
        %v777 = vld [vmem:[%s4 + $0x368] sm:$0xff]
        %v778 = vld [vmem:[%s4 + $0x370] sm:$0xff]
        %v779 = vld [vmem:[%s4 + $0x378] sm:$0xff]
        %v780 = vld [vmem:[%s4 + $0x380] sm:$0xff]
        %v781 = vld [vmem:[%s4 + $0x388] sm:$0xff]
        %v782 = vld [vmem:[%s4 + $0x390] sm:$0xff]
        %v783 = vld [vmem:[%s4 + $0x398] sm:$0xff]
        %v784 = vld [vmem:[%s4 + $0x3a0] sm:$0xff]
        %v785 = vld [vmem:[%s4 + $0x3a8] sm:$0xff]
        %v786 = vld [vmem:[%s4 + $0x3b0] sm:$0xff]
        %v787 = vld [vmem:[%s4 + $0x3b8] sm:$0xff]
        %v788 = vld [vmem:[%s4 + $0x3c0] sm:$0xff]
        %v789 = vld [vmem:[%s4 + $0x3c8] sm:$0xff]
        %v790 = vld [vmem:[%s4 + $0x3d0] sm:$0xff]
        %v791 = vld [vmem:[%s4 + $0x3d8] sm:$0xff]
        %v792 = vld [vmem:[%s4 + $0x3e0] sm:$0xff]
        %v793 = vld [vmem:[%s4 + $0x3e8] sm:$0xff]
        %v794 = vld [vmem:[%s4 + $0x3f0] sm:$0xff]
        %v795 = vld [vmem:[%s4 + $0x3f8] sm:$0xff]
        %v796 = vld [vmem:[%s4 + $0x400] sm:$0xff]
        %v797 = vld [vmem:[%s4 + $0x408] sm:$0xff]
        %v798 = vld [vmem:[%s4 + $0x410] sm:$0xff]
        %v799 = vld [vmem:[%s4 + $0x418] sm:$0xff]
        %v800 = vld [vmem:[%s4 + $0x420] sm:$0xff]
        %v801 = vld [vmem:[%s4 + $0x428] sm:$0xff]
        %v802 = vld [vmem:[%s4 + $0x430] sm:$0xff]
        %v803 = vld [vmem:[%s4 + $0x438] sm:$0xff]
        %v804 = vld [vmem:[%s4 + $0x440] sm:$0xff]
        %v805 = vld [vmem:[%s4 + $0x448] sm:$0xff]
        %v806 = vld [vmem:[%s4 + $0x450] sm:$0xff]
        %v807 = vld [vmem:[%s4 + $0x458] sm:$0xff]
        %v808 = vld [vmem:[%s4 + $0x460] sm:$0xff]
        %v809 = vld [vmem:[%s4 + $0x468] sm:$0xff]
        %v810 = vld [vmem:[%s4 + $0x470] sm:$0xff]
        %v811 = vld [vmem:[%s4 + $0x478] sm:$0xff]
        %v812 = vld [vmem:[%s4 + $0x480] sm:$0xff]
        %v813 = vld [vmem:[%s4 + $0x488] sm:$0xff]
        %v814 = vld [vmem:[%s4 + $0x490] sm:$0xff]
        %v815 = vld [vmem:[%s4 + $0x498] sm:$0xff]
        %v816 = vld [vmem:[%s4 + $0x4a0] sm:$0xff]
        %v817 = vld [vmem:[%s4 + $0x4a8] sm:$0xff]
        %v818 = vld [vmem:[%s4 + $0x4b0] sm:$0xff]
        %v819 = vld [vmem:[%s4 + $0x4b8] sm:$0xff]
        %v820 = vld [vmem:[%s4 + $0x4c0] sm:$0xff]
        %v821 = vld [vmem:[%s4 + $0x4c8] sm:$0xff]
        %v822 = vld [vmem:[%s4 + $0x4d0] sm:$0xff]
        %v823 = vld [vmem:[%s4 + $0x4d8] sm:$0xff]
        %v824 = vld [vmem:[%s4 + $0x4e0] sm:$0xff]
        %v825 = vld [vmem:[%s4 + $0x4e8] sm:$0xff]
        %v826 = vld [vmem:[%s4 + $0x4f0] sm:$0xff]
        %v827 = vld [vmem:[%s4 + $0x4f8] sm:$0xff]
        %v828 = vld [vmem:[%s4 + $0x500] sm:$0xff]
        %v829 = vld [vmem:[%s4 + $0x508] sm:$0xff]
        %v830 = vld [vmem:[%s4 + $0x510] sm:$0xff]
        %v831 = vld [vmem:[%s4 + $0x518] sm:$0xff]
        %v832 = vld [vmem:[%s4 + $0x520] sm:$0xff]
        %v833 = vld [vmem:[%s4 + $0x528] sm:$0xff]
        %v834 = vld [vmem:[%s4 + $0x530] sm:$0xff]
        %v835 = vld [vmem:[%s4 + $0x538] sm:$0xff]
        %v836 = vld [vmem:[%s4 + $0x540] sm:$0xff]
        %v837 = vld [vmem:[%s4 + $0x548] sm:$0xff]
        %v838 = vld [vmem:[%s4 + $0x550] sm:$0xff]
        %v839 = vld [vmem:[%s4 + $0x558] sm:$0xff]
        %v840 = vld [vmem:[%s4 + $0x560] sm:$0xff]
        %v841 = vld [vmem:[%s4 + $0x568] sm:$0xff]
        %v842 = vld [vmem:[%s4 + $0x570] sm:$0xff]
        %v843 = vld [vmem:[%s4 + $0x578] sm:$0xff]
        %v844 = vld [vmem:[%s4 + $0x580] sm:$0xff]
        %v845 = vld [vmem:[%s4 + $0x588] sm:$0xff]
        %v846 = vld [vmem:[%s4 + $0x590] sm:$0xff]
        %v847 = vld [vmem:[%s4 + $0x598] sm:$0xff]
        %v848 = vld [vmem:[%s4 + $0x5a0] sm:$0xff]
        %v849 = vld [vmem:[%s4 + $0x5a8] sm:$0xff]
        %v850 = vld [vmem:[%s4 + $0x5b0] sm:$0xff]
        %v851 = vld [vmem:[%s4 + $0x5b8] sm:$0xff]
        %v852 = vld [vmem:[%s4 + $0x5c0] sm:$0xff]
        %v853 = vld [vmem:[%s4 + $0x5c8] sm:$0xff]
        %v854 = vld [vmem:[%s4 + $0x5d0] sm:$0xff]
        %v855 = vld [vmem:[%s4 + $0x5d8] sm:$0xff]
        %v856 = vld [vmem:[%s4 + $0x5e0] sm:$0xff]
        %v857 = vld [vmem:[%s4 + $0x5e8] sm:$0xff]
        %v858 = vld [vmem:[%s4 + $0x5f0] sm:$0xff]
        %v859 = vld [vmem:[%s4 + $0x5f8] sm:$0xff]
        %v860 = vld [vmem:[%s4 + $0x600] sm:$0xff]
        %v861 = vld [vmem:[%s4 + $0x608] sm:$0xff]
        %v862 = vld [vmem:[%s4 + $0x610] sm:$0xff]
        %v863 = vld [vmem:[%s4 + $0x618] sm:$0xff]
        %v864 = vld [vmem:[%s4 + $0x620] sm:$0xff]
        %v865 = vld [vmem:[%s4 + $0x628] sm:$0xff]
        %v866 = vld [vmem:[%s4 + $0x630] sm:$0xff]
        %v867 = vld [vmem:[%s4 + $0x638] sm:$0xff]
        %v868 = vld [vmem:[%s4 + $0x640] sm:$0xff]
        %v869 = vld [vmem:[%s4 + $0x648] sm:$0xff]
        %v870 = vld [vmem:[%s4 + $0x650] sm:$0xff]
        %v871 = vld [vmem:[%s4 + $0x658] sm:$0xff]
        %v872 = vld [vmem:[%s4 + $0x660] sm:$0xff]
        %v873 = vld [vmem:[%s4 + $0x668] sm:$0xff]
        %v874 = vld [vmem:[%s4 + $0x670] sm:$0xff]
        %v875 = vld [vmem:[%s4 + $0x678] sm:$0xff]
        %v876 = vld [vmem:[%s4 + $0x680] sm:$0xff]
        %v877 = vld [vmem:[%s4 + $0x688] sm:$0xff]
        %v878 = vld [vmem:[%s4 + $0x690] sm:$0xff]
        %v879 = vld [vmem:[%s4 + $0x698] sm:$0xff]
        %v880 = vld [vmem:[%s4 + $0x6a0] sm:$0xff]
        %v881 = vld [vmem:[%s4 + $0x6a8] sm:$0xff]
        %v882 = vld [vmem:[%s4 + $0x6b0] sm:$0xff]
        %v883 = vld [vmem:[%s4 + $0x6b8] sm:$0xff]
        %v884 = vld [vmem:[%s4 + $0x6c0] sm:$0xff]
        %v885 = vld [vmem:[%s4 + $0x6c8] sm:$0xff]
        %v886 = vld [vmem:[%s4 + $0x6d0] sm:$0xff]
        %v887 = vld [vmem:[%s4 + $0x6d8] sm:$0xff]
        %v888 = vld [vmem:[%s4 + $0x6e0] sm:$0xff]
        %v889 = vld [vmem:[%s4 + $0x6e8] sm:$0xff]
        %v890 = vld [vmem:[%s4 + $0x6f0] sm:$0xff]
        %v891 = vld [vmem:[%s4 + $0x6f8] sm:$0xff]
        %v892 = vld [vmem:[%s4 + $0x700] sm:$0xff]
        %v893 = vld [vmem:[%s4 + $0x708] sm:$0xff]
        %v894 = vld [vmem:[%s4 + $0x710] sm:$0xff]
        %v895 = vld [vmem:[%s4 + $0x718] sm:$0xff]
        %v896 = vld [vmem:[%s4 + $0x720] sm:$0xff]
        %v897 = vld [vmem:[%s4 + $0x728] sm:$0xff]
        %v898 = vld [vmem:[%s4 + $0x730] sm:$0xff]
        %v899 = vld [vmem:[%s4 + $0x738] sm:$0xff]
        %v900 = vld [vmem:[%s4 + $0x740] sm:$0xff]
        %v901 = vld [vmem:[%s4 + $0x748] sm:$0xff]
        %v902 = vld [vmem:[%s4 + $0x750] sm:$0xff]
        %v903 = vld [vmem:[%s4 + $0x758] sm:$0xff]
        %v904 = vld [vmem:[%s4 + $0x760] sm:$0xff]
        %v905 = vld [vmem:[%s4 + $0x768] sm:$0xff]
        %v906 = vld [vmem:[%s4 + $0x770] sm:$0xff]
        %v907 = vld [vmem:[%s4 + $0x778] sm:$0xff]
        %v908 = vld [vmem:[%s4 + $0x780] sm:$0xff]
        %v909 = vld [vmem:[%s4 + $0x788] sm:$0xff]
        %v910 = vld [vmem:[%s4 + $0x790] sm:$0xff]
        %v911 = vld [vmem:[%s4 + $0x798] sm:$0xff]
        %v912 = vld [vmem:[%s4 + $0x7a0] sm:$0xff]
        %v913 = vld [vmem:[%s4 + $0x7a8] sm:$0xff]
        %v914 = vld [vmem:[%s4 + $0x7b0] sm:$0xff]
        %v915 = vld [vmem:[%s4 + $0x7b8] sm:$0xff]
        %v916 = vld [vmem:[%s4 + $0x7c0] sm:$0xff]
        %v917 = vld [vmem:[%s4 + $0x7c8] sm:$0xff]
        %v918 = vld [vmem:[%s4 + $0x7d0] sm:$0xff]
        %v919 = vld [vmem:[%s4 + $0x7d8] sm:$0xff]
        %v920 = vld [vmem:[%s4 + $0x7e0] sm:$0xff]
        %v921 = vld [vmem:[%s4 + $0x7e8] sm:$0xff]
        %v922 = vld [vmem:[%s4 + $0x7f0] sm:$0xff]
        %v923 = vld [vmem:[%s4 + $0x7f8] sm:$0xff]
        %v924 = vld [vmem:[%s4 + $0x800] sm:$0xff]
        %v925 = vld [vmem:[%s4 + $0x808] sm:$0xff]
        %v926 = vld [vmem:[%s4 + $0x810] sm:$0xff]
        %v927 = vld [vmem:[%s4 + $0x818] sm:$0xff]
        %v928 = vld [vmem:[%s4 + $0x820] sm:$0xff]
        %v929 = vld [vmem:[%s4 + $0x828] sm:$0xff]
        %v930 = vld [vmem:[%s4 + $0x830] sm:$0xff]
        %v931 = vld [vmem:[%s4 + $0x838] sm:$0xff]
        %v932 = vld [vmem:[%s4 + $0x840] sm:$0xff]
        %v933 = vld [vmem:[%s4 + $0x848] sm:$0xff]
        %v934 = vld [vmem:[%s4 + $0x850] sm:$0xff]
        %v935 = vld [vmem:[%s4 + $0x858] sm:$0xff]
        %v936 = vld [vmem:[%s4 + $0x860] sm:$0xff]
        %v937 = vld [vmem:[%s4 + $0x868] sm:$0xff]
        %v938 = vld [vmem:[%s4 + $0x870] sm:$0xff]
        %v939 = vld [vmem:[%s4 + $0x878] sm:$0xff]
        %v940 = vld [vmem:[%s4 + $0x880] sm:$0xff]
        %v941 = vld [vmem:[%s4 + $0x888] sm:$0xff]
        %v942 = vld [vmem:[%s4 + $0x890] sm:$0xff]
        %v943 = vld [vmem:[%s4 + $0x898] sm:$0xff]
        %v944 = vld [vmem:[%s4 + $0x8a0] sm:$0xff]
        %v945 = vld [vmem:[%s4 + $0x8a8] sm:$0xff]
        %v946 = vld [vmem:[%s4 + $0x8b0] sm:$0xff]
        %v947 = vld [vmem:[%s4 + $0x8b8] sm:$0xff]
        %v948 = vld [vmem:[%s4 + $0x8c0] sm:$0xff]
        %v949 = vld [vmem:[%s4 + $0x8c8] sm:$0xff]
        %v950 = vld [vmem:[%s4 + $0x8d0] sm:$0xff]
        %v951 = vld [vmem:[%s4 + $0x8d8] sm:$0xff]
        %v952 = vld [vmem:[%s4 + $0x8e0] sm:$0xff]
        %v953 = vld [vmem:[%s4 + $0x8e8] sm:$0xff]
        %v954 = vld [vmem:[%s4 + $0x8f0] sm:$0xff]
        %v955 = vld [vmem:[%s4 + $0x8f8] sm:$0xff]
        %v956 = vld [vmem:[%s4 + $0x900] sm:$0xff]
        %v957 = vld [vmem:[%s4 + $0x908] sm:$0xff]
        %v958 = vld [vmem:[%s4 + $0x910] sm:$0xff]
        %v959 = vld [vmem:[%s4 + $0x918] sm:$0xff]
        %v960 = vld [vmem:[%s4 + $0x920] sm:$0xff]
        %v961 = vld [vmem:[%s4 + $0x928] sm:$0xff]
        %v962 = vld [vmem:[%s4 + $0x930] sm:$0xff]
        %v963 = vld [vmem:[%s4 + $0x938] sm:$0xff]
        %v964 = vld [vmem:[%s4 + $0x940] sm:$0xff]
        %v965 = vld [vmem:[%s4 + $0x948] sm:$0xff]
        %v966 = vld [vmem:[%s4 + $0x950] sm:$0xff]
        %v967 = vld [vmem:[%s4 + $0x958] sm:$0xff]
        %v968 = vld [vmem:[%s4 + $0x960] sm:$0xff]
        %v969 = vld [vmem:[%s4 + $0x968] sm:$0xff]
        %v970 = vld [vmem:[%s4 + $0x970] sm:$0xff]
        %v971 = vld [vmem:[%s4 + $0x978] sm:$0xff]
        %v972 = vld [vmem:[%s4 + $0x980] sm:$0xff]
        %v973 = vld [vmem:[%s4 + $0x988] sm:$0xff]
        %v974 = vld [vmem:[%s4 + $0x990] sm:$0xff]
        %v975 = vld [vmem:[%s4 + $0x998] sm:$0xff]
        %v976 = vld [vmem:[%s4 + $0x9a0] sm:$0xff]
        %v977 = vld [vmem:[%s4 + $0x9a8] sm:$0xff]
        %v978 = vld [vmem:[%s4 + $0x9b0] sm:$0xff]
        %v979 = vld [vmem:[%s4 + $0x9b8] sm:$0xff]
        %v980 = vld [vmem:[%s4 + $0x9c0] sm:$0xff]
        %v981 = vld [vmem:[%s4 + $0x9c8] sm:$0xff]
        %v982 = vld [vmem:[%s4 + $0x9d0] sm:$0xff]
        %v983 = vld [vmem:[%s4 + $0x9d8] sm:$0xff]
        %v984 = vld [vmem:[%s4 + $0x9e0] sm:$0xff]
        %v985 = vld [vmem:[%s4 + $0x9e8] sm:$0xff]
        %v986 = vld [vmem:[%s4 + $0x9f0] sm:$0xff]
        %v987 = vld [vmem:[%s4 + $0x9f8] sm:$0xff]
        %v988 = vld [vmem:[%s4 + $0xa00] sm:$0xff]
        %v989 = vld [vmem:[%s4 + $0xa08] sm:$0xff]
        %v990 = vld [vmem:[%s4 + $0xa10] sm:$0xff]
        %v991 = vld [vmem:[%s4 + $0xa18] sm:$0xff]
        %v992 = vld [vmem:[%s4 + $0xa20] sm:$0xff]
        %v993 = vld [vmem:[%s4 + $0xa28] sm:$0xff]
        %v994 = vld [vmem:[%s4 + $0xa30] sm:$0xff]
        %v995 = vld [vmem:[%s4 + $0xa38] sm:$0xff]
        %v996 = vld [vmem:[%s4 + $0xa40] sm:$0xff]
        %v997 = vld [vmem:[%s4 + $0xa48] sm:$0xff]
        %v998 = vld [vmem:[%s4 + $0xa50] sm:$0xff]
        %v999 = vld [vmem:[%s4 + $0xa58] sm:$0xff]
        %v1000 = vld [vmem:[%s4 + $0xa60] sm:$0xff]
        %v1001 = vld [vmem:[%s4 + $0xa68] sm:$0xff]
        %v1002 = vld [vmem:[%s4 + $0xa70] sm:$0xff]
        %v1003 = vld [vmem:[%s4 + $0xa78] sm:$0xff]
        %v1004 = vld [vmem:[%s4 + $0xa80] sm:$0xff]
        %v1005 = vld [vmem:[%s4 + $0xa88] sm:$0xff]
        %v1006 = vld [vmem:[%s4 + $0xa90] sm:$0xff]
        %v1007 = vld [vmem:[%s4 + $0xa98] sm:$0xff]
        %v1008 = vld [vmem:[%s4 + $0xaa0] sm:$0xff]
        %v1009 = vld [vmem:[%s4 + $0xaa8] sm:$0xff]
        %v1010 = vld [vmem:[%s4 + $0xab0] sm:$0xff]
        %v1011 = vld [vmem:[%s4 + $0xab8] sm:$0xff]
        %v1012 = vld [vmem:[%s4 + $0xac0] sm:$0xff]
        %v1013 = vld [vmem:[%s4 + $0xac8] sm:$0xff]
        %v1014 = vld [vmem:[%s4 + $0xad0] sm:$0xff]
        %v1015 = vld [vmem:[%s4 + $0xad8] sm:$0xff]
        %v1016 = vld [vmem:[%s4 + $0xae0] sm:$0xff]
        %v1017 = vld [vmem:[%s4 + $0xae8] sm:$0xff]
        %v1018 = vld [vmem:[%s4 + $0xaf0] sm:$0xff]
        %v1019 = vld [vmem:[%s4 + $0xaf8] sm:$0xff]
        %v1020 = vld [vmem:[%s4 + $0xb00] sm:$0xff]
        %v1021 = vld [vmem:[%s4 + $0xb08] sm:$0xff]
        %v1022 = vld [vmem:[%s4 + $0xb10] sm:$0xff]
        %v1023 = vld [vmem:[%s4 + $0xb18] sm:$0xff]
        %v1024 = vld [vmem:[%s4 + $0xb20] sm:$0xff]
        %v1025 = vld [vmem:[%s4 + $0xb28] sm:$0xff]
        %v1026 = vld [vmem:[%s4 + $0xb30] sm:$0xff]
        %v1027 = vld [vmem:[%s4 + $0xb38] sm:$0xff]
        %v1028 = vld [vmem:[%s4 + $0xb40] sm:$0xff]
        %v1029 = vld [vmem:[%s4 + $0xb48] sm:$0xff]
        %v1030 = vld [vmem:[%s4 + $0xb50] sm:$0xff]
        %v1031 = vld [vmem:[%s4 + $0xb58] sm:$0xff]
        %v1032 = vld [vmem:[%s4 + $0xb60] sm:$0xff]
        %v1033 = vld [vmem:[%s4 + $0xb68] sm:$0xff]
        %v1034 = vld [vmem:[%s4 + $0xb70] sm:$0xff]
        %v1035 = vld [vmem:[%s4 + $0xb78] sm:$0xff]
        %v1036 = vld [vmem:[%s4 + $0xb80] sm:$0xff]
        %v1037 = vld [vmem:[%s4 + $0xb88] sm:$0xff]
        %v1038 = vld [vmem:[%s4 + $0xb90] sm:$0xff]
        %v1039 = vld [vmem:[%s4 + $0xb98] sm:$0xff]
        %v1040 = vld [vmem:[%s4 + $0xba0] sm:$0xff]
        %v1041 = vld [vmem:[%s4 + $0xba8] sm:$0xff]
        %v1042 = vld [vmem:[%s4 + $0xbb0] sm:$0xff]
        %v1043 = vld [vmem:[%s4 + $0xbb8] sm:$0xff]
        %v1044 = vld [vmem:[%s4 + $0xbc0] sm:$0xff]
        %v1045 = vld [vmem:[%s4 + $0xbc8] sm:$0xff]
        %v1046 = vld [vmem:[%s4 + $0xbd0] sm:$0xff]
        %v1047 = vld [vmem:[%s4 + $0xbd8] sm:$0xff]
        %v1048 = vld [vmem:[%s4 + $0xbe0] sm:$0xff]
        %v1049 = vld [vmem:[%s4 + $0xbe8] sm:$0xff]
        %v1050 = vld [vmem:[%s4 + $0xbf0] sm:$0xff]
        %v1051 = vld [vmem:[%s4 + $0xbf8] sm:$0xff]
        %v1052 = vld [vmem:[%s4 + $0xc00] sm:$0xff]
        %v1053 = vld [vmem:[%s4 + $0xc08] sm:$0xff]
        %v1054 = vld [vmem:[%s4 + $0xc10] sm:$0xff]
        %v1055 = vld [vmem:[%s4 + $0xc18] sm:$0xff]
        %v1056 = vld [vmem:[%s4 + $0xc20] sm:$0xff]
        %v1057 = vld [vmem:[%s4 + $0xc28] sm:$0xff]
        %v1058 = vld [vmem:[%s4 + $0xc30] sm:$0xff]
        %v1059 = vld [vmem:[%s4 + $0xc38] sm:$0xff]
        %v1060 = vld [vmem:[%s4 + $0xc40] sm:$0xff]
        %v1061 = vld [vmem:[%s4 + $0xc48] sm:$0xff]
        %v1062 = vld [vmem:[%s4 + $0xc50] sm:$0xff]
        %v1063 = vld [vmem:[%s4 + $0xc58] sm:$0xff]
        %v1064 = vld [vmem:[%s4 + $0xc60] sm:$0xff]
        %v1065 = vld [vmem:[%s4 + $0xc68] sm:$0xff]
        %v1066 = vld [vmem:[%s4 + $0xc70] sm:$0xff]
        %v1067 = vld [vmem:[%s4 + $0xc78] sm:$0xff]
        %v1068 = vld [vmem:[%s4 + $0xc80] sm:$0xff]
        %v1069 = vld [vmem:[%s4 + $0xc88] sm:$0xff]
        %v1070 = vld [vmem:[%s4 + $0xc90] sm:$0xff]
        %v1071 = vld [vmem:[%s4 + $0xc98] sm:$0xff]
        %v1072 = vld [vmem:[%s4 + $0xca0] sm:$0xff]
        %v1073 = vld [vmem:[%s4 + $0xca8] sm:$0xff]
        %v1074 = vld [vmem:[%s4 + $0xcb0] sm:$0xff]
        %v1075 = vld [vmem:[%s4 + $0xcb8] sm:$0xff]
        %v1076 = vld [vmem:[%s4 + $0xcc0] sm:$0xff]
        %v1077 = vld [vmem:[%s4 + $0xcc8] sm:$0xff]
        %v1078 = vld [vmem:[%s4 + $0xcd0] sm:$0xff]
        %v1079 = vld [vmem:[%s4 + $0xcd8] sm:$0xff]
        %v1080 = vld [vmem:[%s4 + $0xce0] sm:$0xff]
        %v1081 = vld [vmem:[%s4 + $0xce8] sm:$0xff]
        %v1082 = vld [vmem:[%s4 + $0xcf0] sm:$0xff]
        %v1083 = vld [vmem:[%s4 + $0xcf8] sm:$0xff]
        %v1084 = vld [vmem:[%s4 + $0xd00] sm:$0xff]
        %v1085 = vld [vmem:[%s4 + $0xd08] sm:$0xff]
        %v1086 = vld [vmem:[%s4 + $0xd10] sm:$0xff]
        %v1087 = vld [vmem:[%s4 + $0xd18] sm:$0xff]
        %v1088 = vld [vmem:[%s4 + $0xd20] sm:$0xff]
        %v1089 = vld [vmem:[%s4 + $0xd28] sm:$0xff]
        %v1090 = vld [vmem:[%s4 + $0xd30] sm:$0xff]
        %v1091 = vld [vmem:[%s4 + $0xd38] sm:$0xff]
        %v1092 = vld [vmem:[%s4 + $0xd40] sm:$0xff]
        %v1093 = vld [vmem:[%s4 + $0xd48] sm:$0xff]
        %v1094 = vld [vmem:[%s4 + $0xd50] sm:$0xff]
        %v1095 = vld [vmem:[%s4 + $0xd58] sm:$0xff]
        %v1096 = vld [vmem:[%s4 + $0xd60] sm:$0xff]
        %v1097 = vld [vmem:[%s4 + $0xd68] sm:$0xff]
        %v1098 = vld [vmem:[%s4 + $0xd70] sm:$0xff]
        %v1099 = vld [vmem:[%s4 + $0xd78] sm:$0xff]
        %v1100 = vld [vmem:[%s4 + $0xd80] sm:$0xff]
        %v1101 = vld [vmem:[%s4 + $0xd88] sm:$0xff]
        %v1102 = vld [vmem:[%s4 + $0xd90] sm:$0xff]
        %v1103 = vld [vmem:[%s4 + $0xd98] sm:$0xff]
        %v1104 = vld [vmem:[%s4 + $0xda0] sm:$0xff]
        %v1105 = vld [vmem:[%s4 + $0xda8] sm:$0xff]
        %v1106 = vld [vmem:[%s4 + $0xdb0] sm:$0xff]
        %v1107 = vld [vmem:[%s4 + $0xdb8] sm:$0xff]
        %v1108 = vld [vmem:[%s4 + $0xdc0] sm:$0xff]
        %v1109 = vld [vmem:[%s4 + $0xdc8] sm:$0xff]
        %v1110 = vld [vmem:[%s4 + $0xdd0] sm:$0xff]
        %v1111 = vld [vmem:[%s4 + $0xdd8] sm:$0xff]
        %v1112 = vld [vmem:[%s4 + $0xde0] sm:$0xff]
        %v1113 = vld [vmem:[%s4 + $0xde8] sm:$0xff]
        %v1114 = vld [vmem:[%s4 + $0xdf0] sm:$0xff]
        %v1115 = vld [vmem:[%s4 + $0xdf8] sm:$0xff]
        %v1116 = vld [vmem:[%s4 + $0xe00] sm:$0xff]
        %v1117 = vld [vmem:[%s4 + $0xe08] sm:$0xff]
        %v1118 = vld [vmem:[%s4 + $0xe10] sm:$0xff]
        %v1119 = vld [vmem:[%s4 + $0xe18] sm:$0xff]
        %v1120 = vld [vmem:[%s4 + $0xe20] sm:$0xff]
        %v1121 = vld [vmem:[%s4 + $0xe28] sm:$0xff]
        %v1122 = vld [vmem:[%s4 + $0xe30] sm:$0xff]
        %v1123 = vld [vmem:[%s4 + $0xe38] sm:$0xff]
        %v1124 = vld [vmem:[%s4 + $0xe40] sm:$0xff]
        %v1125 = vld [vmem:[%s4 + $0xe48] sm:$0xff]
        %v1126 = vld [vmem:[%s4 + $0xe50] sm:$0xff]
        %v1127 = vld [vmem:[%s4 + $0xe58] sm:$0xff]
        %v1128 = vld [vmem:[%s4 + $0xe60] sm:$0xff]
        %v1129 = vld [vmem:[%s4 + $0xe68] sm:$0xff]
        %v1130 = vld [vmem:[%s4 + $0xe70] sm:$0xff]
        %v1131 = vld [vmem:[%s4 + $0xe78] sm:$0xff]
        %v1132 = vld [vmem:[%s4 + $0xe80] sm:$0xff]
        %v1133 = vld [vmem:[%s4 + $0xe88] sm:$0xff]
        %v1134 = vld [vmem:[%s4 + $0xe90] sm:$0xff]
        %v1135 = vld [vmem:[%s4 + $0xe98] sm:$0xff]
        %v1136 = vld [vmem:[%s4 + $0xea0] sm:$0xff]
        %v1137 = vld [vmem:[%s4 + $0xea8] sm:$0xff]
        %v1138 = vld [vmem:[%s4 + $0xeb0] sm:$0xff]
        %v1139 = vld [vmem:[%s4 + $0xeb8] sm:$0xff]
        %v1140 = vld [vmem:[%s4 + $0xec0] sm:$0xff]
        %v1141 = vld [vmem:[%s4 + $0xec8] sm:$0xff]
        %v1142 = vld [vmem:[%s4 + $0xed0] sm:$0xff]
        %v1143 = vld [vmem:[%s4 + $0xed8] sm:$0xff]
        %v1144 = vld [vmem:[%s4 + $0xee0] sm:$0xff]
        %v1145 = vld [vmem:[%s4 + $0xee8] sm:$0xff]
        %v1146 = vld [vmem:[%s4 + $0xef0] sm:$0xff]
        %v1147 = vld [vmem:[%s4 + $0xef8] sm:$0xff]
        %v1148 = vld [vmem:[%s4 + $0xf00] sm:$0xff]
        %v1149 = vld [vmem:[%s4 + $0xf08] sm:$0xff]
        %v1150 = vld [vmem:[%s4 + $0xf10] sm:$0xff]
        %v1151 = vld [vmem:[%s4 + $0xf18] sm:$0xff]
        %v1152 = vld [vmem:[%s4 + $0xf20] sm:$0xff]
        %v1153 = vld [vmem:[%s4 + $0xf28] sm:$0xff]
        %v1154 = vld [vmem:[%s4 + $0xf30] sm:$0xff]
        %v1155 = vld [vmem:[%s4 + $0xf38] sm:$0xff]
        %v1156 = vld [vmem:[%s4 + $0xf40] sm:$0xff]
        %v1157 = vld [vmem:[%s4 + $0xf48] sm:$0xff]
        %v1158 = vld [vmem:[%s4 + $0xf50] sm:$0xff]
        %v1159 = vld [vmem:[%s4 + $0xf58] sm:$0xff]
        %v1160 = vld [vmem:[%s4 + $0xf60] sm:$0xff]
        %v1161 = vld [vmem:[%s4 + $0xf68] sm:$0xff]
        %v1162 = vld [vmem:[%s4 + $0xf70] sm:$0xff]
        %v1163 = vld [vmem:[%s4 + $0xf78] sm:$0xff]
        %v1164 = vld [vmem:[%s4 + $0xf80] sm:$0xff]
        %v1165 = vld [vmem:[%s4 + $0xf88] sm:$0xff]
        %v1166 = vld [vmem:[%s4 + $0xf90] sm:$0xff]
        %v1167 = vld [vmem:[%s4 + $0xf98] sm:$0xff]
        %v1168 = vld [vmem:[%s4 + $0xfa0] sm:$0xff]
        %v1169 = vld [vmem:[%s4 + $0xfa8] sm:$0xff]
        %v1170 = vld [vmem:[%s4 + $0xfb0] sm:$0xff]
        %v1171 = vld [vmem:[%s4 + $0xfb8] sm:$0xff]
        %v1172 = vld [vmem:[%s4 + $0xfc0] sm:$0xff]
        %v1173 = vld [vmem:[%s4 + $0xfc8] sm:$0xff]
        %v1174 = vld [vmem:[%s4 + $0xfd0] sm:$0xff]
        %v1175 = vld [vmem:[%s4 + $0xfd8] sm:$0xff]
        %v1176 = vld [vmem:[%s4 + $0xfe0] sm:$0xff]
        %v1177 = vld [vmem:[%s4 + $0xfe8] sm:$0xff]
        %v1178 = vld [vmem:[%s4 + $0xff0] sm:$0xff]
        %v1179 = vld [vmem:[%s4 + $0xff8] sm:$0xff]
        %v1180 = vld [vmem:[%s494] sm:$0xff]
        %v1182 = vlaneseq
        %v1183 = vshrl.u32 %v1182, 7
        %v1184 = vsub.s32 0, %v1183
        %v1185 = vrot.slane %v1180, %v1184
        %v1186 = vlaneseq
        %v1187 = vshrl.u32 %v1186, 7
        %v1188 = vsub.s32 1, %v1187
        %v1189 = vrot.slane %v1180, %v1188
        %v1190 = vlaneseq
        %v1191 = vshrl.u32 %v1190, 7
        %v1192 = vsub.s32 2, %v1191
        %v1193 = vrot.slane %v1180, %v1192
        %v1194 = vlaneseq
        %v1195 = vshrl.u32 %v1194, 7
        %v1196 = vsub.s32 3, %v1195
        %v1197 = vrot.slane %v1180, %v1196
        %v1198 = vlaneseq
        %v1199 = vshrl.u32 %v1198, 7
        %v1200 = vsub.s32 4, %v1199
        %v1201 = vrot.slane %v1180, %v1200
        %v1202 = vlaneseq
        %v1203 = vshrl.u32 %v1202, 7
        %v1204 = vsub.s32 5, %v1203
        %v1205 = vrot.slane %v1180, %v1204
        %v1206 = vlaneseq
        %v1207 = vshrl.u32 %v1206, 7
        %v1208 = vsub.s32 6, %v1207
        %v1209 = vrot.slane %v1180, %v1208
        %v1210 = vlaneseq
        %v1211 = vshrl.u32 %v1210, 7
        %v1212 = vsub.s32 7, %v1211
        %v1213 = vrot.slane %v1180, %v1212
        %v1734 = vunpack.c.l.b16 %v668
        %v1735 = vunpack.c.h.b16 %v668
        %v1736 = vunpack.c.l.b16 %v669
        %v1737 = vunpack.c.h.b16 %v669
        %v1738 = vunpack.c.l.b16 %v670
        %v1739 = vunpack.c.h.b16 %v670
        %v1740 = vunpack.c.l.b16 %v671
        %v1741 = vunpack.c.h.b16 %v671
        %v1742 = vunpack.c.l.b16 %v672
        %v1743 = vunpack.c.h.b16 %v672
        %v1744 = vunpack.c.l.b16 %v673
        %v1745 = vunpack.c.h.b16 %v673
        %v1746 = vunpack.c.l.b16 %v674
        %v1747 = vunpack.c.h.b16 %v674
        %v1748 = vunpack.c.l.b16 %v675
        %v1749 = vunpack.c.h.b16 %v675
        %v1750 = vunpack.c.l.b16 %v676
        %v1751 = vunpack.c.h.b16 %v676
        %v1752 = vunpack.c.l.b16 %v677
        %v1753 = vunpack.c.h.b16 %v677
        %v1754 = vunpack.c.l.b16 %v678
        %v1755 = vunpack.c.h.b16 %v678
        %v1756 = vunpack.c.l.b16 %v679
        %v1757 = vunpack.c.h.b16 %v679
        %v1758 = vunpack.c.l.b16 %v680
        %v1759 = vunpack.c.h.b16 %v680
        %v1760 = vunpack.c.l.b16 %v681
        %v1761 = vunpack.c.h.b16 %v681
        %v1762 = vunpack.c.l.b16 %v682
        %v1763 = vunpack.c.h.b16 %v682
        %v1764 = vunpack.c.l.b16 %v683
        %v1765 = vunpack.c.h.b16 %v683
        %v1766 = vunpack.c.l.b16 %v684
        %v1767 = vunpack.c.h.b16 %v684
        %v1768 = vunpack.c.l.b16 %v685
        %v1769 = vunpack.c.h.b16 %v685
        %v1770 = vunpack.c.l.b16 %v686
        %v1771 = vunpack.c.h.b16 %v686
        %v1772 = vunpack.c.l.b16 %v687
        %v1773 = vunpack.c.h.b16 %v687
        %v1774 = vunpack.c.l.b16 %v688
        %v1775 = vunpack.c.h.b16 %v688
        %v1776 = vunpack.c.l.b16 %v689
        %v1777 = vunpack.c.h.b16 %v689
        %v1778 = vunpack.c.l.b16 %v690
        %v1779 = vunpack.c.h.b16 %v690
        %v1780 = vunpack.c.l.b16 %v691
        %v1781 = vunpack.c.h.b16 %v691
        %v1782 = vunpack.c.l.b16 %v692
        %v1783 = vunpack.c.h.b16 %v692
        %v1784 = vunpack.c.l.b16 %v693
        %v1785 = vunpack.c.h.b16 %v693
        %v1786 = vunpack.c.l.b16 %v694
        %v1787 = vunpack.c.h.b16 %v694
        %v1788 = vunpack.c.l.b16 %v695
        %v1789 = vunpack.c.h.b16 %v695
        %v1790 = vunpack.c.l.b16 %v696
        %v1791 = vunpack.c.h.b16 %v696
        %v1792 = vunpack.c.l.b16 %v697
        %v1793 = vunpack.c.h.b16 %v697
        %v1794 = vunpack.c.l.b16 %v698
        %v1795 = vunpack.c.h.b16 %v698
        %v1796 = vunpack.c.l.b16 %v699
        %v1797 = vunpack.c.h.b16 %v699
        %v1798 = vunpack.c.l.b16 %v700
        %v1799 = vunpack.c.h.b16 %v700
        %v1800 = vunpack.c.l.b16 %v701
        %v1801 = vunpack.c.h.b16 %v701
        %v1802 = vunpack.c.l.b16 %v702
        %v1803 = vunpack.c.h.b16 %v702
        %v1804 = vunpack.c.l.b16 %v703
        %v1805 = vunpack.c.h.b16 %v703
        %v1806 = vunpack.c.l.b16 %v704
        %v1807 = vunpack.c.h.b16 %v704
        %v1808 = vunpack.c.l.b16 %v705
        %v1809 = vunpack.c.h.b16 %v705
        %v1810 = vunpack.c.l.b16 %v706
        %v1811 = vunpack.c.h.b16 %v706
        %v1812 = vunpack.c.l.b16 %v707
        %v1813 = vunpack.c.h.b16 %v707
        %v1814 = vunpack.c.l.b16 %v708
        %v1815 = vunpack.c.h.b16 %v708
        %v1816 = vunpack.c.l.b16 %v709
        %v1817 = vunpack.c.h.b16 %v709
        %v1818 = vunpack.c.l.b16 %v710
        %v1819 = vunpack.c.h.b16 %v710
        %v1820 = vunpack.c.l.b16 %v711
        %v1821 = vunpack.c.h.b16 %v711
        %v1822 = vunpack.c.l.b16 %v712
        %v1823 = vunpack.c.h.b16 %v712
        %v1824 = vunpack.c.l.b16 %v713
        %v1825 = vunpack.c.h.b16 %v713
        %v1826 = vunpack.c.l.b16 %v714
        %v1827 = vunpack.c.h.b16 %v714
        %v1828 = vunpack.c.l.b16 %v715
        %v1829 = vunpack.c.h.b16 %v715
        %v1830 = vunpack.c.l.b16 %v716
        %v1831 = vunpack.c.h.b16 %v716
        %v1832 = vunpack.c.l.b16 %v717
        %v1833 = vunpack.c.h.b16 %v717
        %v1834 = vunpack.c.l.b16 %v718
        %v1835 = vunpack.c.h.b16 %v718
        %v1836 = vunpack.c.l.b16 %v719
        %v1837 = vunpack.c.h.b16 %v719
        %v1838 = vunpack.c.l.b16 %v720
        %v1839 = vunpack.c.h.b16 %v720
        %v1840 = vunpack.c.l.b16 %v721
        %v1841 = vunpack.c.h.b16 %v721
        %v1842 = vunpack.c.l.b16 %v722
        %v1843 = vunpack.c.h.b16 %v722
        %v1844 = vunpack.c.l.b16 %v723
        %v1845 = vunpack.c.h.b16 %v723
        %v1846 = vunpack.c.l.b16 %v724
        %v1847 = vunpack.c.h.b16 %v724
        %v1848 = vunpack.c.l.b16 %v725
        %v1849 = vunpack.c.h.b16 %v725
        %v1850 = vunpack.c.l.b16 %v726
        %v1851 = vunpack.c.h.b16 %v726
        %v1852 = vunpack.c.l.b16 %v727
        %v1853 = vunpack.c.h.b16 %v727
        %v1854 = vunpack.c.l.b16 %v728
        %v1855 = vunpack.c.h.b16 %v728
        %v1856 = vunpack.c.l.b16 %v729
        %v1857 = vunpack.c.h.b16 %v729
        %v1858 = vunpack.c.l.b16 %v730
        %v1859 = vunpack.c.h.b16 %v730
        %v1860 = vunpack.c.l.b16 %v731
        %v1861 = vunpack.c.h.b16 %v731
        %v1862 = vunpack.c.l.b16 %v732
        %v1863 = vunpack.c.h.b16 %v732
        %v1864 = vunpack.c.l.b16 %v733
        %v1865 = vunpack.c.h.b16 %v733
        %v1866 = vunpack.c.l.b16 %v734
        %v1867 = vunpack.c.h.b16 %v734
        %v1868 = vunpack.c.l.b16 %v735
        %v1869 = vunpack.c.h.b16 %v735
        %v1870 = vunpack.c.l.b16 %v736
        %v1871 = vunpack.c.h.b16 %v736
        %v1872 = vunpack.c.l.b16 %v737
        %v1873 = vunpack.c.h.b16 %v737
        %v1874 = vunpack.c.l.b16 %v738
        %v1875 = vunpack.c.h.b16 %v738
        %v1876 = vunpack.c.l.b16 %v739
        %v1877 = vunpack.c.h.b16 %v739
        %v1878 = vunpack.c.l.b16 %v740
        %v1879 = vunpack.c.h.b16 %v740
        %v1880 = vunpack.c.l.b16 %v741
        %v1881 = vunpack.c.h.b16 %v741
        %v1882 = vunpack.c.l.b16 %v742
        %v1883 = vunpack.c.h.b16 %v742
        %v1884 = vunpack.c.l.b16 %v743
        %v1885 = vunpack.c.h.b16 %v743
        %v1886 = vunpack.c.l.b16 %v744
        %v1887 = vunpack.c.h.b16 %v744
        %v1888 = vunpack.c.l.b16 %v745
        %v1889 = vunpack.c.h.b16 %v745
        %v1890 = vunpack.c.l.b16 %v746
        %v1891 = vunpack.c.h.b16 %v746
        %v1892 = vunpack.c.l.b16 %v747
        %v1893 = vunpack.c.h.b16 %v747
        %v1894 = vunpack.c.l.b16 %v748
        %v1895 = vunpack.c.h.b16 %v748
        %v1896 = vunpack.c.l.b16 %v749
        %v1897 = vunpack.c.h.b16 %v749
        %v1898 = vunpack.c.l.b16 %v750
        %v1899 = vunpack.c.h.b16 %v750
        %v1900 = vunpack.c.l.b16 %v751
        %v1901 = vunpack.c.h.b16 %v751
        %v1902 = vunpack.c.l.b16 %v752
        %v1903 = vunpack.c.h.b16 %v752
        %v1904 = vunpack.c.l.b16 %v753
        %v1905 = vunpack.c.h.b16 %v753
        %v1906 = vunpack.c.l.b16 %v754
        %v1907 = vunpack.c.h.b16 %v754
        %v1908 = vunpack.c.l.b16 %v755
        %v1909 = vunpack.c.h.b16 %v755
        %v1910 = vunpack.c.l.b16 %v756
        %v1911 = vunpack.c.h.b16 %v756
        %v1912 = vunpack.c.l.b16 %v757
        %v1913 = vunpack.c.h.b16 %v757
        %v1914 = vunpack.c.l.b16 %v758
        %v1915 = vunpack.c.h.b16 %v758
        %v1916 = vunpack.c.l.b16 %v759
        %v1917 = vunpack.c.h.b16 %v759
        %v1918 = vunpack.c.l.b16 %v760
        %v1919 = vunpack.c.h.b16 %v760
        %v1920 = vunpack.c.l.b16 %v761
        %v1921 = vunpack.c.h.b16 %v761
        %v1922 = vunpack.c.l.b16 %v762
        %v1923 = vunpack.c.h.b16 %v762
        %v1924 = vunpack.c.l.b16 %v763
        %v1925 = vunpack.c.h.b16 %v763
        %v1926 = vunpack.c.l.b16 %v764
        %v1927 = vunpack.c.h.b16 %v764
        %v1928 = vunpack.c.l.b16 %v765
        %v1929 = vunpack.c.h.b16 %v765
        %v1930 = vunpack.c.l.b16 %v766
        %v1931 = vunpack.c.h.b16 %v766
        %v1932 = vunpack.c.l.b16 %v767
        %v1933 = vunpack.c.h.b16 %v767
        %v1934 = vunpack.c.l.b16 %v768
        %v1935 = vunpack.c.h.b16 %v768
        %v1936 = vunpack.c.l.b16 %v769
        %v1937 = vunpack.c.h.b16 %v769
        %v1938 = vunpack.c.l.b16 %v770
        %v1939 = vunpack.c.h.b16 %v770
        %v1940 = vunpack.c.l.b16 %v771
        %v1941 = vunpack.c.h.b16 %v771
        %v1942 = vunpack.c.l.b16 %v772
        %v1943 = vunpack.c.h.b16 %v772
        %v1944 = vunpack.c.l.b16 %v773
        %v1945 = vunpack.c.h.b16 %v773
        %v1946 = vunpack.c.l.b16 %v774
        %v1947 = vunpack.c.h.b16 %v774
        %v1948 = vunpack.c.l.b16 %v775
        %v1949 = vunpack.c.h.b16 %v775
        %v1950 = vunpack.c.l.b16 %v776
        %v1951 = vunpack.c.h.b16 %v776
        %v1952 = vunpack.c.l.b16 %v777
        %v1953 = vunpack.c.h.b16 %v777
        %v1954 = vunpack.c.l.b16 %v778
        %v1955 = vunpack.c.h.b16 %v778
        %v1956 = vunpack.c.l.b16 %v779
        %v1957 = vunpack.c.h.b16 %v779
        %v1958 = vunpack.c.l.b16 %v780
        %v1959 = vunpack.c.h.b16 %v780
        %v1960 = vunpack.c.l.b16 %v781
        %v1961 = vunpack.c.h.b16 %v781
        %v1962 = vunpack.c.l.b16 %v782
        %v1963 = vunpack.c.h.b16 %v782
        %v1964 = vunpack.c.l.b16 %v783
        %v1965 = vunpack.c.h.b16 %v783
        %v1966 = vunpack.c.l.b16 %v784
        %v1967 = vunpack.c.h.b16 %v784
        %v1968 = vunpack.c.l.b16 %v785
        %v1969 = vunpack.c.h.b16 %v785
        %v1970 = vunpack.c.l.b16 %v786
        %v1971 = vunpack.c.h.b16 %v786
        %v1972 = vunpack.c.l.b16 %v787
        %v1973 = vunpack.c.h.b16 %v787
        %v1974 = vunpack.c.l.b16 %v788
        %v1975 = vunpack.c.h.b16 %v788
        %v1976 = vunpack.c.l.b16 %v789
        %v1977 = vunpack.c.h.b16 %v789
        %v1978 = vunpack.c.l.b16 %v790
        %v1979 = vunpack.c.h.b16 %v790
        %v1980 = vunpack.c.l.b16 %v791
        %v1981 = vunpack.c.h.b16 %v791
        %v1982 = vunpack.c.l.b16 %v792
        %v1983 = vunpack.c.h.b16 %v792
        %v1984 = vunpack.c.l.b16 %v793
        %v1985 = vunpack.c.h.b16 %v793
        %v1986 = vunpack.c.l.b16 %v794
        %v1987 = vunpack.c.h.b16 %v794
        %v1988 = vunpack.c.l.b16 %v795
        %v1989 = vunpack.c.h.b16 %v795
        %v1990 = vunpack.c.l.b16 %v796
        %v1991 = vunpack.c.h.b16 %v796
        %v1992 = vunpack.c.l.b16 %v797
        %v1993 = vunpack.c.h.b16 %v797
        %v1994 = vunpack.c.l.b16 %v798
        %v1995 = vunpack.c.h.b16 %v798
        %v1996 = vunpack.c.l.b16 %v799
        %v1997 = vunpack.c.h.b16 %v799
        %v1998 = vunpack.c.l.b16 %v800
        %v1999 = vunpack.c.h.b16 %v800
        %v2000 = vunpack.c.l.b16 %v801
        %v2001 = vunpack.c.h.b16 %v801
        %v2002 = vunpack.c.l.b16 %v802
        %v2003 = vunpack.c.h.b16 %v802
        %v2004 = vunpack.c.l.b16 %v803
        %v2005 = vunpack.c.h.b16 %v803
        %v2006 = vunpack.c.l.b16 %v804
        %v2007 = vunpack.c.h.b16 %v804
        %v2008 = vunpack.c.l.b16 %v805
        %v2009 = vunpack.c.h.b16 %v805
        %v2010 = vunpack.c.l.b16 %v806
        %v2011 = vunpack.c.h.b16 %v806
        %v2012 = vunpack.c.l.b16 %v807
        %v2013 = vunpack.c.h.b16 %v807
        %v2014 = vunpack.c.l.b16 %v808
        %v2015 = vunpack.c.h.b16 %v808
        %v2016 = vunpack.c.l.b16 %v809
        %v2017 = vunpack.c.h.b16 %v809
        %v2018 = vunpack.c.l.b16 %v810
        %v2019 = vunpack.c.h.b16 %v810
        %v2020 = vunpack.c.l.b16 %v811
        %v2021 = vunpack.c.h.b16 %v811
        %v2022 = vunpack.c.l.b16 %v812
        %v2023 = vunpack.c.h.b16 %v812
        %v2024 = vunpack.c.l.b16 %v813
        %v2025 = vunpack.c.h.b16 %v813
        %v2026 = vunpack.c.l.b16 %v814
        %v2027 = vunpack.c.h.b16 %v814
        %v2028 = vunpack.c.l.b16 %v815
        %v2029 = vunpack.c.h.b16 %v815
        %v2030 = vunpack.c.l.b16 %v816
        %v2031 = vunpack.c.h.b16 %v816
        %v2032 = vunpack.c.l.b16 %v817
        %v2033 = vunpack.c.h.b16 %v817
        %v2034 = vunpack.c.l.b16 %v818
        %v2035 = vunpack.c.h.b16 %v818
        %v2036 = vunpack.c.l.b16 %v819
        %v2037 = vunpack.c.h.b16 %v819
        %v2038 = vunpack.c.l.b16 %v820
        %v2039 = vunpack.c.h.b16 %v820
        %v2040 = vunpack.c.l.b16 %v821
        %v2041 = vunpack.c.h.b16 %v821
        %v2042 = vunpack.c.l.b16 %v822
        %v2043 = vunpack.c.h.b16 %v822
        %v2044 = vunpack.c.l.b16 %v823
        %v2045 = vunpack.c.h.b16 %v823
        %v2046 = vunpack.c.l.b16 %v824
        %v2047 = vunpack.c.h.b16 %v824
        %v2048 = vunpack.c.l.b16 %v825
        %v2049 = vunpack.c.h.b16 %v825
        %v2050 = vunpack.c.l.b16 %v826
        %v2051 = vunpack.c.h.b16 %v826
        %v2052 = vunpack.c.l.b16 %v827
        %v2053 = vunpack.c.h.b16 %v827
        %v2054 = vunpack.c.l.b16 %v828
        %v2055 = vunpack.c.h.b16 %v828
        %v2056 = vunpack.c.l.b16 %v829
        %v2057 = vunpack.c.h.b16 %v829
        %v2058 = vunpack.c.l.b16 %v830
        %v2059 = vunpack.c.h.b16 %v830
        %v2060 = vunpack.c.l.b16 %v831
        %v2061 = vunpack.c.h.b16 %v831
        %v2062 = vunpack.c.l.b16 %v832
        %v2063 = vunpack.c.h.b16 %v832
        %v2064 = vunpack.c.l.b16 %v833
        %v2065 = vunpack.c.h.b16 %v833
        %v2066 = vunpack.c.l.b16 %v834
        %v2067 = vunpack.c.h.b16 %v834
        %v2068 = vunpack.c.l.b16 %v835
        %v2069 = vunpack.c.h.b16 %v835
        %v2070 = vunpack.c.l.b16 %v836
        %v2071 = vunpack.c.h.b16 %v836
        %v2072 = vunpack.c.l.b16 %v837
        %v2073 = vunpack.c.h.b16 %v837
        %v2074 = vunpack.c.l.b16 %v838
        %v2075 = vunpack.c.h.b16 %v838
        %v2076 = vunpack.c.l.b16 %v839
        %v2077 = vunpack.c.h.b16 %v839
        %v2078 = vunpack.c.l.b16 %v840
        %v2079 = vunpack.c.h.b16 %v840
        %v2080 = vunpack.c.l.b16 %v841
        %v2081 = vunpack.c.h.b16 %v841
        %v2082 = vunpack.c.l.b16 %v842
        %v2083 = vunpack.c.h.b16 %v842
        %v2084 = vunpack.c.l.b16 %v843
        %v2085 = vunpack.c.h.b16 %v843
        %v2086 = vunpack.c.l.b16 %v844
        %v2087 = vunpack.c.h.b16 %v844
        %v2088 = vunpack.c.l.b16 %v845
        %v2089 = vunpack.c.h.b16 %v845
        %v2090 = vunpack.c.l.b16 %v846
        %v2091 = vunpack.c.h.b16 %v846
        %v2092 = vunpack.c.l.b16 %v847
        %v2093 = vunpack.c.h.b16 %v847
        %v2094 = vunpack.c.l.b16 %v848
        %v2095 = vunpack.c.h.b16 %v848
        %v2096 = vunpack.c.l.b16 %v849
        %v2097 = vunpack.c.h.b16 %v849
        %v2098 = vunpack.c.l.b16 %v850
        %v2099 = vunpack.c.h.b16 %v850
        %v2100 = vunpack.c.l.b16 %v851
        %v2101 = vunpack.c.h.b16 %v851
        %v2102 = vunpack.c.l.b16 %v852
        %v2103 = vunpack.c.h.b16 %v852
        %v2104 = vunpack.c.l.b16 %v853
        %v2105 = vunpack.c.h.b16 %v853
        %v2106 = vunpack.c.l.b16 %v854
        %v2107 = vunpack.c.h.b16 %v854
        %v2108 = vunpack.c.l.b16 %v855
        %v2109 = vunpack.c.h.b16 %v855
        %v2110 = vunpack.c.l.b16 %v856
        %v2111 = vunpack.c.h.b16 %v856
        %v2112 = vunpack.c.l.b16 %v857
        %v2113 = vunpack.c.h.b16 %v857
        %v2114 = vunpack.c.l.b16 %v858
        %v2115 = vunpack.c.h.b16 %v858
        %v2116 = vunpack.c.l.b16 %v859
        %v2117 = vunpack.c.h.b16 %v859
        %v2118 = vunpack.c.l.b16 %v860
        %v2119 = vunpack.c.h.b16 %v860
        %v2120 = vunpack.c.l.b16 %v861
        %v2121 = vunpack.c.h.b16 %v861
        %v2122 = vunpack.c.l.b16 %v862
        %v2123 = vunpack.c.h.b16 %v862
        %v2124 = vunpack.c.l.b16 %v863
        %v2125 = vunpack.c.h.b16 %v863
        %v2126 = vunpack.c.l.b16 %v864
        %v2127 = vunpack.c.h.b16 %v864
        %v2128 = vunpack.c.l.b16 %v865
        %v2129 = vunpack.c.h.b16 %v865
        %v2130 = vunpack.c.l.b16 %v866
        %v2131 = vunpack.c.h.b16 %v866
        %v2132 = vunpack.c.l.b16 %v867
        %v2133 = vunpack.c.h.b16 %v867
        %v2134 = vunpack.c.l.b16 %v868
        %v2135 = vunpack.c.h.b16 %v868
        %v2136 = vunpack.c.l.b16 %v869
        %v2137 = vunpack.c.h.b16 %v869
        %v2138 = vunpack.c.l.b16 %v870
        %v2139 = vunpack.c.h.b16 %v870
        %v2140 = vunpack.c.l.b16 %v871
        %v2141 = vunpack.c.h.b16 %v871
        %v2142 = vunpack.c.l.b16 %v872
        %v2143 = vunpack.c.h.b16 %v872
        %v2144 = vunpack.c.l.b16 %v873
        %v2145 = vunpack.c.h.b16 %v873
        %v2146 = vunpack.c.l.b16 %v874
        %v2147 = vunpack.c.h.b16 %v874
        %v2148 = vunpack.c.l.b16 %v875
        %v2149 = vunpack.c.h.b16 %v875
        %v2150 = vunpack.c.l.b16 %v876
        %v2151 = vunpack.c.h.b16 %v876
        %v2152 = vunpack.c.l.b16 %v877
        %v2153 = vunpack.c.h.b16 %v877
        %v2154 = vunpack.c.l.b16 %v878
        %v2155 = vunpack.c.h.b16 %v878
        %v2156 = vunpack.c.l.b16 %v879
        %v2157 = vunpack.c.h.b16 %v879
        %v2158 = vunpack.c.l.b16 %v880
        %v2159 = vunpack.c.h.b16 %v880
        %v2160 = vunpack.c.l.b16 %v881
        %v2161 = vunpack.c.h.b16 %v881
        %v2162 = vunpack.c.l.b16 %v882
        %v2163 = vunpack.c.h.b16 %v882
        %v2164 = vunpack.c.l.b16 %v883
        %v2165 = vunpack.c.h.b16 %v883
        %v2166 = vunpack.c.l.b16 %v884
        %v2167 = vunpack.c.h.b16 %v884
        %v2168 = vunpack.c.l.b16 %v885
        %v2169 = vunpack.c.h.b16 %v885
        %v2170 = vunpack.c.l.b16 %v886
        %v2171 = vunpack.c.h.b16 %v886
        %v2172 = vunpack.c.l.b16 %v887
        %v2173 = vunpack.c.h.b16 %v887
        %v2174 = vunpack.c.l.b16 %v888
        %v2175 = vunpack.c.h.b16 %v888
        %v2176 = vunpack.c.l.b16 %v889
        %v2177 = vunpack.c.h.b16 %v889
        %v2178 = vunpack.c.l.b16 %v890
        %v2179 = vunpack.c.h.b16 %v890
        %v2180 = vunpack.c.l.b16 %v891
        %v2181 = vunpack.c.h.b16 %v891
        %v2182 = vunpack.c.l.b16 %v892
        %v2183 = vunpack.c.h.b16 %v892
        %v2184 = vunpack.c.l.b16 %v893
        %v2185 = vunpack.c.h.b16 %v893
        %v2186 = vunpack.c.l.b16 %v894
        %v2187 = vunpack.c.h.b16 %v894
        %v2188 = vunpack.c.l.b16 %v895
        %v2189 = vunpack.c.h.b16 %v895
        %v2190 = vunpack.c.l.b16 %v896
        %v2191 = vunpack.c.h.b16 %v896
        %v2192 = vunpack.c.l.b16 %v897
        %v2193 = vunpack.c.h.b16 %v897
        %v2194 = vunpack.c.l.b16 %v898
        %v2195 = vunpack.c.h.b16 %v898
        %v2196 = vunpack.c.l.b16 %v899
        %v2197 = vunpack.c.h.b16 %v899
        %v2198 = vunpack.c.l.b16 %v900
        %v2199 = vunpack.c.h.b16 %v900
        %v2200 = vunpack.c.l.b16 %v901
        %v2201 = vunpack.c.h.b16 %v901
        %v2202 = vunpack.c.l.b16 %v902
        %v2203 = vunpack.c.h.b16 %v902
        %v2204 = vunpack.c.l.b16 %v903
        %v2205 = vunpack.c.h.b16 %v903
        %v2206 = vunpack.c.l.b16 %v904
        %v2207 = vunpack.c.h.b16 %v904
        %v2208 = vunpack.c.l.b16 %v905
        %v2209 = vunpack.c.h.b16 %v905
        %v2210 = vunpack.c.l.b16 %v906
        %v2211 = vunpack.c.h.b16 %v906
        %v2212 = vunpack.c.l.b16 %v907
        %v2213 = vunpack.c.h.b16 %v907
        %v2214 = vunpack.c.l.b16 %v908
        %v2215 = vunpack.c.h.b16 %v908
        %v2216 = vunpack.c.l.b16 %v909
        %v2217 = vunpack.c.h.b16 %v909
        %v2218 = vunpack.c.l.b16 %v910
        %v2219 = vunpack.c.h.b16 %v910
        %v2220 = vunpack.c.l.b16 %v911
        %v2221 = vunpack.c.h.b16 %v911
        %v2222 = vunpack.c.l.b16 %v912
        %v2223 = vunpack.c.h.b16 %v912
        %v2224 = vunpack.c.l.b16 %v913
        %v2225 = vunpack.c.h.b16 %v913
        %v2226 = vunpack.c.l.b16 %v914
        %v2227 = vunpack.c.h.b16 %v914
        %v2228 = vunpack.c.l.b16 %v915
        %v2229 = vunpack.c.h.b16 %v915
        %v2230 = vunpack.c.l.b16 %v916
        %v2231 = vunpack.c.h.b16 %v916
        %v2232 = vunpack.c.l.b16 %v917
        %v2233 = vunpack.c.h.b16 %v917
        %v2234 = vunpack.c.l.b16 %v918
        %v2235 = vunpack.c.h.b16 %v918
        %v2236 = vunpack.c.l.b16 %v919
        %v2237 = vunpack.c.h.b16 %v919
        %v2238 = vunpack.c.l.b16 %v920
        %v2239 = vunpack.c.h.b16 %v920
        %v2240 = vunpack.c.l.b16 %v921
        %v2241 = vunpack.c.h.b16 %v921
        %v2242 = vunpack.c.l.b16 %v922
        %v2243 = vunpack.c.h.b16 %v922
        %v2244 = vunpack.c.l.b16 %v923
        %v2245 = vunpack.c.h.b16 %v923
        %v2246 = vunpack.c.l.b16 %v924
        %v2247 = vunpack.c.h.b16 %v924
        %v2248 = vunpack.c.l.b16 %v925
        %v2249 = vunpack.c.h.b16 %v925
        %v2250 = vunpack.c.l.b16 %v926
        %v2251 = vunpack.c.h.b16 %v926
        %v2252 = vunpack.c.l.b16 %v927
        %v2253 = vunpack.c.h.b16 %v927
        %v2254 = vunpack.c.l.b16 %v928
        %v2255 = vunpack.c.h.b16 %v928
        %v2256 = vunpack.c.l.b16 %v929
        %v2257 = vunpack.c.h.b16 %v929
        %v2258 = vunpack.c.l.b16 %v930
        %v2259 = vunpack.c.h.b16 %v930
        %v2260 = vunpack.c.l.b16 %v931
        %v2261 = vunpack.c.h.b16 %v931
        %v2262 = vunpack.c.l.b16 %v932
        %v2263 = vunpack.c.h.b16 %v932
        %v2264 = vunpack.c.l.b16 %v933
        %v2265 = vunpack.c.h.b16 %v933
        %v2266 = vunpack.c.l.b16 %v934
        %v2267 = vunpack.c.h.b16 %v934
        %v2268 = vunpack.c.l.b16 %v935
        %v2269 = vunpack.c.h.b16 %v935
        %v2270 = vunpack.c.l.b16 %v936
        %v2271 = vunpack.c.h.b16 %v936
        %v2272 = vunpack.c.l.b16 %v937
        %v2273 = vunpack.c.h.b16 %v937
        %v2274 = vunpack.c.l.b16 %v938
        %v2275 = vunpack.c.h.b16 %v938
        %v2276 = vunpack.c.l.b16 %v939
        %v2277 = vunpack.c.h.b16 %v939
        %v2278 = vunpack.c.l.b16 %v940
        %v2279 = vunpack.c.h.b16 %v940
        %v2280 = vunpack.c.l.b16 %v941
        %v2281 = vunpack.c.h.b16 %v941
        %v2282 = vunpack.c.l.b16 %v942
        %v2283 = vunpack.c.h.b16 %v942
        %v2284 = vunpack.c.l.b16 %v943
        %v2285 = vunpack.c.h.b16 %v943
        %v2286 = vunpack.c.l.b16 %v944
        %v2287 = vunpack.c.h.b16 %v944
        %v2288 = vunpack.c.l.b16 %v945
        %v2289 = vunpack.c.h.b16 %v945
        %v2290 = vunpack.c.l.b16 %v946
        %v2291 = vunpack.c.h.b16 %v946
        %v2292 = vunpack.c.l.b16 %v947
        %v2293 = vunpack.c.h.b16 %v947
        %v2294 = vunpack.c.l.b16 %v948
        %v2295 = vunpack.c.h.b16 %v948
        %v2296 = vunpack.c.l.b16 %v949
        %v2297 = vunpack.c.h.b16 %v949
        %v2298 = vunpack.c.l.b16 %v950
        %v2299 = vunpack.c.h.b16 %v950
        %v2300 = vunpack.c.l.b16 %v951
        %v2301 = vunpack.c.h.b16 %v951
        %v2302 = vunpack.c.l.b16 %v952
        %v2303 = vunpack.c.h.b16 %v952
        %v2304 = vunpack.c.l.b16 %v953
        %v2305 = vunpack.c.h.b16 %v953
        %v2306 = vunpack.c.l.b16 %v954
        %v2307 = vunpack.c.h.b16 %v954
        %v2308 = vunpack.c.l.b16 %v955
        %v2309 = vunpack.c.h.b16 %v955
        %v2310 = vunpack.c.l.b16 %v956
        %v2311 = vunpack.c.h.b16 %v956
        %v2312 = vunpack.c.l.b16 %v957
        %v2313 = vunpack.c.h.b16 %v957
        %v2314 = vunpack.c.l.b16 %v958
        %v2315 = vunpack.c.h.b16 %v958
        %v2316 = vunpack.c.l.b16 %v959
        %v2317 = vunpack.c.h.b16 %v959
        %v2318 = vunpack.c.l.b16 %v960
        %v2319 = vunpack.c.h.b16 %v960
        %v2320 = vunpack.c.l.b16 %v961
        %v2321 = vunpack.c.h.b16 %v961
        %v2322 = vunpack.c.l.b16 %v962
        %v2323 = vunpack.c.h.b16 %v962
        %v2324 = vunpack.c.l.b16 %v963
        %v2325 = vunpack.c.h.b16 %v963
        %v2326 = vunpack.c.l.b16 %v964
        %v2327 = vunpack.c.h.b16 %v964
        %v2328 = vunpack.c.l.b16 %v965
        %v2329 = vunpack.c.h.b16 %v965
        %v2330 = vunpack.c.l.b16 %v966
        %v2331 = vunpack.c.h.b16 %v966
        %v2332 = vunpack.c.l.b16 %v967
        %v2333 = vunpack.c.h.b16 %v967
        %v2334 = vunpack.c.l.b16 %v968
        %v2335 = vunpack.c.h.b16 %v968
        %v2336 = vunpack.c.l.b16 %v969
        %v2337 = vunpack.c.h.b16 %v969
        %v2338 = vunpack.c.l.b16 %v970
        %v2339 = vunpack.c.h.b16 %v970
        %v2340 = vunpack.c.l.b16 %v971
        %v2341 = vunpack.c.h.b16 %v971
        %v2342 = vunpack.c.l.b16 %v972
        %v2343 = vunpack.c.h.b16 %v972
        %v2344 = vunpack.c.l.b16 %v973
        %v2345 = vunpack.c.h.b16 %v973
        %v2346 = vunpack.c.l.b16 %v974
        %v2347 = vunpack.c.h.b16 %v974
        %v2348 = vunpack.c.l.b16 %v975
        %v2349 = vunpack.c.h.b16 %v975
        %v2350 = vunpack.c.l.b16 %v976
        %v2351 = vunpack.c.h.b16 %v976
        %v2352 = vunpack.c.l.b16 %v977
        %v2353 = vunpack.c.h.b16 %v977
        %v2354 = vunpack.c.l.b16 %v978
        %v2355 = vunpack.c.h.b16 %v978
        %v2356 = vunpack.c.l.b16 %v979
        %v2357 = vunpack.c.h.b16 %v979
        %v2358 = vunpack.c.l.b16 %v980
        %v2359 = vunpack.c.h.b16 %v980
        %v2360 = vunpack.c.l.b16 %v981
        %v2361 = vunpack.c.h.b16 %v981
        %v2362 = vunpack.c.l.b16 %v982
        %v2363 = vunpack.c.h.b16 %v982
        %v2364 = vunpack.c.l.b16 %v983
        %v2365 = vunpack.c.h.b16 %v983
        %v2366 = vunpack.c.l.b16 %v984
        %v2367 = vunpack.c.h.b16 %v984
        %v2368 = vunpack.c.l.b16 %v985
        %v2369 = vunpack.c.h.b16 %v985
        %v2370 = vunpack.c.l.b16 %v986
        %v2371 = vunpack.c.h.b16 %v986
        %v2372 = vunpack.c.l.b16 %v987
        %v2373 = vunpack.c.h.b16 %v987
        %v2374 = vunpack.c.l.b16 %v988
        %v2375 = vunpack.c.h.b16 %v988
        %v2376 = vunpack.c.l.b16 %v989
        %v2377 = vunpack.c.h.b16 %v989
        %v2378 = vunpack.c.l.b16 %v990
        %v2379 = vunpack.c.h.b16 %v990
        %v2380 = vunpack.c.l.b16 %v991
        %v2381 = vunpack.c.h.b16 %v991
        %v2382 = vunpack.c.l.b16 %v992
        %v2383 = vunpack.c.h.b16 %v992
        %v2384 = vunpack.c.l.b16 %v993
        %v2385 = vunpack.c.h.b16 %v993
        %v2386 = vunpack.c.l.b16 %v994
        %v2387 = vunpack.c.h.b16 %v994
        %v2388 = vunpack.c.l.b16 %v995
        %v2389 = vunpack.c.h.b16 %v995
        %v2390 = vunpack.c.l.b16 %v996
        %v2391 = vunpack.c.h.b16 %v996
        %v2392 = vunpack.c.l.b16 %v997
        %v2393 = vunpack.c.h.b16 %v997
        %v2394 = vunpack.c.l.b16 %v998
        %v2395 = vunpack.c.h.b16 %v998
        %v2396 = vunpack.c.l.b16 %v999
        %v2397 = vunpack.c.h.b16 %v999
        %v2398 = vunpack.c.l.b16 %v1000
        %v2399 = vunpack.c.h.b16 %v1000
        %v2400 = vunpack.c.l.b16 %v1001
        %v2401 = vunpack.c.h.b16 %v1001
        %v2402 = vunpack.c.l.b16 %v1002
        %v2403 = vunpack.c.h.b16 %v1002
        %v2404 = vunpack.c.l.b16 %v1003
        %v2405 = vunpack.c.h.b16 %v1003
        %v2406 = vunpack.c.l.b16 %v1004
        %v2407 = vunpack.c.h.b16 %v1004
        %v2408 = vunpack.c.l.b16 %v1005
        %v2409 = vunpack.c.h.b16 %v1005
        %v2410 = vunpack.c.l.b16 %v1006
        %v2411 = vunpack.c.h.b16 %v1006
        %v2412 = vunpack.c.l.b16 %v1007
        %v2413 = vunpack.c.h.b16 %v1007
        %v2414 = vunpack.c.l.b16 %v1008
        %v2415 = vunpack.c.h.b16 %v1008
        %v2416 = vunpack.c.l.b16 %v1009
        %v2417 = vunpack.c.h.b16 %v1009
        %v2418 = vunpack.c.l.b16 %v1010
        %v2419 = vunpack.c.h.b16 %v1010
        %v2420 = vunpack.c.l.b16 %v1011
        %v2421 = vunpack.c.h.b16 %v1011
        %v2422 = vunpack.c.l.b16 %v1012
        %v2423 = vunpack.c.h.b16 %v1012
        %v2424 = vunpack.c.l.b16 %v1013
        %v2425 = vunpack.c.h.b16 %v1013
        %v2426 = vunpack.c.l.b16 %v1014
        %v2427 = vunpack.c.h.b16 %v1014
        %v2428 = vunpack.c.l.b16 %v1015
        %v2429 = vunpack.c.h.b16 %v1015
        %v2430 = vunpack.c.l.b16 %v1016
        %v2431 = vunpack.c.h.b16 %v1016
        %v2432 = vunpack.c.l.b16 %v1017
        %v2433 = vunpack.c.h.b16 %v1017
        %v2434 = vunpack.c.l.b16 %v1018
        %v2435 = vunpack.c.h.b16 %v1018
        %v2436 = vunpack.c.l.b16 %v1019
        %v2437 = vunpack.c.h.b16 %v1019
        %v2438 = vunpack.c.l.b16 %v1020
        %v2439 = vunpack.c.h.b16 %v1020
        %v2440 = vunpack.c.l.b16 %v1021
        %v2441 = vunpack.c.h.b16 %v1021
        %v2442 = vunpack.c.l.b16 %v1022
        %v2443 = vunpack.c.h.b16 %v1022
        %v2444 = vunpack.c.l.b16 %v1023
        %v2445 = vunpack.c.h.b16 %v1023
        %v2446 = vunpack.c.l.b16 %v1024
        %v2447 = vunpack.c.h.b16 %v1024
        %v2448 = vunpack.c.l.b16 %v1025
        %v2449 = vunpack.c.h.b16 %v1025
        %v2450 = vunpack.c.l.b16 %v1026
        %v2451 = vunpack.c.h.b16 %v1026
        %v2452 = vunpack.c.l.b16 %v1027
        %v2453 = vunpack.c.h.b16 %v1027
        %v2454 = vunpack.c.l.b16 %v1028
        %v2455 = vunpack.c.h.b16 %v1028
        %v2456 = vunpack.c.l.b16 %v1029
        %v2457 = vunpack.c.h.b16 %v1029
        %v2458 = vunpack.c.l.b16 %v1030
        %v2459 = vunpack.c.h.b16 %v1030
        %v2460 = vunpack.c.l.b16 %v1031
        %v2461 = vunpack.c.h.b16 %v1031
        %v2462 = vunpack.c.l.b16 %v1032
        %v2463 = vunpack.c.h.b16 %v1032
        %v2464 = vunpack.c.l.b16 %v1033
        %v2465 = vunpack.c.h.b16 %v1033
        %v2466 = vunpack.c.l.b16 %v1034
        %v2467 = vunpack.c.h.b16 %v1034
        %v2468 = vunpack.c.l.b16 %v1035
        %v2469 = vunpack.c.h.b16 %v1035
        %v2470 = vunpack.c.l.b16 %v1036
        %v2471 = vunpack.c.h.b16 %v1036
        %v2472 = vunpack.c.l.b16 %v1037
        %v2473 = vunpack.c.h.b16 %v1037
        %v2474 = vunpack.c.l.b16 %v1038
        %v2475 = vunpack.c.h.b16 %v1038
        %v2476 = vunpack.c.l.b16 %v1039
        %v2477 = vunpack.c.h.b16 %v1039
        %v2478 = vunpack.c.l.b16 %v1040
        %v2479 = vunpack.c.h.b16 %v1040
        %v2480 = vunpack.c.l.b16 %v1041
        %v2481 = vunpack.c.h.b16 %v1041
        %v2482 = vunpack.c.l.b16 %v1042
        %v2483 = vunpack.c.h.b16 %v1042
        %v2484 = vunpack.c.l.b16 %v1043
        %v2485 = vunpack.c.h.b16 %v1043
        %v2486 = vunpack.c.l.b16 %v1044
        %v2487 = vunpack.c.h.b16 %v1044
        %v2488 = vunpack.c.l.b16 %v1045
        %v2489 = vunpack.c.h.b16 %v1045
        %v2490 = vunpack.c.l.b16 %v1046
        %v2491 = vunpack.c.h.b16 %v1046
        %v2492 = vunpack.c.l.b16 %v1047
        %v2493 = vunpack.c.h.b16 %v1047
        %v2494 = vunpack.c.l.b16 %v1048
        %v2495 = vunpack.c.h.b16 %v1048
        %v2496 = vunpack.c.l.b16 %v1049
        %v2497 = vunpack.c.h.b16 %v1049
        %v2498 = vunpack.c.l.b16 %v1050
        %v2499 = vunpack.c.h.b16 %v1050
        %v2500 = vunpack.c.l.b16 %v1051
        %v2501 = vunpack.c.h.b16 %v1051
        %v2502 = vunpack.c.l.b16 %v1052
        %v2503 = vunpack.c.h.b16 %v1052
        %v2504 = vunpack.c.l.b16 %v1053
        %v2505 = vunpack.c.h.b16 %v1053
        %v2506 = vunpack.c.l.b16 %v1054
        %v2507 = vunpack.c.h.b16 %v1054
        %v2508 = vunpack.c.l.b16 %v1055
        %v2509 = vunpack.c.h.b16 %v1055
        %v2510 = vunpack.c.l.b16 %v1056
        %v2511 = vunpack.c.h.b16 %v1056
        %v2512 = vunpack.c.l.b16 %v1057
        %v2513 = vunpack.c.h.b16 %v1057
        %v2514 = vunpack.c.l.b16 %v1058
        %v2515 = vunpack.c.h.b16 %v1058
        %v2516 = vunpack.c.l.b16 %v1059
        %v2517 = vunpack.c.h.b16 %v1059
        %v2518 = vunpack.c.l.b16 %v1060
        %v2519 = vunpack.c.h.b16 %v1060
        %v2520 = vunpack.c.l.b16 %v1061
        %v2521 = vunpack.c.h.b16 %v1061
        %v2522 = vunpack.c.l.b16 %v1062
        %v2523 = vunpack.c.h.b16 %v1062
        %v2524 = vunpack.c.l.b16 %v1063
        %v2525 = vunpack.c.h.b16 %v1063
        %v2526 = vunpack.c.l.b16 %v1064
        %v2527 = vunpack.c.h.b16 %v1064
        %v2528 = vunpack.c.l.b16 %v1065
        %v2529 = vunpack.c.h.b16 %v1065
        %v2530 = vunpack.c.l.b16 %v1066
        %v2531 = vunpack.c.h.b16 %v1066
        %v2532 = vunpack.c.l.b16 %v1067
        %v2533 = vunpack.c.h.b16 %v1067
        %v2534 = vunpack.c.l.b16 %v1068
        %v2535 = vunpack.c.h.b16 %v1068
        %v2536 = vunpack.c.l.b16 %v1069
        %v2537 = vunpack.c.h.b16 %v1069
        %v2538 = vunpack.c.l.b16 %v1070
        %v2539 = vunpack.c.h.b16 %v1070
        %v2540 = vunpack.c.l.b16 %v1071
        %v2541 = vunpack.c.h.b16 %v1071
        %v2542 = vunpack.c.l.b16 %v1072
        %v2543 = vunpack.c.h.b16 %v1072
        %v2544 = vunpack.c.l.b16 %v1073
        %v2545 = vunpack.c.h.b16 %v1073
        %v2546 = vunpack.c.l.b16 %v1074
        %v2547 = vunpack.c.h.b16 %v1074
        %v2548 = vunpack.c.l.b16 %v1075
        %v2549 = vunpack.c.h.b16 %v1075
        %v2550 = vunpack.c.l.b16 %v1076
        %v2551 = vunpack.c.h.b16 %v1076
        %v2552 = vunpack.c.l.b16 %v1077
        %v2553 = vunpack.c.h.b16 %v1077
        %v2554 = vunpack.c.l.b16 %v1078
        %v2555 = vunpack.c.h.b16 %v1078
        %v2556 = vunpack.c.l.b16 %v1079
        %v2557 = vunpack.c.h.b16 %v1079
        %v2558 = vunpack.c.l.b16 %v1080
        %v2559 = vunpack.c.h.b16 %v1080
        %v2560 = vunpack.c.l.b16 %v1081
        %v2561 = vunpack.c.h.b16 %v1081
        %v2562 = vunpack.c.l.b16 %v1082
        %v2563 = vunpack.c.h.b16 %v1082
        %v2564 = vunpack.c.l.b16 %v1083
        %v2565 = vunpack.c.h.b16 %v1083
        %v2566 = vunpack.c.l.b16 %v1084
        %v2567 = vunpack.c.h.b16 %v1084
        %v2568 = vunpack.c.l.b16 %v1085
        %v2569 = vunpack.c.h.b16 %v1085
        %v2570 = vunpack.c.l.b16 %v1086
        %v2571 = vunpack.c.h.b16 %v1086
        %v2572 = vunpack.c.l.b16 %v1087
        %v2573 = vunpack.c.h.b16 %v1087
        %v2574 = vunpack.c.l.b16 %v1088
        %v2575 = vunpack.c.h.b16 %v1088
        %v2576 = vunpack.c.l.b16 %v1089
        %v2577 = vunpack.c.h.b16 %v1089
        %v2578 = vunpack.c.l.b16 %v1090
        %v2579 = vunpack.c.h.b16 %v1090
        %v2580 = vunpack.c.l.b16 %v1091
        %v2581 = vunpack.c.h.b16 %v1091
        %v2582 = vunpack.c.l.b16 %v1092
        %v2583 = vunpack.c.h.b16 %v1092
        %v2584 = vunpack.c.l.b16 %v1093
        %v2585 = vunpack.c.h.b16 %v1093
        %v2586 = vunpack.c.l.b16 %v1094
        %v2587 = vunpack.c.h.b16 %v1094
        %v2588 = vunpack.c.l.b16 %v1095
        %v2589 = vunpack.c.h.b16 %v1095
        %v2590 = vunpack.c.l.b16 %v1096
        %v2591 = vunpack.c.h.b16 %v1096
        %v2592 = vunpack.c.l.b16 %v1097
        %v2593 = vunpack.c.h.b16 %v1097
        %v2594 = vunpack.c.l.b16 %v1098
        %v2595 = vunpack.c.h.b16 %v1098
        %v2596 = vunpack.c.l.b16 %v1099
        %v2597 = vunpack.c.h.b16 %v1099
        %v2598 = vunpack.c.l.b16 %v1100
        %v2599 = vunpack.c.h.b16 %v1100
        %v2600 = vunpack.c.l.b16 %v1101
        %v2601 = vunpack.c.h.b16 %v1101
        %v2602 = vunpack.c.l.b16 %v1102
        %v2603 = vunpack.c.h.b16 %v1102
        %v2604 = vunpack.c.l.b16 %v1103
        %v2605 = vunpack.c.h.b16 %v1103
        %v2606 = vunpack.c.l.b16 %v1104
        %v2607 = vunpack.c.h.b16 %v1104
        %v2608 = vunpack.c.l.b16 %v1105
        %v2609 = vunpack.c.h.b16 %v1105
        %v2610 = vunpack.c.l.b16 %v1106
        %v2611 = vunpack.c.h.b16 %v1106
        %v2612 = vunpack.c.l.b16 %v1107
        %v2613 = vunpack.c.h.b16 %v1107
        %v2614 = vunpack.c.l.b16 %v1108
        %v2615 = vunpack.c.h.b16 %v1108
        %v2616 = vunpack.c.l.b16 %v1109
        %v2617 = vunpack.c.h.b16 %v1109
        %v2618 = vunpack.c.l.b16 %v1110
        %v2619 = vunpack.c.h.b16 %v1110
        %v2620 = vunpack.c.l.b16 %v1111
        %v2621 = vunpack.c.h.b16 %v1111
        %v2622 = vunpack.c.l.b16 %v1112
        %v2623 = vunpack.c.h.b16 %v1112
        %v2624 = vunpack.c.l.b16 %v1113
        %v2625 = vunpack.c.h.b16 %v1113
        %v2626 = vunpack.c.l.b16 %v1114
        %v2627 = vunpack.c.h.b16 %v1114
        %v2628 = vunpack.c.l.b16 %v1115
        %v2629 = vunpack.c.h.b16 %v1115
        %v2630 = vunpack.c.l.b16 %v1116
        %v2631 = vunpack.c.h.b16 %v1116
        %v2632 = vunpack.c.l.b16 %v1117
        %v2633 = vunpack.c.h.b16 %v1117
        %v2634 = vunpack.c.l.b16 %v1118
        %v2635 = vunpack.c.h.b16 %v1118
        %v2636 = vunpack.c.l.b16 %v1119
        %v2637 = vunpack.c.h.b16 %v1119
        %v2638 = vunpack.c.l.b16 %v1120
        %v2639 = vunpack.c.h.b16 %v1120
        %v2640 = vunpack.c.l.b16 %v1121
        %v2641 = vunpack.c.h.b16 %v1121
        %v2642 = vunpack.c.l.b16 %v1122
        %v2643 = vunpack.c.h.b16 %v1122
        %v2644 = vunpack.c.l.b16 %v1123
        %v2645 = vunpack.c.h.b16 %v1123
        %v2646 = vunpack.c.l.b16 %v1124
        %v2647 = vunpack.c.h.b16 %v1124
        %v2648 = vunpack.c.l.b16 %v1125
        %v2649 = vunpack.c.h.b16 %v1125
        %v2650 = vunpack.c.l.b16 %v1126
        %v2651 = vunpack.c.h.b16 %v1126
        %v2652 = vunpack.c.l.b16 %v1127
        %v2653 = vunpack.c.h.b16 %v1127
        %v2654 = vunpack.c.l.b16 %v1128
        %v2655 = vunpack.c.h.b16 %v1128
        %v2656 = vunpack.c.l.b16 %v1129
        %v2657 = vunpack.c.h.b16 %v1129
        %v2658 = vunpack.c.l.b16 %v1130
        %v2659 = vunpack.c.h.b16 %v1130
        %v2660 = vunpack.c.l.b16 %v1131
        %v2661 = vunpack.c.h.b16 %v1131
        %v2662 = vunpack.c.l.b16 %v1132
        %v2663 = vunpack.c.h.b16 %v1132
        %v2664 = vunpack.c.l.b16 %v1133
        %v2665 = vunpack.c.h.b16 %v1133
        %v2666 = vunpack.c.l.b16 %v1134
        %v2667 = vunpack.c.h.b16 %v1134
        %v2668 = vunpack.c.l.b16 %v1135
        %v2669 = vunpack.c.h.b16 %v1135
        %v2670 = vunpack.c.l.b16 %v1136
        %v2671 = vunpack.c.h.b16 %v1136
        %v2672 = vunpack.c.l.b16 %v1137
        %v2673 = vunpack.c.h.b16 %v1137
        %v2674 = vunpack.c.l.b16 %v1138
        %v2675 = vunpack.c.h.b16 %v1138
        %v2676 = vunpack.c.l.b16 %v1139
        %v2677 = vunpack.c.h.b16 %v1139
        %v2678 = vunpack.c.l.b16 %v1140
        %v2679 = vunpack.c.h.b16 %v1140
        %v2680 = vunpack.c.l.b16 %v1141
        %v2681 = vunpack.c.h.b16 %v1141
        %v2682 = vunpack.c.l.b16 %v1142
        %v2683 = vunpack.c.h.b16 %v1142
        %v2684 = vunpack.c.l.b16 %v1143
        %v2685 = vunpack.c.h.b16 %v1143
        %v2686 = vunpack.c.l.b16 %v1144
        %v2687 = vunpack.c.h.b16 %v1144
        %v2688 = vunpack.c.l.b16 %v1145
        %v2689 = vunpack.c.h.b16 %v1145
        %v2690 = vunpack.c.l.b16 %v1146
        %v2691 = vunpack.c.h.b16 %v1146
        %v2692 = vunpack.c.l.b16 %v1147
        %v2693 = vunpack.c.h.b16 %v1147
        %v2694 = vunpack.c.l.b16 %v1148
        %v2695 = vunpack.c.h.b16 %v1148
        %v2696 = vunpack.c.l.b16 %v1149
        %v2697 = vunpack.c.h.b16 %v1149
        %v2698 = vunpack.c.l.b16 %v1150
        %v2699 = vunpack.c.h.b16 %v1150
        %v2700 = vunpack.c.l.b16 %v1151
        %v2701 = vunpack.c.h.b16 %v1151
        %v2702 = vunpack.c.l.b16 %v1152
        %v2703 = vunpack.c.h.b16 %v1152
        %v2704 = vunpack.c.l.b16 %v1153
        %v2705 = vunpack.c.h.b16 %v1153
        %v2706 = vunpack.c.l.b16 %v1154
        %v2707 = vunpack.c.h.b16 %v1154
        %v2708 = vunpack.c.l.b16 %v1155
        %v2709 = vunpack.c.h.b16 %v1155
        %v2710 = vunpack.c.l.b16 %v1156
        %v2711 = vunpack.c.h.b16 %v1156
        %v2712 = vunpack.c.l.b16 %v1157
        %v2713 = vunpack.c.h.b16 %v1157
        %v2714 = vunpack.c.l.b16 %v1158
        %v2715 = vunpack.c.h.b16 %v1158
        %v2716 = vunpack.c.l.b16 %v1159
        %v2717 = vunpack.c.h.b16 %v1159
        %v2718 = vunpack.c.l.b16 %v1160
        %v2719 = vunpack.c.h.b16 %v1160
        %v2720 = vunpack.c.l.b16 %v1161
        %v2721 = vunpack.c.h.b16 %v1161
        %v2722 = vunpack.c.l.b16 %v1162
        %v2723 = vunpack.c.h.b16 %v1162
        %v2724 = vunpack.c.l.b16 %v1163
        %v2725 = vunpack.c.h.b16 %v1163
        %v2726 = vunpack.c.l.b16 %v1164
        %v2727 = vunpack.c.h.b16 %v1164
        %v2728 = vunpack.c.l.b16 %v1165
        %v2729 = vunpack.c.h.b16 %v1165
        %v2730 = vunpack.c.l.b16 %v1166
        %v2731 = vunpack.c.h.b16 %v1166
        %v2732 = vunpack.c.l.b16 %v1167
        %v2733 = vunpack.c.h.b16 %v1167
        %v2734 = vunpack.c.l.b16 %v1168
        %v2735 = vunpack.c.h.b16 %v1168
        %v2736 = vunpack.c.l.b16 %v1169
        %v2737 = vunpack.c.h.b16 %v1169
        %v2738 = vunpack.c.l.b16 %v1170
        %v2739 = vunpack.c.h.b16 %v1170
        %v2740 = vunpack.c.l.b16 %v1171
        %v2741 = vunpack.c.h.b16 %v1171
        %v2742 = vunpack.c.l.b16 %v1172
        %v2743 = vunpack.c.h.b16 %v1172
        %v2744 = vunpack.c.l.b16 %v1173
        %v2745 = vunpack.c.h.b16 %v1173
        %v2746 = vunpack.c.l.b16 %v1174
        %v2747 = vunpack.c.h.b16 %v1174
        %v2748 = vunpack.c.l.b16 %v1175
        %v2749 = vunpack.c.h.b16 %v1175
        %v2750 = vunpack.c.l.b16 %v1176
        %v2751 = vunpack.c.h.b16 %v1176
        %v2752 = vunpack.c.l.b16 %v1177
        %v2753 = vunpack.c.h.b16 %v1177
        %v2754 = vunpack.c.l.b16 %v1178
        %v2755 = vunpack.c.h.b16 %v1178
        %v2756 = vunpack.c.l.b16 %v1179
        %v2757 = vunpack.c.h.b16 %v1179
        %v2758 = vpack.c.b16 %v1742, %v1734
        %v2759 = vpack.c.b16 %v1743, %v1735
        %v2760 = vpack.c.b16 %v1744, %v1736
        %v2761 = vpack.c.b16 %v1745, %v1737
        %v2762 = vpack.c.b16 %v1746, %v1738
        %v2763 = vpack.c.b16 %v1747, %v1739
        %v2764 = vpack.c.b16 %v1748, %v1740
        %v2765 = vpack.c.b16 %v1749, %v1741
        %v2766 = vpack.c.b16 %v1758, %v1750
        %v2767 = vpack.c.b16 %v1759, %v1751
        %v2768 = vpack.c.b16 %v1760, %v1752
        %v2769 = vpack.c.b16 %v1761, %v1753
        %v2770 = vpack.c.b16 %v1762, %v1754
        %v2771 = vpack.c.b16 %v1763, %v1755
        %v2772 = vpack.c.b16 %v1764, %v1756
        %v2773 = vpack.c.b16 %v1765, %v1757
        %v2774 = vpack.c.b16 %v1774, %v1766
        %v2775 = vpack.c.b16 %v1775, %v1767
        %v2776 = vpack.c.b16 %v1776, %v1768
        %v2777 = vpack.c.b16 %v1777, %v1769
        %v2778 = vpack.c.b16 %v1778, %v1770
        %v2779 = vpack.c.b16 %v1779, %v1771
        %v2780 = vpack.c.b16 %v1780, %v1772
        %v2781 = vpack.c.b16 %v1781, %v1773
        %v2782 = vpack.c.b16 %v1790, %v1782
        %v2783 = vpack.c.b16 %v1791, %v1783
        %v2784 = vpack.c.b16 %v1792, %v1784
        %v2785 = vpack.c.b16 %v1793, %v1785
        %v2786 = vpack.c.b16 %v1794, %v1786
        %v2787 = vpack.c.b16 %v1795, %v1787
        %v2788 = vpack.c.b16 %v1796, %v1788
        %v2789 = vpack.c.b16 %v1797, %v1789
        %v2790 = vpack.c.b16 %v1806, %v1798
        %v2791 = vpack.c.b16 %v1807, %v1799
        %v2792 = vpack.c.b16 %v1808, %v1800
        %v2793 = vpack.c.b16 %v1809, %v1801
        %v2794 = vpack.c.b16 %v1810, %v1802
        %v2795 = vpack.c.b16 %v1811, %v1803
        %v2796 = vpack.c.b16 %v1812, %v1804
        %v2797 = vpack.c.b16 %v1813, %v1805
        %v2798 = vpack.c.b16 %v1822, %v1814
        %v2799 = vpack.c.b16 %v1823, %v1815
        %v2800 = vpack.c.b16 %v1824, %v1816
        %v2801 = vpack.c.b16 %v1825, %v1817
        %v2802 = vpack.c.b16 %v1826, %v1818
        %v2803 = vpack.c.b16 %v1827, %v1819
        %v2804 = vpack.c.b16 %v1828, %v1820
        %v2805 = vpack.c.b16 %v1829, %v1821
        %v2806 = vpack.c.b16 %v1838, %v1830
        %v2807 = vpack.c.b16 %v1839, %v1831
        %v2808 = vpack.c.b16 %v1840, %v1832
        %v2809 = vpack.c.b16 %v1841, %v1833
        %v2810 = vpack.c.b16 %v1842, %v1834
        %v2811 = vpack.c.b16 %v1843, %v1835
        %v2812 = vpack.c.b16 %v1844, %v1836
        %v2813 = vpack.c.b16 %v1845, %v1837
        %v2814 = vpack.c.b16 %v1854, %v1846
        %v2815 = vpack.c.b16 %v1855, %v1847
        %v2816 = vpack.c.b16 %v1856, %v1848
        %v2817 = vpack.c.b16 %v1857, %v1849
        %v2818 = vpack.c.b16 %v1858, %v1850
        %v2819 = vpack.c.b16 %v1859, %v1851
        %v2820 = vpack.c.b16 %v1860, %v1852
        %v2821 = vpack.c.b16 %v1861, %v1853
        %v2822 = vpack.c.b16 %v1870, %v1862
        %v2823 = vpack.c.b16 %v1871, %v1863
        %v2824 = vpack.c.b16 %v1872, %v1864
        %v2825 = vpack.c.b16 %v1873, %v1865
        %v2826 = vpack.c.b16 %v1874, %v1866
        %v2827 = vpack.c.b16 %v1875, %v1867
        %v2828 = vpack.c.b16 %v1876, %v1868
        %v2829 = vpack.c.b16 %v1877, %v1869
        %v2830 = vpack.c.b16 %v1886, %v1878
        %v2831 = vpack.c.b16 %v1887, %v1879
        %v2832 = vpack.c.b16 %v1888, %v1880
        %v2833 = vpack.c.b16 %v1889, %v1881
        %v2834 = vpack.c.b16 %v1890, %v1882
        %v2835 = vpack.c.b16 %v1891, %v1883
        %v2836 = vpack.c.b16 %v1892, %v1884
        %v2837 = vpack.c.b16 %v1893, %v1885
        %v2838 = vpack.c.b16 %v1902, %v1894
        %v2839 = vpack.c.b16 %v1903, %v1895
        %v2840 = vpack.c.b16 %v1904, %v1896
        %v2841 = vpack.c.b16 %v1905, %v1897
        %v2842 = vpack.c.b16 %v1906, %v1898
        %v2843 = vpack.c.b16 %v1907, %v1899
        %v2844 = vpack.c.b16 %v1908, %v1900
        %v2845 = vpack.c.b16 %v1909, %v1901
        %v2846 = vpack.c.b16 %v1918, %v1910
        %v2847 = vpack.c.b16 %v1919, %v1911
        %v2848 = vpack.c.b16 %v1920, %v1912
        %v2849 = vpack.c.b16 %v1921, %v1913
        %v2850 = vpack.c.b16 %v1922, %v1914
        %v2851 = vpack.c.b16 %v1923, %v1915
        %v2852 = vpack.c.b16 %v1924, %v1916
        %v2853 = vpack.c.b16 %v1925, %v1917
        %v2854 = vpack.c.b16 %v1934, %v1926
        %v2855 = vpack.c.b16 %v1935, %v1927
        %v2856 = vpack.c.b16 %v1936, %v1928
        %v2857 = vpack.c.b16 %v1937, %v1929
        %v2858 = vpack.c.b16 %v1938, %v1930
        %v2859 = vpack.c.b16 %v1939, %v1931
        %v2860 = vpack.c.b16 %v1940, %v1932
        %v2861 = vpack.c.b16 %v1941, %v1933
        %v2862 = vpack.c.b16 %v1950, %v1942
        %v2863 = vpack.c.b16 %v1951, %v1943
        %v2864 = vpack.c.b16 %v1952, %v1944
        %v2865 = vpack.c.b16 %v1953, %v1945
        %v2866 = vpack.c.b16 %v1954, %v1946
        %v2867 = vpack.c.b16 %v1955, %v1947
        %v2868 = vpack.c.b16 %v1956, %v1948
        %v2869 = vpack.c.b16 %v1957, %v1949
        %v2870 = vpack.c.b16 %v1966, %v1958
        %v2871 = vpack.c.b16 %v1967, %v1959
        %v2872 = vpack.c.b16 %v1968, %v1960
        %v2873 = vpack.c.b16 %v1969, %v1961
        %v2874 = vpack.c.b16 %v1970, %v1962
        %v2875 = vpack.c.b16 %v1971, %v1963
        %v2876 = vpack.c.b16 %v1972, %v1964
        %v2877 = vpack.c.b16 %v1973, %v1965
        %v2878 = vpack.c.b16 %v1982, %v1974
        %v2879 = vpack.c.b16 %v1983, %v1975
        %v2880 = vpack.c.b16 %v1984, %v1976
        %v2881 = vpack.c.b16 %v1985, %v1977
        %v2882 = vpack.c.b16 %v1986, %v1978
        %v2883 = vpack.c.b16 %v1987, %v1979
        %v2884 = vpack.c.b16 %v1988, %v1980
        %v2885 = vpack.c.b16 %v1989, %v1981
        %v2886 = vpack.c.b16 %v1998, %v1990
        %v2887 = vpack.c.b16 %v1999, %v1991
        %v2888 = vpack.c.b16 %v2000, %v1992
        %v2889 = vpack.c.b16 %v2001, %v1993
        %v2890 = vpack.c.b16 %v2002, %v1994
        %v2891 = vpack.c.b16 %v2003, %v1995
        %v2892 = vpack.c.b16 %v2004, %v1996
        %v2893 = vpack.c.b16 %v2005, %v1997
        %v2894 = vpack.c.b16 %v2014, %v2006
        %v2895 = vpack.c.b16 %v2015, %v2007
        %v2896 = vpack.c.b16 %v2016, %v2008
        %v2897 = vpack.c.b16 %v2017, %v2009
        %v2898 = vpack.c.b16 %v2018, %v2010
        %v2899 = vpack.c.b16 %v2019, %v2011
        %v2900 = vpack.c.b16 %v2020, %v2012
        %v2901 = vpack.c.b16 %v2021, %v2013
        %v2902 = vpack.c.b16 %v2030, %v2022
        %v2903 = vpack.c.b16 %v2031, %v2023
        %v2904 = vpack.c.b16 %v2032, %v2024
        %v2905 = vpack.c.b16 %v2033, %v2025
        %v2906 = vpack.c.b16 %v2034, %v2026
        %v2907 = vpack.c.b16 %v2035, %v2027
        %v2908 = vpack.c.b16 %v2036, %v2028
        %v2909 = vpack.c.b16 %v2037, %v2029
        %v2910 = vpack.c.b16 %v2046, %v2038
        %v2911 = vpack.c.b16 %v2047, %v2039
        %v2912 = vpack.c.b16 %v2048, %v2040
        %v2913 = vpack.c.b16 %v2049, %v2041
        %v2914 = vpack.c.b16 %v2050, %v2042
        %v2915 = vpack.c.b16 %v2051, %v2043
        %v2916 = vpack.c.b16 %v2052, %v2044
        %v2917 = vpack.c.b16 %v2053, %v2045
        %v2918 = vpack.c.b16 %v2062, %v2054
        %v2919 = vpack.c.b16 %v2063, %v2055
        %v2920 = vpack.c.b16 %v2064, %v2056
        %v2921 = vpack.c.b16 %v2065, %v2057
        %v2922 = vpack.c.b16 %v2066, %v2058
        %v2923 = vpack.c.b16 %v2067, %v2059
        %v2924 = vpack.c.b16 %v2068, %v2060
        %v2925 = vpack.c.b16 %v2069, %v2061
        %v2926 = vpack.c.b16 %v2078, %v2070
        %v2927 = vpack.c.b16 %v2079, %v2071
        %v2928 = vpack.c.b16 %v2080, %v2072
        %v2929 = vpack.c.b16 %v2081, %v2073
        %v2930 = vpack.c.b16 %v2082, %v2074
        %v2931 = vpack.c.b16 %v2083, %v2075
        %v2932 = vpack.c.b16 %v2084, %v2076
        %v2933 = vpack.c.b16 %v2085, %v2077
        %v2934 = vpack.c.b16 %v2094, %v2086
        %v2935 = vpack.c.b16 %v2095, %v2087
        %v2936 = vpack.c.b16 %v2096, %v2088
        %v2937 = vpack.c.b16 %v2097, %v2089
        %v2938 = vpack.c.b16 %v2098, %v2090
        %v2939 = vpack.c.b16 %v2099, %v2091
        %v2940 = vpack.c.b16 %v2100, %v2092
        %v2941 = vpack.c.b16 %v2101, %v2093
        %v2942 = vpack.c.b16 %v2110, %v2102
        %v2943 = vpack.c.b16 %v2111, %v2103
        %v2944 = vpack.c.b16 %v2112, %v2104
        %v2945 = vpack.c.b16 %v2113, %v2105
        %v2946 = vpack.c.b16 %v2114, %v2106
        %v2947 = vpack.c.b16 %v2115, %v2107
        %v2948 = vpack.c.b16 %v2116, %v2108
        %v2949 = vpack.c.b16 %v2117, %v2109
        %v2950 = vpack.c.b16 %v2126, %v2118
        %v2951 = vpack.c.b16 %v2127, %v2119
        %v2952 = vpack.c.b16 %v2128, %v2120
        %v2953 = vpack.c.b16 %v2129, %v2121
        %v2954 = vpack.c.b16 %v2130, %v2122
        %v2955 = vpack.c.b16 %v2131, %v2123
        %v2956 = vpack.c.b16 %v2132, %v2124
        %v2957 = vpack.c.b16 %v2133, %v2125
        %v2958 = vpack.c.b16 %v2142, %v2134
        %v2959 = vpack.c.b16 %v2143, %v2135
        %v2960 = vpack.c.b16 %v2144, %v2136
        %v2961 = vpack.c.b16 %v2145, %v2137
        %v2962 = vpack.c.b16 %v2146, %v2138
        %v2963 = vpack.c.b16 %v2147, %v2139
        %v2964 = vpack.c.b16 %v2148, %v2140
        %v2965 = vpack.c.b16 %v2149, %v2141
        %v2966 = vpack.c.b16 %v2158, %v2150
        %v2967 = vpack.c.b16 %v2159, %v2151
        %v2968 = vpack.c.b16 %v2160, %v2152
        %v2969 = vpack.c.b16 %v2161, %v2153
        %v2970 = vpack.c.b16 %v2162, %v2154
        %v2971 = vpack.c.b16 %v2163, %v2155
        %v2972 = vpack.c.b16 %v2164, %v2156
        %v2973 = vpack.c.b16 %v2165, %v2157
        %v2974 = vpack.c.b16 %v2174, %v2166
        %v2975 = vpack.c.b16 %v2175, %v2167
        %v2976 = vpack.c.b16 %v2176, %v2168
        %v2977 = vpack.c.b16 %v2177, %v2169
        %v2978 = vpack.c.b16 %v2178, %v2170
        %v2979 = vpack.c.b16 %v2179, %v2171
        %v2980 = vpack.c.b16 %v2180, %v2172
        %v2981 = vpack.c.b16 %v2181, %v2173
        %v2982 = vpack.c.b16 %v2190, %v2182
        %v2983 = vpack.c.b16 %v2191, %v2183
        %v2984 = vpack.c.b16 %v2192, %v2184
        %v2985 = vpack.c.b16 %v2193, %v2185
        %v2986 = vpack.c.b16 %v2194, %v2186
        %v2987 = vpack.c.b16 %v2195, %v2187
        %v2988 = vpack.c.b16 %v2196, %v2188
        %v2989 = vpack.c.b16 %v2197, %v2189
        %v2990 = vpack.c.b16 %v2206, %v2198
        %v2991 = vpack.c.b16 %v2207, %v2199
        %v2992 = vpack.c.b16 %v2208, %v2200
        %v2993 = vpack.c.b16 %v2209, %v2201
        %v2994 = vpack.c.b16 %v2210, %v2202
        %v2995 = vpack.c.b16 %v2211, %v2203
        %v2996 = vpack.c.b16 %v2212, %v2204
        %v2997 = vpack.c.b16 %v2213, %v2205
        %v2998 = vpack.c.b16 %v2222, %v2214
        %v2999 = vpack.c.b16 %v2223, %v2215
        %v3000 = vpack.c.b16 %v2224, %v2216
        %v3001 = vpack.c.b16 %v2225, %v2217
        %v3002 = vpack.c.b16 %v2226, %v2218
        %v3003 = vpack.c.b16 %v2227, %v2219
        %v3004 = vpack.c.b16 %v2228, %v2220
        %v3005 = vpack.c.b16 %v2229, %v2221
        %v3006 = vpack.c.b16 %v2238, %v2230
        %v3007 = vpack.c.b16 %v2239, %v2231
        %v3008 = vpack.c.b16 %v2240, %v2232
        %v3009 = vpack.c.b16 %v2241, %v2233
        %v3010 = vpack.c.b16 %v2242, %v2234
        %v3011 = vpack.c.b16 %v2243, %v2235
        %v3012 = vpack.c.b16 %v2244, %v2236
        %v3013 = vpack.c.b16 %v2245, %v2237
        %v3014 = vpack.c.b16 %v2254, %v2246
        %v3015 = vpack.c.b16 %v2255, %v2247
        %v3016 = vpack.c.b16 %v2256, %v2248
        %v3017 = vpack.c.b16 %v2257, %v2249
        %v3018 = vpack.c.b16 %v2258, %v2250
        %v3019 = vpack.c.b16 %v2259, %v2251
        %v3020 = vpack.c.b16 %v2260, %v2252
        %v3021 = vpack.c.b16 %v2261, %v2253
        %v3022 = vpack.c.b16 %v2270, %v2262
        %v3023 = vpack.c.b16 %v2271, %v2263
        %v3024 = vpack.c.b16 %v2272, %v2264
        %v3025 = vpack.c.b16 %v2273, %v2265
        %v3026 = vpack.c.b16 %v2274, %v2266
        %v3027 = vpack.c.b16 %v2275, %v2267
        %v3028 = vpack.c.b16 %v2276, %v2268
        %v3029 = vpack.c.b16 %v2277, %v2269
        %v3030 = vpack.c.b16 %v2286, %v2278
        %v3031 = vpack.c.b16 %v2287, %v2279
        %v3032 = vpack.c.b16 %v2288, %v2280
        %v3033 = vpack.c.b16 %v2289, %v2281
        %v3034 = vpack.c.b16 %v2290, %v2282
        %v3035 = vpack.c.b16 %v2291, %v2283
        %v3036 = vpack.c.b16 %v2292, %v2284
        %v3037 = vpack.c.b16 %v2293, %v2285
        %v3038 = vpack.c.b16 %v2302, %v2294
        %v3039 = vpack.c.b16 %v2303, %v2295
        %v3040 = vpack.c.b16 %v2304, %v2296
        %v3041 = vpack.c.b16 %v2305, %v2297
        %v3042 = vpack.c.b16 %v2306, %v2298
        %v3043 = vpack.c.b16 %v2307, %v2299
        %v3044 = vpack.c.b16 %v2308, %v2300
        %v3045 = vpack.c.b16 %v2309, %v2301
        %v3046 = vpack.c.b16 %v2318, %v2310
        %v3047 = vpack.c.b16 %v2319, %v2311
        %v3048 = vpack.c.b16 %v2320, %v2312
        %v3049 = vpack.c.b16 %v2321, %v2313
        %v3050 = vpack.c.b16 %v2322, %v2314
        %v3051 = vpack.c.b16 %v2323, %v2315
        %v3052 = vpack.c.b16 %v2324, %v2316
        %v3053 = vpack.c.b16 %v2325, %v2317
        %v3054 = vpack.c.b16 %v2334, %v2326
        %v3055 = vpack.c.b16 %v2335, %v2327
        %v3056 = vpack.c.b16 %v2336, %v2328
        %v3057 = vpack.c.b16 %v2337, %v2329
        %v3058 = vpack.c.b16 %v2338, %v2330
        %v3059 = vpack.c.b16 %v2339, %v2331
        %v3060 = vpack.c.b16 %v2340, %v2332
        %v3061 = vpack.c.b16 %v2341, %v2333
        %v3062 = vpack.c.b16 %v2350, %v2342
        %v3063 = vpack.c.b16 %v2351, %v2343
        %v3064 = vpack.c.b16 %v2352, %v2344
        %v3065 = vpack.c.b16 %v2353, %v2345
        %v3066 = vpack.c.b16 %v2354, %v2346
        %v3067 = vpack.c.b16 %v2355, %v2347
        %v3068 = vpack.c.b16 %v2356, %v2348
        %v3069 = vpack.c.b16 %v2357, %v2349
        %v3070 = vpack.c.b16 %v2366, %v2358
        %v3071 = vpack.c.b16 %v2367, %v2359
        %v3072 = vpack.c.b16 %v2368, %v2360
        %v3073 = vpack.c.b16 %v2369, %v2361
        %v3074 = vpack.c.b16 %v2370, %v2362
        %v3075 = vpack.c.b16 %v2371, %v2363
        %v3076 = vpack.c.b16 %v2372, %v2364
        %v3077 = vpack.c.b16 %v2373, %v2365
        %v3078 = vpack.c.b16 %v2382, %v2374
        %v3079 = vpack.c.b16 %v2383, %v2375
        %v3080 = vpack.c.b16 %v2384, %v2376
        %v3081 = vpack.c.b16 %v2385, %v2377
        %v3082 = vpack.c.b16 %v2386, %v2378
        %v3083 = vpack.c.b16 %v2387, %v2379
        %v3084 = vpack.c.b16 %v2388, %v2380
        %v3085 = vpack.c.b16 %v2389, %v2381
        %v3086 = vpack.c.b16 %v2398, %v2390
        %v3087 = vpack.c.b16 %v2399, %v2391
        %v3088 = vpack.c.b16 %v2400, %v2392
        %v3089 = vpack.c.b16 %v2401, %v2393
        %v3090 = vpack.c.b16 %v2402, %v2394
        %v3091 = vpack.c.b16 %v2403, %v2395
        %v3092 = vpack.c.b16 %v2404, %v2396
        %v3093 = vpack.c.b16 %v2405, %v2397
        %v3094 = vpack.c.b16 %v2414, %v2406
        %v3095 = vpack.c.b16 %v2415, %v2407
        %v3096 = vpack.c.b16 %v2416, %v2408
        %v3097 = vpack.c.b16 %v2417, %v2409
        %v3098 = vpack.c.b16 %v2418, %v2410
        %v3099 = vpack.c.b16 %v2419, %v2411
        %v3100 = vpack.c.b16 %v2420, %v2412
        %v3101 = vpack.c.b16 %v2421, %v2413
        %v3102 = vpack.c.b16 %v2430, %v2422
        %v3103 = vpack.c.b16 %v2431, %v2423
        %v3104 = vpack.c.b16 %v2432, %v2424
        %v3105 = vpack.c.b16 %v2433, %v2425
        %v3106 = vpack.c.b16 %v2434, %v2426
        %v3107 = vpack.c.b16 %v2435, %v2427
        %v3108 = vpack.c.b16 %v2436, %v2428
        %v3109 = vpack.c.b16 %v2437, %v2429
        %v3110 = vpack.c.b16 %v2446, %v2438
        %v3111 = vpack.c.b16 %v2447, %v2439
        %v3112 = vpack.c.b16 %v2448, %v2440
        %v3113 = vpack.c.b16 %v2449, %v2441
        %v3114 = vpack.c.b16 %v2450, %v2442
        %v3115 = vpack.c.b16 %v2451, %v2443
        %v3116 = vpack.c.b16 %v2452, %v2444
        %v3117 = vpack.c.b16 %v2453, %v2445
        %v3118 = vpack.c.b16 %v2462, %v2454
        %v3119 = vpack.c.b16 %v2463, %v2455
        %v3120 = vpack.c.b16 %v2464, %v2456
        %v3121 = vpack.c.b16 %v2465, %v2457
        %v3122 = vpack.c.b16 %v2466, %v2458
        %v3123 = vpack.c.b16 %v2467, %v2459
        %v3124 = vpack.c.b16 %v2468, %v2460
        %v3125 = vpack.c.b16 %v2469, %v2461
        %v3126 = vpack.c.b16 %v2478, %v2470
        %v3127 = vpack.c.b16 %v2479, %v2471
        %v3128 = vpack.c.b16 %v2480, %v2472
        %v3129 = vpack.c.b16 %v2481, %v2473
        %v3130 = vpack.c.b16 %v2482, %v2474
        %v3131 = vpack.c.b16 %v2483, %v2475
        %v3132 = vpack.c.b16 %v2484, %v2476
        %v3133 = vpack.c.b16 %v2485, %v2477
        %v3134 = vpack.c.b16 %v2494, %v2486
        %v3135 = vpack.c.b16 %v2495, %v2487
        %v3136 = vpack.c.b16 %v2496, %v2488
        %v3137 = vpack.c.b16 %v2497, %v2489
        %v3138 = vpack.c.b16 %v2498, %v2490
        %v3139 = vpack.c.b16 %v2499, %v2491
        %v3140 = vpack.c.b16 %v2500, %v2492
        %v3141 = vpack.c.b16 %v2501, %v2493
        %v3142 = vpack.c.b16 %v2510, %v2502
        %v3143 = vpack.c.b16 %v2511, %v2503
        %v3144 = vpack.c.b16 %v2512, %v2504
        %v3145 = vpack.c.b16 %v2513, %v2505
        %v3146 = vpack.c.b16 %v2514, %v2506
        %v3147 = vpack.c.b16 %v2515, %v2507
        %v3148 = vpack.c.b16 %v2516, %v2508
        %v3149 = vpack.c.b16 %v2517, %v2509
        %v3150 = vpack.c.b16 %v2526, %v2518
        %v3151 = vpack.c.b16 %v2527, %v2519
        %v3152 = vpack.c.b16 %v2528, %v2520
        %v3153 = vpack.c.b16 %v2529, %v2521
        %v3154 = vpack.c.b16 %v2530, %v2522
        %v3155 = vpack.c.b16 %v2531, %v2523
        %v3156 = vpack.c.b16 %v2532, %v2524
        %v3157 = vpack.c.b16 %v2533, %v2525
        %v3158 = vpack.c.b16 %v2542, %v2534
        %v3159 = vpack.c.b16 %v2543, %v2535
        %v3160 = vpack.c.b16 %v2544, %v2536
        %v3161 = vpack.c.b16 %v2545, %v2537
        %v3162 = vpack.c.b16 %v2546, %v2538
        %v3163 = vpack.c.b16 %v2547, %v2539
        %v3164 = vpack.c.b16 %v2548, %v2540
        %v3165 = vpack.c.b16 %v2549, %v2541
        %v3166 = vpack.c.b16 %v2558, %v2550
        %v3167 = vpack.c.b16 %v2559, %v2551
        %v3168 = vpack.c.b16 %v2560, %v2552
        %v3169 = vpack.c.b16 %v2561, %v2553
        %v3170 = vpack.c.b16 %v2562, %v2554
        %v3171 = vpack.c.b16 %v2563, %v2555
        %v3172 = vpack.c.b16 %v2564, %v2556
        %v3173 = vpack.c.b16 %v2565, %v2557
        %v3174 = vpack.c.b16 %v2574, %v2566
        %v3175 = vpack.c.b16 %v2575, %v2567
        %v3176 = vpack.c.b16 %v2576, %v2568
        %v3177 = vpack.c.b16 %v2577, %v2569
        %v3178 = vpack.c.b16 %v2578, %v2570
        %v3179 = vpack.c.b16 %v2579, %v2571
        %v3180 = vpack.c.b16 %v2580, %v2572
        %v3181 = vpack.c.b16 %v2581, %v2573
        %v3182 = vpack.c.b16 %v2590, %v2582
        %v3183 = vpack.c.b16 %v2591, %v2583
        %v3184 = vpack.c.b16 %v2592, %v2584
        %v3185 = vpack.c.b16 %v2593, %v2585
        %v3186 = vpack.c.b16 %v2594, %v2586
        %v3187 = vpack.c.b16 %v2595, %v2587
        %v3188 = vpack.c.b16 %v2596, %v2588
        %v3189 = vpack.c.b16 %v2597, %v2589
        %v3190 = vpack.c.b16 %v2606, %v2598
        %v3191 = vpack.c.b16 %v2607, %v2599
        %v3192 = vpack.c.b16 %v2608, %v2600
        %v3193 = vpack.c.b16 %v2609, %v2601
        %v3194 = vpack.c.b16 %v2610, %v2602
        %v3195 = vpack.c.b16 %v2611, %v2603
        %v3196 = vpack.c.b16 %v2612, %v2604
        %v3197 = vpack.c.b16 %v2613, %v2605
        %v3198 = vpack.c.b16 %v2622, %v2614
        %v3199 = vpack.c.b16 %v2623, %v2615
        %v3200 = vpack.c.b16 %v2624, %v2616
        %v3201 = vpack.c.b16 %v2625, %v2617
        %v3202 = vpack.c.b16 %v2626, %v2618
        %v3203 = vpack.c.b16 %v2627, %v2619
        %v3204 = vpack.c.b16 %v2628, %v2620
        %v3205 = vpack.c.b16 %v2629, %v2621
        %v3206 = vpack.c.b16 %v2638, %v2630
        %v3207 = vpack.c.b16 %v2639, %v2631
        %v3208 = vpack.c.b16 %v2640, %v2632
        %v3209 = vpack.c.b16 %v2641, %v2633
        %v3210 = vpack.c.b16 %v2642, %v2634
        %v3211 = vpack.c.b16 %v2643, %v2635
        %v3212 = vpack.c.b16 %v2644, %v2636
        %v3213 = vpack.c.b16 %v2645, %v2637
        %v3214 = vpack.c.b16 %v2654, %v2646
        %v3215 = vpack.c.b16 %v2655, %v2647
        %v3216 = vpack.c.b16 %v2656, %v2648
        %v3217 = vpack.c.b16 %v2657, %v2649
        %v3218 = vpack.c.b16 %v2658, %v2650
        %v3219 = vpack.c.b16 %v2659, %v2651
        %v3220 = vpack.c.b16 %v2660, %v2652
        %v3221 = vpack.c.b16 %v2661, %v2653
        %v3222 = vpack.c.b16 %v2670, %v2662
        %v3223 = vpack.c.b16 %v2671, %v2663
        %v3224 = vpack.c.b16 %v2672, %v2664
        %v3225 = vpack.c.b16 %v2673, %v2665
        %v3226 = vpack.c.b16 %v2674, %v2666
        %v3227 = vpack.c.b16 %v2675, %v2667
        %v3228 = vpack.c.b16 %v2676, %v2668
        %v3229 = vpack.c.b16 %v2677, %v2669
        %v3230 = vpack.c.b16 %v2686, %v2678
        %v3231 = vpack.c.b16 %v2687, %v2679
        %v3232 = vpack.c.b16 %v2688, %v2680
        %v3233 = vpack.c.b16 %v2689, %v2681
        %v3234 = vpack.c.b16 %v2690, %v2682
        %v3235 = vpack.c.b16 %v2691, %v2683
        %v3236 = vpack.c.b16 %v2692, %v2684
        %v3237 = vpack.c.b16 %v2693, %v2685
        %v3238 = vpack.c.b16 %v2702, %v2694
        %v3239 = vpack.c.b16 %v2703, %v2695
        %v3240 = vpack.c.b16 %v2704, %v2696
        %v3241 = vpack.c.b16 %v2705, %v2697
        %v3242 = vpack.c.b16 %v2706, %v2698
        %v3243 = vpack.c.b16 %v2707, %v2699
        %v3244 = vpack.c.b16 %v2708, %v2700
        %v3245 = vpack.c.b16 %v2709, %v2701
        %v3246 = vpack.c.b16 %v2718, %v2710
        %v3247 = vpack.c.b16 %v2719, %v2711
        %v3248 = vpack.c.b16 %v2720, %v2712
        %v3249 = vpack.c.b16 %v2721, %v2713
        %v3250 = vpack.c.b16 %v2722, %v2714
        %v3251 = vpack.c.b16 %v2723, %v2715
        %v3252 = vpack.c.b16 %v2724, %v2716
        %v3253 = vpack.c.b16 %v2725, %v2717
        %v3254 = vpack.c.b16 %v2734, %v2726
        %v3255 = vpack.c.b16 %v2735, %v2727
        %v3256 = vpack.c.b16 %v2736, %v2728
        %v3257 = vpack.c.b16 %v2737, %v2729
        %v3258 = vpack.c.b16 %v2738, %v2730
        %v3259 = vpack.c.b16 %v2739, %v2731
        %v3260 = vpack.c.b16 %v2740, %v2732
        %v3261 = vpack.c.b16 %v2741, %v2733
        %v3262 = vpack.c.b16 %v2750, %v2742
        %v3263 = vpack.c.b16 %v2751, %v2743
        %v3264 = vpack.c.b16 %v2752, %v2744
        %v3265 = vpack.c.b16 %v2753, %v2745
        %v3266 = vpack.c.b16 %v2754, %v2746
        %v3267 = vpack.c.b16 %v2755, %v2747
        %v3268 = vpack.c.b16 %v2756, %v2748
        %v3269 = vpack.c.b16 %v2757, %v2749
        %3782 = vmatprep.subr.bf16.mxu0 %v2759
        %3783 = vmatpush1.bf16.msra.mxu0 %v2758
        %3784 = vmatprep.subr.bf16.mxu0 %v2767
        %3785 = vmatpush1.bf16.msra.mxu0 %v2766
        %3786 = vmatprep.subr.bf16.mxu0 %v2775
        %3787 = vmatpush1.bf16.msra.mxu0 %v2774
        %3788 = vmatprep.subr.bf16.mxu0 %v2783
        %3789 = vmatpush1.bf16.msra.mxu0 %v2782
        %3790 = vmatprep.subr.bf16.mxu0 %v2791
        %3791 = vmatpush1.bf16.msra.mxu0 %v2790
        %3792 = vmatprep.subr.bf16.mxu0 %v2799
        %3793 = vmatpush1.bf16.msra.mxu0 %v2798
        %3794 = vmatprep.subr.bf16.mxu0 %v2807
        %3795 = vmatpush1.bf16.msra.mxu0 %v2806
        %3796 = vmatprep.subr.bf16.mxu0 %v2815
        %3797 = vmatpush1.bf16.msra.mxu0 %v2814
        %3798 = vmatprep.subr.bf16.mxu0 %v2823
        %3799 = vmatpush1.bf16.msra.mxu0 %v2822
        %3800 = vmatprep.subr.bf16.mxu0 %v2831
        %3801 = vmatpush1.bf16.msra.mxu0 %v2830
        %3802 = vmatprep.subr.bf16.mxu0 %v2839
        %3803 = vmatpush1.bf16.msra.mxu0 %v2838
        %3804 = vmatprep.subr.bf16.mxu0 %v2847
        %3805 = vmatpush1.bf16.msra.mxu0 %v2846
        %3806 = vmatprep.subr.bf16.mxu0 %v2855
        %3807 = vmatpush1.bf16.msra.mxu0 %v2854
        %3808 = vmatprep.subr.bf16.mxu0 %v2863
        %3809 = vmatpush1.bf16.msra.mxu0 %v2862
        %3810 = vmatprep.subr.bf16.mxu0 %v2871
        %3811 = vmatpush1.bf16.msra.mxu0 %v2870
        %3812 = vmatprep.subr.bf16.mxu0 %v2879
        %3813 = vmatpush1.bf16.msra.mxu0 %v2878
        %3814 = vmatprep.mubr.bf16.mxu0 %v661
        %3815 = vmatmul.mubr.bf16.gmra.mrb[0].mxu0 %v660
        %v3816 = vpop.f32.mrb[0].mxu0
        %v3817 = vadd.f32 %v1185, %v3816
        %v3818 = vpop.f32.mrb[0].mxu0
        %v3819 = vadd.f32 %v1189, %v3818
        %v3820 = vpop.f32.mrb[0].mxu0
        %v3821 = vadd.f32 %v1185, %v3820
        %v3822 = vpop.f32.mrb[0].mxu0
        %v3823 = vadd.f32 %v1189, %v3822
        %3824 = vdwg.mxu0
        %3825 = vmatprep.subr.bf16.mxu0 %v2887
        %3826 = vmatpush1.bf16.msra.mxu0 %v2886
        %3827 = vmatprep.subr.bf16.mxu0 %v2895
        %3828 = vmatpush1.bf16.msra.mxu0 %v2894
        %3829 = vmatprep.subr.bf16.mxu0 %v2903
        %3830 = vmatpush1.bf16.msra.mxu0 %v2902
        %3831 = vmatprep.subr.bf16.mxu0 %v2911
        %3832 = vmatpush1.bf16.msra.mxu0 %v2910
        %3833 = vmatprep.subr.bf16.mxu0 %v2919
        %3834 = vmatpush1.bf16.msra.mxu0 %v2918
        %3835 = vmatprep.subr.bf16.mxu0 %v2927
        %3836 = vmatpush1.bf16.msra.mxu0 %v2926
        %3837 = vmatprep.subr.bf16.mxu0 %v2935
        %3838 = vmatpush1.bf16.msra.mxu0 %v2934
        %3839 = vmatprep.subr.bf16.mxu0 %v2943
        %3840 = vmatpush1.bf16.msra.mxu0 %v2942
        %3841 = vmatprep.subr.bf16.mxu0 %v2951
        %3842 = vmatpush1.bf16.msra.mxu0 %v2950
        %3843 = vmatprep.subr.bf16.mxu0 %v2959
        %3844 = vmatpush1.bf16.msra.mxu0 %v2958
        %3845 = vmatprep.subr.bf16.mxu0 %v2967
        %3846 = vmatpush1.bf16.msra.mxu0 %v2966
        %3847 = vmatprep.subr.bf16.mxu0 %v2975
        %3848 = vmatpush1.bf16.msra.mxu0 %v2974
        %3849 = vmatprep.subr.bf16.mxu0 %v2983
        %3850 = vmatpush1.bf16.msra.mxu0 %v2982
        %3851 = vmatprep.subr.bf16.mxu0 %v2991
        %3852 = vmatpush1.bf16.msra.mxu0 %v2990
        %3853 = vmatprep.subr.bf16.mxu0 %v2999
        %3854 = vmatpush1.bf16.msra.mxu0 %v2998
        %3855 = vmatprep.subr.bf16.mxu0 %v3007
        %3856 = vmatpush1.bf16.msra.mxu0 %v3006
        %3857 = vmatprep.mubr.bf16.mxu0 %v663
        %3858 = vmatmul.mubr.bf16.gmra.mrb[0].mxu0 %v662
        %v3859 = vpop.f32.mrb[0].mxu0
        %v3860 = vadd.f32 %v3817, %v3859
        %v3861 = vpop.f32.mrb[0].mxu0
        %v3862 = vadd.f32 %v3819, %v3861
        %v3863 = vpop.f32.mrb[0].mxu0
        %v3864 = vadd.f32 %v3821, %v3863
        %v3865 = vpop.f32.mrb[0].mxu0
        %v3866 = vadd.f32 %v3823, %v3865
        %3867 = vdwg.mxu0
        %3868 = vmatprep.subr.bf16.mxu0 %v3015
        %3869 = vmatpush1.bf16.msra.mxu0 %v3014
        %3870 = vmatprep.subr.bf16.mxu0 %v3023
        %3871 = vmatpush1.bf16.msra.mxu0 %v3022
        %3872 = vmatprep.subr.bf16.mxu0 %v3031
        %3873 = vmatpush1.bf16.msra.mxu0 %v3030
        %3874 = vmatprep.subr.bf16.mxu0 %v3039
        %3875 = vmatpush1.bf16.msra.mxu0 %v3038
        %3876 = vmatprep.subr.bf16.mxu0 %v3047
        %3877 = vmatpush1.bf16.msra.mxu0 %v3046
        %3878 = vmatprep.subr.bf16.mxu0 %v3055
        %3879 = vmatpush1.bf16.msra.mxu0 %v3054
        %3880 = vmatprep.subr.bf16.mxu0 %v3063
        %3881 = vmatpush1.bf16.msra.mxu0 %v3062
        %3882 = vmatprep.subr.bf16.mxu0 %v3071
        %3883 = vmatpush1.bf16.msra.mxu0 %v3070
        %3884 = vmatprep.subr.bf16.mxu0 %v3079
        %3885 = vmatpush1.bf16.msra.mxu0 %v3078
        %3886 = vmatprep.subr.bf16.mxu0 %v3087
        %3887 = vmatpush1.bf16.msra.mxu0 %v3086
        %3888 = vmatprep.subr.bf16.mxu0 %v3095
        %3889 = vmatpush1.bf16.msra.mxu0 %v3094
        %3890 = vmatprep.subr.bf16.mxu0 %v3103
        %3891 = vmatpush1.bf16.msra.mxu0 %v3102
        %3892 = vmatprep.subr.bf16.mxu0 %v3111
        %3893 = vmatpush1.bf16.msra.mxu0 %v3110
        %3894 = vmatprep.subr.bf16.mxu0 %v3119
        %3895 = vmatpush1.bf16.msra.mxu0 %v3118
        %3896 = vmatprep.subr.bf16.mxu0 %v3127
        %3897 = vmatpush1.bf16.msra.mxu0 %v3126
        %3898 = vmatprep.subr.bf16.mxu0 %v3135
        %3899 = vmatpush1.bf16.msra.mxu0 %v3134
        %3900 = vmatprep.mubr.bf16.mxu0 %v665
        %3901 = vmatmul.mubr.bf16.gmra.mrb[0].mxu0 %v664
        %v3902 = vpop.f32.mrb[0].mxu0
        %v3903 = vadd.f32 %v3860, %v3902
        %v3904 = vpop.f32.mrb[0].mxu0
        %v3905 = vadd.f32 %v3862, %v3904
        %v3906 = vpop.f32.mrb[0].mxu0
        %v3907 = vadd.f32 %v3864, %v3906
        %v3908 = vpop.f32.mrb[0].mxu0
        %v3909 = vadd.f32 %v3866, %v3908
        %3910 = vdwg.mxu0
        %3911 = vmatprep.subr.bf16.mxu0 %v3143
        %3912 = vmatpush1.bf16.msra.mxu0 %v3142
        %3913 = vmatprep.subr.bf16.mxu0 %v3151
        %3914 = vmatpush1.bf16.msra.mxu0 %v3150
        %3915 = vmatprep.subr.bf16.mxu0 %v3159
        %3916 = vmatpush1.bf16.msra.mxu0 %v3158
        %3917 = vmatprep.subr.bf16.mxu0 %v3167
        %3918 = vmatpush1.bf16.msra.mxu0 %v3166
        %3919 = vmatprep.subr.bf16.mxu0 %v3175
        %3920 = vmatpush1.bf16.msra.mxu0 %v3174
        %3921 = vmatprep.subr.bf16.mxu0 %v3183
        %3922 = vmatpush1.bf16.msra.mxu0 %v3182
        %3923 = vmatprep.subr.bf16.mxu0 %v3191
        %3924 = vmatpush1.bf16.msra.mxu0 %v3190
        %3925 = vmatprep.subr.bf16.mxu0 %v3199
        %3926 = vmatpush1.bf16.msra.mxu0 %v3198
        %3927 = vmatprep.subr.bf16.mxu0 %v3207
        %3928 = vmatpush1.bf16.msra.mxu0 %v3206
        %3929 = vmatprep.subr.bf16.mxu0 %v3215
        %3930 = vmatpush1.bf16.msra.mxu0 %v3214
        %3931 = vmatprep.subr.bf16.mxu0 %v3223
        %3932 = vmatpush1.bf16.msra.mxu0 %v3222
        %3933 = vmatprep.subr.bf16.mxu0 %v3231
        %3934 = vmatpush1.bf16.msra.mxu0 %v3230
        %3935 = vmatprep.subr.bf16.mxu0 %v3239
        %3936 = vmatpush1.bf16.msra.mxu0 %v3238
        %3937 = vmatprep.subr.bf16.mxu0 %v3247
        %3938 = vmatpush1.bf16.msra.mxu0 %v3246
        %3939 = vmatprep.subr.bf16.mxu0 %v3255
        %3940 = vmatpush1.bf16.msra.mxu0 %v3254
        %3941 = vmatprep.subr.bf16.mxu0 %v3263
        %3942 = vmatpush1.bf16.msra.mxu0 %v3262
        %3943 = vmatprep.mubr.bf16.mxu0 %v667
        %3944 = vmatmul.mubr.bf16.gmra.mrb[0].mxu0 %v666
        %v3945 = vpop.f32.mrb[0].mxu0
        %v3946 = vadd.f32 %v3903, %v3945
        %v3947 = vpop.f32.mrb[0].mxu0
        %v3948 = vadd.f32 %v3905, %v3947
        %v3949 = vpop.f32.mrb[0].mxu0
        %v3950 = vadd.f32 %v3907, %v3949
        %v3951 = vpop.f32.mrb[0].mxu0
        %v3952 = vadd.f32 %v3909, %v3951
        %3953 = vdwg.mxu0
        %3954 = vmatprep.subr.bf16.mxu0 %v2761
        %3955 = vmatpush1.bf16.msra.mxu0 %v2760
        %3956 = vmatprep.subr.bf16.mxu0 %v2769
        %3957 = vmatpush1.bf16.msra.mxu0 %v2768
        %3958 = vmatprep.subr.bf16.mxu0 %v2777
        %3959 = vmatpush1.bf16.msra.mxu0 %v2776
        %3960 = vmatprep.subr.bf16.mxu0 %v2785
        %3961 = vmatpush1.bf16.msra.mxu0 %v2784
        %3962 = vmatprep.subr.bf16.mxu0 %v2793
        %3963 = vmatpush1.bf16.msra.mxu0 %v2792
        %3964 = vmatprep.subr.bf16.mxu0 %v2801
        %3965 = vmatpush1.bf16.msra.mxu0 %v2800
        %3966 = vmatprep.subr.bf16.mxu0 %v2809
        %3967 = vmatpush1.bf16.msra.mxu0 %v2808
        %3968 = vmatprep.subr.bf16.mxu0 %v2817
        %3969 = vmatpush1.bf16.msra.mxu0 %v2816
        %3970 = vmatprep.subr.bf16.mxu0 %v2825
        %3971 = vmatpush1.bf16.msra.mxu0 %v2824
        %3972 = vmatprep.subr.bf16.mxu0 %v2833
        %3973 = vmatpush1.bf16.msra.mxu0 %v2832
        %3974 = vmatprep.subr.bf16.mxu0 %v2841
        %3975 = vmatpush1.bf16.msra.mxu0 %v2840
        %3976 = vmatprep.subr.bf16.mxu0 %v2849
        %3977 = vmatpush1.bf16.msra.mxu0 %v2848
        %3978 = vmatprep.subr.bf16.mxu0 %v2857
        %3979 = vmatpush1.bf16.msra.mxu0 %v2856
        %3980 = vmatprep.subr.bf16.mxu0 %v2865
        %3981 = vmatpush1.bf16.msra.mxu0 %v2864
        %3982 = vmatprep.subr.bf16.mxu0 %v2873
        %3983 = vmatpush1.bf16.msra.mxu0 %v2872
        %3984 = vmatprep.subr.bf16.mxu0 %v2881
        %3985 = vmatpush1.bf16.msra.mxu0 %v2880
        %3986 = vmatprep.mubr.bf16.mxu0 %v661
        %3987 = vmatmul.mubr.bf16.gmra.mrb[0].mxu0 %v660
        %v3988 = vpop.f32.mrb[0].mxu0
        %v3989 = vadd.f32 %v1193, %v3988
        %v3990 = vpop.f32.mrb[0].mxu0
        %v3991 = vadd.f32 %v1197, %v3990
        %v3992 = vpop.f32.mrb[0].mxu0
        %v3993 = vadd.f32 %v1193, %v3992
        %v3994 = vpop.f32.mrb[0].mxu0
        %v3995 = vadd.f32 %v1197, %v3994
        %3996 = vdwg.mxu0
        %3997 = vmatprep.subr.bf16.mxu0 %v2889
        %3998 = vmatpush1.bf16.msra.mxu0 %v2888
        %3999 = vmatprep.subr.bf16.mxu0 %v2897
        %4000 = vmatpush1.bf16.msra.mxu0 %v2896
        %4001 = vmatprep.subr.bf16.mxu0 %v2905
        %4002 = vmatpush1.bf16.msra.mxu0 %v2904
        %4003 = vmatprep.subr.bf16.mxu0 %v2913
        %4004 = vmatpush1.bf16.msra.mxu0 %v2912
        %4005 = vmatprep.subr.bf16.mxu0 %v2921
        %4006 = vmatpush1.bf16.msra.mxu0 %v2920
        %4007 = vmatprep.subr.bf16.mxu0 %v2929
        %4008 = vmatpush1.bf16.msra.mxu0 %v2928
        %4009 = vmatprep.subr.bf16.mxu0 %v2937
        %4010 = vmatpush1.bf16.msra.mxu0 %v2936
        %4011 = vmatprep.subr.bf16.mxu0 %v2945
        %4012 = vmatpush1.bf16.msra.mxu0 %v2944
        %4013 = vmatprep.subr.bf16.mxu0 %v2953
        %4014 = vmatpush1.bf16.msra.mxu0 %v2952
        %4015 = vmatprep.subr.bf16.mxu0 %v2961
        %4016 = vmatpush1.bf16.msra.mxu0 %v2960
        %4017 = vmatprep.subr.bf16.mxu0 %v2969
        %4018 = vmatpush1.bf16.msra.mxu0 %v2968
        %4019 = vmatprep.subr.bf16.mxu0 %v2977
        %4020 = vmatpush1.bf16.msra.mxu0 %v2976
        %4021 = vmatprep.subr.bf16.mxu0 %v2985
        %4022 = vmatpush1.bf16.msra.mxu0 %v2984
        %4023 = vmatprep.subr.bf16.mxu0 %v2993
        %4024 = vmatpush1.bf16.msra.mxu0 %v2992
        %4025 = vmatprep.subr.bf16.mxu0 %v3001
        %4026 = vmatpush1.bf16.msra.mxu0 %v3000
        %4027 = vmatprep.subr.bf16.mxu0 %v3009
        %4028 = vmatpush1.bf16.msra.mxu0 %v3008
        %4029 = vmatprep.mubr.bf16.mxu0 %v663
        %4030 = vmatmul.mubr.bf16.gmra.mrb[0].mxu0 %v662
        %v4031 = vpop.f32.mrb[0].mxu0
        %v4032 = vadd.f32 %v3989, %v4031
        %v4033 = vpop.f32.mrb[0].mxu0
        %v4034 = vadd.f32 %v3991, %v4033
        %v4035 = vpop.f32.mrb[0].mxu0
        %v4036 = vadd.f32 %v3993, %v4035
        %v4037 = vpop.f32.mrb[0].mxu0
        %v4038 = vadd.f32 %v3995, %v4037
        %4039 = vdwg.mxu0
        %4040 = vmatprep.subr.bf16.mxu0 %v3017
        %4041 = vmatpush1.bf16.msra.mxu0 %v3016
        %4042 = vmatprep.subr.bf16.mxu0 %v3025
        %4043 = vmatpush1.bf16.msra.mxu0 %v3024
        %4044 = vmatprep.subr.bf16.mxu0 %v3033
        %4045 = vmatpush1.bf16.msra.mxu0 %v3032
        %4046 = vmatprep.subr.bf16.mxu0 %v3041
        %4047 = vmatpush1.bf16.msra.mxu0 %v3040
        %4048 = vmatprep.subr.bf16.mxu0 %v3049
        %4049 = vmatpush1.bf16.msra.mxu0 %v3048
        %4050 = vmatprep.subr.bf16.mxu0 %v3057
        %4051 = vmatpush1.bf16.msra.mxu0 %v3056
        %4052 = vmatprep.subr.bf16.mxu0 %v3065
        %4053 = vmatpush1.bf16.msra.mxu0 %v3064
        %4054 = vmatprep.subr.bf16.mxu0 %v3073
        %4055 = vmatpush1.bf16.msra.mxu0 %v3072
        %4056 = vmatprep.subr.bf16.mxu0 %v3081
        %4057 = vmatpush1.bf16.msra.mxu0 %v3080
        %4058 = vmatprep.subr.bf16.mxu0 %v3089
        %4059 = vmatpush1.bf16.msra.mxu0 %v3088
        %4060 = vmatprep.subr.bf16.mxu0 %v3097
        %4061 = vmatpush1.bf16.msra.mxu0 %v3096
        %4062 = vmatprep.subr.bf16.mxu0 %v3105
        %4063 = vmatpush1.bf16.msra.mxu0 %v3104
        %4064 = vmatprep.subr.bf16.mxu0 %v3113
        %4065 = vmatpush1.bf16.msra.mxu0 %v3112
        %4066 = vmatprep.subr.bf16.mxu0 %v3121
        %4067 = vmatpush1.bf16.msra.mxu0 %v3120
        %4068 = vmatprep.subr.bf16.mxu0 %v3129
        %4069 = vmatpush1.bf16.msra.mxu0 %v3128
        %4070 = vmatprep.subr.bf16.mxu0 %v3137
        %4071 = vmatpush1.bf16.msra.mxu0 %v3136
        %4072 = vmatprep.mubr.bf16.mxu0 %v665
        %4073 = vmatmul.mubr.bf16.gmra.mrb[0].mxu0 %v664
        %v4074 = vpop.f32.mrb[0].mxu0
        %v4075 = vadd.f32 %v4032, %v4074
        %v4076 = vpop.f32.mrb[0].mxu0
        %v4077 = vadd.f32 %v4034, %v4076
        %v4078 = vpop.f32.mrb[0].mxu0
        %v4079 = vadd.f32 %v4036, %v4078
        %v4080 = vpop.f32.mrb[0].mxu0
        %v4081 = vadd.f32 %v4038, %v4080
        %4082 = vdwg.mxu0
        %4083 = vmatprep.subr.bf16.mxu0 %v3145
        %4084 = vmatpush1.bf16.msra.mxu0 %v3144
        %4085 = vmatprep.subr.bf16.mxu0 %v3153
        %4086 = vmatpush1.bf16.msra.mxu0 %v3152
        %4087 = vmatprep.subr.bf16.mxu0 %v3161
        %4088 = vmatpush1.bf16.msra.mxu0 %v3160
        %4089 = vmatprep.subr.bf16.mxu0 %v3169
        %4090 = vmatpush1.bf16.msra.mxu0 %v3168
        %4091 = vmatprep.subr.bf16.mxu0 %v3177
        %4092 = vmatpush1.bf16.msra.mxu0 %v3176
        %4093 = vmatprep.subr.bf16.mxu0 %v3185
        %4094 = vmatpush1.bf16.msra.mxu0 %v3184
        %4095 = vmatprep.subr.bf16.mxu0 %v3193
        %4096 = vmatpush1.bf16.msra.mxu0 %v3192
        %4097 = vmatprep.subr.bf16.mxu0 %v3201
        %4098 = vmatpush1.bf16.msra.mxu0 %v3200
        %4099 = vmatprep.subr.bf16.mxu0 %v3209
        %4100 = vmatpush1.bf16.msra.mxu0 %v3208
        %4101 = vmatprep.subr.bf16.mxu0 %v3217
        %4102 = vmatpush1.bf16.msra.mxu0 %v3216
        %4103 = vmatprep.subr.bf16.mxu0 %v3225
        %4104 = vmatpush1.bf16.msra.mxu0 %v3224
        %4105 = vmatprep.subr.bf16.mxu0 %v3233
        %4106 = vmatpush1.bf16.msra.mxu0 %v3232
        %4107 = vmatprep.subr.bf16.mxu0 %v3241
        %4108 = vmatpush1.bf16.msra.mxu0 %v3240
        %4109 = vmatprep.subr.bf16.mxu0 %v3249
        %4110 = vmatpush1.bf16.msra.mxu0 %v3248
        %4111 = vmatprep.subr.bf16.mxu0 %v3257
        %4112 = vmatpush1.bf16.msra.mxu0 %v3256
        %4113 = vmatprep.subr.bf16.mxu0 %v3265
        %4114 = vmatpush1.bf16.msra.mxu0 %v3264
        %4115 = vmatprep.mubr.bf16.mxu0 %v667
        %4116 = vmatmul.mubr.bf16.gmra.mrb[0].mxu0 %v666
        %v4117 = vpop.f32.mrb[0].mxu0
        %v4118 = vadd.f32 %v4075, %v4117
        %v4119 = vpop.f32.mrb[0].mxu0
        %v4120 = vadd.f32 %v4077, %v4119
        %v4121 = vpop.f32.mrb[0].mxu0
        %v4122 = vadd.f32 %v4079, %v4121
        %v4123 = vpop.f32.mrb[0].mxu0
        %v4124 = vadd.f32 %v4081, %v4123
        %4125 = vdwg.mxu0
        %4126 = vmatprep.subr.bf16.mxu0 %v2763
        %4127 = vmatpush1.bf16.msra.mxu0 %v2762
        %4128 = vmatprep.subr.bf16.mxu0 %v2771
        %4129 = vmatpush1.bf16.msra.mxu0 %v2770
        %4130 = vmatprep.subr.bf16.mxu0 %v2779
        %4131 = vmatpush1.bf16.msra.mxu0 %v2778
        %4132 = vmatprep.subr.bf16.mxu0 %v2787
        %4133 = vmatpush1.bf16.msra.mxu0 %v2786
        %4134 = vmatprep.subr.bf16.mxu0 %v2795
        %4135 = vmatpush1.bf16.msra.mxu0 %v2794
        %4136 = vmatprep.subr.bf16.mxu0 %v2803
        %4137 = vmatpush1.bf16.msra.mxu0 %v2802
        %4138 = vmatprep.subr.bf16.mxu0 %v2811
        %4139 = vmatpush1.bf16.msra.mxu0 %v2810
        %4140 = vmatprep.subr.bf16.mxu0 %v2819
        %4141 = vmatpush1.bf16.msra.mxu0 %v2818
        %4142 = vmatprep.subr.bf16.mxu0 %v2827
        %4143 = vmatpush1.bf16.msra.mxu0 %v2826
        %4144 = vmatprep.subr.bf16.mxu0 %v2835
        %4145 = vmatpush1.bf16.msra.mxu0 %v2834
        %4146 = vmatprep.subr.bf16.mxu0 %v2843
        %4147 = vmatpush1.bf16.msra.mxu0 %v2842
        %4148 = vmatprep.subr.bf16.mxu0 %v2851
        %4149 = vmatpush1.bf16.msra.mxu0 %v2850
        %4150 = vmatprep.subr.bf16.mxu0 %v2859
        %4151 = vmatpush1.bf16.msra.mxu0 %v2858
        %4152 = vmatprep.subr.bf16.mxu0 %v2867
        %4153 = vmatpush1.bf16.msra.mxu0 %v2866
        %4154 = vmatprep.subr.bf16.mxu0 %v2875
        %4155 = vmatpush1.bf16.msra.mxu0 %v2874
        %4156 = vmatprep.subr.bf16.mxu0 %v2883
        %4157 = vmatpush1.bf16.msra.mxu0 %v2882
        %4158 = vmatprep.mubr.bf16.mxu0 %v661
        %4159 = vmatmul.mubr.bf16.gmra.mrb[0].mxu0 %v660
        %v4160 = vpop.f32.mrb[0].mxu0
        %v4161 = vadd.f32 %v1201, %v4160
        %v4162 = vpop.f32.mrb[0].mxu0
        %v4163 = vadd.f32 %v1205, %v4162
        %v4164 = vpop.f32.mrb[0].mxu0
        %v4165 = vadd.f32 %v1201, %v4164
        %v4166 = vpop.f32.mrb[0].mxu0
        %v4167 = vadd.f32 %v1205, %v4166
        %4168 = vdwg.mxu0
        %4169 = vmatprep.subr.bf16.mxu0 %v2891
        %4170 = vmatpush1.bf16.msra.mxu0 %v2890
        %4171 = vmatprep.subr.bf16.mxu0 %v2899
        %4172 = vmatpush1.bf16.msra.mxu0 %v2898
        %4173 = vmatprep.subr.bf16.mxu0 %v2907
        %4174 = vmatpush1.bf16.msra.mxu0 %v2906
        %4175 = vmatprep.subr.bf16.mxu0 %v2915
        %4176 = vmatpush1.bf16.msra.mxu0 %v2914
        %4177 = vmatprep.subr.bf16.mxu0 %v2923
        %4178 = vmatpush1.bf16.msra.mxu0 %v2922
        %4179 = vmatprep.subr.bf16.mxu0 %v2931
        %4180 = vmatpush1.bf16.msra.mxu0 %v2930
        %4181 = vmatprep.subr.bf16.mxu0 %v2939
        %4182 = vmatpush1.bf16.msra.mxu0 %v2938
        %4183 = vmatprep.subr.bf16.mxu0 %v2947
        %4184 = vmatpush1.bf16.msra.mxu0 %v2946
        %4185 = vmatprep.subr.bf16.mxu0 %v2955
        %4186 = vmatpush1.bf16.msra.mxu0 %v2954
        %4187 = vmatprep.subr.bf16.mxu0 %v2963
        %4188 = vmatpush1.bf16.msra.mxu0 %v2962
        %4189 = vmatprep.subr.bf16.mxu0 %v2971
        %4190 = vmatpush1.bf16.msra.mxu0 %v2970
        %4191 = vmatprep.subr.bf16.mxu0 %v2979
        %4192 = vmatpush1.bf16.msra.mxu0 %v2978
        %4193 = vmatprep.subr.bf16.mxu0 %v2987
        %4194 = vmatpush1.bf16.msra.mxu0 %v2986
        %4195 = vmatprep.subr.bf16.mxu0 %v2995
        %4196 = vmatpush1.bf16.msra.mxu0 %v2994
        %4197 = vmatprep.subr.bf16.mxu0 %v3003
        %4198 = vmatpush1.bf16.msra.mxu0 %v3002
        %4199 = vmatprep.subr.bf16.mxu0 %v3011
        %4200 = vmatpush1.bf16.msra.mxu0 %v3010
        %4201 = vmatprep.mubr.bf16.mxu0 %v663
        %4202 = vmatmul.mubr.bf16.gmra.mrb[0].mxu0 %v662
        %v4203 = vpop.f32.mrb[0].mxu0
        %v4204 = vadd.f32 %v4161, %v4203
        %v4205 = vpop.f32.mrb[0].mxu0
        %v4206 = vadd.f32 %v4163, %v4205
        %v4207 = vpop.f32.mrb[0].mxu0
        %v4208 = vadd.f32 %v4165, %v4207
        %v4209 = vpop.f32.mrb[0].mxu0
        %v4210 = vadd.f32 %v4167, %v4209
        %4211 = vdwg.mxu0
        %4212 = vmatprep.subr.bf16.mxu0 %v3019
        %4213 = vmatpush1.bf16.msra.mxu0 %v3018
        %4214 = vmatprep.subr.bf16.mxu0 %v3027
        %4215 = vmatpush1.bf16.msra.mxu0 %v3026
        %4216 = vmatprep.subr.bf16.mxu0 %v3035
        %4217 = vmatpush1.bf16.msra.mxu0 %v3034
        %4218 = vmatprep.subr.bf16.mxu0 %v3043
        %4219 = vmatpush1.bf16.msra.mxu0 %v3042
        %4220 = vmatprep.subr.bf16.mxu0 %v3051
        %4221 = vmatpush1.bf16.msra.mxu0 %v3050
        %4222 = vmatprep.subr.bf16.mxu0 %v3059
        %4223 = vmatpush1.bf16.msra.mxu0 %v3058
        %4224 = vmatprep.subr.bf16.mxu0 %v3067
        %4225 = vmatpush1.bf16.msra.mxu0 %v3066
        %4226 = vmatprep.subr.bf16.mxu0 %v3075
        %4227 = vmatpush1.bf16.msra.mxu0 %v3074
        %4228 = vmatprep.subr.bf16.mxu0 %v3083
        %4229 = vmatpush1.bf16.msra.mxu0 %v3082
        %4230 = vmatprep.subr.bf16.mxu0 %v3091
        %4231 = vmatpush1.bf16.msra.mxu0 %v3090
        %4232 = vmatprep.subr.bf16.mxu0 %v3099
        %4233 = vmatpush1.bf16.msra.mxu0 %v3098
        %4234 = vmatprep.subr.bf16.mxu0 %v3107
        %4235 = vmatpush1.bf16.msra.mxu0 %v3106
        %4236 = vmatprep.subr.bf16.mxu0 %v3115
        %4237 = vmatpush1.bf16.msra.mxu0 %v3114
        %4238 = vmatprep.subr.bf16.mxu0 %v3123
        %4239 = vmatpush1.bf16.msra.mxu0 %v3122
        %4240 = vmatprep.subr.bf16.mxu0 %v3131
        %4241 = vmatpush1.bf16.msra.mxu0 %v3130
        %4242 = vmatprep.subr.bf16.mxu0 %v3139
        %4243 = vmatpush1.bf16.msra.mxu0 %v3138
        %4244 = vmatprep.mubr.bf16.mxu0 %v665
        %4245 = vmatmul.mubr.bf16.gmra.mrb[0].mxu0 %v664
        %v4246 = vpop.f32.mrb[0].mxu0
        %v4247 = vadd.f32 %v4204, %v4246
        %v4248 = vpop.f32.mrb[0].mxu0
        %v4249 = vadd.f32 %v4206, %v4248
        %v4250 = vpop.f32.mrb[0].mxu0
        %v4251 = vadd.f32 %v4208, %v4250
        %v4252 = vpop.f32.mrb[0].mxu0
        %v4253 = vadd.f32 %v4210, %v4252
        %4254 = vdwg.mxu0
        %4255 = vmatprep.subr.bf16.mxu0 %v3147
        %4256 = vmatpush1.bf16.msra.mxu0 %v3146
        %4257 = vmatprep.subr.bf16.mxu0 %v3155
        %4258 = vmatpush1.bf16.msra.mxu0 %v3154
        %4259 = vmatprep.subr.bf16.mxu0 %v3163
        %4260 = vmatpush1.bf16.msra.mxu0 %v3162
        %4261 = vmatprep.subr.bf16.mxu0 %v3171
        %4262 = vmatpush1.bf16.msra.mxu0 %v3170
        %4263 = vmatprep.subr.bf16.mxu0 %v3179
        %4264 = vmatpush1.bf16.msra.mxu0 %v3178
        %4265 = vmatprep.subr.bf16.mxu0 %v3187
        %4266 = vmatpush1.bf16.msra.mxu0 %v3186
        %4267 = vmatprep.subr.bf16.mxu0 %v3195
        %4268 = vmatpush1.bf16.msra.mxu0 %v3194
        %4269 = vmatprep.subr.bf16.mxu0 %v3203
        %4270 = vmatpush1.bf16.msra.mxu0 %v3202
        %4271 = vmatprep.subr.bf16.mxu0 %v3211
        %4272 = vmatpush1.bf16.msra.mxu0 %v3210
        %4273 = vmatprep.subr.bf16.mxu0 %v3219
        %4274 = vmatpush1.bf16.msra.mxu0 %v3218
        %4275 = vmatprep.subr.bf16.mxu0 %v3227
        %4276 = vmatpush1.bf16.msra.mxu0 %v3226
        %4277 = vmatprep.subr.bf16.mxu0 %v3235
        %4278 = vmatpush1.bf16.msra.mxu0 %v3234
        %4279 = vmatprep.subr.bf16.mxu0 %v3243
        %4280 = vmatpush1.bf16.msra.mxu0 %v3242
        %4281 = vmatprep.subr.bf16.mxu0 %v3251
        %4282 = vmatpush1.bf16.msra.mxu0 %v3250
        %4283 = vmatprep.subr.bf16.mxu0 %v3259
        %4284 = vmatpush1.bf16.msra.mxu0 %v3258
        %4285 = vmatprep.subr.bf16.mxu0 %v3267
        %4286 = vmatpush1.bf16.msra.mxu0 %v3266
        %4287 = vmatprep.mubr.bf16.mxu0 %v667
        %4288 = vmatmul.mubr.bf16.gmra.mrb[0].mxu0 %v666
        %v4289 = vpop.f32.mrb[0].mxu0
        %v4290 = vadd.f32 %v4247, %v4289
        %v4291 = vpop.f32.mrb[0].mxu0
        %v4292 = vadd.f32 %v4249, %v4291
        %v4293 = vpop.f32.mrb[0].mxu0
        %v4294 = vadd.f32 %v4251, %v4293
        %v4295 = vpop.f32.mrb[0].mxu0
        %v4296 = vadd.f32 %v4253, %v4295
        %4297 = vdwg.mxu0
        %4298 = vmatprep.subr.bf16.mxu0 %v2765
        %4299 = vmatpush1.bf16.msra.mxu0 %v2764
        %4300 = vmatprep.subr.bf16.mxu0 %v2773
        %4301 = vmatpush1.bf16.msra.mxu0 %v2772
        %4302 = vmatprep.subr.bf16.mxu0 %v2781
        %4303 = vmatpush1.bf16.msra.mxu0 %v2780
        %4304 = vmatprep.subr.bf16.mxu0 %v2789
        %4305 = vmatpush1.bf16.msra.mxu0 %v2788
        %4306 = vmatprep.subr.bf16.mxu0 %v2797
        %4307 = vmatpush1.bf16.msra.mxu0 %v2796
        %4308 = vmatprep.subr.bf16.mxu0 %v2805
        %4309 = vmatpush1.bf16.msra.mxu0 %v2804
        %4310 = vmatprep.subr.bf16.mxu0 %v2813
        %4311 = vmatpush1.bf16.msra.mxu0 %v2812
        %4312 = vmatprep.subr.bf16.mxu0 %v2821
        %4313 = vmatpush1.bf16.msra.mxu0 %v2820
        %4314 = vmatprep.subr.bf16.mxu0 %v2829
        %4315 = vmatpush1.bf16.msra.mxu0 %v2828
        %4316 = vmatprep.subr.bf16.mxu0 %v2837
        %4317 = vmatpush1.bf16.msra.mxu0 %v2836
        %4318 = vmatprep.subr.bf16.mxu0 %v2845
        %4319 = vmatpush1.bf16.msra.mxu0 %v2844
        %4320 = vmatprep.subr.bf16.mxu0 %v2853
        %4321 = vmatpush1.bf16.msra.mxu0 %v2852
        %4322 = vmatprep.subr.bf16.mxu0 %v2861
        %4323 = vmatpush1.bf16.msra.mxu0 %v2860
        %4324 = vmatprep.subr.bf16.mxu0 %v2869
        %4325 = vmatpush1.bf16.msra.mxu0 %v2868
        %4326 = vmatprep.subr.bf16.mxu0 %v2877
        %4327 = vmatpush1.bf16.msra.mxu0 %v2876
        %4328 = vmatprep.subr.bf16.mxu0 %v2885
        %4329 = vmatpush1.bf16.msra.mxu0 %v2884
        %4330 = vmatprep.mubr.bf16.mxu0 %v661
        %4331 = vmatmul.mubr.bf16.gmra.mrb[0].mxu0 %v660
        %v4332 = vpop.f32.mrb[0].mxu0
        %v4333 = vadd.f32 %v1209, %v4332
        %v4334 = vpop.f32.mrb[0].mxu0
        %v4335 = vadd.f32 %v1213, %v4334
        %v4336 = vpop.f32.mrb[0].mxu0
        %v4337 = vadd.f32 %v1209, %v4336
        %v4338 = vpop.f32.mrb[0].mxu0
        %v4339 = vadd.f32 %v1213, %v4338
        %4340 = vdwg.mxu0
        %4341 = vmatprep.subr.bf16.mxu0 %v2893
        %4342 = vmatpush1.bf16.msra.mxu0 %v2892
        %4343 = vmatprep.subr.bf16.mxu0 %v2901
        %4344 = vmatpush1.bf16.msra.mxu0 %v2900
        %4345 = vmatprep.subr.bf16.mxu0 %v2909
        %4346 = vmatpush1.bf16.msra.mxu0 %v2908
        %4347 = vmatprep.subr.bf16.mxu0 %v2917
        %4348 = vmatpush1.bf16.msra.mxu0 %v2916
        %4349 = vmatprep.subr.bf16.mxu0 %v2925
        %4350 = vmatpush1.bf16.msra.mxu0 %v2924
        %4351 = vmatprep.subr.bf16.mxu0 %v2933
        %4352 = vmatpush1.bf16.msra.mxu0 %v2932
        %4353 = vmatprep.subr.bf16.mxu0 %v2941
        %4354 = vmatpush1.bf16.msra.mxu0 %v2940
        %4355 = vmatprep.subr.bf16.mxu0 %v2949
        %4356 = vmatpush1.bf16.msra.mxu0 %v2948
        %4357 = vmatprep.subr.bf16.mxu0 %v2957
        %4358 = vmatpush1.bf16.msra.mxu0 %v2956
        %4359 = vmatprep.subr.bf16.mxu0 %v2965
        %4360 = vmatpush1.bf16.msra.mxu0 %v2964
        %4361 = vmatprep.subr.bf16.mxu0 %v2973
        %4362 = vmatpush1.bf16.msra.mxu0 %v2972
        %4363 = vmatprep.subr.bf16.mxu0 %v2981
        %4364 = vmatpush1.bf16.msra.mxu0 %v2980
        %4365 = vmatprep.subr.bf16.mxu0 %v2989
        %4366 = vmatpush1.bf16.msra.mxu0 %v2988
        %4367 = vmatprep.subr.bf16.mxu0 %v2997
        %4368 = vmatpush1.bf16.msra.mxu0 %v2996
        %4369 = vmatprep.subr.bf16.mxu0 %v3005
        %4370 = vmatpush1.bf16.msra.mxu0 %v3004
        %4371 = vmatprep.subr.bf16.mxu0 %v3013
        %4372 = vmatpush1.bf16.msra.mxu0 %v3012
        %4373 = vmatprep.mubr.bf16.mxu0 %v663
        %4374 = vmatmul.mubr.bf16.gmra.mrb[0].mxu0 %v662
        %v4375 = vpop.f32.mrb[0].mxu0
        %v4376 = vadd.f32 %v4333, %v4375
        %v4377 = vpop.f32.mrb[0].mxu0
        %v4378 = vadd.f32 %v4335, %v4377
        %v4379 = vpop.f32.mrb[0].mxu0
        %v4380 = vadd.f32 %v4337, %v4379
        %v4381 = vpop.f32.mrb[0].mxu0
        %v4382 = vadd.f32 %v4339, %v4381
        %4383 = vdwg.mxu0
        %4384 = vmatprep.subr.bf16.mxu0 %v3021
        %4385 = vmatpush1.bf16.msra.mxu0 %v3020
        %4386 = vmatprep.subr.bf16.mxu0 %v3029
        %4387 = vmatpush1.bf16.msra.mxu0 %v3028
        %4388 = vmatprep.subr.bf16.mxu0 %v3037
        %4389 = vmatpush1.bf16.msra.mxu0 %v3036
        %4390 = vmatprep.subr.bf16.mxu0 %v3045
        %4391 = vmatpush1.bf16.msra.mxu0 %v3044
        %4392 = vmatprep.subr.bf16.mxu0 %v3053
        %4393 = vmatpush1.bf16.msra.mxu0 %v3052
        %4394 = vmatprep.subr.bf16.mxu0 %v3061
        %4395 = vmatpush1.bf16.msra.mxu0 %v3060
        %4396 = vmatprep.subr.bf16.mxu0 %v3069
        %4397 = vmatpush1.bf16.msra.mxu0 %v3068
        %4398 = vmatprep.subr.bf16.mxu0 %v3077
        %4399 = vmatpush1.bf16.msra.mxu0 %v3076
        %4400 = vmatprep.subr.bf16.mxu0 %v3085
        %4401 = vmatpush1.bf16.msra.mxu0 %v3084
        %4402 = vmatprep.subr.bf16.mxu0 %v3093
        %4403 = vmatpush1.bf16.msra.mxu0 %v3092
        %4404 = vmatprep.subr.bf16.mxu0 %v3101
        %4405 = vmatpush1.bf16.msra.mxu0 %v3100
        %4406 = vmatprep.subr.bf16.mxu0 %v3109
        %4407 = vmatpush1.bf16.msra.mxu0 %v3108
        %4408 = vmatprep.subr.bf16.mxu0 %v3117
        %4409 = vmatpush1.bf16.msra.mxu0 %v3116
        %4410 = vmatprep.subr.bf16.mxu0 %v3125
        %4411 = vmatpush1.bf16.msra.mxu0 %v3124
        %4412 = vmatprep.subr.bf16.mxu0 %v3133
        %4413 = vmatpush1.bf16.msra.mxu0 %v3132
        %4414 = vmatprep.subr.bf16.mxu0 %v3141
        %4415 = vmatpush1.bf16.msra.mxu0 %v3140
        %4416 = vmatprep.mubr.bf16.mxu0 %v665
        %4417 = vmatmul.mubr.bf16.gmra.mrb[0].mxu0 %v664
        %v4418 = vpop.f32.mrb[0].mxu0
        %v4419 = vadd.f32 %v4376, %v4418
        %v4420 = vpop.f32.mrb[0].mxu0
        %v4421 = vadd.f32 %v4378, %v4420
        %v4422 = vpop.f32.mrb[0].mxu0
        %v4423 = vadd.f32 %v4380, %v4422
        %v4424 = vpop.f32.mrb[0].mxu0
        %v4425 = vadd.f32 %v4382, %v4424
        %4426 = vdwg.mxu0
        %4427 = vmatprep.subr.bf16.mxu0 %v3149
        %4428 = vmatpush1.bf16.msra.mxu0 %v3148
        %4429 = vmatprep.subr.bf16.mxu0 %v3157
        %4430 = vmatpush1.bf16.msra.mxu0 %v3156
        %4431 = vmatprep.subr.bf16.mxu0 %v3165
        %4432 = vmatpush1.bf16.msra.mxu0 %v3164
        %4433 = vmatprep.subr.bf16.mxu0 %v3173
        %4434 = vmatpush1.bf16.msra.mxu0 %v3172
        %4435 = vmatprep.subr.bf16.mxu0 %v3181
        %4436 = vmatpush1.bf16.msra.mxu0 %v3180
        %4437 = vmatprep.subr.bf16.mxu0 %v3189
        %4438 = vmatpush1.bf16.msra.mxu0 %v3188
        %4439 = vmatprep.subr.bf16.mxu0 %v3197
        %4440 = vmatpush1.bf16.msra.mxu0 %v3196
        %4441 = vmatprep.subr.bf16.mxu0 %v3205
        %4442 = vmatpush1.bf16.msra.mxu0 %v3204
        %4443 = vmatprep.subr.bf16.mxu0 %v3213
        %4444 = vmatpush1.bf16.msra.mxu0 %v3212
        %4445 = vmatprep.subr.bf16.mxu0 %v3221
        %4446 = vmatpush1.bf16.msra.mxu0 %v3220
        %4447 = vmatprep.subr.bf16.mxu0 %v3229
        %4448 = vmatpush1.bf16.msra.mxu0 %v3228
        %4449 = vmatprep.subr.bf16.mxu0 %v3237
        %4450 = vmatpush1.bf16.msra.mxu0 %v3236
        %4451 = vmatprep.subr.bf16.mxu0 %v3245
        %4452 = vmatpush1.bf16.msra.mxu0 %v3244
        %4453 = vmatprep.subr.bf16.mxu0 %v3253
        %4454 = vmatpush1.bf16.msra.mxu0 %v3252
        %4455 = vmatprep.subr.bf16.mxu0 %v3261
        %4456 = vmatpush1.bf16.msra.mxu0 %v3260
        %4457 = vmatprep.subr.bf16.mxu0 %v3269
        %4458 = vmatpush1.bf16.msra.mxu0 %v3268
        %4459 = vmatprep.mubr.bf16.mxu0 %v667
        %4460 = vmatmul.mubr.bf16.gmra.mrb[0].mxu0 %v666
        %v4461 = vpop.f32.mrb[0].mxu0
        %v4462 = vadd.f32 %v4419, %v4461
        %v4463 = vpop.f32.mrb[0].mxu0
        %v4464 = vadd.f32 %v4421, %v4463
        %v4465 = vpop.f32.mrb[0].mxu0
        %v4466 = vadd.f32 %v4423, %v4465
        %v4467 = vpop.f32.mrb[0].mxu0
        %v4468 = vadd.f32 %v4425, %v4467
        %4469 = vdwg.mxu0
        %v4470 = vmax.f32 %v3946, 0.0
        %v4471 = vmax.f32 %v3948, 0.0
        %v4472 = vmax.f32 %v4118, 0.0
        %v4473 = vmax.f32 %v4120, 0.0
        %v4474 = vmax.f32 %v4290, 0.0
        %v4475 = vmax.f32 %v4292, 0.0
        %v4476 = vmax.f32 %v4462, 0.0
        %v4477 = vmax.f32 %v4464, 0.0
        %v4478 = vmax.f32 %v3950, 0.0
        %v4479 = vmax.f32 %v3952, 0.0
        %v4480 = vmax.f32 %v4122, 0.0
        %v4481 = vmax.f32 %v4124, 0.0
        %v4482 = vmax.f32 %v4294, 0.0
        %v4483 = vmax.f32 %v4296, 0.0
        %v4484 = vmax.f32 %v4466, 0.0
        %v4485 = vmax.f32 %v4468, 0.0
        %v4486 = vpack.c.bf16 %v4478, %v4470
        %v4487 = vpack.c.bf16 %v4479, %v4471
        %v4488 = vpack.c.bf16 %v4480, %v4472
        %v4489 = vpack.c.bf16 %v4481, %v4473
        %v4490 = vpack.c.bf16 %v4482, %v4474
        %v4491 = vpack.c.bf16 %v4483, %v4475
        %v4492 = vpack.c.bf16 %v4484, %v4476
        %v4493 = vpack.c.bf16 %v4485, %v4477
        %v4494 = vld [vmem:[%s5] sm:$0xff]
        %v4495 = vld [vmem:[%s5 + $0x8] sm:$0xff]
        %v4496 = vld [vmem:[%s5 + $0x10] sm:$0xff]
        %v4497 = vld [vmem:[%s5 + $0x18] sm:$0xff]
        %v4498 = vld [vmem:[%s5 + $0x20] sm:$0xff]
        %v4499 = vld [vmem:[%s5 + $0x28] sm:$0xff]
        %v4500 = vld [vmem:[%s5 + $0x30] sm:$0xff]
        %v4501 = vld [vmem:[%s5 + $0x38] sm:$0xff]
        %v4502 = vld [vmem:[%s5 + $0x40] sm:$0xff]
        %v4503 = vld [vmem:[%s5 + $0x48] sm:$0xff]
        %v4504 = vld [vmem:[%s5 + $0x50] sm:$0xff]
        %v4505 = vld [vmem:[%s5 + $0x58] sm:$0xff]
        %v4506 = vld [vmem:[%s5 + $0x60] sm:$0xff]
        %v4507 = vld [vmem:[%s5 + $0x68] sm:$0xff]
        %v4508 = vld [vmem:[%s5 + $0x70] sm:$0xff]
        %v4509 = vld [vmem:[%s5 + $0x78] sm:$0xff]
        %v4510 = vld [vmem:[%s5 + $0x80] sm:$0xff]
        %v4511 = vld [vmem:[%s5 + $0x88] sm:$0xff]
        %v4512 = vld [vmem:[%s5 + $0x90] sm:$0xff]
        %v4513 = vld [vmem:[%s5 + $0x98] sm:$0xff]
        %v4514 = vld [vmem:[%s5 + $0xa0] sm:$0xff]
        %v4515 = vld [vmem:[%s5 + $0xa8] sm:$0xff]
        %v4516 = vld [vmem:[%s5 + $0xb0] sm:$0xff]
        %v4517 = vld [vmem:[%s5 + $0xb8] sm:$0xff]
        %v4518 = vld [vmem:[%s5 + $0xc0] sm:$0xff]
        %v4519 = vld [vmem:[%s5 + $0xc8] sm:$0xff]
        %v4520 = vld [vmem:[%s5 + $0xd0] sm:$0xff]
        %v4521 = vld [vmem:[%s5 + $0xd8] sm:$0xff]
        %v4522 = vld [vmem:[%s5 + $0xe0] sm:$0xff]
        %v4523 = vld [vmem:[%s5 + $0xe8] sm:$0xff]
        %v4524 = vld [vmem:[%s5 + $0xf0] sm:$0xff]
        %v4525 = vld [vmem:[%s5 + $0xf8] sm:$0xff]
        %v4526 = vld [vmem:[%s5 + $0x100] sm:$0xff]
        %v4527 = vld [vmem:[%s5 + $0x108] sm:$0xff]
        %v4528 = vld [vmem:[%s5 + $0x110] sm:$0xff]
        %v4529 = vld [vmem:[%s5 + $0x118] sm:$0xff]
        %v4530 = vld [vmem:[%s5 + $0x120] sm:$0xff]
        %v4531 = vld [vmem:[%s5 + $0x128] sm:$0xff]
        %v4532 = vld [vmem:[%s5 + $0x130] sm:$0xff]
        %v4533 = vld [vmem:[%s5 + $0x138] sm:$0xff]
        %v4534 = vld [vmem:[%s5 + $0x140] sm:$0xff]
        %v4535 = vld [vmem:[%s5 + $0x148] sm:$0xff]
        %v4536 = vld [vmem:[%s5 + $0x150] sm:$0xff]
        %v4537 = vld [vmem:[%s5 + $0x158] sm:$0xff]
        %v4538 = vld [vmem:[%s5 + $0x160] sm:$0xff]
        %v4539 = vld [vmem:[%s5 + $0x168] sm:$0xff]
        %v4540 = vld [vmem:[%s5 + $0x170] sm:$0xff]
        %v4541 = vld [vmem:[%s5 + $0x178] sm:$0xff]
        %v4542 = vld [vmem:[%s5 + $0x180] sm:$0xff]
        %v4543 = vld [vmem:[%s5 + $0x188] sm:$0xff]
        %v4544 = vld [vmem:[%s5 + $0x190] sm:$0xff]
        %v4545 = vld [vmem:[%s5 + $0x198] sm:$0xff]
        %v4546 = vld [vmem:[%s5 + $0x1a0] sm:$0xff]
        %v4547 = vld [vmem:[%s5 + $0x1a8] sm:$0xff]
        %v4548 = vld [vmem:[%s5 + $0x1b0] sm:$0xff]
        %v4549 = vld [vmem:[%s5 + $0x1b8] sm:$0xff]
        %v4550 = vld [vmem:[%s5 + $0x1c0] sm:$0xff]
        %v4551 = vld [vmem:[%s5 + $0x1c8] sm:$0xff]
        %v4552 = vld [vmem:[%s5 + $0x1d0] sm:$0xff]
        %v4553 = vld [vmem:[%s5 + $0x1d8] sm:$0xff]
        %v4554 = vld [vmem:[%s5 + $0x1e0] sm:$0xff]
        %v4555 = vld [vmem:[%s5 + $0x1e8] sm:$0xff]
        %v4556 = vld [vmem:[%s5 + $0x1f0] sm:$0xff]
        %v4557 = vld [vmem:[%s5 + $0x1f8] sm:$0xff]
        %v4558 = vld [vmem:[%s5 + $0x200] sm:$0xff]
        %v4559 = vld [vmem:[%s5 + $0x208] sm:$0xff]
        %v4560 = vld [vmem:[%s5 + $0x210] sm:$0xff]
        %v4561 = vld [vmem:[%s5 + $0x218] sm:$0xff]
        %v4562 = vld [vmem:[%s5 + $0x220] sm:$0xff]
        %v4563 = vld [vmem:[%s5 + $0x228] sm:$0xff]
        %v4564 = vld [vmem:[%s5 + $0x230] sm:$0xff]
        %v4565 = vld [vmem:[%s5 + $0x238] sm:$0xff]
        %v4566 = vld [vmem:[%s5 + $0x240] sm:$0xff]
        %v4567 = vld [vmem:[%s5 + $0x248] sm:$0xff]
        %v4568 = vld [vmem:[%s5 + $0x250] sm:$0xff]
        %v4569 = vld [vmem:[%s5 + $0x258] sm:$0xff]
        %v4570 = vld [vmem:[%s5 + $0x260] sm:$0xff]
        %v4571 = vld [vmem:[%s5 + $0x268] sm:$0xff]
        %v4572 = vld [vmem:[%s5 + $0x270] sm:$0xff]
        %v4573 = vld [vmem:[%s5 + $0x278] sm:$0xff]
        %v4574 = vld [vmem:[%s5 + $0x280] sm:$0xff]
        %v4575 = vld [vmem:[%s5 + $0x288] sm:$0xff]
        %v4576 = vld [vmem:[%s5 + $0x290] sm:$0xff]
        %v4577 = vld [vmem:[%s5 + $0x298] sm:$0xff]
        %v4578 = vld [vmem:[%s5 + $0x2a0] sm:$0xff]
        %v4579 = vld [vmem:[%s5 + $0x2a8] sm:$0xff]
        %v4580 = vld [vmem:[%s5 + $0x2b0] sm:$0xff]
        %v4581 = vld [vmem:[%s5 + $0x2b8] sm:$0xff]
        %v4582 = vld [vmem:[%s5 + $0x2c0] sm:$0xff]
        %v4583 = vld [vmem:[%s5 + $0x2c8] sm:$0xff]
        %v4584 = vld [vmem:[%s5 + $0x2d0] sm:$0xff]
        %v4585 = vld [vmem:[%s5 + $0x2d8] sm:$0xff]
        %v4586 = vld [vmem:[%s5 + $0x2e0] sm:$0xff]
        %v4587 = vld [vmem:[%s5 + $0x2e8] sm:$0xff]
        %v4588 = vld [vmem:[%s5 + $0x2f0] sm:$0xff]
        %v4589 = vld [vmem:[%s5 + $0x2f8] sm:$0xff]
        %v4590 = vld [vmem:[%s5 + $0x300] sm:$0xff]
        %v4591 = vld [vmem:[%s5 + $0x308] sm:$0xff]
        %v4592 = vld [vmem:[%s5 + $0x310] sm:$0xff]
        %v4593 = vld [vmem:[%s5 + $0x318] sm:$0xff]
        %v4594 = vld [vmem:[%s5 + $0x320] sm:$0xff]
        %v4595 = vld [vmem:[%s5 + $0x328] sm:$0xff]
        %v4596 = vld [vmem:[%s5 + $0x330] sm:$0xff]
        %v4597 = vld [vmem:[%s5 + $0x338] sm:$0xff]
        %v4598 = vld [vmem:[%s5 + $0x340] sm:$0xff]
        %v4599 = vld [vmem:[%s5 + $0x348] sm:$0xff]
        %v4600 = vld [vmem:[%s5 + $0x350] sm:$0xff]
        %v4601 = vld [vmem:[%s5 + $0x358] sm:$0xff]
        %v4602 = vld [vmem:[%s5 + $0x360] sm:$0xff]
        %v4603 = vld [vmem:[%s5 + $0x368] sm:$0xff]
        %v4604 = vld [vmem:[%s5 + $0x370] sm:$0xff]
        %v4605 = vld [vmem:[%s5 + $0x378] sm:$0xff]
        %v4606 = vld [vmem:[%s5 + $0x380] sm:$0xff]
        %v4607 = vld [vmem:[%s5 + $0x388] sm:$0xff]
        %v4608 = vld [vmem:[%s5 + $0x390] sm:$0xff]
        %v4609 = vld [vmem:[%s5 + $0x398] sm:$0xff]
        %v4610 = vld [vmem:[%s5 + $0x3a0] sm:$0xff]
        %v4611 = vld [vmem:[%s5 + $0x3a8] sm:$0xff]
        %v4612 = vld [vmem:[%s5 + $0x3b0] sm:$0xff]
        %v4613 = vld [vmem:[%s5 + $0x3b8] sm:$0xff]
        %v4614 = vld [vmem:[%s5 + $0x3c0] sm:$0xff]
        %v4615 = vld [vmem:[%s5 + $0x3c8] sm:$0xff]
        %v4616 = vld [vmem:[%s5 + $0x3d0] sm:$0xff]
        %v4617 = vld [vmem:[%s5 + $0x3d8] sm:$0xff]
        %v4618 = vld [vmem:[%s5 + $0x3e0] sm:$0xff]
        %v4619 = vld [vmem:[%s5 + $0x3e8] sm:$0xff]
        %v4620 = vld [vmem:[%s5 + $0x3f0] sm:$0xff]
        %v4621 = vld [vmem:[%s5 + $0x3f8] sm:$0xff]
        %v4622 = vld [vmem:[%s5 + $0x400] sm:$0xff]
        %v4623 = vld [vmem:[%s5 + $0x408] sm:$0xff]
        %v4624 = vld [vmem:[%s5 + $0x410] sm:$0xff]
        %v4625 = vld [vmem:[%s5 + $0x418] sm:$0xff]
        %v4626 = vld [vmem:[%s5 + $0x420] sm:$0xff]
        %v4627 = vld [vmem:[%s5 + $0x428] sm:$0xff]
        %v4628 = vld [vmem:[%s5 + $0x430] sm:$0xff]
        %v4629 = vld [vmem:[%s5 + $0x438] sm:$0xff]
        %v4630 = vld [vmem:[%s5 + $0x440] sm:$0xff]
        %v4631 = vld [vmem:[%s5 + $0x448] sm:$0xff]
        %v4632 = vld [vmem:[%s5 + $0x450] sm:$0xff]
        %v4633 = vld [vmem:[%s5 + $0x458] sm:$0xff]
        %v4634 = vld [vmem:[%s5 + $0x460] sm:$0xff]
        %v4635 = vld [vmem:[%s5 + $0x468] sm:$0xff]
        %v4636 = vld [vmem:[%s5 + $0x470] sm:$0xff]
        %v4637 = vld [vmem:[%s5 + $0x478] sm:$0xff]
        %v4638 = vld [vmem:[%s5 + $0x480] sm:$0xff]
        %v4639 = vld [vmem:[%s5 + $0x488] sm:$0xff]
        %v4640 = vld [vmem:[%s5 + $0x490] sm:$0xff]
        %v4641 = vld [vmem:[%s5 + $0x498] sm:$0xff]
        %v4642 = vld [vmem:[%s5 + $0x4a0] sm:$0xff]
        %v4643 = vld [vmem:[%s5 + $0x4a8] sm:$0xff]
        %v4644 = vld [vmem:[%s5 + $0x4b0] sm:$0xff]
        %v4645 = vld [vmem:[%s5 + $0x4b8] sm:$0xff]
        %v4646 = vld [vmem:[%s5 + $0x4c0] sm:$0xff]
        %v4647 = vld [vmem:[%s5 + $0x4c8] sm:$0xff]
        %v4648 = vld [vmem:[%s5 + $0x4d0] sm:$0xff]
        %v4649 = vld [vmem:[%s5 + $0x4d8] sm:$0xff]
        %v4650 = vld [vmem:[%s5 + $0x4e0] sm:$0xff]
        %v4651 = vld [vmem:[%s5 + $0x4e8] sm:$0xff]
        %v4652 = vld [vmem:[%s5 + $0x4f0] sm:$0xff]
        %v4653 = vld [vmem:[%s5 + $0x4f8] sm:$0xff]
        %v4654 = vld [vmem:[%s5 + $0x500] sm:$0xff]
        %v4655 = vld [vmem:[%s5 + $0x508] sm:$0xff]
        %v4656 = vld [vmem:[%s5 + $0x510] sm:$0xff]
        %v4657 = vld [vmem:[%s5 + $0x518] sm:$0xff]
        %v4658 = vld [vmem:[%s5 + $0x520] sm:$0xff]
        %v4659 = vld [vmem:[%s5 + $0x528] sm:$0xff]
        %v4660 = vld [vmem:[%s5 + $0x530] sm:$0xff]
        %v4661 = vld [vmem:[%s5 + $0x538] sm:$0xff]
        %v4662 = vld [vmem:[%s5 + $0x540] sm:$0xff]
        %v4663 = vld [vmem:[%s5 + $0x548] sm:$0xff]
        %v4664 = vld [vmem:[%s5 + $0x550] sm:$0xff]
        %v4665 = vld [vmem:[%s5 + $0x558] sm:$0xff]
        %v4666 = vld [vmem:[%s5 + $0x560] sm:$0xff]
        %v4667 = vld [vmem:[%s5 + $0x568] sm:$0xff]
        %v4668 = vld [vmem:[%s5 + $0x570] sm:$0xff]
        %v4669 = vld [vmem:[%s5 + $0x578] sm:$0xff]
        %v4670 = vld [vmem:[%s5 + $0x580] sm:$0xff]
        %v4671 = vld [vmem:[%s5 + $0x588] sm:$0xff]
        %v4672 = vld [vmem:[%s5 + $0x590] sm:$0xff]
        %v4673 = vld [vmem:[%s5 + $0x598] sm:$0xff]
        %v4674 = vld [vmem:[%s5 + $0x5a0] sm:$0xff]
        %v4675 = vld [vmem:[%s5 + $0x5a8] sm:$0xff]
        %v4676 = vld [vmem:[%s5 + $0x5b0] sm:$0xff]
        %v4677 = vld [vmem:[%s5 + $0x5b8] sm:$0xff]
        %v4678 = vld [vmem:[%s5 + $0x5c0] sm:$0xff]
        %v4679 = vld [vmem:[%s5 + $0x5c8] sm:$0xff]
        %v4680 = vld [vmem:[%s5 + $0x5d0] sm:$0xff]
        %v4681 = vld [vmem:[%s5 + $0x5d8] sm:$0xff]
        %v4682 = vld [vmem:[%s5 + $0x5e0] sm:$0xff]
        %v4683 = vld [vmem:[%s5 + $0x5e8] sm:$0xff]
        %v4684 = vld [vmem:[%s5 + $0x5f0] sm:$0xff]
        %v4685 = vld [vmem:[%s5 + $0x5f8] sm:$0xff]
        %v4686 = vld [vmem:[%s5 + $0x600] sm:$0xff]
        %v4687 = vld [vmem:[%s5 + $0x608] sm:$0xff]
        %v4688 = vld [vmem:[%s5 + $0x610] sm:$0xff]
        %v4689 = vld [vmem:[%s5 + $0x618] sm:$0xff]
        %v4690 = vld [vmem:[%s5 + $0x620] sm:$0xff]
        %v4691 = vld [vmem:[%s5 + $0x628] sm:$0xff]
        %v4692 = vld [vmem:[%s5 + $0x630] sm:$0xff]
        %v4693 = vld [vmem:[%s5 + $0x638] sm:$0xff]
        %v4694 = vld [vmem:[%s5 + $0x640] sm:$0xff]
        %v4695 = vld [vmem:[%s5 + $0x648] sm:$0xff]
        %v4696 = vld [vmem:[%s5 + $0x650] sm:$0xff]
        %v4697 = vld [vmem:[%s5 + $0x658] sm:$0xff]
        %v4698 = vld [vmem:[%s5 + $0x660] sm:$0xff]
        %v4699 = vld [vmem:[%s5 + $0x668] sm:$0xff]
        %v4700 = vld [vmem:[%s5 + $0x670] sm:$0xff]
        %v4701 = vld [vmem:[%s5 + $0x678] sm:$0xff]
        %v4702 = vld [vmem:[%s5 + $0x680] sm:$0xff]
        %v4703 = vld [vmem:[%s5 + $0x688] sm:$0xff]
        %v4704 = vld [vmem:[%s5 + $0x690] sm:$0xff]
        %v4705 = vld [vmem:[%s5 + $0x698] sm:$0xff]
        %v4706 = vld [vmem:[%s5 + $0x6a0] sm:$0xff]
        %v4707 = vld [vmem:[%s5 + $0x6a8] sm:$0xff]
        %v4708 = vld [vmem:[%s5 + $0x6b0] sm:$0xff]
        %v4709 = vld [vmem:[%s5 + $0x6b8] sm:$0xff]
        %v4710 = vld [vmem:[%s5 + $0x6c0] sm:$0xff]
        %v4711 = vld [vmem:[%s5 + $0x6c8] sm:$0xff]
        %v4712 = vld [vmem:[%s5 + $0x6d0] sm:$0xff]
        %v4713 = vld [vmem:[%s5 + $0x6d8] sm:$0xff]
        %v4714 = vld [vmem:[%s5 + $0x6e0] sm:$0xff]
        %v4715 = vld [vmem:[%s5 + $0x6e8] sm:$0xff]
        %v4716 = vld [vmem:[%s5 + $0x6f0] sm:$0xff]
        %v4717 = vld [vmem:[%s5 + $0x6f8] sm:$0xff]
        %v4718 = vld [vmem:[%s5 + $0x700] sm:$0xff]
        %v4719 = vld [vmem:[%s5 + $0x708] sm:$0xff]
        %v4720 = vld [vmem:[%s5 + $0x710] sm:$0xff]
        %v4721 = vld [vmem:[%s5 + $0x718] sm:$0xff]
        %v4722 = vld [vmem:[%s5 + $0x720] sm:$0xff]
        %v4723 = vld [vmem:[%s5 + $0x728] sm:$0xff]
        %v4724 = vld [vmem:[%s5 + $0x730] sm:$0xff]
        %v4725 = vld [vmem:[%s5 + $0x738] sm:$0xff]
        %v4726 = vld [vmem:[%s5 + $0x740] sm:$0xff]
        %v4727 = vld [vmem:[%s5 + $0x748] sm:$0xff]
        %v4728 = vld [vmem:[%s5 + $0x750] sm:$0xff]
        %v4729 = vld [vmem:[%s5 + $0x758] sm:$0xff]
        %v4730 = vld [vmem:[%s5 + $0x760] sm:$0xff]
        %v4731 = vld [vmem:[%s5 + $0x768] sm:$0xff]
        %v4732 = vld [vmem:[%s5 + $0x770] sm:$0xff]
        %v4733 = vld [vmem:[%s5 + $0x778] sm:$0xff]
        %v4734 = vld [vmem:[%s5 + $0x780] sm:$0xff]
        %v4735 = vld [vmem:[%s5 + $0x788] sm:$0xff]
        %v4736 = vld [vmem:[%s5 + $0x790] sm:$0xff]
        %v4737 = vld [vmem:[%s5 + $0x798] sm:$0xff]
        %v4738 = vld [vmem:[%s5 + $0x7a0] sm:$0xff]
        %v4739 = vld [vmem:[%s5 + $0x7a8] sm:$0xff]
        %v4740 = vld [vmem:[%s5 + $0x7b0] sm:$0xff]
        %v4741 = vld [vmem:[%s5 + $0x7b8] sm:$0xff]
        %v4742 = vld [vmem:[%s5 + $0x7c0] sm:$0xff]
        %v4743 = vld [vmem:[%s5 + $0x7c8] sm:$0xff]
        %v4744 = vld [vmem:[%s5 + $0x7d0] sm:$0xff]
        %v4745 = vld [vmem:[%s5 + $0x7d8] sm:$0xff]
        %v4746 = vld [vmem:[%s5 + $0x7e0] sm:$0xff]
        %v4747 = vld [vmem:[%s5 + $0x7e8] sm:$0xff]
        %v4748 = vld [vmem:[%s5 + $0x7f0] sm:$0xff]
        %v4749 = vld [vmem:[%s5 + $0x7f8] sm:$0xff]
        %v4750 = vld [vmem:[%s6] sm:$0xf]
        %v4752 = vlaneseq
        %v4753 = vshrl.u32 %v4752, 7
        %v4754 = vsub.s32 0, %v4753
        %v4755 = vrot.slane %v4750, %v4754
        %v4756 = vlaneseq
        %v4757 = vshrl.u32 %v4756, 7
        %v4758 = vsub.s32 1, %v4757
        %v4759 = vrot.slane %v4750, %v4758
        %v4760 = vlaneseq
        %v4761 = vshrl.u32 %v4760, 7
        %v4762 = vsub.s32 2, %v4761
        %v4763 = vrot.slane %v4750, %v4762
        %v4764 = vlaneseq
        %v4765 = vshrl.u32 %v4764, 7
        %v4766 = vsub.s32 3, %v4765
        %v4767 = vrot.slane %v4750, %v4766
        %v5028 = vunpack.c.l.b16 %v4494
        %v5029 = vunpack.c.h.b16 %v4494
        %v5030 = vunpack.c.l.b16 %v4495
        %v5031 = vunpack.c.h.b16 %v4495
        %v5032 = vunpack.c.l.b16 %v4496
        %v5033 = vunpack.c.h.b16 %v4496
        %v5034 = vunpack.c.l.b16 %v4497
        %v5035 = vunpack.c.h.b16 %v4497
        %v5036 = vunpack.c.l.b16 %v4498
        %v5037 = vunpack.c.h.b16 %v4498
        %v5038 = vunpack.c.l.b16 %v4499
        %v5039 = vunpack.c.h.b16 %v4499
        %v5040 = vunpack.c.l.b16 %v4500
        %v5041 = vunpack.c.h.b16 %v4500
        %v5042 = vunpack.c.l.b16 %v4501
        %v5043 = vunpack.c.h.b16 %v4501
        %v5044 = vunpack.c.l.b16 %v4502
        %v5045 = vunpack.c.h.b16 %v4502
        %v5046 = vunpack.c.l.b16 %v4503
        %v5047 = vunpack.c.h.b16 %v4503
        %v5048 = vunpack.c.l.b16 %v4504
        %v5049 = vunpack.c.h.b16 %v4504
        %v5050 = vunpack.c.l.b16 %v4505
        %v5051 = vunpack.c.h.b16 %v4505
        %v5052 = vunpack.c.l.b16 %v4506
        %v5053 = vunpack.c.h.b16 %v4506
        %v5054 = vunpack.c.l.b16 %v4507
        %v5055 = vunpack.c.h.b16 %v4507
        %v5056 = vunpack.c.l.b16 %v4508
        %v5057 = vunpack.c.h.b16 %v4508
        %v5058 = vunpack.c.l.b16 %v4509
        %v5059 = vunpack.c.h.b16 %v4509
        %v5060 = vunpack.c.l.b16 %v4510
        %v5061 = vunpack.c.h.b16 %v4510
        %v5062 = vunpack.c.l.b16 %v4511
        %v5063 = vunpack.c.h.b16 %v4511
        %v5064 = vunpack.c.l.b16 %v4512
        %v5065 = vunpack.c.h.b16 %v4512
        %v5066 = vunpack.c.l.b16 %v4513
        %v5067 = vunpack.c.h.b16 %v4513
        %v5068 = vunpack.c.l.b16 %v4514
        %v5069 = vunpack.c.h.b16 %v4514
        %v5070 = vunpack.c.l.b16 %v4515
        %v5071 = vunpack.c.h.b16 %v4515
        %v5072 = vunpack.c.l.b16 %v4516
        %v5073 = vunpack.c.h.b16 %v4516
        %v5074 = vunpack.c.l.b16 %v4517
        %v5075 = vunpack.c.h.b16 %v4517
        %v5076 = vunpack.c.l.b16 %v4518
        %v5077 = vunpack.c.h.b16 %v4518
        %v5078 = vunpack.c.l.b16 %v4519
        %v5079 = vunpack.c.h.b16 %v4519
        %v5080 = vunpack.c.l.b16 %v4520
        %v5081 = vunpack.c.h.b16 %v4520
        %v5082 = vunpack.c.l.b16 %v4521
        %v5083 = vunpack.c.h.b16 %v4521
        %v5084 = vunpack.c.l.b16 %v4522
        %v5085 = vunpack.c.h.b16 %v4522
        %v5086 = vunpack.c.l.b16 %v4523
        %v5087 = vunpack.c.h.b16 %v4523
        %v5088 = vunpack.c.l.b16 %v4524
        %v5089 = vunpack.c.h.b16 %v4524
        %v5090 = vunpack.c.l.b16 %v4525
        %v5091 = vunpack.c.h.b16 %v4525
        %v5092 = vunpack.c.l.b16 %v4526
        %v5093 = vunpack.c.h.b16 %v4526
        %v5094 = vunpack.c.l.b16 %v4527
        %v5095 = vunpack.c.h.b16 %v4527
        %v5096 = vunpack.c.l.b16 %v4528
        %v5097 = vunpack.c.h.b16 %v4528
        %v5098 = vunpack.c.l.b16 %v4529
        %v5099 = vunpack.c.h.b16 %v4529
        %v5100 = vunpack.c.l.b16 %v4530
        %v5101 = vunpack.c.h.b16 %v4530
        %v5102 = vunpack.c.l.b16 %v4531
        %v5103 = vunpack.c.h.b16 %v4531
        %v5104 = vunpack.c.l.b16 %v4532
        %v5105 = vunpack.c.h.b16 %v4532
        %v5106 = vunpack.c.l.b16 %v4533
        %v5107 = vunpack.c.h.b16 %v4533
        %v5108 = vunpack.c.l.b16 %v4534
        %v5109 = vunpack.c.h.b16 %v4534
        %v5110 = vunpack.c.l.b16 %v4535
        %v5111 = vunpack.c.h.b16 %v4535
        %v5112 = vunpack.c.l.b16 %v4536
        %v5113 = vunpack.c.h.b16 %v4536
        %v5114 = vunpack.c.l.b16 %v4537
        %v5115 = vunpack.c.h.b16 %v4537
        %v5116 = vunpack.c.l.b16 %v4538
        %v5117 = vunpack.c.h.b16 %v4538
        %v5118 = vunpack.c.l.b16 %v4539
        %v5119 = vunpack.c.h.b16 %v4539
        %v5120 = vunpack.c.l.b16 %v4540
        %v5121 = vunpack.c.h.b16 %v4540
        %v5122 = vunpack.c.l.b16 %v4541
        %v5123 = vunpack.c.h.b16 %v4541
        %v5124 = vunpack.c.l.b16 %v4542
        %v5125 = vunpack.c.h.b16 %v4542
        %v5126 = vunpack.c.l.b16 %v4543
        %v5127 = vunpack.c.h.b16 %v4543
        %v5128 = vunpack.c.l.b16 %v4544
        %v5129 = vunpack.c.h.b16 %v4544
        %v5130 = vunpack.c.l.b16 %v4545
        %v5131 = vunpack.c.h.b16 %v4545
        %v5132 = vunpack.c.l.b16 %v4546
        %v5133 = vunpack.c.h.b16 %v4546
        %v5134 = vunpack.c.l.b16 %v4547
        %v5135 = vunpack.c.h.b16 %v4547
        %v5136 = vunpack.c.l.b16 %v4548
        %v5137 = vunpack.c.h.b16 %v4548
        %v5138 = vunpack.c.l.b16 %v4549
        %v5139 = vunpack.c.h.b16 %v4549
        %v5140 = vunpack.c.l.b16 %v4550
        %v5141 = vunpack.c.h.b16 %v4550
        %v5142 = vunpack.c.l.b16 %v4551
        %v5143 = vunpack.c.h.b16 %v4551
        %v5144 = vunpack.c.l.b16 %v4552
        %v5145 = vunpack.c.h.b16 %v4552
        %v5146 = vunpack.c.l.b16 %v4553
        %v5147 = vunpack.c.h.b16 %v4553
        %v5148 = vunpack.c.l.b16 %v4554
        %v5149 = vunpack.c.h.b16 %v4554
        %v5150 = vunpack.c.l.b16 %v4555
        %v5151 = vunpack.c.h.b16 %v4555
        %v5152 = vunpack.c.l.b16 %v4556
        %v5153 = vunpack.c.h.b16 %v4556
        %v5154 = vunpack.c.l.b16 %v4557
        %v5155 = vunpack.c.h.b16 %v4557
        %v5156 = vunpack.c.l.b16 %v4558
        %v5157 = vunpack.c.h.b16 %v4558
        %v5158 = vunpack.c.l.b16 %v4559
        %v5159 = vunpack.c.h.b16 %v4559
        %v5160 = vunpack.c.l.b16 %v4560
        %v5161 = vunpack.c.h.b16 %v4560
        %v5162 = vunpack.c.l.b16 %v4561
        %v5163 = vunpack.c.h.b16 %v4561
        %v5164 = vunpack.c.l.b16 %v4562
        %v5165 = vunpack.c.h.b16 %v4562
        %v5166 = vunpack.c.l.b16 %v4563
        %v5167 = vunpack.c.h.b16 %v4563
        %v5168 = vunpack.c.l.b16 %v4564
        %v5169 = vunpack.c.h.b16 %v4564
        %v5170 = vunpack.c.l.b16 %v4565
        %v5171 = vunpack.c.h.b16 %v4565
        %v5172 = vunpack.c.l.b16 %v4566
        %v5173 = vunpack.c.h.b16 %v4566
        %v5174 = vunpack.c.l.b16 %v4567
        %v5175 = vunpack.c.h.b16 %v4567
        %v5176 = vunpack.c.l.b16 %v4568
        %v5177 = vunpack.c.h.b16 %v4568
        %v5178 = vunpack.c.l.b16 %v4569
        %v5179 = vunpack.c.h.b16 %v4569
        %v5180 = vunpack.c.l.b16 %v4570
        %v5181 = vunpack.c.h.b16 %v4570
        %v5182 = vunpack.c.l.b16 %v4571
        %v5183 = vunpack.c.h.b16 %v4571
        %v5184 = vunpack.c.l.b16 %v4572
        %v5185 = vunpack.c.h.b16 %v4572
        %v5186 = vunpack.c.l.b16 %v4573
        %v5187 = vunpack.c.h.b16 %v4573
        %v5188 = vunpack.c.l.b16 %v4574
        %v5189 = vunpack.c.h.b16 %v4574
        %v5190 = vunpack.c.l.b16 %v4575
        %v5191 = vunpack.c.h.b16 %v4575
        %v5192 = vunpack.c.l.b16 %v4576
        %v5193 = vunpack.c.h.b16 %v4576
        %v5194 = vunpack.c.l.b16 %v4577
        %v5195 = vunpack.c.h.b16 %v4577
        %v5196 = vunpack.c.l.b16 %v4578
        %v5197 = vunpack.c.h.b16 %v4578
        %v5198 = vunpack.c.l.b16 %v4579
        %v5199 = vunpack.c.h.b16 %v4579
        %v5200 = vunpack.c.l.b16 %v4580
        %v5201 = vunpack.c.h.b16 %v4580
        %v5202 = vunpack.c.l.b16 %v4581
        %v5203 = vunpack.c.h.b16 %v4581
        %v5204 = vunpack.c.l.b16 %v4582
        %v5205 = vunpack.c.h.b16 %v4582
        %v5206 = vunpack.c.l.b16 %v4583
        %v5207 = vunpack.c.h.b16 %v4583
        %v5208 = vunpack.c.l.b16 %v4584
        %v5209 = vunpack.c.h.b16 %v4584
        %v5210 = vunpack.c.l.b16 %v4585
        %v5211 = vunpack.c.h.b16 %v4585
        %v5212 = vunpack.c.l.b16 %v4586
        %v5213 = vunpack.c.h.b16 %v4586
        %v5214 = vunpack.c.l.b16 %v4587
        %v5215 = vunpack.c.h.b16 %v4587
        %v5216 = vunpack.c.l.b16 %v4588
        %v5217 = vunpack.c.h.b16 %v4588
        %v5218 = vunpack.c.l.b16 %v4589
        %v5219 = vunpack.c.h.b16 %v4589
        %v5220 = vunpack.c.l.b16 %v4590
        %v5221 = vunpack.c.h.b16 %v4590
        %v5222 = vunpack.c.l.b16 %v4591
        %v5223 = vunpack.c.h.b16 %v4591
        %v5224 = vunpack.c.l.b16 %v4592
        %v5225 = vunpack.c.h.b16 %v4592
        %v5226 = vunpack.c.l.b16 %v4593
        %v5227 = vunpack.c.h.b16 %v4593
        %v5228 = vunpack.c.l.b16 %v4594
        %v5229 = vunpack.c.h.b16 %v4594
        %v5230 = vunpack.c.l.b16 %v4595
        %v5231 = vunpack.c.h.b16 %v4595
        %v5232 = vunpack.c.l.b16 %v4596
        %v5233 = vunpack.c.h.b16 %v4596
        %v5234 = vunpack.c.l.b16 %v4597
        %v5235 = vunpack.c.h.b16 %v4597
        %v5236 = vunpack.c.l.b16 %v4598
        %v5237 = vunpack.c.h.b16 %v4598
        %v5238 = vunpack.c.l.b16 %v4599
        %v5239 = vunpack.c.h.b16 %v4599
        %v5240 = vunpack.c.l.b16 %v4600
        %v5241 = vunpack.c.h.b16 %v4600
        %v5242 = vunpack.c.l.b16 %v4601
        %v5243 = vunpack.c.h.b16 %v4601
        %v5244 = vunpack.c.l.b16 %v4602
        %v5245 = vunpack.c.h.b16 %v4602
        %v5246 = vunpack.c.l.b16 %v4603
        %v5247 = vunpack.c.h.b16 %v4603
        %v5248 = vunpack.c.l.b16 %v4604
        %v5249 = vunpack.c.h.b16 %v4604
        %v5250 = vunpack.c.l.b16 %v4605
        %v5251 = vunpack.c.h.b16 %v4605
        %v5252 = vunpack.c.l.b16 %v4606
        %v5253 = vunpack.c.h.b16 %v4606
        %v5254 = vunpack.c.l.b16 %v4607
        %v5255 = vunpack.c.h.b16 %v4607
        %v5256 = vunpack.c.l.b16 %v4608
        %v5257 = vunpack.c.h.b16 %v4608
        %v5258 = vunpack.c.l.b16 %v4609
        %v5259 = vunpack.c.h.b16 %v4609
        %v5260 = vunpack.c.l.b16 %v4610
        %v5261 = vunpack.c.h.b16 %v4610
        %v5262 = vunpack.c.l.b16 %v4611
        %v5263 = vunpack.c.h.b16 %v4611
        %v5264 = vunpack.c.l.b16 %v4612
        %v5265 = vunpack.c.h.b16 %v4612
        %v5266 = vunpack.c.l.b16 %v4613
        %v5267 = vunpack.c.h.b16 %v4613
        %v5268 = vunpack.c.l.b16 %v4614
        %v5269 = vunpack.c.h.b16 %v4614
        %v5270 = vunpack.c.l.b16 %v4615
        %v5271 = vunpack.c.h.b16 %v4615
        %v5272 = vunpack.c.l.b16 %v4616
        %v5273 = vunpack.c.h.b16 %v4616
        %v5274 = vunpack.c.l.b16 %v4617
        %v5275 = vunpack.c.h.b16 %v4617
        %v5276 = vunpack.c.l.b16 %v4618
        %v5277 = vunpack.c.h.b16 %v4618
        %v5278 = vunpack.c.l.b16 %v4619
        %v5279 = vunpack.c.h.b16 %v4619
        %v5280 = vunpack.c.l.b16 %v4620
        %v5281 = vunpack.c.h.b16 %v4620
        %v5282 = vunpack.c.l.b16 %v4621
        %v5283 = vunpack.c.h.b16 %v4621
        %v5284 = vunpack.c.l.b16 %v4622
        %v5285 = vunpack.c.h.b16 %v4622
        %v5286 = vunpack.c.l.b16 %v4623
        %v5287 = vunpack.c.h.b16 %v4623
        %v5288 = vunpack.c.l.b16 %v4624
        %v5289 = vunpack.c.h.b16 %v4624
        %v5290 = vunpack.c.l.b16 %v4625
        %v5291 = vunpack.c.h.b16 %v4625
        %v5292 = vunpack.c.l.b16 %v4626
        %v5293 = vunpack.c.h.b16 %v4626
        %v5294 = vunpack.c.l.b16 %v4627
        %v5295 = vunpack.c.h.b16 %v4627
        %v5296 = vunpack.c.l.b16 %v4628
        %v5297 = vunpack.c.h.b16 %v4628
        %v5298 = vunpack.c.l.b16 %v4629
        %v5299 = vunpack.c.h.b16 %v4629
        %v5300 = vunpack.c.l.b16 %v4630
        %v5301 = vunpack.c.h.b16 %v4630
        %v5302 = vunpack.c.l.b16 %v4631
        %v5303 = vunpack.c.h.b16 %v4631
        %v5304 = vunpack.c.l.b16 %v4632
        %v5305 = vunpack.c.h.b16 %v4632
        %v5306 = vunpack.c.l.b16 %v4633
        %v5307 = vunpack.c.h.b16 %v4633
        %v5308 = vunpack.c.l.b16 %v4634
        %v5309 = vunpack.c.h.b16 %v4634
        %v5310 = vunpack.c.l.b16 %v4635
        %v5311 = vunpack.c.h.b16 %v4635
        %v5312 = vunpack.c.l.b16 %v4636
        %v5313 = vunpack.c.h.b16 %v4636
        %v5314 = vunpack.c.l.b16 %v4637
        %v5315 = vunpack.c.h.b16 %v4637
        %v5316 = vunpack.c.l.b16 %v4638
        %v5317 = vunpack.c.h.b16 %v4638
        %v5318 = vunpack.c.l.b16 %v4639
        %v5319 = vunpack.c.h.b16 %v4639
        %v5320 = vunpack.c.l.b16 %v4640
        %v5321 = vunpack.c.h.b16 %v4640
        %v5322 = vunpack.c.l.b16 %v4641
        %v5323 = vunpack.c.h.b16 %v4641
        %v5324 = vunpack.c.l.b16 %v4642
        %v5325 = vunpack.c.h.b16 %v4642
        %v5326 = vunpack.c.l.b16 %v4643
        %v5327 = vunpack.c.h.b16 %v4643
        %v5328 = vunpack.c.l.b16 %v4644
        %v5329 = vunpack.c.h.b16 %v4644
        %v5330 = vunpack.c.l.b16 %v4645
        %v5331 = vunpack.c.h.b16 %v4645
        %v5332 = vunpack.c.l.b16 %v4646
        %v5333 = vunpack.c.h.b16 %v4646
        %v5334 = vunpack.c.l.b16 %v4647
        %v5335 = vunpack.c.h.b16 %v4647
        %v5336 = vunpack.c.l.b16 %v4648
        %v5337 = vunpack.c.h.b16 %v4648
        %v5338 = vunpack.c.l.b16 %v4649
        %v5339 = vunpack.c.h.b16 %v4649
        %v5340 = vunpack.c.l.b16 %v4650
        %v5341 = vunpack.c.h.b16 %v4650
        %v5342 = vunpack.c.l.b16 %v4651
        %v5343 = vunpack.c.h.b16 %v4651
        %v5344 = vunpack.c.l.b16 %v4652
        %v5345 = vunpack.c.h.b16 %v4652
        %v5346 = vunpack.c.l.b16 %v4653
        %v5347 = vunpack.c.h.b16 %v4653
        %v5348 = vunpack.c.l.b16 %v4654
        %v5349 = vunpack.c.h.b16 %v4654
        %v5350 = vunpack.c.l.b16 %v4655
        %v5351 = vunpack.c.h.b16 %v4655
        %v5352 = vunpack.c.l.b16 %v4656
        %v5353 = vunpack.c.h.b16 %v4656
        %v5354 = vunpack.c.l.b16 %v4657
        %v5355 = vunpack.c.h.b16 %v4657
        %v5356 = vunpack.c.l.b16 %v4658
        %v5357 = vunpack.c.h.b16 %v4658
        %v5358 = vunpack.c.l.b16 %v4659
        %v5359 = vunpack.c.h.b16 %v4659
        %v5360 = vunpack.c.l.b16 %v4660
        %v5361 = vunpack.c.h.b16 %v4660
        %v5362 = vunpack.c.l.b16 %v4661
        %v5363 = vunpack.c.h.b16 %v4661
        %v5364 = vunpack.c.l.b16 %v4662
        %v5365 = vunpack.c.h.b16 %v4662
        %v5366 = vunpack.c.l.b16 %v4663
        %v5367 = vunpack.c.h.b16 %v4663
        %v5368 = vunpack.c.l.b16 %v4664
        %v5369 = vunpack.c.h.b16 %v4664
        %v5370 = vunpack.c.l.b16 %v4665
        %v5371 = vunpack.c.h.b16 %v4665
        %v5372 = vunpack.c.l.b16 %v4666
        %v5373 = vunpack.c.h.b16 %v4666
        %v5374 = vunpack.c.l.b16 %v4667
        %v5375 = vunpack.c.h.b16 %v4667
        %v5376 = vunpack.c.l.b16 %v4668
        %v5377 = vunpack.c.h.b16 %v4668
        %v5378 = vunpack.c.l.b16 %v4669
        %v5379 = vunpack.c.h.b16 %v4669
        %v5380 = vunpack.c.l.b16 %v4670
        %v5381 = vunpack.c.h.b16 %v4670
        %v5382 = vunpack.c.l.b16 %v4671
        %v5383 = vunpack.c.h.b16 %v4671
        %v5384 = vunpack.c.l.b16 %v4672
        %v5385 = vunpack.c.h.b16 %v4672
        %v5386 = vunpack.c.l.b16 %v4673
        %v5387 = vunpack.c.h.b16 %v4673
        %v5388 = vunpack.c.l.b16 %v4674
        %v5389 = vunpack.c.h.b16 %v4674
        %v5390 = vunpack.c.l.b16 %v4675
        %v5391 = vunpack.c.h.b16 %v4675
        %v5392 = vunpack.c.l.b16 %v4676
        %v5393 = vunpack.c.h.b16 %v4676
        %v5394 = vunpack.c.l.b16 %v4677
        %v5395 = vunpack.c.h.b16 %v4677
        %v5396 = vunpack.c.l.b16 %v4678
        %v5397 = vunpack.c.h.b16 %v4678
        %v5398 = vunpack.c.l.b16 %v4679
        %v5399 = vunpack.c.h.b16 %v4679
        %v5400 = vunpack.c.l.b16 %v4680
        %v5401 = vunpack.c.h.b16 %v4680
        %v5402 = vunpack.c.l.b16 %v4681
        %v5403 = vunpack.c.h.b16 %v4681
        %v5404 = vunpack.c.l.b16 %v4682
        %v5405 = vunpack.c.h.b16 %v4682
        %v5406 = vunpack.c.l.b16 %v4683
        %v5407 = vunpack.c.h.b16 %v4683
        %v5408 = vunpack.c.l.b16 %v4684
        %v5409 = vunpack.c.h.b16 %v4684
        %v5410 = vunpack.c.l.b16 %v4685
        %v5411 = vunpack.c.h.b16 %v4685
        %v5412 = vunpack.c.l.b16 %v4686
        %v5413 = vunpack.c.h.b16 %v4686
        %v5414 = vunpack.c.l.b16 %v4687
        %v5415 = vunpack.c.h.b16 %v4687
        %v5416 = vunpack.c.l.b16 %v4688
        %v5417 = vunpack.c.h.b16 %v4688
        %v5418 = vunpack.c.l.b16 %v4689
        %v5419 = vunpack.c.h.b16 %v4689
        %v5420 = vunpack.c.l.b16 %v4690
        %v5421 = vunpack.c.h.b16 %v4690
        %v5422 = vunpack.c.l.b16 %v4691
        %v5423 = vunpack.c.h.b16 %v4691
        %v5424 = vunpack.c.l.b16 %v4692
        %v5425 = vunpack.c.h.b16 %v4692
        %v5426 = vunpack.c.l.b16 %v4693
        %v5427 = vunpack.c.h.b16 %v4693
        %v5428 = vunpack.c.l.b16 %v4694
        %v5429 = vunpack.c.h.b16 %v4694
        %v5430 = vunpack.c.l.b16 %v4695
        %v5431 = vunpack.c.h.b16 %v4695
        %v5432 = vunpack.c.l.b16 %v4696
        %v5433 = vunpack.c.h.b16 %v4696
        %v5434 = vunpack.c.l.b16 %v4697
        %v5435 = vunpack.c.h.b16 %v4697
        %v5436 = vunpack.c.l.b16 %v4698
        %v5437 = vunpack.c.h.b16 %v4698
        %v5438 = vunpack.c.l.b16 %v4699
        %v5439 = vunpack.c.h.b16 %v4699
        %v5440 = vunpack.c.l.b16 %v4700
        %v5441 = vunpack.c.h.b16 %v4700
        %v5442 = vunpack.c.l.b16 %v4701
        %v5443 = vunpack.c.h.b16 %v4701
        %v5444 = vunpack.c.l.b16 %v4702
        %v5445 = vunpack.c.h.b16 %v4702
        %v5446 = vunpack.c.l.b16 %v4703
        %v5447 = vunpack.c.h.b16 %v4703
        %v5448 = vunpack.c.l.b16 %v4704
        %v5449 = vunpack.c.h.b16 %v4704
        %v5450 = vunpack.c.l.b16 %v4705
        %v5451 = vunpack.c.h.b16 %v4705
        %v5452 = vunpack.c.l.b16 %v4706
        %v5453 = vunpack.c.h.b16 %v4706
        %v5454 = vunpack.c.l.b16 %v4707
        %v5455 = vunpack.c.h.b16 %v4707
        %v5456 = vunpack.c.l.b16 %v4708
        %v5457 = vunpack.c.h.b16 %v4708
        %v5458 = vunpack.c.l.b16 %v4709
        %v5459 = vunpack.c.h.b16 %v4709
        %v5460 = vunpack.c.l.b16 %v4710
        %v5461 = vunpack.c.h.b16 %v4710
        %v5462 = vunpack.c.l.b16 %v4711
        %v5463 = vunpack.c.h.b16 %v4711
        %v5464 = vunpack.c.l.b16 %v4712
        %v5465 = vunpack.c.h.b16 %v4712
        %v5466 = vunpack.c.l.b16 %v4713
        %v5467 = vunpack.c.h.b16 %v4713
        %v5468 = vunpack.c.l.b16 %v4714
        %v5469 = vunpack.c.h.b16 %v4714
        %v5470 = vunpack.c.l.b16 %v4715
        %v5471 = vunpack.c.h.b16 %v4715
        %v5472 = vunpack.c.l.b16 %v4716
        %v5473 = vunpack.c.h.b16 %v4716
        %v5474 = vunpack.c.l.b16 %v4717
        %v5475 = vunpack.c.h.b16 %v4717
        %v5476 = vunpack.c.l.b16 %v4718
        %v5477 = vunpack.c.h.b16 %v4718
        %v5478 = vunpack.c.l.b16 %v4719
        %v5479 = vunpack.c.h.b16 %v4719
        %v5480 = vunpack.c.l.b16 %v4720
        %v5481 = vunpack.c.h.b16 %v4720
        %v5482 = vunpack.c.l.b16 %v4721
        %v5483 = vunpack.c.h.b16 %v4721
        %v5484 = vunpack.c.l.b16 %v4722
        %v5485 = vunpack.c.h.b16 %v4722
        %v5486 = vunpack.c.l.b16 %v4723
        %v5487 = vunpack.c.h.b16 %v4723
        %v5488 = vunpack.c.l.b16 %v4724
        %v5489 = vunpack.c.h.b16 %v4724
        %v5490 = vunpack.c.l.b16 %v4725
        %v5491 = vunpack.c.h.b16 %v4725
        %v5492 = vunpack.c.l.b16 %v4726
        %v5493 = vunpack.c.h.b16 %v4726
        %v5494 = vunpack.c.l.b16 %v4727
        %v5495 = vunpack.c.h.b16 %v4727
        %v5496 = vunpack.c.l.b16 %v4728
        %v5497 = vunpack.c.h.b16 %v4728
        %v5498 = vunpack.c.l.b16 %v4729
        %v5499 = vunpack.c.h.b16 %v4729
        %v5500 = vunpack.c.l.b16 %v4730
        %v5501 = vunpack.c.h.b16 %v4730
        %v5502 = vunpack.c.l.b16 %v4731
        %v5503 = vunpack.c.h.b16 %v4731
        %v5504 = vunpack.c.l.b16 %v4732
        %v5505 = vunpack.c.h.b16 %v4732
        %v5506 = vunpack.c.l.b16 %v4733
        %v5507 = vunpack.c.h.b16 %v4733
        %v5508 = vunpack.c.l.b16 %v4734
        %v5509 = vunpack.c.h.b16 %v4734
        %v5510 = vunpack.c.l.b16 %v4735
        %v5511 = vunpack.c.h.b16 %v4735
        %v5512 = vunpack.c.l.b16 %v4736
        %v5513 = vunpack.c.h.b16 %v4736
        %v5514 = vunpack.c.l.b16 %v4737
        %v5515 = vunpack.c.h.b16 %v4737
        %v5516 = vunpack.c.l.b16 %v4738
        %v5517 = vunpack.c.h.b16 %v4738
        %v5518 = vunpack.c.l.b16 %v4739
        %v5519 = vunpack.c.h.b16 %v4739
        %v5520 = vunpack.c.l.b16 %v4740
        %v5521 = vunpack.c.h.b16 %v4740
        %v5522 = vunpack.c.l.b16 %v4741
        %v5523 = vunpack.c.h.b16 %v4741
        %v5524 = vunpack.c.l.b16 %v4742
        %v5525 = vunpack.c.h.b16 %v4742
        %v5526 = vunpack.c.l.b16 %v4743
        %v5527 = vunpack.c.h.b16 %v4743
        %v5528 = vunpack.c.l.b16 %v4744
        %v5529 = vunpack.c.h.b16 %v4744
        %v5530 = vunpack.c.l.b16 %v4745
        %v5531 = vunpack.c.h.b16 %v4745
        %v5532 = vunpack.c.l.b16 %v4746
        %v5533 = vunpack.c.h.b16 %v4746
        %v5534 = vunpack.c.l.b16 %v4747
        %v5535 = vunpack.c.h.b16 %v4747
        %v5536 = vunpack.c.l.b16 %v4748
        %v5537 = vunpack.c.h.b16 %v4748
        %v5538 = vunpack.c.l.b16 %v4749
        %v5539 = vunpack.c.h.b16 %v4749
        %v5540 = vpack.c.b16 %v5032, %v5028
        %v5541 = vpack.c.b16 %v5033, %v5029
        %v5542 = vpack.c.b16 %v5034, %v5030
        %v5543 = vpack.c.b16 %v5035, %v5031
        %v5544 = vpack.c.b16 %v5040, %v5036
        %v5545 = vpack.c.b16 %v5041, %v5037
        %v5546 = vpack.c.b16 %v5042, %v5038
        %v5547 = vpack.c.b16 %v5043, %v5039
        %v5548 = vpack.c.b16 %v5048, %v5044
        %v5549 = vpack.c.b16 %v5049, %v5045
        %v5550 = vpack.c.b16 %v5050, %v5046
        %v5551 = vpack.c.b16 %v5051, %v5047
        %v5552 = vpack.c.b16 %v5056, %v5052
        %v5553 = vpack.c.b16 %v5057, %v5053
        %v5554 = vpack.c.b16 %v5058, %v5054
        %v5555 = vpack.c.b16 %v5059, %v5055
        %v5556 = vpack.c.b16 %v5064, %v5060
        %v5557 = vpack.c.b16 %v5065, %v5061
        %v5558 = vpack.c.b16 %v5066, %v5062
        %v5559 = vpack.c.b16 %v5067, %v5063
        %v5560 = vpack.c.b16 %v5072, %v5068
        %v5561 = vpack.c.b16 %v5073, %v5069
        %v5562 = vpack.c.b16 %v5074, %v5070
        %v5563 = vpack.c.b16 %v5075, %v5071
        %v5564 = vpack.c.b16 %v5080, %v5076
        %v5565 = vpack.c.b16 %v5081, %v5077
        %v5566 = vpack.c.b16 %v5082, %v5078
        %v5567 = vpack.c.b16 %v5083, %v5079
        %v5568 = vpack.c.b16 %v5088, %v5084
        %v5569 = vpack.c.b16 %v5089, %v5085
        %v5570 = vpack.c.b16 %v5090, %v5086
        %v5571 = vpack.c.b16 %v5091, %v5087
        %v5572 = vpack.c.b16 %v5096, %v5092
        %v5573 = vpack.c.b16 %v5097, %v5093
        %v5574 = vpack.c.b16 %v5098, %v5094
        %v5575 = vpack.c.b16 %v5099, %v5095
        %v5576 = vpack.c.b16 %v5104, %v5100
        %v5577 = vpack.c.b16 %v5105, %v5101
        %v5578 = vpack.c.b16 %v5106, %v5102
        %v5579 = vpack.c.b16 %v5107, %v5103
        %v5580 = vpack.c.b16 %v5112, %v5108
        %v5581 = vpack.c.b16 %v5113, %v5109
        %v5582 = vpack.c.b16 %v5114, %v5110
        %v5583 = vpack.c.b16 %v5115, %v5111
        %v5584 = vpack.c.b16 %v5120, %v5116
        %v5585 = vpack.c.b16 %v5121, %v5117
        %v5586 = vpack.c.b16 %v5122, %v5118
        %v5587 = vpack.c.b16 %v5123, %v5119
        %v5588 = vpack.c.b16 %v5128, %v5124
        %v5589 = vpack.c.b16 %v5129, %v5125
        %v5590 = vpack.c.b16 %v5130, %v5126
        %v5591 = vpack.c.b16 %v5131, %v5127
        %v5592 = vpack.c.b16 %v5136, %v5132
        %v5593 = vpack.c.b16 %v5137, %v5133
        %v5594 = vpack.c.b16 %v5138, %v5134
        %v5595 = vpack.c.b16 %v5139, %v5135
        %v5596 = vpack.c.b16 %v5144, %v5140
        %v5597 = vpack.c.b16 %v5145, %v5141
        %v5598 = vpack.c.b16 %v5146, %v5142
        %v5599 = vpack.c.b16 %v5147, %v5143
        %v5600 = vpack.c.b16 %v5152, %v5148
        %v5601 = vpack.c.b16 %v5153, %v5149
        %v5602 = vpack.c.b16 %v5154, %v5150
        %v5603 = vpack.c.b16 %v5155, %v5151
        %v5604 = vpack.c.b16 %v5160, %v5156
        %v5605 = vpack.c.b16 %v5161, %v5157
        %v5606 = vpack.c.b16 %v5162, %v5158
        %v5607 = vpack.c.b16 %v5163, %v5159
        %v5608 = vpack.c.b16 %v5168, %v5164
        %v5609 = vpack.c.b16 %v5169, %v5165
        %v5610 = vpack.c.b16 %v5170, %v5166
        %v5611 = vpack.c.b16 %v5171, %v5167
        %v5612 = vpack.c.b16 %v5176, %v5172
        %v5613 = vpack.c.b16 %v5177, %v5173
        %v5614 = vpack.c.b16 %v5178, %v5174
        %v5615 = vpack.c.b16 %v5179, %v5175
        %v5616 = vpack.c.b16 %v5184, %v5180
        %v5617 = vpack.c.b16 %v5185, %v5181
        %v5618 = vpack.c.b16 %v5186, %v5182
        %v5619 = vpack.c.b16 %v5187, %v5183
        %v5620 = vpack.c.b16 %v5192, %v5188
        %v5621 = vpack.c.b16 %v5193, %v5189
        %v5622 = vpack.c.b16 %v5194, %v5190
        %v5623 = vpack.c.b16 %v5195, %v5191
        %v5624 = vpack.c.b16 %v5200, %v5196
        %v5625 = vpack.c.b16 %v5201, %v5197
        %v5626 = vpack.c.b16 %v5202, %v5198
        %v5627 = vpack.c.b16 %v5203, %v5199
        %v5628 = vpack.c.b16 %v5208, %v5204
        %v5629 = vpack.c.b16 %v5209, %v5205
        %v5630 = vpack.c.b16 %v5210, %v5206
        %v5631 = vpack.c.b16 %v5211, %v5207
        %v5632 = vpack.c.b16 %v5216, %v5212
        %v5633 = vpack.c.b16 %v5217, %v5213
        %v5634 = vpack.c.b16 %v5218, %v5214
        %v5635 = vpack.c.b16 %v5219, %v5215
        %v5636 = vpack.c.b16 %v5224, %v5220
        %v5637 = vpack.c.b16 %v5225, %v5221
        %v5638 = vpack.c.b16 %v5226, %v5222
        %v5639 = vpack.c.b16 %v5227, %v5223
        %v5640 = vpack.c.b16 %v5232, %v5228
        %v5641 = vpack.c.b16 %v5233, %v5229
        %v5642 = vpack.c.b16 %v5234, %v5230
        %v5643 = vpack.c.b16 %v5235, %v5231
        %v5644 = vpack.c.b16 %v5240, %v5236
        %v5645 = vpack.c.b16 %v5241, %v5237
        %v5646 = vpack.c.b16 %v5242, %v5238
        %v5647 = vpack.c.b16 %v5243, %v5239
        %v5648 = vpack.c.b16 %v5248, %v5244
        %v5649 = vpack.c.b16 %v5249, %v5245
        %v5650 = vpack.c.b16 %v5250, %v5246
        %v5651 = vpack.c.b16 %v5251, %v5247
        %v5652 = vpack.c.b16 %v5256, %v5252
        %v5653 = vpack.c.b16 %v5257, %v5253
        %v5654 = vpack.c.b16 %v5258, %v5254
        %v5655 = vpack.c.b16 %v5259, %v5255
        %v5656 = vpack.c.b16 %v5264, %v5260
        %v5657 = vpack.c.b16 %v5265, %v5261
        %v5658 = vpack.c.b16 %v5266, %v5262
        %v5659 = vpack.c.b16 %v5267, %v5263
        %v5660 = vpack.c.b16 %v5272, %v5268
        %v5661 = vpack.c.b16 %v5273, %v5269
        %v5662 = vpack.c.b16 %v5274, %v5270
        %v5663 = vpack.c.b16 %v5275, %v5271
        %v5664 = vpack.c.b16 %v5280, %v5276
        %v5665 = vpack.c.b16 %v5281, %v5277
        %v5666 = vpack.c.b16 %v5282, %v5278
        %v5667 = vpack.c.b16 %v5283, %v5279
        %v5668 = vpack.c.b16 %v5288, %v5284
        %v5669 = vpack.c.b16 %v5289, %v5285
        %v5670 = vpack.c.b16 %v5290, %v5286
        %v5671 = vpack.c.b16 %v5291, %v5287
        %v5672 = vpack.c.b16 %v5296, %v5292
        %v5673 = vpack.c.b16 %v5297, %v5293
        %v5674 = vpack.c.b16 %v5298, %v5294
        %v5675 = vpack.c.b16 %v5299, %v5295
        %v5676 = vpack.c.b16 %v5304, %v5300
        %v5677 = vpack.c.b16 %v5305, %v5301
        %v5678 = vpack.c.b16 %v5306, %v5302
        %v5679 = vpack.c.b16 %v5307, %v5303
        %v5680 = vpack.c.b16 %v5312, %v5308
        %v5681 = vpack.c.b16 %v5313, %v5309
        %v5682 = vpack.c.b16 %v5314, %v5310
        %v5683 = vpack.c.b16 %v5315, %v5311
        %v5684 = vpack.c.b16 %v5320, %v5316
        %v5685 = vpack.c.b16 %v5321, %v5317
        %v5686 = vpack.c.b16 %v5322, %v5318
        %v5687 = vpack.c.b16 %v5323, %v5319
        %v5688 = vpack.c.b16 %v5328, %v5324
        %v5689 = vpack.c.b16 %v5329, %v5325
        %v5690 = vpack.c.b16 %v5330, %v5326
        %v5691 = vpack.c.b16 %v5331, %v5327
        %v5692 = vpack.c.b16 %v5336, %v5332
        %v5693 = vpack.c.b16 %v5337, %v5333
        %v5694 = vpack.c.b16 %v5338, %v5334
        %v5695 = vpack.c.b16 %v5339, %v5335
        %v5696 = vpack.c.b16 %v5344, %v5340
        %v5697 = vpack.c.b16 %v5345, %v5341
        %v5698 = vpack.c.b16 %v5346, %v5342
        %v5699 = vpack.c.b16 %v5347, %v5343
        %v5700 = vpack.c.b16 %v5352, %v5348
        %v5701 = vpack.c.b16 %v5353, %v5349
        %v5702 = vpack.c.b16 %v5354, %v5350
        %v5703 = vpack.c.b16 %v5355, %v5351
        %v5704 = vpack.c.b16 %v5360, %v5356
        %v5705 = vpack.c.b16 %v5361, %v5357
        %v5706 = vpack.c.b16 %v5362, %v5358
        %v5707 = vpack.c.b16 %v5363, %v5359
        %v5708 = vpack.c.b16 %v5368, %v5364
        %v5709 = vpack.c.b16 %v5369, %v5365
        %v5710 = vpack.c.b16 %v5370, %v5366
        %v5711 = vpack.c.b16 %v5371, %v5367
        %v5712 = vpack.c.b16 %v5376, %v5372
        %v5713 = vpack.c.b16 %v5377, %v5373
        %v5714 = vpack.c.b16 %v5378, %v5374
        %v5715 = vpack.c.b16 %v5379, %v5375
        %v5716 = vpack.c.b16 %v5384, %v5380
        %v5717 = vpack.c.b16 %v5385, %v5381
        %v5718 = vpack.c.b16 %v5386, %v5382
        %v5719 = vpack.c.b16 %v5387, %v5383
        %v5720 = vpack.c.b16 %v5392, %v5388
        %v5721 = vpack.c.b16 %v5393, %v5389
        %v5722 = vpack.c.b16 %v5394, %v5390
        %v5723 = vpack.c.b16 %v5395, %v5391
        %v5724 = vpack.c.b16 %v5400, %v5396
        %v5725 = vpack.c.b16 %v5401, %v5397
        %v5726 = vpack.c.b16 %v5402, %v5398
        %v5727 = vpack.c.b16 %v5403, %v5399
        %v5728 = vpack.c.b16 %v5408, %v5404
        %v5729 = vpack.c.b16 %v5409, %v5405
        %v5730 = vpack.c.b16 %v5410, %v5406
        %v5731 = vpack.c.b16 %v5411, %v5407
        %v5732 = vpack.c.b16 %v5416, %v5412
        %v5733 = vpack.c.b16 %v5417, %v5413
        %v5734 = vpack.c.b16 %v5418, %v5414
        %v5735 = vpack.c.b16 %v5419, %v5415
        %v5736 = vpack.c.b16 %v5424, %v5420
        %v5737 = vpack.c.b16 %v5425, %v5421
        %v5738 = vpack.c.b16 %v5426, %v5422
        %v5739 = vpack.c.b16 %v5427, %v5423
        %v5740 = vpack.c.b16 %v5432, %v5428
        %v5741 = vpack.c.b16 %v5433, %v5429
        %v5742 = vpack.c.b16 %v5434, %v5430
        %v5743 = vpack.c.b16 %v5435, %v5431
        %v5744 = vpack.c.b16 %v5440, %v5436
        %v5745 = vpack.c.b16 %v5441, %v5437
        %v5746 = vpack.c.b16 %v5442, %v5438
        %v5747 = vpack.c.b16 %v5443, %v5439
        %v5748 = vpack.c.b16 %v5448, %v5444
        %v5749 = vpack.c.b16 %v5449, %v5445
        %v5750 = vpack.c.b16 %v5450, %v5446
        %v5751 = vpack.c.b16 %v5451, %v5447
        %v5752 = vpack.c.b16 %v5456, %v5452
        %v5753 = vpack.c.b16 %v5457, %v5453
        %v5754 = vpack.c.b16 %v5458, %v5454
        %v5755 = vpack.c.b16 %v5459, %v5455
        %v5756 = vpack.c.b16 %v5464, %v5460
        %v5757 = vpack.c.b16 %v5465, %v5461
        %v5758 = vpack.c.b16 %v5466, %v5462
        %v5759 = vpack.c.b16 %v5467, %v5463
        %v5760 = vpack.c.b16 %v5472, %v5468
        %v5761 = vpack.c.b16 %v5473, %v5469
        %v5762 = vpack.c.b16 %v5474, %v5470
        %v5763 = vpack.c.b16 %v5475, %v5471
        %v5764 = vpack.c.b16 %v5480, %v5476
        %v5765 = vpack.c.b16 %v5481, %v5477
        %v5766 = vpack.c.b16 %v5482, %v5478
        %v5767 = vpack.c.b16 %v5483, %v5479
        %v5768 = vpack.c.b16 %v5488, %v5484
        %v5769 = vpack.c.b16 %v5489, %v5485
        %v5770 = vpack.c.b16 %v5490, %v5486
        %v5771 = vpack.c.b16 %v5491, %v5487
        %v5772 = vpack.c.b16 %v5496, %v5492
        %v5773 = vpack.c.b16 %v5497, %v5493
        %v5774 = vpack.c.b16 %v5498, %v5494
        %v5775 = vpack.c.b16 %v5499, %v5495
        %v5776 = vpack.c.b16 %v5504, %v5500
        %v5777 = vpack.c.b16 %v5505, %v5501
        %v5778 = vpack.c.b16 %v5506, %v5502
        %v5779 = vpack.c.b16 %v5507, %v5503
        %v5780 = vpack.c.b16 %v5512, %v5508
        %v5781 = vpack.c.b16 %v5513, %v5509
        %v5782 = vpack.c.b16 %v5514, %v5510
        %v5783 = vpack.c.b16 %v5515, %v5511
        %v5784 = vpack.c.b16 %v5520, %v5516
        %v5785 = vpack.c.b16 %v5521, %v5517
        %v5786 = vpack.c.b16 %v5522, %v5518
        %v5787 = vpack.c.b16 %v5523, %v5519
        %v5788 = vpack.c.b16 %v5528, %v5524
        %v5789 = vpack.c.b16 %v5529, %v5525
        %v5790 = vpack.c.b16 %v5530, %v5526
        %v5791 = vpack.c.b16 %v5531, %v5527
        %v5792 = vpack.c.b16 %v5536, %v5532
        %v5793 = vpack.c.b16 %v5537, %v5533
        %v5794 = vpack.c.b16 %v5538, %v5534
        %v5795 = vpack.c.b16 %v5539, %v5535
        %6052 = vmatprep.subr.bf16.mxu0 %v5541
        %6053 = vmatpush1.bf16.msra.mxu0 %v5540
        %6054 = vmatprep.subr.bf16.mxu0 %v5545
        %6055 = vmatpush1.bf16.msra.mxu0 %v5544
        %6056 = vmatprep.subr.bf16.mxu0 %v5549
        %6057 = vmatpush1.bf16.msra.mxu0 %v5548
        %6058 = vmatprep.subr.bf16.mxu0 %v5553
        %6059 = vmatpush1.bf16.msra.mxu0 %v5552
        %6060 = vmatprep.subr.bf16.mxu0 %v5557
        %6061 = vmatpush1.bf16.msra.mxu0 %v5556
        %6062 = vmatprep.subr.bf16.mxu0 %v5561
        %6063 = vmatpush1.bf16.msra.mxu0 %v5560
        %6064 = vmatprep.subr.bf16.mxu0 %v5565
        %6065 = vmatpush1.bf16.msra.mxu0 %v5564
        %6066 = vmatprep.subr.bf16.mxu0 %v5569
        %6067 = vmatpush1.bf16.msra.mxu0 %v5568
        %6068 = vmatprep.subr.bf16.mxu0 %v5573
        %6069 = vmatpush1.bf16.msra.mxu0 %v5572
        %6070 = vmatprep.subr.bf16.mxu0 %v5577
        %6071 = vmatpush1.bf16.msra.mxu0 %v5576
        %6072 = vmatprep.subr.bf16.mxu0 %v5581
        %6073 = vmatpush1.bf16.msra.mxu0 %v5580
        %6074 = vmatprep.subr.bf16.mxu0 %v5585
        %6075 = vmatpush1.bf16.msra.mxu0 %v5584
        %6076 = vmatprep.subr.bf16.mxu0 %v5589
        %6077 = vmatpush1.bf16.msra.mxu0 %v5588
        %6078 = vmatprep.subr.bf16.mxu0 %v5593
        %6079 = vmatpush1.bf16.msra.mxu0 %v5592
        %6080 = vmatprep.subr.bf16.mxu0 %v5597
        %6081 = vmatpush1.bf16.msra.mxu0 %v5596
        %6082 = vmatprep.subr.bf16.mxu0 %v5601
        %6083 = vmatpush1.bf16.msra.mxu0 %v5600
        %6084 = vmatprep.mubr.bf16.mxu0 %v4487
        %6085 = vmatmul.mubr.bf16.gmra.mrb[0].mxu0 %v4486
        %v6086 = vpop.f32.mrb[0].mxu0
        %v6087 = vadd.f32 %v4755, %v6086
        %v6088 = vpop.f32.mrb[0].mxu0
        %v6089 = vadd.f32 %v4759, %v6088
        %v6090 = vpop.f32.mrb[0].mxu0
        %v6091 = vadd.f32 %v4755, %v6090
        %v6092 = vpop.f32.mrb[0].mxu0
        %v6093 = vadd.f32 %v4759, %v6092
        %6094 = vdwg.mxu0
        %6095 = vmatprep.subr.bf16.mxu0 %v5605
        %6096 = vmatpush1.bf16.msra.mxu0 %v5604
        %6097 = vmatprep.subr.bf16.mxu0 %v5609
        %6098 = vmatpush1.bf16.msra.mxu0 %v5608
        %6099 = vmatprep.subr.bf16.mxu0 %v5613
        %6100 = vmatpush1.bf16.msra.mxu0 %v5612
        %6101 = vmatprep.subr.bf16.mxu0 %v5617
        %6102 = vmatpush1.bf16.msra.mxu0 %v5616
        %6103 = vmatprep.subr.bf16.mxu0 %v5621
        %6104 = vmatpush1.bf16.msra.mxu0 %v5620
        %6105 = vmatprep.subr.bf16.mxu0 %v5625
        %6106 = vmatpush1.bf16.msra.mxu0 %v5624
        %6107 = vmatprep.subr.bf16.mxu0 %v5629
        %6108 = vmatpush1.bf16.msra.mxu0 %v5628
        %6109 = vmatprep.subr.bf16.mxu0 %v5633
        %6110 = vmatpush1.bf16.msra.mxu0 %v5632
        %6111 = vmatprep.subr.bf16.mxu0 %v5637
        %6112 = vmatpush1.bf16.msra.mxu0 %v5636
        %6113 = vmatprep.subr.bf16.mxu0 %v5641
        %6114 = vmatpush1.bf16.msra.mxu0 %v5640
        %6115 = vmatprep.subr.bf16.mxu0 %v5645
        %6116 = vmatpush1.bf16.msra.mxu0 %v5644
        %6117 = vmatprep.subr.bf16.mxu0 %v5649
        %6118 = vmatpush1.bf16.msra.mxu0 %v5648
        %6119 = vmatprep.subr.bf16.mxu0 %v5653
        %6120 = vmatpush1.bf16.msra.mxu0 %v5652
        %6121 = vmatprep.subr.bf16.mxu0 %v5657
        %6122 = vmatpush1.bf16.msra.mxu0 %v5656
        %6123 = vmatprep.subr.bf16.mxu0 %v5661
        %6124 = vmatpush1.bf16.msra.mxu0 %v5660
        %6125 = vmatprep.subr.bf16.mxu0 %v5665
        %6126 = vmatpush1.bf16.msra.mxu0 %v5664
        %6127 = vmatprep.mubr.bf16.mxu0 %v4489
        %6128 = vmatmul.mubr.bf16.gmra.mrb[0].mxu0 %v4488
        %v6129 = vpop.f32.mrb[0].mxu0
        %v6130 = vadd.f32 %v6087, %v6129
        %v6131 = vpop.f32.mrb[0].mxu0
        %v6132 = vadd.f32 %v6089, %v6131
        %v6133 = vpop.f32.mrb[0].mxu0
        %v6134 = vadd.f32 %v6091, %v6133
        %v6135 = vpop.f32.mrb[0].mxu0
        %v6136 = vadd.f32 %v6093, %v6135
        %6137 = vdwg.mxu0
        %6138 = vmatprep.subr.bf16.mxu0 %v5669
        %6139 = vmatpush1.bf16.msra.mxu0 %v5668
        %6140 = vmatprep.subr.bf16.mxu0 %v5673
        %6141 = vmatpush1.bf16.msra.mxu0 %v5672
        %6142 = vmatprep.subr.bf16.mxu0 %v5677
        %6143 = vmatpush1.bf16.msra.mxu0 %v5676
        %6144 = vmatprep.subr.bf16.mxu0 %v5681
        %6145 = vmatpush1.bf16.msra.mxu0 %v5680
        %6146 = vmatprep.subr.bf16.mxu0 %v5685
        %6147 = vmatpush1.bf16.msra.mxu0 %v5684
        %6148 = vmatprep.subr.bf16.mxu0 %v5689
        %6149 = vmatpush1.bf16.msra.mxu0 %v5688
        %6150 = vmatprep.subr.bf16.mxu0 %v5693
        %6151 = vmatpush1.bf16.msra.mxu0 %v5692
        %6152 = vmatprep.subr.bf16.mxu0 %v5697
        %6153 = vmatpush1.bf16.msra.mxu0 %v5696
        %6154 = vmatprep.subr.bf16.mxu0 %v5701
        %6155 = vmatpush1.bf16.msra.mxu0 %v5700
        %6156 = vmatprep.subr.bf16.mxu0 %v5705
        %6157 = vmatpush1.bf16.msra.mxu0 %v5704
        %6158 = vmatprep.subr.bf16.mxu0 %v5709
        %6159 = vmatpush1.bf16.msra.mxu0 %v5708
        %6160 = vmatprep.subr.bf16.mxu0 %v5713
        %6161 = vmatpush1.bf16.msra.mxu0 %v5712
        %6162 = vmatprep.subr.bf16.mxu0 %v5717
        %6163 = vmatpush1.bf16.msra.mxu0 %v5716
        %6164 = vmatprep.subr.bf16.mxu0 %v5721
        %6165 = vmatpush1.bf16.msra.mxu0 %v5720
        %6166 = vmatprep.subr.bf16.mxu0 %v5725
        %6167 = vmatpush1.bf16.msra.mxu0 %v5724
        %6168 = vmatprep.subr.bf16.mxu0 %v5729
        %6169 = vmatpush1.bf16.msra.mxu0 %v5728
        %6170 = vmatprep.mubr.bf16.mxu0 %v4491
        %6171 = vmatmul.mubr.bf16.gmra.mrb[0].mxu0 %v4490
        %v6172 = vpop.f32.mrb[0].mxu0
        %v6173 = vadd.f32 %v6130, %v6172
        %v6174 = vpop.f32.mrb[0].mxu0
        %v6175 = vadd.f32 %v6132, %v6174
        %v6176 = vpop.f32.mrb[0].mxu0
        %v6177 = vadd.f32 %v6134, %v6176
        %v6178 = vpop.f32.mrb[0].mxu0
        %v6179 = vadd.f32 %v6136, %v6178
        %6180 = vdwg.mxu0
        %6181 = vmatprep.subr.bf16.mxu0 %v5733
        %6182 = vmatpush1.bf16.msra.mxu0 %v5732
        %6183 = vmatprep.subr.bf16.mxu0 %v5737
        %6184 = vmatpush1.bf16.msra.mxu0 %v5736
        %6185 = vmatprep.subr.bf16.mxu0 %v5741
        %6186 = vmatpush1.bf16.msra.mxu0 %v5740
        %6187 = vmatprep.subr.bf16.mxu0 %v5745
        %6188 = vmatpush1.bf16.msra.mxu0 %v5744
        %6189 = vmatprep.subr.bf16.mxu0 %v5749
        %6190 = vmatpush1.bf16.msra.mxu0 %v5748
        %6191 = vmatprep.subr.bf16.mxu0 %v5753
        %6192 = vmatpush1.bf16.msra.mxu0 %v5752
        %6193 = vmatprep.subr.bf16.mxu0 %v5757
        %6194 = vmatpush1.bf16.msra.mxu0 %v5756
        %6195 = vmatprep.subr.bf16.mxu0 %v5761
        %6196 = vmatpush1.bf16.msra.mxu0 %v5760
        %6197 = vmatprep.subr.bf16.mxu0 %v5765
        %6198 = vmatpush1.bf16.msra.mxu0 %v5764
        %6199 = vmatprep.subr.bf16.mxu0 %v5769
        %6200 = vmatpush1.bf16.msra.mxu0 %v5768
        %6201 = vmatprep.subr.bf16.mxu0 %v5773
        %6202 = vmatpush1.bf16.msra.mxu0 %v5772
        %6203 = vmatprep.subr.bf16.mxu0 %v5777
        %6204 = vmatpush1.bf16.msra.mxu0 %v5776
        %6205 = vmatprep.subr.bf16.mxu0 %v5781
        %6206 = vmatpush1.bf16.msra.mxu0 %v5780
        %6207 = vmatprep.subr.bf16.mxu0 %v5785
        %6208 = vmatpush1.bf16.msra.mxu0 %v5784
        %6209 = vmatprep.subr.bf16.mxu0 %v5789
        %6210 = vmatpush1.bf16.msra.mxu0 %v5788
        %6211 = vmatprep.subr.bf16.mxu0 %v5793
        %6212 = vmatpush1.bf16.msra.mxu0 %v5792
        %6213 = vmatprep.mubr.bf16.mxu0 %v4493
        %6214 = vmatmul.mubr.bf16.gmra.mrb[0].mxu0 %v4492
        %v6215 = vpop.f32.mrb[0].mxu0
        %v6216 = vadd.f32 %v6173, %v6215
        %v6217 = vpop.f32.mrb[0].mxu0
        %v6218 = vadd.f32 %v6175, %v6217
        %v6219 = vpop.f32.mrb[0].mxu0
        %v6220 = vadd.f32 %v6177, %v6219
        %v6221 = vpop.f32.mrb[0].mxu0
        %v6222 = vadd.f32 %v6179, %v6221
        %6223 = vdwg.mxu0
        %6224 = vmatprep.subr.bf16.mxu0 %v5543
        %6225 = vmatpush1.bf16.msra.mxu0 %v5542
        %6226 = vmatprep.subr.bf16.mxu0 %v5547
        %6227 = vmatpush1.bf16.msra.mxu0 %v5546
        %6228 = vmatprep.subr.bf16.mxu0 %v5551
        %6229 = vmatpush1.bf16.msra.mxu0 %v5550
        %6230 = vmatprep.subr.bf16.mxu0 %v5555
        %6231 = vmatpush1.bf16.msra.mxu0 %v5554
        %6232 = vmatprep.subr.bf16.mxu0 %v5559
        %6233 = vmatpush1.bf16.msra.mxu0 %v5558
        %6234 = vmatprep.subr.bf16.mxu0 %v5563
        %6235 = vmatpush1.bf16.msra.mxu0 %v5562
        %6236 = vmatprep.subr.bf16.mxu0 %v5567
        %6237 = vmatpush1.bf16.msra.mxu0 %v5566
        %6238 = vmatprep.subr.bf16.mxu0 %v5571
        %6239 = vmatpush1.bf16.msra.mxu0 %v5570
        %6240 = vmatprep.subr.bf16.mxu0 %v5575
        %6241 = vmatpush1.bf16.msra.mxu0 %v5574
        %6242 = vmatprep.subr.bf16.mxu0 %v5579
        %6243 = vmatpush1.bf16.msra.mxu0 %v5578
        %6244 = vmatprep.subr.bf16.mxu0 %v5583
        %6245 = vmatpush1.bf16.msra.mxu0 %v5582
        %6246 = vmatprep.subr.bf16.mxu0 %v5587
        %6247 = vmatpush1.bf16.msra.mxu0 %v5586
        %6248 = vmatprep.subr.bf16.mxu0 %v5591
        %6249 = vmatpush1.bf16.msra.mxu0 %v5590
        %6250 = vmatprep.subr.bf16.mxu0 %v5595
        %6251 = vmatpush1.bf16.msra.mxu0 %v5594
        %6252 = vmatprep.subr.bf16.mxu0 %v5599
        %6253 = vmatpush1.bf16.msra.mxu0 %v5598
        %6254 = vmatprep.subr.bf16.mxu0 %v5603
        %6255 = vmatpush1.bf16.msra.mxu0 %v5602
        %6256 = vmatprep.mubr.bf16.mxu0 %v4487
        %6257 = vmatmul.mubr.bf16.gmra.mrb[0].mxu0 %v4486
        %v6258 = vpop.f32.mrb[0].mxu0
        %v6259 = vadd.f32 %v4763, %v6258
        %v6260 = vpop.f32.mrb[0].mxu0
        %v6261 = vadd.f32 %v4767, %v6260
        %v6262 = vpop.f32.mrb[0].mxu0
        %v6263 = vadd.f32 %v4763, %v6262
        %v6264 = vpop.f32.mrb[0].mxu0
        %v6265 = vadd.f32 %v4767, %v6264
        %6266 = vdwg.mxu0
        %6267 = vmatprep.subr.bf16.mxu0 %v5607
        %6268 = vmatpush1.bf16.msra.mxu0 %v5606
        %6269 = vmatprep.subr.bf16.mxu0 %v5611
        %6270 = vmatpush1.bf16.msra.mxu0 %v5610
        %6271 = vmatprep.subr.bf16.mxu0 %v5615
        %6272 = vmatpush1.bf16.msra.mxu0 %v5614
        %6273 = vmatprep.subr.bf16.mxu0 %v5619
        %6274 = vmatpush1.bf16.msra.mxu0 %v5618
        %6275 = vmatprep.subr.bf16.mxu0 %v5623
        %6276 = vmatpush1.bf16.msra.mxu0 %v5622
        %6277 = vmatprep.subr.bf16.mxu0 %v5627
        %6278 = vmatpush1.bf16.msra.mxu0 %v5626
        %6279 = vmatprep.subr.bf16.mxu0 %v5631
        %6280 = vmatpush1.bf16.msra.mxu0 %v5630
        %6281 = vmatprep.subr.bf16.mxu0 %v5635
        %6282 = vmatpush1.bf16.msra.mxu0 %v5634
        %6283 = vmatprep.subr.bf16.mxu0 %v5639
        %6284 = vmatpush1.bf16.msra.mxu0 %v5638
        %6285 = vmatprep.subr.bf16.mxu0 %v5643
        %6286 = vmatpush1.bf16.msra.mxu0 %v5642
        %6287 = vmatprep.subr.bf16.mxu0 %v5647
        %6288 = vmatpush1.bf16.msra.mxu0 %v5646
        %6289 = vmatprep.subr.bf16.mxu0 %v5651
        %6290 = vmatpush1.bf16.msra.mxu0 %v5650
        %6291 = vmatprep.subr.bf16.mxu0 %v5655
        %6292 = vmatpush1.bf16.msra.mxu0 %v5654
        %6293 = vmatprep.subr.bf16.mxu0 %v5659
        %6294 = vmatpush1.bf16.msra.mxu0 %v5658
        %6295 = vmatprep.subr.bf16.mxu0 %v5663
        %6296 = vmatpush1.bf16.msra.mxu0 %v5662
        %6297 = vmatprep.subr.bf16.mxu0 %v5667
        %6298 = vmatpush1.bf16.msra.mxu0 %v5666
        %6299 = vmatprep.mubr.bf16.mxu0 %v4489
        %6300 = vmatmul.mubr.bf16.gmra.mrb[0].mxu0 %v4488
        %v6301 = vpop.f32.mrb[0].mxu0
        %v6302 = vadd.f32 %v6259, %v6301
        %v6303 = vpop.f32.mrb[0].mxu0
        %v6304 = vadd.f32 %v6261, %v6303
        %v6305 = vpop.f32.mrb[0].mxu0
        %v6306 = vadd.f32 %v6263, %v6305
        %v6307 = vpop.f32.mrb[0].mxu0
        %v6308 = vadd.f32 %v6265, %v6307
        %6309 = vdwg.mxu0
        %6310 = vmatprep.subr.bf16.mxu0 %v5671
        %6311 = vmatpush1.bf16.msra.mxu0 %v5670
        %6312 = vmatprep.subr.bf16.mxu0 %v5675
        %6313 = vmatpush1.bf16.msra.mxu0 %v5674
        %6314 = vmatprep.subr.bf16.mxu0 %v5679
        %6315 = vmatpush1.bf16.msra.mxu0 %v5678
        %6316 = vmatprep.subr.bf16.mxu0 %v5683
        %6317 = vmatpush1.bf16.msra.mxu0 %v5682
        %6318 = vmatprep.subr.bf16.mxu0 %v5687
        %6319 = vmatpush1.bf16.msra.mxu0 %v5686
        %6320 = vmatprep.subr.bf16.mxu0 %v5691
        %6321 = vmatpush1.bf16.msra.mxu0 %v5690
        %6322 = vmatprep.subr.bf16.mxu0 %v5695
        %6323 = vmatpush1.bf16.msra.mxu0 %v5694
        %6324 = vmatprep.subr.bf16.mxu0 %v5699
        %6325 = vmatpush1.bf16.msra.mxu0 %v5698
        %6326 = vmatprep.subr.bf16.mxu0 %v5703
        %6327 = vmatpush1.bf16.msra.mxu0 %v5702
        %6328 = vmatprep.subr.bf16.mxu0 %v5707
        %6329 = vmatpush1.bf16.msra.mxu0 %v5706
        %6330 = vmatprep.subr.bf16.mxu0 %v5711
        %6331 = vmatpush1.bf16.msra.mxu0 %v5710
        %6332 = vmatprep.subr.bf16.mxu0 %v5715
        %6333 = vmatpush1.bf16.msra.mxu0 %v5714
        %6334 = vmatprep.subr.bf16.mxu0 %v5719
        %6335 = vmatpush1.bf16.msra.mxu0 %v5718
        %6336 = vmatprep.subr.bf16.mxu0 %v5723
        %6337 = vmatpush1.bf16.msra.mxu0 %v5722
        %6338 = vmatprep.subr.bf16.mxu0 %v5727
        %6339 = vmatpush1.bf16.msra.mxu0 %v5726
        %6340 = vmatprep.subr.bf16.mxu0 %v5731
        %6341 = vmatpush1.bf16.msra.mxu0 %v5730
        %6342 = vmatprep.mubr.bf16.mxu0 %v4491
        %6343 = vmatmul.mubr.bf16.gmra.mrb[0].mxu0 %v4490
        %v6344 = vpop.f32.mrb[0].mxu0
        %v6345 = vadd.f32 %v6302, %v6344
        %v6346 = vpop.f32.mrb[0].mxu0
        %v6347 = vadd.f32 %v6304, %v6346
        %v6348 = vpop.f32.mrb[0].mxu0
        %v6349 = vadd.f32 %v6306, %v6348
        %v6350 = vpop.f32.mrb[0].mxu0
        %v6351 = vadd.f32 %v6308, %v6350
        %6352 = vdwg.mxu0
        %6353 = vmatprep.subr.bf16.mxu0 %v5735
        %6354 = vmatpush1.bf16.msra.mxu0 %v5734
        %6355 = vmatprep.subr.bf16.mxu0 %v5739
        %6356 = vmatpush1.bf16.msra.mxu0 %v5738
        %6357 = vmatprep.subr.bf16.mxu0 %v5743
        %6358 = vmatpush1.bf16.msra.mxu0 %v5742
        %6359 = vmatprep.subr.bf16.mxu0 %v5747
        %6360 = vmatpush1.bf16.msra.mxu0 %v5746
        %6361 = vmatprep.subr.bf16.mxu0 %v5751
        %6362 = vmatpush1.bf16.msra.mxu0 %v5750
        %6363 = vmatprep.subr.bf16.mxu0 %v5755
        %6364 = vmatpush1.bf16.msra.mxu0 %v5754
        %6365 = vmatprep.subr.bf16.mxu0 %v5759
        %6366 = vmatpush1.bf16.msra.mxu0 %v5758
        %6367 = vmatprep.subr.bf16.mxu0 %v5763
        %6368 = vmatpush1.bf16.msra.mxu0 %v5762
        %6369 = vmatprep.subr.bf16.mxu0 %v5767
        %6370 = vmatpush1.bf16.msra.mxu0 %v5766
        %6371 = vmatprep.subr.bf16.mxu0 %v5771
        %6372 = vmatpush1.bf16.msra.mxu0 %v5770
        %6373 = vmatprep.subr.bf16.mxu0 %v5775
        %6374 = vmatpush1.bf16.msra.mxu0 %v5774
        %6375 = vmatprep.subr.bf16.mxu0 %v5779
        %6376 = vmatpush1.bf16.msra.mxu0 %v5778
        %6377 = vmatprep.subr.bf16.mxu0 %v5783
        %6378 = vmatpush1.bf16.msra.mxu0 %v5782
        %6379 = vmatprep.subr.bf16.mxu0 %v5787
        %6380 = vmatpush1.bf16.msra.mxu0 %v5786
        %6381 = vmatprep.subr.bf16.mxu0 %v5791
        %6382 = vmatpush1.bf16.msra.mxu0 %v5790
        %6383 = vmatprep.subr.bf16.mxu0 %v5795
        %6384 = vmatpush1.bf16.msra.mxu0 %v5794
        %6385 = vmatprep.mubr.bf16.mxu0 %v4493
        %6386 = vmatmul.mubr.bf16.gmra.mrb[0].mxu0 %v4492
        %v6387 = vpop.f32.mrb[0].mxu0
        %v6388 = vadd.f32 %v6345, %v6387
        %v6389 = vpop.f32.mrb[0].mxu0
        %v6390 = vadd.f32 %v6347, %v6389
        %v6391 = vpop.f32.mrb[0].mxu0
        %v6392 = vadd.f32 %v6349, %v6391
        %v6393 = vpop.f32.mrb[0].mxu0
        %v6394 = vadd.f32 %v6351, %v6393
        %6395 = vdwg.mxu0
        %v6396 = vmax.f32 %v6216, 0.0
        %v6397 = vmax.f32 %v6218, 0.0
        %v6398 = vmax.f32 %v6388, 0.0
        %v6399 = vmax.f32 %v6390, 0.0
        %v6400 = vmax.f32 %v6220, 0.0
        %v6401 = vmax.f32 %v6222, 0.0
        %v6402 = vmax.f32 %v6392, 0.0
        %v6403 = vmax.f32 %v6394, 0.0
        %v6404 = vpack.c.bf16 %v6400, %v6396
        %v6405 = vpack.c.bf16 %v6401, %v6397
        %v6406 = vpack.c.bf16 %v6402, %v6398
        %v6407 = vpack.c.bf16 %v6403, %v6399
        %v6408 = vld [vmem:[%s7] sm:$0xff]
        %v6409 = vld [vmem:[%s7 + $0x8] sm:$0xff]
        %v6410 = vld [vmem:[%s7 + $0x10] sm:$0xff]
        %v6411 = vld [vmem:[%s7 + $0x18] sm:$0xff]
        %v6412 = vld [vmem:[%s7 + $0x20] sm:$0xff]
        %v6413 = vld [vmem:[%s7 + $0x28] sm:$0xff]
        %v6414 = vld [vmem:[%s7 + $0x30] sm:$0xff]
        %v6415 = vld [vmem:[%s7 + $0x38] sm:$0xff]
        %v6416 = vld [vmem:[%s7 + $0x40] sm:$0xff]
        %v6417 = vld [vmem:[%s7 + $0x48] sm:$0xff]
        %v6418 = vld [vmem:[%s7 + $0x50] sm:$0xff]
        %v6419 = vld [vmem:[%s7 + $0x58] sm:$0xff]
        %v6420 = vld [vmem:[%s7 + $0x60] sm:$0xff]
        %v6421 = vld [vmem:[%s7 + $0x68] sm:$0xff]
        %v6422 = vld [vmem:[%s7 + $0x70] sm:$0xff]
        %v6423 = vld [vmem:[%s7 + $0x78] sm:$0xff]
        %v6424 = vld [vmem:[%s7 + $0x80] sm:$0xff]
        %v6425 = vld [vmem:[%s7 + $0x88] sm:$0xff]
        %v6426 = vld [vmem:[%s7 + $0x90] sm:$0xff]
        %v6427 = vld [vmem:[%s7 + $0x98] sm:$0xff]
        %v6428 = vld [vmem:[%s7 + $0xa0] sm:$0xff]
        %v6429 = vld [vmem:[%s7 + $0xa8] sm:$0xff]
        %v6430 = vld [vmem:[%s7 + $0xb0] sm:$0xff]
        %v6431 = vld [vmem:[%s7 + $0xb8] sm:$0xff]
        %v6432 = vld [vmem:[%s7 + $0xc0] sm:$0xff]
        %v6433 = vld [vmem:[%s7 + $0xc8] sm:$0xff]
        %v6434 = vld [vmem:[%s7 + $0xd0] sm:$0xff]
        %v6435 = vld [vmem:[%s7 + $0xd8] sm:$0xff]
        %v6436 = vld [vmem:[%s7 + $0xe0] sm:$0xff]
        %v6437 = vld [vmem:[%s7 + $0xe8] sm:$0xff]
        %v6438 = vld [vmem:[%s7 + $0xf0] sm:$0xff]
        %v6439 = vld [vmem:[%s7 + $0xf8] sm:$0xff]
        %v6440 = vld [vmem:[%s7 + $0x100] sm:$0xff]
        %v6441 = vld [vmem:[%s7 + $0x108] sm:$0xff]
        %v6442 = vld [vmem:[%s7 + $0x110] sm:$0xff]
        %v6443 = vld [vmem:[%s7 + $0x118] sm:$0xff]
        %v6444 = vld [vmem:[%s7 + $0x120] sm:$0xff]
        %v6445 = vld [vmem:[%s7 + $0x128] sm:$0xff]
        %v6446 = vld [vmem:[%s7 + $0x130] sm:$0xff]
        %v6447 = vld [vmem:[%s7 + $0x138] sm:$0xff]
        %v6448 = vld [vmem:[%s7 + $0x140] sm:$0xff]
        %v6449 = vld [vmem:[%s7 + $0x148] sm:$0xff]
        %v6450 = vld [vmem:[%s7 + $0x150] sm:$0xff]
        %v6451 = vld [vmem:[%s7 + $0x158] sm:$0xff]
        %v6452 = vld [vmem:[%s7 + $0x160] sm:$0xff]
        %v6453 = vld [vmem:[%s7 + $0x168] sm:$0xff]
        %v6454 = vld [vmem:[%s7 + $0x170] sm:$0xff]
        %v6455 = vld [vmem:[%s7 + $0x178] sm:$0xff]
        %v6456 = vld [vmem:[%s7 + $0x180] sm:$0xff]
        %v6457 = vld [vmem:[%s7 + $0x188] sm:$0xff]
        %v6458 = vld [vmem:[%s7 + $0x190] sm:$0xff]
        %v6459 = vld [vmem:[%s7 + $0x198] sm:$0xff]
        %v6460 = vld [vmem:[%s7 + $0x1a0] sm:$0xff]
        %v6461 = vld [vmem:[%s7 + $0x1a8] sm:$0xff]
        %v6462 = vld [vmem:[%s7 + $0x1b0] sm:$0xff]
        %v6463 = vld [vmem:[%s7 + $0x1b8] sm:$0xff]
        %v6464 = vld [vmem:[%s7 + $0x1c0] sm:$0xff]
        %v6465 = vld [vmem:[%s7 + $0x1c8] sm:$0xff]
        %v6466 = vld [vmem:[%s7 + $0x1d0] sm:$0xff]
        %v6467 = vld [vmem:[%s7 + $0x1d8] sm:$0xff]
        %v6468 = vld [vmem:[%s7 + $0x1e0] sm:$0xff]
        %v6469 = vld [vmem:[%s7 + $0x1e8] sm:$0xff]
        %v6470 = vld [vmem:[%s7 + $0x1f0] sm:$0xff]
        %v6471 = vld [vmem:[%s7 + $0x1f8] sm:$0xff]
        %v6472 = vld [vmem:[%s8] sm:$0x3]
        %v6474 = vlaneseq
        %v6475 = vshrl.u32 %v6474, 7
        %v6476 = vsub.s32 0, %v6475
        %v6477 = vrot.slane %v6472, %v6476
        %v6478 = vlaneseq
        %v6479 = vshrl.u32 %v6478, 7
        %v6480 = vsub.s32 1, %v6479
        %v6481 = vrot.slane %v6472, %v6480
        %v6548 = vunpack.c.l.b16 %v6408
        %v6549 = vunpack.c.h.b16 %v6408
        %v6550 = vunpack.c.l.b16 %v6409
        %v6551 = vunpack.c.h.b16 %v6409
        %v6552 = vunpack.c.l.b16 %v6410
        %v6553 = vunpack.c.h.b16 %v6410
        %v6554 = vunpack.c.l.b16 %v6411
        %v6555 = vunpack.c.h.b16 %v6411
        %v6556 = vunpack.c.l.b16 %v6412
        %v6557 = vunpack.c.h.b16 %v6412
        %v6558 = vunpack.c.l.b16 %v6413
        %v6559 = vunpack.c.h.b16 %v6413
        %v6560 = vunpack.c.l.b16 %v6414
        %v6561 = vunpack.c.h.b16 %v6414
        %v6562 = vunpack.c.l.b16 %v6415
        %v6563 = vunpack.c.h.b16 %v6415
        %v6564 = vunpack.c.l.b16 %v6416
        %v6565 = vunpack.c.h.b16 %v6416
        %v6566 = vunpack.c.l.b16 %v6417
        %v6567 = vunpack.c.h.b16 %v6417
        %v6568 = vunpack.c.l.b16 %v6418
        %v6569 = vunpack.c.h.b16 %v6418
        %v6570 = vunpack.c.l.b16 %v6419
        %v6571 = vunpack.c.h.b16 %v6419
        %v6572 = vunpack.c.l.b16 %v6420
        %v6573 = vunpack.c.h.b16 %v6420
        %v6574 = vunpack.c.l.b16 %v6421
        %v6575 = vunpack.c.h.b16 %v6421
        %v6576 = vunpack.c.l.b16 %v6422
        %v6577 = vunpack.c.h.b16 %v6422
        %v6578 = vunpack.c.l.b16 %v6423
        %v6579 = vunpack.c.h.b16 %v6423
        %v6580 = vunpack.c.l.b16 %v6424
        %v6581 = vunpack.c.h.b16 %v6424
        %v6582 = vunpack.c.l.b16 %v6425
        %v6583 = vunpack.c.h.b16 %v6425
        %v6584 = vunpack.c.l.b16 %v6426
        %v6585 = vunpack.c.h.b16 %v6426
        %v6586 = vunpack.c.l.b16 %v6427
        %v6587 = vunpack.c.h.b16 %v6427
        %v6588 = vunpack.c.l.b16 %v6428
        %v6589 = vunpack.c.h.b16 %v6428
        %v6590 = vunpack.c.l.b16 %v6429
        %v6591 = vunpack.c.h.b16 %v6429
        %v6592 = vunpack.c.l.b16 %v6430
        %v6593 = vunpack.c.h.b16 %v6430
        %v6594 = vunpack.c.l.b16 %v6431
        %v6595 = vunpack.c.h.b16 %v6431
        %v6596 = vunpack.c.l.b16 %v6432
        %v6597 = vunpack.c.h.b16 %v6432
        %v6598 = vunpack.c.l.b16 %v6433
        %v6599 = vunpack.c.h.b16 %v6433
        %v6600 = vunpack.c.l.b16 %v6434
        %v6601 = vunpack.c.h.b16 %v6434
        %v6602 = vunpack.c.l.b16 %v6435
        %v6603 = vunpack.c.h.b16 %v6435
        %v6604 = vunpack.c.l.b16 %v6436
        %v6605 = vunpack.c.h.b16 %v6436
        %v6606 = vunpack.c.l.b16 %v6437
        %v6607 = vunpack.c.h.b16 %v6437
        %v6608 = vunpack.c.l.b16 %v6438
        %v6609 = vunpack.c.h.b16 %v6438
        %v6610 = vunpack.c.l.b16 %v6439
        %v6611 = vunpack.c.h.b16 %v6439
        %v6612 = vunpack.c.l.b16 %v6440
        %v6613 = vunpack.c.h.b16 %v6440
        %v6614 = vunpack.c.l.b16 %v6441
        %v6615 = vunpack.c.h.b16 %v6441
        %v6616 = vunpack.c.l.b16 %v6442
        %v6617 = vunpack.c.h.b16 %v6442
        %v6618 = vunpack.c.l.b16 %v6443
        %v6619 = vunpack.c.h.b16 %v6443
        %v6620 = vunpack.c.l.b16 %v6444
        %v6621 = vunpack.c.h.b16 %v6444
        %v6622 = vunpack.c.l.b16 %v6445
        %v6623 = vunpack.c.h.b16 %v6445
        %v6624 = vunpack.c.l.b16 %v6446
        %v6625 = vunpack.c.h.b16 %v6446
        %v6626 = vunpack.c.l.b16 %v6447
        %v6627 = vunpack.c.h.b16 %v6447
        %v6628 = vunpack.c.l.b16 %v6448
        %v6629 = vunpack.c.h.b16 %v6448
        %v6630 = vunpack.c.l.b16 %v6449
        %v6631 = vunpack.c.h.b16 %v6449
        %v6632 = vunpack.c.l.b16 %v6450
        %v6633 = vunpack.c.h.b16 %v6450
        %v6634 = vunpack.c.l.b16 %v6451
        %v6635 = vunpack.c.h.b16 %v6451
        %v6636 = vunpack.c.l.b16 %v6452
        %v6637 = vunpack.c.h.b16 %v6452
        %v6638 = vunpack.c.l.b16 %v6453
        %v6639 = vunpack.c.h.b16 %v6453
        %v6640 = vunpack.c.l.b16 %v6454
        %v6641 = vunpack.c.h.b16 %v6454
        %v6642 = vunpack.c.l.b16 %v6455
        %v6643 = vunpack.c.h.b16 %v6455
        %v6644 = vunpack.c.l.b16 %v6456
        %v6645 = vunpack.c.h.b16 %v6456
        %v6646 = vunpack.c.l.b16 %v6457
        %v6647 = vunpack.c.h.b16 %v6457
        %v6648 = vunpack.c.l.b16 %v6458
        %v6649 = vunpack.c.h.b16 %v6458
        %v6650 = vunpack.c.l.b16 %v6459
        %v6651 = vunpack.c.h.b16 %v6459
        %v6652 = vunpack.c.l.b16 %v6460
        %v6653 = vunpack.c.h.b16 %v6460
        %v6654 = vunpack.c.l.b16 %v6461
        %v6655 = vunpack.c.h.b16 %v6461
        %v6656 = vunpack.c.l.b16 %v6462
        %v6657 = vunpack.c.h.b16 %v6462
        %v6658 = vunpack.c.l.b16 %v6463
        %v6659 = vunpack.c.h.b16 %v6463
        %v6660 = vunpack.c.l.b16 %v6464
        %v6661 = vunpack.c.h.b16 %v6464
        %v6662 = vunpack.c.l.b16 %v6465
        %v6663 = vunpack.c.h.b16 %v6465
        %v6664 = vunpack.c.l.b16 %v6466
        %v6665 = vunpack.c.h.b16 %v6466
        %v6666 = vunpack.c.l.b16 %v6467
        %v6667 = vunpack.c.h.b16 %v6467
        %v6668 = vunpack.c.l.b16 %v6468
        %v6669 = vunpack.c.h.b16 %v6468
        %v6670 = vunpack.c.l.b16 %v6469
        %v6671 = vunpack.c.h.b16 %v6469
        %v6672 = vunpack.c.l.b16 %v6470
        %v6673 = vunpack.c.h.b16 %v6470
        %v6674 = vunpack.c.l.b16 %v6471
        %v6675 = vunpack.c.h.b16 %v6471
        %v6676 = vpack.c.b16 %v6550, %v6548
        %v6677 = vpack.c.b16 %v6551, %v6549
        %v6678 = vpack.c.b16 %v6554, %v6552
        %v6679 = vpack.c.b16 %v6555, %v6553
        %v6680 = vpack.c.b16 %v6558, %v6556
        %v6681 = vpack.c.b16 %v6559, %v6557
        %v6682 = vpack.c.b16 %v6562, %v6560
        %v6683 = vpack.c.b16 %v6563, %v6561
        %v6684 = vpack.c.b16 %v6566, %v6564
        %v6685 = vpack.c.b16 %v6567, %v6565
        %v6686 = vpack.c.b16 %v6570, %v6568
        %v6687 = vpack.c.b16 %v6571, %v6569
        %v6688 = vpack.c.b16 %v6574, %v6572
        %v6689 = vpack.c.b16 %v6575, %v6573
        %v6690 = vpack.c.b16 %v6578, %v6576
        %v6691 = vpack.c.b16 %v6579, %v6577
        %v6692 = vpack.c.b16 %v6582, %v6580
        %v6693 = vpack.c.b16 %v6583, %v6581
        %v6694 = vpack.c.b16 %v6586, %v6584
        %v6695 = vpack.c.b16 %v6587, %v6585
        %v6696 = vpack.c.b16 %v6590, %v6588
        %v6697 = vpack.c.b16 %v6591, %v6589
        %v6698 = vpack.c.b16 %v6594, %v6592
        %v6699 = vpack.c.b16 %v6595, %v6593
        %v6700 = vpack.c.b16 %v6598, %v6596
        %v6701 = vpack.c.b16 %v6599, %v6597
        %v6702 = vpack.c.b16 %v6602, %v6600
        %v6703 = vpack.c.b16 %v6603, %v6601
        %v6704 = vpack.c.b16 %v6606, %v6604
        %v6705 = vpack.c.b16 %v6607, %v6605
        %v6706 = vpack.c.b16 %v6610, %v6608
        %v6707 = vpack.c.b16 %v6611, %v6609
        %v6708 = vpack.c.b16 %v6614, %v6612
        %v6709 = vpack.c.b16 %v6615, %v6613
        %v6710 = vpack.c.b16 %v6618, %v6616
        %v6711 = vpack.c.b16 %v6619, %v6617
        %v6712 = vpack.c.b16 %v6622, %v6620
        %v6713 = vpack.c.b16 %v6623, %v6621
        %v6714 = vpack.c.b16 %v6626, %v6624
        %v6715 = vpack.c.b16 %v6627, %v6625
        %v6716 = vpack.c.b16 %v6630, %v6628
        %v6717 = vpack.c.b16 %v6631, %v6629
        %v6718 = vpack.c.b16 %v6634, %v6632
        %v6719 = vpack.c.b16 %v6635, %v6633
        %v6720 = vpack.c.b16 %v6638, %v6636
        %v6721 = vpack.c.b16 %v6639, %v6637
        %v6722 = vpack.c.b16 %v6642, %v6640
        %v6723 = vpack.c.b16 %v6643, %v6641
        %v6724 = vpack.c.b16 %v6646, %v6644
        %v6725 = vpack.c.b16 %v6647, %v6645
        %v6726 = vpack.c.b16 %v6650, %v6648
        %v6727 = vpack.c.b16 %v6651, %v6649
        %v6728 = vpack.c.b16 %v6654, %v6652
        %v6729 = vpack.c.b16 %v6655, %v6653
        %v6730 = vpack.c.b16 %v6658, %v6656
        %v6731 = vpack.c.b16 %v6659, %v6657
        %v6732 = vpack.c.b16 %v6662, %v6660
        %v6733 = vpack.c.b16 %v6663, %v6661
        %v6734 = vpack.c.b16 %v6666, %v6664
        %v6735 = vpack.c.b16 %v6667, %v6665
        %v6736 = vpack.c.b16 %v6670, %v6668
        %v6737 = vpack.c.b16 %v6671, %v6669
        %v6738 = vpack.c.b16 %v6674, %v6672
        %v6739 = vpack.c.b16 %v6675, %v6673
        %6804 = vmatprep.subr.bf16.mxu0 %v6677
        %6805 = vmatpush1.bf16.msra.mxu0 %v6676
        %6806 = vmatprep.subr.bf16.mxu0 %v6679
        %6807 = vmatpush1.bf16.msra.mxu0 %v6678
        %6808 = vmatprep.subr.bf16.mxu0 %v6681
        %6809 = vmatpush1.bf16.msra.mxu0 %v6680
        %6810 = vmatprep.subr.bf16.mxu0 %v6683
        %6811 = vmatpush1.bf16.msra.mxu0 %v6682
        %6812 = vmatprep.subr.bf16.mxu0 %v6685
        %6813 = vmatpush1.bf16.msra.mxu0 %v6684
        %6814 = vmatprep.subr.bf16.mxu0 %v6687
        %6815 = vmatpush1.bf16.msra.mxu0 %v6686
        %6816 = vmatprep.subr.bf16.mxu0 %v6689
        %6817 = vmatpush1.bf16.msra.mxu0 %v6688
        %6818 = vmatprep.subr.bf16.mxu0 %v6691
        %6819 = vmatpush1.bf16.msra.mxu0 %v6690
        %6820 = vmatprep.subr.bf16.mxu0 %v6693
        %6821 = vmatpush1.bf16.msra.mxu0 %v6692
        %6822 = vmatprep.subr.bf16.mxu0 %v6695
        %6823 = vmatpush1.bf16.msra.mxu0 %v6694
        %6824 = vmatprep.subr.bf16.mxu0 %v6697
        %6825 = vmatpush1.bf16.msra.mxu0 %v6696
        %6826 = vmatprep.subr.bf16.mxu0 %v6699
        %6827 = vmatpush1.bf16.msra.mxu0 %v6698
        %6828 = vmatprep.subr.bf16.mxu0 %v6701
        %6829 = vmatpush1.bf16.msra.mxu0 %v6700
        %6830 = vmatprep.subr.bf16.mxu0 %v6703
        %6831 = vmatpush1.bf16.msra.mxu0 %v6702
        %6832 = vmatprep.subr.bf16.mxu0 %v6705
        %6833 = vmatpush1.bf16.msra.mxu0 %v6704
        %6834 = vmatprep.subr.bf16.mxu0 %v6707
        %6835 = vmatpush1.bf16.msra.mxu0 %v6706
        %6836 = vmatprep.mubr.bf16.mxu0 %v6405
        %6837 = vmatmul.mubr.bf16.gmra.mrb[0].mxu0 %v6404
        %v6838 = vpop.f32.mrb[0].mxu0
        %v6839 = vadd.f32 %v6477, %v6838
        %v6840 = vpop.f32.mrb[0].mxu0
        %v6841 = vadd.f32 %v6481, %v6840
        %v6842 = vpop.f32.mrb[0].mxu0
        %v6843 = vadd.f32 %v6477, %v6842
        %v6844 = vpop.f32.mrb[0].mxu0
        %v6845 = vadd.f32 %v6481, %v6844
        %6846 = vdwg.mxu0
        %6847 = vmatprep.subr.bf16.mxu0 %v6709
        %6848 = vmatpush1.bf16.msra.mxu0 %v6708
        %6849 = vmatprep.subr.bf16.mxu0 %v6711
        %6850 = vmatpush1.bf16.msra.mxu0 %v6710
        %6851 = vmatprep.subr.bf16.mxu0 %v6713
        %6852 = vmatpush1.bf16.msra.mxu0 %v6712
        %6853 = vmatprep.subr.bf16.mxu0 %v6715
        %6854 = vmatpush1.bf16.msra.mxu0 %v6714
        %6855 = vmatprep.subr.bf16.mxu0 %v6717
        %6856 = vmatpush1.bf16.msra.mxu0 %v6716
        %6857 = vmatprep.subr.bf16.mxu0 %v6719
        %6858 = vmatpush1.bf16.msra.mxu0 %v6718
        %6859 = vmatprep.subr.bf16.mxu0 %v6721
        %6860 = vmatpush1.bf16.msra.mxu0 %v6720
        %6861 = vmatprep.subr.bf16.mxu0 %v6723
        %6862 = vmatpush1.bf16.msra.mxu0 %v6722
        %6863 = vmatprep.subr.bf16.mxu0 %v6725
        %6864 = vmatpush1.bf16.msra.mxu0 %v6724
        %6865 = vmatprep.subr.bf16.mxu0 %v6727
        %6866 = vmatpush1.bf16.msra.mxu0 %v6726
        %6867 = vmatprep.subr.bf16.mxu0 %v6729
        %6868 = vmatpush1.bf16.msra.mxu0 %v6728
        %6869 = vmatprep.subr.bf16.mxu0 %v6731
        %6870 = vmatpush1.bf16.msra.mxu0 %v6730
        %6871 = vmatprep.subr.bf16.mxu0 %v6733
        %6872 = vmatpush1.bf16.msra.mxu0 %v6732
        %6873 = vmatprep.subr.bf16.mxu0 %v6735
        %6874 = vmatpush1.bf16.msra.mxu0 %v6734
        %6875 = vmatprep.subr.bf16.mxu0 %v6737
        %6876 = vmatpush1.bf16.msra.mxu0 %v6736
        %6877 = vmatprep.subr.bf16.mxu0 %v6739
        %6878 = vmatpush1.bf16.msra.mxu0 %v6738
        %6879 = vmatprep.mubr.bf16.mxu0 %v6407
        %6880 = vmatmul.mubr.bf16.gmra.mrb[0].mxu0 %v6406
        %v6881 = vpop.f32.mrb[0].mxu0
        %v6882 = vadd.f32 %v6839, %v6881
        %v6883 = vpop.f32.mrb[0].mxu0
        %v6884 = vadd.f32 %v6841, %v6883
        %v6885 = vpop.f32.mrb[0].mxu0
        %v6886 = vadd.f32 %v6843, %v6885
        %v6887 = vpop.f32.mrb[0].mxu0
        %v6888 = vadd.f32 %v6845, %v6887
        %6889 = vdwg.mxu0
        %v6890 = vmax.f32 %v6882, 0.0
        %v6891 = vmax.f32 %v6884, 0.0
        %v6892 = vmax.f32 %v6886, 0.0
        %v6893 = vmax.f32 %v6888, 0.0
        %v6894 = vpack.c.bf16 %v6892, %v6890
        %v6895 = vpack.c.bf16 %v6893, %v6891
        %v6896 = vld [vmem:[%s9] sm:$0xf]
        %v6897 = vld [vmem:[%s9 + $0x4] sm:$0xf]
        %v6898 = vld [vmem:[%s9 + $0x8] sm:$0xf]
        %v6899 = vld [vmem:[%s9 + $0xc] sm:$0xf]
        %v6900 = vld [vmem:[%s9 + $0x10] sm:$0xf]
        %v6901 = vld [vmem:[%s9 + $0x14] sm:$0xf]
        %v6902 = vld [vmem:[%s9 + $0x18] sm:$0xf]
        %v6903 = vld [vmem:[%s9 + $0x1c] sm:$0xf]
        %v6904 = vld [vmem:[%s9 + $0x20] sm:$0xf]
        %v6905 = vld [vmem:[%s9 + $0x24] sm:$0xf]
        %v6906 = vld [vmem:[%s9 + $0x28] sm:$0xf]
        %v6907 = vld [vmem:[%s9 + $0x2c] sm:$0xf]
        %v6908 = vld [vmem:[%s9 + $0x30] sm:$0xf]
        %v6909 = vld [vmem:[%s9 + $0x34] sm:$0xf]
        %v6910 = vld [vmem:[%s9 + $0x38] sm:$0xf]
        %v6911 = vld [vmem:[%s9 + $0x3c] sm:$0xf]
        %v6912 = vld [vmem:[%s9 + $0x40] sm:$0xf]
        %v6913 = vld [vmem:[%s9 + $0x44] sm:$0xf]
        %v6914 = vld [vmem:[%s9 + $0x48] sm:$0xf]
        %v6915 = vld [vmem:[%s9 + $0x4c] sm:$0xf]
        %v6916 = vld [vmem:[%s9 + $0x50] sm:$0xf]
        %v6917 = vld [vmem:[%s9 + $0x54] sm:$0xf]
        %v6918 = vld [vmem:[%s9 + $0x58] sm:$0xf]
        %v6919 = vld [vmem:[%s9 + $0x5c] sm:$0xf]
        %v6920 = vld [vmem:[%s9 + $0x60] sm:$0xf]
        %v6921 = vld [vmem:[%s9 + $0x64] sm:$0xf]
        %v6922 = vld [vmem:[%s9 + $0x68] sm:$0xf]
        %v6923 = vld [vmem:[%s9 + $0x6c] sm:$0xf]
        %v6924 = vld [vmem:[%s9 + $0x70] sm:$0xf]
        %v6925 = vld [vmem:[%s9 + $0x74] sm:$0xf]
        %v6926 = vld [vmem:[%s9 + $0x78] sm:$0xf]
        %v6927 = vld [vmem:[%s9 + $0x7c] sm:$0xf]
        %v6928 = vld [vmem:[%s10] sm:$0x1]
        %v6930 = vlaneseq
        %v6931 = vshrl.u32 %v6930, 7
        %v6932 = vsub.s32 0, %v6931
        %v6933 = vrot.slane %v6928, %v6932
        %v6967 = vunpack.c.l.b16 %v6896
        %v6968 = vunpack.c.l.b16 %v6897
        %v6969 = vunpack.c.l.b16 %v6898
        %v6970 = vunpack.c.l.b16 %v6899
        %v6971 = vunpack.c.l.b16 %v6900
        %v6972 = vunpack.c.l.b16 %v6901
        %v6973 = vunpack.c.l.b16 %v6902
        %v6974 = vunpack.c.l.b16 %v6903
        %v6975 = vunpack.c.l.b16 %v6904
        %v6976 = vunpack.c.l.b16 %v6905
        %v6977 = vunpack.c.l.b16 %v6906
        %v6978 = vunpack.c.l.b16 %v6907
        %v6979 = vunpack.c.l.b16 %v6908
        %v6980 = vunpack.c.l.b16 %v6909
        %v6981 = vunpack.c.l.b16 %v6910
        %v6982 = vunpack.c.l.b16 %v6911
        %v6983 = vunpack.c.l.b16 %v6912
        %v6984 = vunpack.c.l.b16 %v6913
        %v6985 = vunpack.c.l.b16 %v6914
        %v6986 = vunpack.c.l.b16 %v6915
        %v6987 = vunpack.c.l.b16 %v6916
        %v6988 = vunpack.c.l.b16 %v6917
        %v6989 = vunpack.c.l.b16 %v6918
        %v6990 = vunpack.c.l.b16 %v6919
        %v6991 = vunpack.c.l.b16 %v6920
        %v6992 = vunpack.c.l.b16 %v6921
        %v6993 = vunpack.c.l.b16 %v6922
        %v6994 = vunpack.c.l.b16 %v6923
        %v6995 = vunpack.c.l.b16 %v6924
        %v6996 = vunpack.c.l.b16 %v6925
        %v6997 = vunpack.c.l.b16 %v6926
        %v6998 = vunpack.c.l.b16 %v6927
        %v6999 = vpack.c.b16 %v6968, %v6967
        %v7000 = vpack.c.b16 %v6970, %v6969
        %v7001 = vpack.c.b16 %v6972, %v6971
        %v7002 = vpack.c.b16 %v6974, %v6973
        %v7003 = vpack.c.b16 %v6976, %v6975
        %v7004 = vpack.c.b16 %v6978, %v6977
        %v7005 = vpack.c.b16 %v6980, %v6979
        %v7006 = vpack.c.b16 %v6982, %v6981
        %v7007 = vpack.c.b16 %v6984, %v6983
        %v7008 = vpack.c.b16 %v6986, %v6985
        %v7009 = vpack.c.b16 %v6988, %v6987
        %v7010 = vpack.c.b16 %v6990, %v6989
        %v7011 = vpack.c.b16 %v6992, %v6991
        %v7012 = vpack.c.b16 %v6994, %v6993
        %v7013 = vpack.c.b16 %v6996, %v6995
        %v7014 = vpack.c.b16 %v6998, %v6997
        %7031 = vmatprep.subr.bf16.mxu0 0
        %7032 = vmatpush1.bf16.msra.mxu0 %v6999
        %7033 = vmatprep.subr.bf16.mxu0 0
        %7034 = vmatpush1.bf16.msra.mxu0 %v7000
        %7035 = vmatprep.subr.bf16.mxu0 0
        %7036 = vmatpush1.bf16.msra.mxu0 %v7001
        %7037 = vmatprep.subr.bf16.mxu0 0
        %7038 = vmatpush1.bf16.msra.mxu0 %v7002
        %7039 = vmatprep.subr.bf16.mxu0 0
        %7040 = vmatpush1.bf16.msra.mxu0 %v7003
        %7041 = vmatprep.subr.bf16.mxu0 0
        %7042 = vmatpush1.bf16.msra.mxu0 %v7004
        %7043 = vmatprep.subr.bf16.mxu0 0
        %7044 = vmatpush1.bf16.msra.mxu0 %v7005
        %7045 = vmatprep.subr.bf16.mxu0 0
        %7046 = vmatpush1.bf16.msra.mxu0 %v7006
        %7047 = vmatprep.subr.bf16.mxu0 0
        %7048 = vmatpush1.bf16.msra.mxu0 %v7007
        %7049 = vmatprep.subr.bf16.mxu0 0
        %7050 = vmatpush1.bf16.msra.mxu0 %v7008
        %7051 = vmatprep.subr.bf16.mxu0 0
        %7052 = vmatpush1.bf16.msra.mxu0 %v7009
        %7053 = vmatprep.subr.bf16.mxu0 0
        %7054 = vmatpush1.bf16.msra.mxu0 %v7010
        %7055 = vmatprep.subr.bf16.mxu0 0
        %7056 = vmatpush1.bf16.msra.mxu0 %v7011
        %7057 = vmatprep.subr.bf16.mxu0 0
        %7058 = vmatpush1.bf16.msra.mxu0 %v7012
        %7059 = vmatprep.subr.bf16.mxu0 0
        %7060 = vmatpush1.bf16.msra.mxu0 %v7013
        %7061 = vmatprep.subr.bf16.mxu0 0
        %7062 = vmatpush1.bf16.msra.mxu0 %v7014
        %7063 = vmatprep.mubr.bf16.mxu0 %v6895
        %7064 = vmatmul.mubr.bf16.gmra.mrb[0].mxu0 %v6894
        %v7065 = vpop.f32.mrb[0].mxu0
        %v7066 = vadd.f32 %v6933, %v7065
        %v7067 = vpop.f32.mrb[0].mxu0
        %v7068 = vpop.f32.mrb[0].mxu0
        %v7069 = vadd.f32 %v6933, %v7068
        %v7070 = vpop.f32.mrb[0].mxu0
        %7071 = vdwg.mxu0
        %v7072 = vmax.f32 %v7066, 0.0
        %v7073 = vmax.f32 %v7069, 0.0
        %v7074 = vpack.c.bf16 %v7073, %v7072
        %v7075 = vld [vmem:[#allocation2] sm:$0xf]
        %v7076 = vld [vmem:[#allocation2 + $0x4] sm:$0xf]
        %v7077 = vld [vmem:[#allocation2 + $0x8] sm:$0xf]
        %v7078 = vld [vmem:[#allocation2 + $0xc] sm:$0xf]
        %v7079 = vld [vmem:[#allocation2 + $0x10] sm:$0xf]
        %v7080 = vld [vmem:[#allocation2 + $0x14] sm:$0xf]
        %v7081 = vld [vmem:[#allocation2 + $0x18] sm:$0xf]
        %v7082 = vld [vmem:[#allocation2 + $0x1c] sm:$0xf]
        %v7083 = vld [vmem:[#allocation2 + $0x20] sm:$0xf]
        %v7084 = vld [vmem:[#allocation2 + $0x24] sm:$0xf]
        %v7085 = vld [vmem:[#allocation2 + $0x28] sm:$0xf]
        %v7086 = vld [vmem:[#allocation2 + $0x2c] sm:$0xf]
        %v7087 = vld [vmem:[#allocation2 + $0x30] sm:$0xf]
        %v7088 = vld [vmem:[#allocation2 + $0x34] sm:$0xf]
        %v7089 = vld [vmem:[#allocation2 + $0x38] sm:$0xf]
        %v7090 = vld [vmem:[#allocation2 + $0x3c] sm:$0xf]
        %v7091 = vld [vmem:[%s12] sm:$0x1]
        %v7093 = vlaneseq
        %v7094 = vshrl.u32 %v7093, 7
        %v7095 = vsub.s32 0, %v7094
        %v7096 = vrot.slane %v7091, %v7095
        %v7114 = vunpack.c.l.b16 %v7075
        %v7115 = vunpack.c.l.b16 %v7076
        %v7116 = vunpack.c.l.b16 %v7077
        %v7117 = vunpack.c.l.b16 %v7078
        %v7118 = vunpack.c.l.b16 %v7079
        %v7119 = vunpack.c.l.b16 %v7080
        %v7120 = vunpack.c.l.b16 %v7081
        %v7121 = vunpack.c.l.b16 %v7082
        %v7122 = vunpack.c.l.b16 %v7083
        %v7123 = vunpack.c.l.b16 %v7084
        %v7124 = vunpack.c.l.b16 %v7085
        %v7125 = vunpack.c.l.b16 %v7086
        %v7126 = vunpack.c.l.b16 %v7087
        %v7127 = vunpack.c.l.b16 %v7088
        %v7128 = vunpack.c.l.b16 %v7089
        %v7129 = vunpack.c.l.b16 %v7090
        %v7130 = vpack.c.b16 %v7115, %v7114
        %v7131 = vpack.c.b16 %v7117, %v7116
        %v7132 = vpack.c.b16 %v7119, %v7118
        %v7133 = vpack.c.b16 %v7121, %v7120
        %v7134 = vpack.c.b16 %v7123, %v7122
        %v7135 = vpack.c.b16 %v7125, %v7124
        %v7136 = vpack.c.b16 %v7127, %v7126
        %v7137 = vpack.c.b16 %v7129, %v7128
        %7146 = vmatprep.subr.bf16.mxu0 0
        %7147 = vmatpush1.bf16.msra.mxu0 %v7130
        %7148 = vmatprep.subr.bf16.mxu0 0
        %7149 = vmatpush1.bf16.msra.mxu0 %v7131
        %7150 = vmatprep.subr.bf16.mxu0 0
        %7151 = vmatpush1.bf16.msra.mxu0 %v7132
        %7152 = vmatprep.subr.bf16.mxu0 0
        %7153 = vmatpush1.bf16.msra.mxu0 %v7133
        %7154 = vmatprep.subr.bf16.mxu0 0
        %7155 = vmatpush1.bf16.msra.mxu0 %v7134
        %7156 = vmatprep.subr.bf16.mxu0 0
        %7157 = vmatpush1.bf16.msra.mxu0 %v7135
        %7158 = vmatprep.subr.bf16.mxu0 0
        %7159 = vmatpush1.bf16.msra.mxu0 %v7136
        %7160 = vmatprep.subr.bf16.mxu0 0
        %7161 = vmatpush1.bf16.msra.mxu0 %v7137
        %7162 = vmatprep.subr.bf16.mxu0 0
        %7163 = vmatpush1.bf16.msra.mxu0 0
        %7164 = vmatprep.subr.bf16.mxu0 0
        %7165 = vmatpush1.bf16.msra.mxu0 0
        %7166 = vmatprep.subr.bf16.mxu0 0
        %7167 = vmatpush1.bf16.msra.mxu0 0
        %7168 = vmatprep.subr.bf16.mxu0 0
        %7169 = vmatpush1.bf16.msra.mxu0 0
        %7170 = vmatprep.subr.bf16.mxu0 0
        %7171 = vmatpush1.bf16.msra.mxu0 0
        %7172 = vmatprep.subr.bf16.mxu0 0
        %7173 = vmatpush1.bf16.msra.mxu0 0
        %7174 = vmatprep.subr.bf16.mxu0 0
        %7175 = vmatpush1.bf16.msra.mxu0 0
        %7176 = vmatprep.subr.bf16.mxu0 0
        %7177 = vmatpush1.bf16.msra.mxu0 0
        %7178 = vmatprep.mubr.bf16.mxu0 0
        %7179 = vmatmul.mubr.bf16.gmra.mrb[0].mxu0 %v7074
        %v7180 = vpop.f32.mrb[0].mxu0
        %v7181 = vadd.f32 %v7096, %v7180
        %v7182 = vpop.f32.mrb[0].mxu0
        %v7183 = vpop.f32.mrb[0].mxu0
        %v7184 = vadd.f32 %v7096, %v7183
        %v7185 = vpop.f32.mrb[0].mxu0
        %7186 = vdwg.mxu0
        %v7187 = vsub.f32 0.0, %v7181
        %v7188 = vsub.f32 0.0, %v7184
        %v7189 = vmul.f32 %v7187, 1.442695
        %v7190 = vpow.pop %v7189
        %v7191 = vmul.f32 %v7188, 1.442695
        %v7192 = vpow.pop %v7191
        %v7193 = vadd.f32 %v7190, 1.0
        %v7194 = vadd.f32 %v7192, 1.0
        %v7195 = vrcp.pop %v7193
        %v7196 = vrcp.pop %v7194
        %vm7197 = vcmask 64512
        %7198 = vst.msk [vmem:[%s500] sm:$0xff] %vm7197, %v7195
        %7199 = vst.msk [vmem:[%s500 + $0x8] sm:$0xff] %vm7197, %v7196
        %s7200 = sadd.s32 %s29, %s30
        %s7201 = smul.u32 2, %s7200
        %p7202 = scmp.lt.s32.totalorder %s7201, 3
        %s7203 = scalar_select %p7202, %s7201, 3
        %s7204 = smul.addr %s7203, 8
        %s7205 = scalar_lea.vmem %s13, %s7204
        // Predicated region
        $region77: #{masknet_forward.21} parent=71 // pred_check
          %p7206 = pneg %p342
        $region78: #{masknet_forward.21} parent=71 // pred_check_branch
          %7208 = sbr.rel (%p7206) target = $region80
        $region79: #{masknet_forward.21} parent=71 // pred_region
          %s7209 = sadd.s32 %s29, %s30
          %s7210 = smul.u32 2, %s7209
        $region80: #{masknet_forward.21} parent=71 // pred_fallthru
          _
      $region72: #{masknet_forward.21} parent=5 // pred_fallthru
        _
      %p7211 = scmp.le.s32.totalorder 2, %s20
      // Predicated region
      $region81: #{masknet_forward.21} parent=5 // pred_check
        %p7212 = pneg %p7211
      $region82: #{masknet_forward.21} parent=5 // pred_check_branch
        %7214 = sbr.rel (%p7212) target = $region84
      $region83: #{masknet_forward.21} parent=5 // pred_region
        %s7215 = ssub.s32 %s20, 2
        // Predicated region
        $region85: #{masknet_forward.21} parent=83 // pred_check
          %p7216 = pneg %p348
        $region86: #{masknet_forward.21} parent=83 // pred_check_branch
          %7218 = sbr.rel (%p7216) target = $region88
        $region87: #{masknet_forward.21} parent=83 // pred_region
          %s7219 = sadd.s32 %s31, %s32
          %s7220 = smul.u32 2, %s7219
          %p7221 = scmp.lt.s32.totalorder %s7220, 3
          %s7222 = scalar_select %p7221, %s7220, 3
          %s7223 = smul.addr %s7222, 8
          %s7224 = scalar_lea.vmem %s13, %s7223
        $region88: #{masknet_forward.21} parent=83 // pred_fallthru
          _
      $region84: #{masknet_forward.21} parent=5 // pred_fallthru
        _
    $region6: #{masknet_forward.21} parent=1 // loop_footer
      %s24 = sadd.s32 1, %s20
    $region7: #{masknet_forward.21} parent=1 // loop_footer_branch
      %19 = sbr.rel target = $region3
    $region8: #{masknet_forward.21} parent=1 // loop_exit
      _
    %7225 = vsyncpa [#allocation3], 1
    %s7226 = scalar_lea.sflag [#allocation3], 1
    %7227 = vsyncpa %s7226, 1

</llo_original>
